<compile_context>
chip_gen: v7x
topology: tpu7x:2x2x1
jax: 0.10.0
libtpu: 0.0.40
codegen_flags: <defaults>
</compile_context>

<pallas_src>
import functools
import itertools

import numpy as np
import jax
import jax.numpy as jnp
from jax.experimental import pallas as pl
from jax.experimental.pallas import tpu as pltpu


def _compiler_params(dims):
    """Small shim: prefer pltpu.CompilerParams, tolerate older class name."""
    cls = getattr(pltpu, "CompilerParams", None) or getattr(pltpu, "TPUCompilerParams", None)
    return cls(dimension_semantics=dims) if cls is not None else None


# ---------------------------------------------------------------------------
# Pallas kernel 1: fused  out = maybe_relu(x @ w + shift)
# (serves every Conv3d / Conv2d via im2col patches; BN scale is pre-folded
#  into w, BN shift + conv bias are pre-folded into shift)
# ---------------------------------------------------------------------------
def _fused_matmul_kernel(x_ref, w_ref, b_ref, o_ref, *, relu):
    acc = jnp.dot(x_ref[...], w_ref[...], preferred_element_type=jnp.float32)
    y = acc + b_ref[...]
    if relu:
        y = jnp.maximum(y, 0.0)
    o_ref[...] = y.astype(o_ref.dtype)


def _pick_tm(M, K, N, x_itemsize, o_itemsize, budget=10 * 1024 * 1024):
    """Largest M tile whose double-buffered working set fits a conservative
    VMEM budget (safe for v5e's 16 MiB scoped default; v6e/v7x have 32 MiB)."""
    if M <= 2048:
        return M                      # single block == full dim (no 8-div needed)
    for tm in (2048, 1024, 512, 256, 128):
        need = (2 * tm * K * x_itemsize      # x blocks (double-buffered)
                + 2 * tm * N * o_itemsize    # out blocks
                + 2 * K * N * x_itemsize     # weight (resident, double-buffered)
                + 2 * N * 4)                 # shift
        if need <= budget:
            return tm
    return 128


def fused_matmul(x, w, shift, *, relu=False, out_dtype=jnp.float32):
    """x: (M, K), w: (K, N), shift: (N,) or (1, N).  No HBM padding/slicing."""
    M, K = x.shape
    K2, N = w.shape
    assert K == K2
    shift = shift.reshape(1, N).astype(jnp.float32)
    tm = _pick_tm(M, K, N, x.dtype.itemsize, jnp.dtype(out_dtype).itemsize)
    return pl.pallas_call(
        functools.partial(_fused_matmul_kernel, relu=relu),
        out_shape=jax.ShapeDtypeStruct((M, N), out_dtype),
        grid=(pl.cdiv(M, tm),),                        # ragged last tile masked
        in_specs=[
            pl.BlockSpec((tm, K), lambda i: (i, 0)),   # K block == full dim
            pl.BlockSpec((K, N), lambda i: (0, 0)),    # weight, resident
            pl.BlockSpec((1, N), lambda i: (0, 0)),    # folded BN shift + bias
        ],
        out_specs=pl.BlockSpec((tm, N), lambda i: (i, 0)),
        compiler_params=_compiler_params(("parallel",)),
    )(x, w, shift)


# ---------------------------------------------------------------------------
# Pallas kernel 2: fused FC head  (Linear->ReLU->Linear->ReLU->Linear(.,1))
# All operands fit VMEM; single invocation, everything chained in-register.
# ---------------------------------------------------------------------------
def _fc_head_kernel(x_ref, w1_ref, b1_ref, w2_ref, b2_ref, w3_ref, b3_ref, o_ref):
    h = jnp.dot(x_ref[...], w1_ref[...], preferred_element_type=jnp.float32)
    h = jnp.maximum(h + b1_ref[...], 0.0)
    h = jnp.dot(h, w2_ref[...], preferred_element_type=jnp.float32)
    h = jnp.maximum(h + b2_ref[...], 0.0)
    # final Linear(48, 1) as a lane reduction (avoids a degenerate N=1 matmul)
    o_ref[...] = jnp.sum(h * w3_ref[...], axis=-1, keepdims=True) + b3_ref[...]


def fc_head(x, fp):
    M = x.shape[0]
    return pl.pallas_call(
        _fc_head_kernel,
        out_shape=jax.ShapeDtypeStruct((M, 1), jnp.float32),
    )(x.astype(jnp.float32), fp['fc1_w'], fp['fc1_b'],
      fp['fc2_w'], fp['fc2_b'], fp['fc3_w'], fp['fc3_b'])


# ---------------------------------------------------------------------------
# Glue: im2col, pooling, conv wrapper
# ---------------------------------------------------------------------------
def _im2col(x, k, pad):
    """x: (N, *spatial, C) channels-last -> (N*prod(out_sp), k^d * C)."""
    nsp = x.ndim - 2
    if pad:
        cfg = ((0, 0),) + ((pad, pad),) * nsp + ((0, 0),)
        x = jnp.pad(x, cfg)
    spatial = x.shape[1:-1]
    out_sp = tuple(s - k + 1 for s in spatial)
    cols = []
    for offs in itertools.product(range(k), repeat=nsp):
        sl = ((slice(None),)
              + tuple(slice(o, o + os) for o, os in zip(offs, out_sp))
              + (slice(None),))
        cols.append(x[sl])
    patches = jnp.concatenate(cols, axis=-1)
    M = x.shape[0] * int(np.prod(out_sp))
    return patches.reshape(M, (k ** nsp) * x.shape[-1]), out_sp


def conv_bn_relu(x, layer, *, k, pad, relu=True):
    """Conv(Nd) + folded BatchNorm + ReLU via ONE fused Pallas matmul.
    Patches are built/streamed in bf16; MXU accumulates in f32."""
    x = x.astype(jnp.bfloat16)
    patches, out_sp = _im2col(x, k, pad)
    y = fused_matmul(patches, layer['w'], layer['shift'],
                     relu=relu, out_dtype=jnp.bfloat16)
    return y.reshape((x.shape[0],) + out_sp + (layer['w'].shape[1],))


def maxpool(x, k):
    """Channels-last max pool, kernel == stride == k, floor mode (PyTorch)."""
    if k == 1:
        return x
    n, c = x.shape[0], x.shape[-1]
    spatial = x.shape[1:-1]
    out_sp = tuple(s // k for s in spatial)
    crop = (slice(None),) + tuple(slice(0, o * k) for o in out_sp) + (slice(None),)
    x = x[crop]
    new_shape = (n,) + tuple(v for o in out_sp for v in (o, k)) + (c,)
    x = x.reshape(new_shape)
    axes = tuple(2 + 2 * i for i in range(len(out_sp)))
    return jnp.max(x, axis=axes)


# ---------------------------------------------------------------------------
# One-time parameter folding (BN -> weight/shift, matmul-layout weights)
# ---------------------------------------------------------------------------
def fold_params(p):
    def conv(wkey, bkey, bnkey):
        w, b = p[wkey], p[bkey]
        gamma, beta, mean, var = p[bnkey]
        s = gamma * jax.lax.rsqrt(var + 1e-5)            # BN scale
        sh = (b - mean) * s + beta                        # BN shift (+conv bias)
        nsp = w.ndim - 2
        k = w.shape[-1]
        cin, cout = w.shape[1], w.shape[0]
        axes = tuple(range(2, 2 + nsp)) + (1, 0)          # (k..., cin, cout)
        wmat = jnp.transpose(w, axes).reshape((k ** nsp) * cin, cout)
        wmat = wmat * s[None, :]                          # fold scale into weight
        return dict(w=wmat.astype(jnp.bfloat16),
                    shift=sh.reshape(1, -1).astype(jnp.float32))

    return dict(
        c1=conv('c1_w', 'c1_b', 'bn1'),
        c2=conv('c2_w', 'c2_b', 'bn2'),
        d1=conv('d1_w', 'd1_b', 'bn3'),
        d2=conv('d2_w', 'd2_b', 'bn4'),
        tfc_w=p['tfc_w'][0].astype(jnp.float32),            # (T2,)
        tfc_b=p['tfc_b'][0].astype(jnp.float32),
        fc1_w=p['fc1_w'].T.astype(jnp.float32),              # (in, 128)
        fc1_b=p['fc1_b'].reshape(1, -1).astype(jnp.float32),
        fc2_w=p['fc2_w'].T.astype(jnp.float32),              # (128, 48)
        fc2_b=p['fc2_b'].reshape(1, -1).astype(jnp.float32),
        fc3_w=p['fc3_w'].astype(jnp.float32),                # (1, 48) broadcast row
        fc3_b=p['fc3_b'].reshape(1, 1).astype(jnp.float32),
        label_shift=p['label_shift'],
    )


# ---------------------------------------------------------------------------
# Forward pass == SubsetNetwork.forward + Network.out/loss (mse branch)
# ---------------------------------------------------------------------------
def forward(fp, occupancy, costs):
    B, S, C, H, W, T = occupancy.shape
    x = occupancy.reshape(B * S, C, H, W, T)
    x = jnp.transpose(x, (0, 2, 3, 4, 1))          # -> channels-last (N,H,W,T,C)

    # occupancy_cnn: Conv3d+BN+ReLU, MaxPool3d(3), Conv3d+BN+ReLU, MaxPool3d(2)
    x = conv_bn_relu(x, fp['c1'], k=3, pad=1)
    x = maxpool(x, 3)
    x = conv_bn_relu(x, fp['c2'], k=3, pad=0)
    x = maxpool(x, 2)

    # time_fc: Linear(T2, 1) over trailing time axis == weighted sum (VPU op,
    # no degenerate K=2/N=1 matmul kernel), then squeeze(-1).
    N, H2, W2, T2, Cc = x.shape
    if T2 > 1:
        x = (jnp.einsum('nhwtc,t->nhwc', x.astype(jnp.float32), fp['tfc_w'])
             + fp['tfc_b'])
    else:
        x = x[:, :, :, 0, :]

    # merged_cnn: Conv2d+BN+ReLU, MaxPool2d(1), Conv2d+BN+ReLU, MaxPool2d(2)
    x = conv_bn_relu(x, fp['d1'], k=3, pad=1)
    x = maxpool(x, 1)
    x = conv_bn_relu(x, fp['d2'], k=3, pad=1)
    x = maxpool(x, 2)

    # flatten in PyTorch (C, H, W) order, then the fused out_fc head kernel
    N2, H3, W3, C3 = x.shape
    x = jnp.transpose(x, (0, 3, 1, 2)).reshape(B * S, C3 * H3 * W3)
    preds = fc_head(x, fp).reshape(B, S)            # .squeeze(-1)

    # Network.out(): loss='mse', label_shift=None, mse_clip=False, huber_delta=0
    shortest, init, final = costs['shortest'], costs['init'], costs['final']
    preds = preds + 0.0 + fp['label_shift']
    preds = preds + jnp.maximum(shortest - preds, 0.0)   # (shortest-preds).clamp(min=0)
    preds = preds - init
    target = final - init
    loss = jnp.mean((preds - target) ** 2)               # F.mse_loss
    return preds, loss


# ---------------------------------------------------------------------------
# Deterministic synthetic parameters (PyTorch layouts), then fold once
# ---------------------------------------------------------------------------
def _derived_shapes(H, W, T):
    s = (H, W, T)                                   # Conv3d pad=1 keeps
    s = tuple(v // 3 for v in s)                    # MaxPool3d(3)
    s = tuple(v - 2 for v in s)                     # Conv3d k=3 no pad
    s = tuple(v // 2 for v in s)                    # MaxPool3d(2)
    H2, W2, T2 = s
    H3, W3 = H2 // 2, W2 // 2                       # 2d convs pad=1, pools 1 & 2
    return T2, 64 * H3 * W3


def init_params(key, C, H, W, T):
    T2, in_features = _derived_shapes(H, W, T)
    keys = iter(jax.random.split(key, 64))

    def nrm(shape, s=0.05):
        return s * jax.random.normal(next(keys), shape, jnp.float32)

    def bn(c):
        return (1.0 + 0.1 * jax.random.normal(next(keys), (c,), jnp.float32),   # gamma
                0.05 * jax.random.normal(next(keys), (c,), jnp.float32),         # beta
                0.05 * jax.random.normal(next(keys), (c,), jnp.float32),         # running_mean
                1.0 + 0.25 * jax.random.uniform(next(keys), (c,), jnp.float32))  # running_var

    depth_1 = 32
    return dict(
        c1_w=nrm((depth_1, C, 3, 3, 3)), c1_b=nrm((depth_1,)), bn1=bn(depth_1),
        c2_w=nrm((64, depth_1, 3, 3, 3)), c2_b=nrm((64,)), bn2=bn(64),
        tfc_w=nrm((1, T2)), tfc_b=nrm((1,)),
        d1_w=nrm((128, 64, 3, 3)), d1_b=nrm((128,)), bn3=bn(128),
        d2_w=nrm((64, 128, 3, 3)), d2_b=nrm((64,)), bn4=bn(64),
        fc1_w=nrm((128, in_features)), fc1_b=nrm((128,)),
        fc2_w=nrm((48, 128)), fc2_b=nrm((48,)),
        fc3_w=nrm((1, 48)), fc3_b=nrm((1,)),
        label_shift=jnp.float32(0.0),               # registered buffer (train_data=None)
    )


if __name__ == "__main__":
    # small shapes consistent with the module's pooling pipeline
    B, S, C, H, W, T = 2, 2, 3, 18, 18, 18
    key = jax.random.PRNGKey(0)
    k_param, k_occ, k_f, k_s, k_i = jax.random.split(key, 5)

    params = init_params(k_param, C, H, W, T)
    folded = fold_params(params)                     # one-time fold
    occupancy = jax.random.normal(k_occ, (B, S, C, H, W, T), jnp.float32)
    costs = {
        'init': 10.0 + jax.random.uniform(k_i, (B, S), dtype=jnp.float32),
        'shortest': 8.0 + jax.random.uniform(k_s, (B, S), dtype=jnp.float32),
        'final': 9.0 + jax.random.uniform(k_f, (B, S), dtype=jnp.float32),
    }

    fwd = jax.jit(forward)
    preds, loss = fwd(folded, occupancy, costs)
    jax.block_until_ready((preds, loss))
    assert preds.shape == (B, S) and loss.shape == ()
    assert bool(jnp.isfinite(loss))
    print("KERNEL_OK")
</pallas_src>

<mosaic_0001>
module attributes {stable_mosaic.version = 11 : i64} {
  func.func @_fused_matmul_kernel(%arg0: i32, %arg1: memref<2048x81xbf16, #tpu.memory_space<vmem>>, %arg2: memref<81x32xbf16, #tpu.memory_space<vmem>>, %arg3: memref<1x32xf32, #tpu.memory_space<vmem>>, %arg4: memref<2048x32xbf16, #tpu.memory_space<vmem>>) attributes {dimension_semantics = [#tpu.dimension_semantics<parallel>], iteration_bounds = array<i64: 12>, scalar_prefetch = 0 : i64, scratch_operands = 0 : i64, tpu.core_type = #tpu.core_type<tc>, window_params = [{transform_indices = @transform_0, window_bounds = array<i64: 2048, 81>}, {pipeline_mode = #tpu.pipeline_mode<synchronous>, transform_indices = @transform_1, window_bounds = array<i64: 81, 32>}, {pipeline_mode = #tpu.pipeline_mode<synchronous>, transform_indices = @transform_2, window_bounds = array<i64: 1, 32>}, {transform_indices = @transform_3, window_bounds = array<i64: 2048, 32>}]} {
    %c0 = arith.constant 0 : index
    %c0_0 = arith.constant 0 : index
    %0 = vector.load %arg1[%c0, %c0_0] : memref<2048x81xbf16, #tpu.memory_space<vmem>>, vector<2048x81xbf16>
    %c0_1 = arith.constant 0 : index
    %c0_2 = arith.constant 0 : index
    %1 = vector.load %arg2[%c0_1, %c0_2] : memref<81x32xbf16, #tpu.memory_space<vmem>>, vector<81x32xbf16>
    %cst = arith.constant dense<0.000000e+00> : vector<2048x32xf32>
    %2 = tpu.matmul %0, %1, %cst {dimension_numbers = #tpu.dot_dimension_numbers<[1], [0], [0], [1], [0, 0, 1, 1], [], []>} : vector<2048x81xbf16>, vector<81x32xbf16>, vector<2048x32xf32> -> vector<2048x32xf32>
    %c0_3 = arith.constant 0 : index
    %c0_4 = arith.constant 0 : index
    %3 = vector.load %arg3[%c0_3, %c0_4] : memref<1x32xf32, #tpu.memory_space<vmem>>, vector<1x32xf32>
    %4 = vector.broadcast %3 : vector<1x32xf32> to vector<2048x32xf32>
    %5 = arith.addf %2, %4 : vector<2048x32xf32>
    %cst_5 = arith.constant 0.000000e+00 : f32
    %6 = vector.broadcast %cst_5 : f32 to vector<2048x32xf32>
    %7 = arith.maximumf %5, %6 : vector<2048x32xf32>
    %8 = arith.truncf %7 : vector<2048x32xf32> to vector<2048x32xbf16>
    %c0_6 = arith.constant 0 : index
    %c0_7 = arith.constant 0 : index
    %9 = vector.load %arg4[%c0_6, %c0_7] : memref<2048x32xbf16, #tpu.memory_space<vmem>>, vector<2048x32xbf16>
    tpu.vector_store %arg4[%c0_6, %c0_7], %8 {strides = array<i32>} : memref<2048x32xbf16, #tpu.memory_space<vmem>>, vector<2048x32xbf16>,
    return
  }
  func.func @transform_0(%arg0: i32) -> (i32, i32) {
    %c0_i32 = arith.constant 0 : i32
    %c0_i32_0 = arith.constant 0 : i32
    return %arg0, %c0_i32 : i32, i32
  }
  func.func @transform_1(%arg0: i32) -> (i32, i32) {
    %c0_i32 = arith.constant 0 : i32
    %c0_i32_0 = arith.constant 0 : i32
    %c0_i32_1 = arith.constant 0 : i32
    return %c0_i32, %c0_i32_0 : i32, i32
  }
  func.func @transform_2(%arg0: i32) -> (i32, i32) {
    %c0_i32 = arith.constant 0 : i32
    %c0_i32_0 = arith.constant 0 : i32
    %c0_i32_1 = arith.constant 0 : i32
    return %c0_i32, %c0_i32_0 : i32, i32
  }
  func.func @transform_3(%arg0: i32) -> (i32, i32) {
    %c0_i32 = arith.constant 0 : i32
    %c0_i32_0 = arith.constant 0 : i32
    return %arg0, %c0_i32 : i32, i32
  }
}

module attributes {stable_mosaic.version = 11 : i64} {
  func.func @_fused_matmul_kernel(%arg0: i32, %arg1: memref<256x864xbf16, #tpu.memory_space<vmem>>, %arg2: memref<864x64xbf16, #tpu.memory_space<vmem>>, %arg3: memref<1x64xf32, #tpu.memory_space<vmem>>, %arg4: memref<256x64xbf16, #tpu.memory_space<vmem>>) attributes {dimension_semantics = [#tpu.dimension_semantics<parallel>], iteration_bounds = array<i64: 1>, scalar_prefetch = 0 : i64, scratch_operands = 0 : i64, tpu.core_type = #tpu.core_type<tc>, window_params = [{transform_indices = @transform_0, window_bounds = array<i64: 256, 864>}, {pipeline_mode = #tpu.pipeline_mode<synchronous>, transform_indices = @transform_1, window_bounds = array<i64: 864, 64>}, {pipeline_mode = #tpu.pipeline_mode<synchronous>, transform_indices = @transform_2, window_bounds = array<i64: 1, 64>}, {transform_indices = @transform_3, window_bounds = array<i64: 256, 64>}]} {
    %c0 = arith.constant 0 : index
    %c0_0 = arith.constant 0 : index
    %0 = vector.load %arg1[%c0, %c0_0] : memref<256x864xbf16, #tpu.memory_space<vmem>>, vector<256x864xbf16>
    %c0_1 = arith.constant 0 : index
    %c0_2 = arith.constant 0 : index
    %1 = vector.load %arg2[%c0_1, %c0_2] : memref<864x64xbf16, #tpu.memory_space<vmem>>, vector<864x64xbf16>
    %cst = arith.constant dense<0.000000e+00> : vector<256x64xf32>
    %2 = tpu.matmul %0, %1, %cst {dimension_numbers = #tpu.dot_dimension_numbers<[1], [0], [0], [1], [0, 0, 1, 1], [], []>} : vector<256x864xbf16>, vector<864x64xbf16>, vector<256x64xf32> -> vector<256x64xf32>
    %c0_3 = arith.constant 0 : index
    %c0_4 = arith.constant 0 : index
    %3 = vector.load %arg3[%c0_3, %c0_4] : memref<1x64xf32, #tpu.memory_space<vmem>>, vector<1x64xf32>
    %4 = vector.broadcast %3 : vector<1x64xf32> to vector<256x64xf32>
    %5 = arith.addf %2, %4 : vector<256x64xf32>
    %cst_5 = arith.constant 0.000000e+00 : f32
    %6 = vector.broadcast %cst_5 : f32 to vector<256x64xf32>
    %7 = arith.maximumf %5, %6 : vector<256x64xf32>
    %8 = arith.truncf %7 : vector<256x64xf32> to vector<256x64xbf16>
    %c0_6 = arith.constant 0 : index
    %c0_7 = arith.constant 0 : index
    %9 = vector.load %arg4[%c0_6, %c0_7] : memref<256x64xbf16, #tpu.memory_space<vmem>>, vector<256x64xbf16>
    tpu.vector_store %arg4[%c0_6, %c0_7], %8 {strides = array<i32>} : memref<256x64xbf16, #tpu.memory_space<vmem>>, vector<256x64xbf16>,
    return
  }
  func.func @transform_0(%arg0: i32) -> (i32, i32) {
    %c0_i32 = arith.constant 0 : i32
    %c0_i32_0 = arith.constant 0 : i32
    return %arg0, %c0_i32 : i32, i32
  }
  func.func @transform_1(%arg0: i32) -> (i32, i32) {
    %c0_i32 = arith.constant 0 : i32
    %c0_i32_0 = arith.constant 0 : i32
    %c0_i32_1 = arith.constant 0 : i32
    return %c0_i32, %c0_i32_0 : i32, i32
  }
  func.func @transform_2(%arg0: i32) -> (i32, i32) {
    %c0_i32 = arith.constant 0 : i32
    %c0_i32_0 = arith.constant 0 : i32
    %c0_i32_1 = arith.constant 0 : i32
    return %c0_i32, %c0_i32_0 : i32, i32
  }
  func.func @transform_3(%arg0: i32) -> (i32, i32) {
    %c0_i32 = arith.constant 0 : i32
    %c0_i32_0 = arith.constant 0 : i32
    return %arg0, %c0_i32 : i32, i32
  }
}

module attributes {stable_mosaic.version = 11 : i64} {
  func.func @_fused_matmul_kernel(%arg0: i32, %arg1: memref<16x576xbf16, #tpu.memory_space<vmem>>, %arg2: memref<576x128xbf16, #tpu.memory_space<vmem>>, %arg3: memref<1x128xf32, #tpu.memory_space<vmem>>, %arg4: memref<16x128xbf16, #tpu.memory_space<vmem>>) attributes {dimension_semantics = [#tpu.dimension_semantics<parallel>], iteration_bounds = array<i64: 1>, scalar_prefetch = 0 : i64, scratch_operands = 0 : i64, tpu.core_type = #tpu.core_type<tc>, window_params = [{transform_indices = @transform_0, window_bounds = array<i64: 16, 576>}, {pipeline_mode = #tpu.pipeline_mode<synchronous>, transform_indices = @transform_1, window_bounds = array<i64: 576, 128>}, {pipeline_mode = #tpu.pipeline_mode<synchronous>, transform_indices = @transform_2, window_bounds = array<i64: 1, 128>}, {transform_indices = @transform_3, window_bounds = array<i64: 16, 128>}]} {
    %c0 = arith.constant 0 : index
    %c0_0 = arith.constant 0 : index
    %0 = vector.load %arg1[%c0, %c0_0] : memref<16x576xbf16, #tpu.memory_space<vmem>>, vector<16x576xbf16>
    %c0_1 = arith.constant 0 : index
    %c0_2 = arith.constant 0 : index
    %1 = vector.load %arg2[%c0_1, %c0_2] : memref<576x128xbf16, #tpu.memory_space<vmem>>, vector<576x128xbf16>
    %cst = arith.constant dense<0.000000e+00> : vector<16x128xf32>
    %2 = tpu.matmul %0, %1, %cst {dimension_numbers = #tpu.dot_dimension_numbers<[1], [0], [0], [1], [0, 0, 1, 1], [], []>} : vector<16x576xbf16>, vector<576x128xbf16>, vector<16x128xf32> -> vector<16x128xf32>
    %c0_3 = arith.constant 0 : index
    %c0_4 = arith.constant 0 : index
    %3 = vector.load %arg3[%c0_3, %c0_4] : memref<1x128xf32, #tpu.memory_space<vmem>>, vector<1x128xf32>
    %4 = vector.broadcast %3 : vector<1x128xf32> to vector<16x128xf32>
    %5 = arith.addf %2, %4 : vector<16x128xf32>
    %cst_5 = arith.constant 0.000000e+00 : f32
    %6 = vector.broadcast %cst_5 : f32 to vector<16x128xf32>
    %7 = arith.maximumf %5, %6 : vector<16x128xf32>
    %8 = arith.truncf %7 : vector<16x128xf32> to vector<16x128xbf16>
    %c0_6 = arith.constant 0 : index
    %c0_7 = arith.constant 0 : index
    %9 = vector.load %arg4[%c0_6, %c0_7] : memref<16x128xbf16, #tpu.memory_space<vmem>>, vector<16x128xbf16>
    tpu.vector_store %arg4[%c0_6, %c0_7], %8 {strides = array<i32>} : memref<16x128xbf16, #tpu.memory_space<vmem>>, vector<16x128xbf16>,
    return
  }
  func.func @transform_0(%arg0: i32) -> (i32, i32) {
    %c0_i32 = arith.constant 0 : i32
    %c0_i32_0 = arith.constant 0 : i32
    return %arg0, %c0_i32 : i32, i32
  }
  func.func @transform_1(%arg0: i32) -> (i32, i32) {
    %c0_i32 = arith.constant 0 : i32
    %c0_i32_0 = arith.constant 0 : i32
    %c0_i32_1 = arith.constant 0 : i32
    return %c0_i32, %c0_i32_0 : i32, i32
  }
  func.func @transform_2(%arg0: i32) -> (i32, i32) {
    %c0_i32 = arith.constant 0 : i32
    %c0_i32_0 = arith.constant 0 : i32
    %c0_i32_1 = arith.constant 0 : i32
    return %c0_i32, %c0_i32_0 : i32, i32
  }
  func.func @transform_3(%arg0: i32) -> (i32, i32) {
    %c0_i32 = arith.constant 0 : i32
    %c0_i32_0 = arith.constant 0 : i32
    return %arg0, %c0_i32 : i32, i32
  }
}

module attributes {stable_mosaic.version = 11 : i64} {
  func.func @_fused_matmul_kernel(%arg0: i32, %arg1: memref<16x1152xbf16, #tpu.memory_space<vmem>>, %arg2: memref<1152x64xbf16, #tpu.memory_space<vmem>>, %arg3: memref<1x64xf32, #tpu.memory_space<vmem>>, %arg4: memref<16x64xbf16, #tpu.memory_space<vmem>>) attributes {dimension_semantics = [#tpu.dimension_semantics<parallel>], iteration_bounds = array<i64: 1>, scalar_prefetch = 0 : i64, scratch_operands = 0 : i64, tpu.core_type = #tpu.core_type<tc>, window_params = [{transform_indices = @transform_0, window_bounds = array<i64: 16, 1152>}, {pipeline_mode = #tpu.pipeline_mode<synchronous>, transform_indices = @transform_1, window_bounds = array<i64: 1152, 64>}, {pipeline_mode = #tpu.pipeline_mode<synchronous>, transform_indices = @transform_2, window_bounds = array<i64: 1, 64>}, {transform_indices = @transform_3, window_bounds = array<i64: 16, 64>}]} {
    %c0 = arith.constant 0 : index
    %c0_0 = arith.constant 0 : index
    %0 = vector.load %arg1[%c0, %c0_0] : memref<16x1152xbf16, #tpu.memory_space<vmem>>, vector<16x1152xbf16>
    %c0_1 = arith.constant 0 : index
    %c0_2 = arith.constant 0 : index
    %1 = vector.load %arg2[%c0_1, %c0_2] : memref<1152x64xbf16, #tpu.memory_space<vmem>>, vector<1152x64xbf16>
    %cst = arith.constant dense<0.000000e+00> : vector<16x64xf32>
    %2 = tpu.matmul %0, %1, %cst {dimension_numbers = #tpu.dot_dimension_numbers<[1], [0], [0], [1], [0, 0, 1, 1], [], []>} : vector<16x1152xbf16>, vector<1152x64xbf16>, vector<16x64xf32> -> vector<16x64xf32>
    %c0_3 = arith.constant 0 : index
    %c0_4 = arith.constant 0 : index
    %3 = vector.load %arg3[%c0_3, %c0_4] : memref<1x64xf32, #tpu.memory_space<vmem>>, vector<1x64xf32>
    %4 = vector.broadcast %3 : vector<1x64xf32> to vector<16x64xf32>
    %5 = arith.addf %2, %4 : vector<16x64xf32>
    %cst_5 = arith.constant 0.000000e+00 : f32
    %6 = vector.broadcast %cst_5 : f32 to vector<16x64xf32>
    %7 = arith.maximumf %5, %6 : vector<16x64xf32>
    %8 = arith.truncf %7 : vector<16x64xf32> to vector<16x64xbf16>
    %c0_6 = arith.constant 0 : index
    %c0_7 = arith.constant 0 : index
    %9 = vector.load %arg4[%c0_6, %c0_7] : memref<16x64xbf16, #tpu.memory_space<vmem>>, vector<16x64xbf16>
    tpu.vector_store %arg4[%c0_6, %c0_7], %8 {strides = array<i32>} : memref<16x64xbf16, #tpu.memory_space<vmem>>, vector<16x64xbf16>,
    return
  }
  func.func @transform_0(%arg0: i32) -> (i32, i32) {
    %c0_i32 = arith.constant 0 : i32
    %c0_i32_0 = arith.constant 0 : i32
    return %arg0, %c0_i32 : i32, i32
  }
  func.func @transform_1(%arg0: i32) -> (i32, i32) {
    %c0_i32 = arith.constant 0 : i32
    %c0_i32_0 = arith.constant 0 : i32
    %c0_i32_1 = arith.constant 0 : i32
    return %c0_i32, %c0_i32_0 : i32, i32
  }
  func.func @transform_2(%arg0: i32) -> (i32, i32) {
    %c0_i32 = arith.constant 0 : i32
    %c0_i32_0 = arith.constant 0 : i32
    %c0_i32_1 = arith.constant 0 : i32
    return %c0_i32, %c0_i32_0 : i32, i32
  }
  func.func @transform_3(%arg0: i32) -> (i32, i32) {
    %c0_i32 = arith.constant 0 : i32
    %c0_i32_0 = arith.constant 0 : i32
    return %arg0, %c0_i32 : i32, i32
  }
}

module attributes {stable_mosaic.version = 11 : i64} {
  func.func @_fc_head_kernel(%arg0: memref<4x64xf32, #tpu.memory_space<vmem>>, %arg1: memref<64x128xf32, #tpu.memory_space<vmem>>, %arg2: memref<1x128xf32, #tpu.memory_space<vmem>>, %arg3: memref<128x48xf32, #tpu.memory_space<vmem>>, %arg4: memref<1x48xf32, #tpu.memory_space<vmem>>, %arg5: memref<1x48xf32, #tpu.memory_space<vmem>>, %arg6: memref<1x1xf32, #tpu.memory_space<vmem>>, %arg7: memref<4x1xf32, #tpu.memory_space<vmem>>) attributes {dimension_semantics = [], scalar_prefetch = 0 : i64, scratch_operands = 0 : i64, tpu.core_type = #tpu.core_type<tc>} {
    %c0 = arith.constant 0 : index
    %c0_0 = arith.constant 0 : index
    %0 = vector.load %arg0[%c0, %c0_0] : memref<4x64xf32, #tpu.memory_space<vmem>>, vector<4x64xf32>
    %c0_1 = arith.constant 0 : index
    %c0_2 = arith.constant 0 : index
    %1 = vector.load %arg1[%c0_1, %c0_2] : memref<64x128xf32, #tpu.memory_space<vmem>>, vector<64x128xf32>
    %cst = arith.constant dense<0.000000e+00> : vector<4x128xf32>
    %2 = tpu.matmul %0, %1, %cst {dimension_numbers = #tpu.dot_dimension_numbers<[1], [0], [0], [1], [0, 0, 1, 1], [], []>} : vector<4x64xf32>, vector<64x128xf32>, vector<4x128xf32> -> vector<4x128xf32>
    %c0_3 = arith.constant 0 : index
    %c0_4 = arith.constant 0 : index
    %3 = vector.load %arg2[%c0_3, %c0_4] : memref<1x128xf32, #tpu.memory_space<vmem>>, vector<1x128xf32>
    %4 = vector.broadcast %3 : vector<1x128xf32> to vector<4x128xf32>
    %5 = arith.addf %2, %4 : vector<4x128xf32>
    %cst_5 = arith.constant 0.000000e+00 : f32
    %6 = vector.broadcast %cst_5 : f32 to vector<4x128xf32>
    %7 = arith.maximumf %5, %6 : vector<4x128xf32>
    %c0_6 = arith.constant 0 : index
    %c0_7 = arith.constant 0 : index
    %8 = vector.load %arg3[%c0_6, %c0_7] : memref<128x48xf32, #tpu.memory_space<vmem>>, vector<128x48xf32>
    %cst_8 = arith.constant dense<0.000000e+00> : vector<4x48xf32>
    %9 = tpu.matmul %7, %8, %cst_8 {dimension_numbers = #tpu.dot_dimension_numbers<[1], [0], [0], [1], [0, 0, 1, 1], [], []>} : vector<4x128xf32>, vector<128x48xf32>, vector<4x48xf32> -> vector<4x48xf32>
    %c0_9 = arith.constant 0 : index
    %c0_10 = arith.constant 0 : index
    %10 = vector.load %arg4[%c0_9, %c0_10] : memref<1x48xf32, #tpu.memory_space<vmem>>, vector<1x48xf32>
    %11 = vector.broadcast %10 : vector<1x48xf32> to vector<4x48xf32>
    %12 = arith.addf %9, %11 : vector<4x48xf32>
    %cst_11 = arith.constant 0.000000e+00 : f32
    %13 = vector.broadcast %cst_11 : f32 to vector<4x48xf32>
    %14 = arith.maximumf %12, %13 : vector<4x48xf32>
    %c0_12 = arith.constant 0 : index
    %c0_13 = arith.constant 0 : index
    %15 = vector.load %arg5[%c0_12, %c0_13] : memref<1x48xf32, #tpu.memory_space<vmem>>, vector<1x48xf32>
    %16 = vector.broadcast %15 : vector<1x48xf32> to vector<4x48xf32>
    %17 = arith.mulf %14, %16 : vector<4x48xf32>
    %cst_14 = arith.constant dense<0.000000e+00> : vector<4xf32>
    %18 = vector.multi_reduction <add>, %17, %cst_14 [1] : vector<4x48xf32> to vector<4xf32>
    %19 = vector.shape_cast %18 : vector<4xf32> to vector<4x1xf32>
    %c0_15 = arith.constant 0 : index
    %c0_16 = arith.constant 0 : index
    %20 = vector.load %arg6[%c0_15, %c0_16] : memref<1x1xf32, #tpu.memory_space<vmem>>, vector<1x1xf32>
    %21 = vector.broadcast %20 : vector<1x1xf32> to vector<4x1xf32>
    %22 = arith.addf %19, %21 : vector<4x1xf32>
    %c0_17 = arith.constant 0 : index
    %c0_18 = arith.constant 0 : index
    %23 = vector.load %arg7[%c0_17, %c0_18] : memref<4x1xf32, #tpu.memory_space<vmem>>, vector<4x1xf32>
    tpu.vector_store %arg7[%c0_17, %c0_18], %22 {strides = array<i32>} : memref<4x1xf32, #tpu.memory_space<vmem>>, vector<4x1xf32>,
    return
  }
}

</mosaic_0001>

<llo_original>
// kernel: forward.5
$region0: #{forward.5}
  #allocation0 [shape = 'u32[]', space=smem, size = 0x4, offset = 0x4, fixed_abs, tag = 'smem constant byte address 0x4 - core index']
  #allocation1 [shape = 'u32[144,128]{1,0:T(1,128)}', space=vmem, size = 0x12000, scoped, tag = 'internal scratch']
  %s0 = inlined_call_operand.vmem [shape: bf16[23328,81], index: 0, kind: input, shape index: {}]
  %s1 = inlined_call_operand.vmem [shape: bf16[81,32], index: 1, kind: input, shape index: {}]
  %s2 = inlined_call_operand.vmem [shape: f32[1,32], index: 2, kind: input, shape index: {}]
  %s3 = inlined_call_operand.vmem [shape: bf16[23328,32], index: 3, kind: output, shape index: {}]
  %s4 = sld [smem:[#allocation0]]
  $region89: #{forward.5} parent=0
    _
  %s6 = ssub.s32 1, %s4
  %s7 = scalar_select 0, %s6, %s4
  $region1: #{forward.5} parent=0
    #allocation2 [shape = 'u8[1048576]{0}', space=vmem, size = 0x100000, scoped, tag = 'output window, operand 0']
    loop: start=0, step=1, limit=14
    $region2: #{forward.5} parent=1 // loop_pre_header
      _
    $region3: #{forward.5} parent=1 // loop_header
      %s9 = sphi 0, %s13
      %p10 = scmp.ge.s32.totalorder %s9, 14
      %s19 = sphi 0, %s21
      %s22 = sphi 0, %s19
      %s23 = sphi 0, %s22
      %s39 = sphi 0, %s23
      %s43 = sphi 0, %s43
      %s45 = sphi 0, %s43
      %s46 = sphi 0, %s45
      %s60 = sphi 0, %s46
      %s64 = sphi 0, %s64
      %s66 = sphi 0, %s64
      %s67 = sphi 0, %s66
      %s81 = sphi 0, %s67
      %s87 = sphi 0, %s89
      %s90 = sphi 0, %s87
      %s91 = sphi 0, %s90
      %s107 = sphi 0, %s91
    $region4: #{forward.5} parent=1 // loop_header_branch
      %12 = sbr.rel (%p10) target = $region8
    $region5: #{forward.5} parent=1 // loop_body
      %s14 = ssub.s32 %s9, 1
      %s15 = ssub.s32 %s9, 2
      %s16 = sadd.s32 %s9, 1
      %s17 = ssub.s32 %s9, %s16
      %p18 = scmp.eq.s32.totalorder %s17, 0
      %s20 = sadd.s32 %s19, 1
      %s21 = scalar_select %p18, %s19, %s20
      %p24 = pneg %p18
      %p25 = scmp.eq.s32.totalorder %s9, 11
      %p26 = por %p24, %p25
      %p27 = scmp.ne.s32.totalorder %s19, %s22
      %p28 = scmp.eq.s32.totalorder %s9, 0
      %p29 = por %p27, %p28
      %p30 = scmp.ne.s32.totalorder %s19, %s22
      %p31 = scmp.eq.s32.totalorder %s14, 11
      %p32 = por %p30, %p31
      %p33 = scmp.ne.s32.totalorder %s22, %s23
      %p34 = scmp.eq.s32.totalorder %s14, 0
      %p35 = por %p33, %p34
      %p36 = scmp.ne.s32.totalorder %s22, %s23
      %p37 = scmp.eq.s32.totalorder %s15, 11
      %p38 = por %p36, %p37
      %p40 = scmp.ne.s32.totalorder %s23, %s39
      %p41 = scmp.eq.s32.totalorder %s15, 0
      %p42 = por %p40, %p41
      %s44 = sadd.s32 %s43, 1
      %p47 = scmp.eq.s32.totalorder %s9, 11
      %p48 = scmp.ne.s32.totalorder %s43, %s45
      %p49 = scmp.eq.s32.totalorder %s9, 0
      %p50 = por %p48, %p49
      %p51 = scmp.ne.s32.totalorder %s43, %s45
      %p52 = scmp.eq.s32.totalorder %s14, 11
      %p53 = por %p51, %p52
      %p54 = scmp.ne.s32.totalorder %s45, %s46
      %p55 = scmp.eq.s32.totalorder %s14, 0
      %p56 = por %p54, %p55
      %p57 = scmp.ne.s32.totalorder %s45, %s46
      %p58 = scmp.eq.s32.totalorder %s15, 11
      %p59 = por %p57, %p58
      %p61 = scmp.ne.s32.totalorder %s46, %s60
      %p62 = scmp.eq.s32.totalorder %s15, 0
      %p63 = por %p61, %p62
      %s65 = sadd.s32 %s64, 1
      %p68 = scmp.eq.s32.totalorder %s9, 11
      %p69 = scmp.ne.s32.totalorder %s64, %s66
      %p70 = scmp.eq.s32.totalorder %s9, 0
      %p71 = por %p69, %p70
      %p72 = scmp.ne.s32.totalorder %s64, %s66
      %p73 = scmp.eq.s32.totalorder %s14, 11
      %p74 = por %p72, %p73
      %p75 = scmp.ne.s32.totalorder %s66, %s67
      %p76 = scmp.eq.s32.totalorder %s14, 0
      %p77 = por %p75, %p76
      %p78 = scmp.ne.s32.totalorder %s66, %s67
      %p79 = scmp.eq.s32.totalorder %s15, 11
      %p80 = por %p78, %p79
      %p82 = scmp.ne.s32.totalorder %s67, %s81
      %p83 = scmp.eq.s32.totalorder %s15, 0
      %p84 = por %p82, %p83
      %s85 = ssub.s32 %s9, %s16
      %p86 = scmp.eq.s32.totalorder %s85, 0
      %s88 = sadd.s32 %s87, 1
      %s89 = scalar_select %p86, %s87, %s88
      %p92 = pneg %p86
      %p93 = scmp.eq.s32.totalorder %s9, 11
      %p94 = por %p92, %p93
      %p95 = scmp.ne.s32.totalorder %s87, %s90
      %p96 = scmp.eq.s32.totalorder %s9, 0
      %p97 = por %p95, %p96
      %p98 = scmp.ne.s32.totalorder %s87, %s90
      %p99 = scmp.eq.s32.totalorder %s14, 11
      %p100 = por %p98, %p99
      %p101 = scmp.ne.s32.totalorder %s90, %s91
      %p102 = scmp.eq.s32.totalorder %s14, 0
      %p103 = por %p101, %p102
      %p104 = scmp.ne.s32.totalorder %s90, %s91
      %p105 = scmp.eq.s32.totalorder %s15, 11
      %p106 = por %p104, %p105
      %p108 = scmp.ne.s32.totalorder %s91, %s107
      %p109 = scmp.eq.s32.totalorder %s15, 0
      %p110 = por %p108, %p109
      %p111 = scmp.le.s32.totalorder 1, %s9
      %p112 = scmp.lt.s32.totalorder %s9, 13
      %p113 = pnand %p111, %p112
      %p114 = pneg %p113
      // Predicated region
      $region9: #{forward.5} parent=5 // pred_check
        _
      $region10: #{forward.5} parent=5 // pred_check_branch
        %116 = sbr.rel (%p113) target = $region12
      $region11: #{forward.5} parent=5 // pred_region
        %s117 = ssub.s32 %s9, 1
        // Predicated region
        $region13: #{forward.5} parent=11 // pred_check
          %p118 = pneg %p56
        $region14: #{forward.5} parent=11 // pred_check_branch
          %120 = sbr.rel (%p118) target = $region16
        $region15: #{forward.5} parent=11 // pred_region
          _
        $region16: #{forward.5} parent=11 // pred_fallthru
          _
        // Predicated region
        $region17: #{forward.5} parent=11 // pred_check
          %p121 = pneg %p77
        $region18: #{forward.5} parent=11 // pred_check_branch
          %123 = sbr.rel (%p121) target = $region20
        $region19: #{forward.5} parent=11 // pred_region
          _
        $region20: #{forward.5} parent=11 // pred_fallthru
          _
      $region12: #{forward.5} parent=5 // pred_fallthru
        _
      %p124 = scmp.lt.s32.totalorder %s9, 12
      // Predicated region
      $region21: #{forward.5} parent=5 // pred_check
        %p125 = pneg %p124
      $region22: #{forward.5} parent=5 // pred_check_branch
        %127 = sbr.rel (%p125) target = $region24
      $region23: #{forward.5} parent=5 // pred_region
        // Predicated region
        $region25: #{forward.5} parent=23 // pred_check
          %p128 = pneg %p29
        $region26: #{forward.5} parent=23 // pred_check_branch
          %130 = sbr.rel (%p128) target = $region28
        $region27: #{forward.5} parent=23 // pred_region
          %s131 = smul.u32 256, %s9
          %s132 = ssub.s32 2916, %s131
          %p133 = scmp.lt.s32.totalorder %s132, 256
          %s134 = scalar_select %p133, %s132, 256
          %s135 = smul.u32 64, %s134
          %p136 = scmp.lt.s32.totalorder %s131, 2915
          %s137 = scalar_select %p136, %s131, 2915
          %s138 = smul.addr %s137, 4
          %s139 = scalar_lea.vmem %s0, %s138
          %s140 = smul.u32 256, %s9
          %s141 = ssub.s32 2916, %s140
          %p142 = scmp.lt.s32.totalorder %s141, 256
          %s143 = scalar_select %p142, %s141, 256
          %s144 = smul.u32 64, %s143
        $region28: #{forward.5} parent=23 // pred_fallthru
          _
      $region24: #{forward.5} parent=5 // pred_fallthru
        _
      %p145 = scmp.le.s32.totalorder 1, %s9
      %p146 = scmp.lt.s32.totalorder %s9, 13
      %p147 = pnand %p145, %p146
      %p148 = pneg %p147
      // Predicated region
      $region29: #{forward.5} parent=5 // pred_check
        _
      $region30: #{forward.5} parent=5 // pred_check_branch
        %150 = sbr.rel (%p147) target = $region32
      $region31: #{forward.5} parent=5 // pred_region
        %s151 = ssub.s32 %s9, 1
        %s152 = smul.u32 256, %s14
        %s153 = ssub.s32 2916, %s152
        %p154 = scmp.lt.s32.totalorder %s153, 256
        %s155 = scalar_select %p154, %s153, 256
        %s156 = smul.u32 64, %s155
        %p157 = scmp.lt.s32.totalorder %s152, 2915
        %s158 = scalar_select %p157, %s152, 2915
        %s159 = smul.addr %s158, 4
        %s160 = scalar_lea.vmem %s0, %s159
        %p161 = pneg %p35
        %p162 = pneg %p32
        %p163 = pneg %p56
        %p164 = pneg %p53
        %p165 = pneg %p77
        %p166 = pneg %p74
        %p167 = pneg %p103
        %p168 = pneg %p100
        %s169 = sand.u32 %s90, 1
        %s170 = sand.u32 %s90, 1
        %s171 = smul.addr %s170, 1024
        %s172 = scalar_lea.vmem [#allocation2], %s171
        %s173 = smul.u32 256, %s14
        %s174 = ssub.s32 2916, %s173
        %p175 = scmp.lt.s32.totalorder %s174, 256
        %s176 = scalar_select %p175, %s174, 256
        %s177 = smul.u32 64, %s176
        %p178 = scmp.lt.s32.totalorder %s173, 2915
        %s179 = scalar_select %p178, %s173, 2915
        %s180 = smul.addr %s179, 4
        %s181 = scalar_lea.vmem %s0, %s180
        %s182 = smul.u32 256, %s14
        %s183 = ssub.s32 2916, %s182
        %p184 = scmp.lt.s32.totalorder %s183, 256
        %s185 = scalar_select %p184, %s183, 256
        %s186 = smul.u32 64, %s185
        %s187 = smul.u32 256, %s14
        %s188 = ssub.s32 2916, %s187
        %p189 = scmp.lt.s32.totalorder %s188, 256
        %s190 = scalar_select %p189, %s188, 256
        %s191 = smul.u32 64, %s190
        %v193 = vld [vmem:[%s181] sm:$0xf]
        %v194 = vld [vmem:[%s181 + $0x4] sm:$0xf]
        %v195 = vld [vmem:[%s181 + $0x8] sm:$0xf]
        %v196 = vld [vmem:[%s181 + $0xc] sm:$0xf]
        %v197 = vld [vmem:[%s181 + $0x10] sm:$0xf]
        %v198 = vld [vmem:[%s181 + $0x14] sm:$0xf]
        %v199 = vld [vmem:[%s181 + $0x18] sm:$0xf]
        %v200 = vld [vmem:[%s181 + $0x1c] sm:$0xf]
        %v201 = vld [vmem:[%s181 + $0x20] sm:$0xf]
        %v202 = vld [vmem:[%s181 + $0x24] sm:$0xf]
        %v203 = vld [vmem:[%s181 + $0x28] sm:$0xf]
        %v204 = vld [vmem:[%s181 + $0x2c] sm:$0xf]
        %v205 = vld [vmem:[%s181 + $0x30] sm:$0xf]
        %v206 = vld [vmem:[%s181 + $0x34] sm:$0xf]
        %v207 = vld [vmem:[%s181 + $0x38] sm:$0xf]
        %v208 = vld [vmem:[%s181 + $0x3c] sm:$0xf]
        %v209 = vld [vmem:[%s181 + $0x40] sm:$0xf]
        %v210 = vld [vmem:[%s181 + $0x44] sm:$0xf]
        %v211 = vld [vmem:[%s181 + $0x48] sm:$0xf]
        %v212 = vld [vmem:[%s181 + $0x4c] sm:$0xf]
        %v213 = vld [vmem:[%s181 + $0x50] sm:$0xf]
        %v214 = vld [vmem:[%s181 + $0x54] sm:$0xf]
        %v215 = vld [vmem:[%s181 + $0x58] sm:$0xf]
        %v216 = vld [vmem:[%s181 + $0x5c] sm:$0xf]
        %v217 = vld [vmem:[%s181 + $0x60] sm:$0xf]
        %v218 = vld [vmem:[%s181 + $0x64] sm:$0xf]
        %v219 = vld [vmem:[%s181 + $0x68] sm:$0xf]
        %v220 = vld [vmem:[%s181 + $0x6c] sm:$0xf]
        %v221 = vld [vmem:[%s181 + $0x70] sm:$0xf]
        %v222 = vld [vmem:[%s181 + $0x74] sm:$0xf]
        %v223 = vld [vmem:[%s181 + $0x78] sm:$0xf]
        %v224 = vld [vmem:[%s181 + $0x7c] sm:$0xf]
        %v225 = vld [vmem:[%s181 + $0x80] sm:$0xf]
        %v226 = vld [vmem:[%s181 + $0x84] sm:$0xf]
        %v227 = vld [vmem:[%s181 + $0x88] sm:$0xf]
        %v228 = vld [vmem:[%s181 + $0x8c] sm:$0xf]
        %v229 = vld [vmem:[%s181 + $0x90] sm:$0xf]
        %v230 = vld [vmem:[%s181 + $0x94] sm:$0xf]
        %v231 = vld [vmem:[%s181 + $0x98] sm:$0xf]
        %v232 = vld [vmem:[%s181 + $0x9c] sm:$0xf]
        %v233 = vld [vmem:[%s181 + $0xa0] sm:$0xf]
        %v234 = vld [vmem:[%s181 + $0xa4] sm:$0xf]
        %v235 = vld [vmem:[%s181 + $0xa8] sm:$0xf]
        %v236 = vld [vmem:[%s181 + $0xac] sm:$0xf]
        %v237 = vld [vmem:[%s181 + $0xb0] sm:$0xf]
        %v238 = vld [vmem:[%s181 + $0xb4] sm:$0xf]
        %v239 = vld [vmem:[%s181 + $0xb8] sm:$0xf]
        %v240 = vld [vmem:[%s181 + $0xbc] sm:$0xf]
        %v241 = vld [vmem:[%s181 + $0xc0] sm:$0xf]
        %v242 = vld [vmem:[%s181 + $0xc4] sm:$0xf]
        %v243 = vld [vmem:[%s181 + $0xc8] sm:$0xf]
        %v244 = vld [vmem:[%s181 + $0xcc] sm:$0xf]
        %v245 = vld [vmem:[%s181 + $0xd0] sm:$0xf]
        %v246 = vld [vmem:[%s181 + $0xd4] sm:$0xf]
        %v247 = vld [vmem:[%s181 + $0xd8] sm:$0xf]
        %v248 = vld [vmem:[%s181 + $0xdc] sm:$0xf]
        %v249 = vld [vmem:[%s181 + $0xe0] sm:$0xf]
        %v250 = vld [vmem:[%s181 + $0xe4] sm:$0xf]
        %v251 = vld [vmem:[%s181 + $0xe8] sm:$0xf]
        %v252 = vld [vmem:[%s181 + $0xec] sm:$0xf]
        %v253 = vld [vmem:[%s181 + $0xf0] sm:$0xf]
        %v254 = vld [vmem:[%s181 + $0xf4] sm:$0xf]
        %v255 = vld [vmem:[%s181 + $0xf8] sm:$0xf]
        %v256 = vld [vmem:[%s181 + $0xfc] sm:$0xf]
        %v257 = vld [vmem:[%s181 + $0x100] sm:$0xf]
        %v258 = vld [vmem:[%s181 + $0x104] sm:$0xf]
        %v259 = vld [vmem:[%s181 + $0x108] sm:$0xf]
        %v260 = vld [vmem:[%s181 + $0x10c] sm:$0xf]
        %v261 = vld [vmem:[%s181 + $0x110] sm:$0xf]
        %v262 = vld [vmem:[%s181 + $0x114] sm:$0xf]
        %v263 = vld [vmem:[%s181 + $0x118] sm:$0xf]
        %v264 = vld [vmem:[%s181 + $0x11c] sm:$0xf]
        %v265 = vld [vmem:[%s181 + $0x120] sm:$0xf]
        %v266 = vld [vmem:[%s181 + $0x124] sm:$0xf]
        %v267 = vld [vmem:[%s181 + $0x128] sm:$0xf]
        %v268 = vld [vmem:[%s181 + $0x12c] sm:$0xf]
        %v269 = vld [vmem:[%s181 + $0x130] sm:$0xf]
        %v270 = vld [vmem:[%s181 + $0x134] sm:$0xf]
        %v271 = vld [vmem:[%s181 + $0x138] sm:$0xf]
        %v272 = vld [vmem:[%s181 + $0x13c] sm:$0xf]
        %v273 = vld [vmem:[%s181 + $0x140] sm:$0xf]
        %v274 = vld [vmem:[%s181 + $0x144] sm:$0xf]
        %v275 = vld [vmem:[%s181 + $0x148] sm:$0xf]
        %v276 = vld [vmem:[%s181 + $0x14c] sm:$0xf]
        %v277 = vld [vmem:[%s181 + $0x150] sm:$0xf]
        %v278 = vld [vmem:[%s181 + $0x154] sm:$0xf]
        %v279 = vld [vmem:[%s181 + $0x158] sm:$0xf]
        %v280 = vld [vmem:[%s181 + $0x15c] sm:$0xf]
        %v281 = vld [vmem:[%s181 + $0x160] sm:$0xf]
        %v282 = vld [vmem:[%s181 + $0x164] sm:$0xf]
        %v283 = vld [vmem:[%s181 + $0x168] sm:$0xf]
        %v284 = vld [vmem:[%s181 + $0x16c] sm:$0xf]
        %v285 = vld [vmem:[%s181 + $0x170] sm:$0xf]
        %v286 = vld [vmem:[%s181 + $0x174] sm:$0xf]
        %v287 = vld [vmem:[%s181 + $0x178] sm:$0xf]
        %v288 = vld [vmem:[%s181 + $0x17c] sm:$0xf]
        %v289 = vld [vmem:[%s181 + $0x180] sm:$0xf]
        %v290 = vld [vmem:[%s181 + $0x184] sm:$0xf]
        %v291 = vld [vmem:[%s181 + $0x188] sm:$0xf]
        %v292 = vld [vmem:[%s181 + $0x18c] sm:$0xf]
        %v293 = vld [vmem:[%s181 + $0x190] sm:$0xf]
        %v294 = vld [vmem:[%s181 + $0x194] sm:$0xf]
        %v295 = vld [vmem:[%s181 + $0x198] sm:$0xf]
        %v296 = vld [vmem:[%s181 + $0x19c] sm:$0xf]
        %v297 = vld [vmem:[%s181 + $0x1a0] sm:$0xf]
        %v298 = vld [vmem:[%s181 + $0x1a4] sm:$0xf]
        %v299 = vld [vmem:[%s181 + $0x1a8] sm:$0xf]
        %v300 = vld [vmem:[%s181 + $0x1ac] sm:$0xf]
        %v301 = vld [vmem:[%s181 + $0x1b0] sm:$0xf]
        %v302 = vld [vmem:[%s181 + $0x1b4] sm:$0xf]
        %v303 = vld [vmem:[%s181 + $0x1b8] sm:$0xf]
        %v304 = vld [vmem:[%s181 + $0x1bc] sm:$0xf]
        %v305 = vld [vmem:[%s181 + $0x1c0] sm:$0xf]
        %v306 = vld [vmem:[%s181 + $0x1c4] sm:$0xf]
        %v307 = vld [vmem:[%s181 + $0x1c8] sm:$0xf]
        %v308 = vld [vmem:[%s181 + $0x1cc] sm:$0xf]
        %v309 = vld [vmem:[%s181 + $0x1d0] sm:$0xf]
        %v310 = vld [vmem:[%s181 + $0x1d4] sm:$0xf]
        %v311 = vld [vmem:[%s181 + $0x1d8] sm:$0xf]
        %v312 = vld [vmem:[%s181 + $0x1dc] sm:$0xf]
        %v313 = vld [vmem:[%s181 + $0x1e0] sm:$0xf]
        %v314 = vld [vmem:[%s181 + $0x1e4] sm:$0xf]
        %v315 = vld [vmem:[%s181 + $0x1e8] sm:$0xf]
        %v316 = vld [vmem:[%s181 + $0x1ec] sm:$0xf]
        %v317 = vld [vmem:[%s181 + $0x1f0] sm:$0xf]
        %v318 = vld [vmem:[%s181 + $0x1f4] sm:$0xf]
        %v319 = vld [vmem:[%s181 + $0x1f8] sm:$0xf]
        %v320 = vld [vmem:[%s181 + $0x1fc] sm:$0xf]
        %v321 = vld [vmem:[%s181 + $0x200] sm:$0xf]
        %v322 = vld [vmem:[%s181 + $0x204] sm:$0xf]
        %v323 = vld [vmem:[%s181 + $0x208] sm:$0xf]
        %v324 = vld [vmem:[%s181 + $0x20c] sm:$0xf]
        %v325 = vld [vmem:[%s181 + $0x210] sm:$0xf]
        %v326 = vld [vmem:[%s181 + $0x214] sm:$0xf]
        %v327 = vld [vmem:[%s181 + $0x218] sm:$0xf]
        %v328 = vld [vmem:[%s181 + $0x21c] sm:$0xf]
        %v329 = vld [vmem:[%s181 + $0x220] sm:$0xf]
        %v330 = vld [vmem:[%s181 + $0x224] sm:$0xf]
        %v331 = vld [vmem:[%s181 + $0x228] sm:$0xf]
        %v332 = vld [vmem:[%s181 + $0x22c] sm:$0xf]
        %v333 = vld [vmem:[%s181 + $0x230] sm:$0xf]
        %v334 = vld [vmem:[%s181 + $0x234] sm:$0xf]
        %v335 = vld [vmem:[%s181 + $0x238] sm:$0xf]
        %v336 = vld [vmem:[%s181 + $0x23c] sm:$0xf]
        %v337 = vld [vmem:[%s181 + $0x240] sm:$0xf]
        %v338 = vld [vmem:[%s181 + $0x244] sm:$0xf]
        %v339 = vld [vmem:[%s181 + $0x248] sm:$0xf]
        %v340 = vld [vmem:[%s181 + $0x24c] sm:$0xf]
        %v341 = vld [vmem:[%s181 + $0x250] sm:$0xf]
        %v342 = vld [vmem:[%s181 + $0x254] sm:$0xf]
        %v343 = vld [vmem:[%s181 + $0x258] sm:$0xf]
        %v344 = vld [vmem:[%s181 + $0x25c] sm:$0xf]
        %v345 = vld [vmem:[%s181 + $0x260] sm:$0xf]
        %v346 = vld [vmem:[%s181 + $0x264] sm:$0xf]
        %v347 = vld [vmem:[%s181 + $0x268] sm:$0xf]
        %v348 = vld [vmem:[%s181 + $0x26c] sm:$0xf]
        %v349 = vld [vmem:[%s181 + $0x270] sm:$0xf]
        %v350 = vld [vmem:[%s181 + $0x274] sm:$0xf]
        %v351 = vld [vmem:[%s181 + $0x278] sm:$0xf]
        %v352 = vld [vmem:[%s181 + $0x27c] sm:$0xf]
        %v353 = vld [vmem:[%s181 + $0x280] sm:$0xf]
        %v354 = vld [vmem:[%s181 + $0x284] sm:$0xf]
        %v355 = vld [vmem:[%s181 + $0x288] sm:$0xf]
        %v356 = vld [vmem:[%s181 + $0x28c] sm:$0xf]
        %v357 = vld [vmem:[%s181 + $0x290] sm:$0xf]
        %v358 = vld [vmem:[%s181 + $0x294] sm:$0xf]
        %v359 = vld [vmem:[%s181 + $0x298] sm:$0xf]
        %v360 = vld [vmem:[%s181 + $0x29c] sm:$0xf]
        %v361 = vld [vmem:[%s181 + $0x2a0] sm:$0xf]
        %v362 = vld [vmem:[%s181 + $0x2a4] sm:$0xf]
        %v363 = vld [vmem:[%s181 + $0x2a8] sm:$0xf]
        %v364 = vld [vmem:[%s181 + $0x2ac] sm:$0xf]
        %v365 = vld [vmem:[%s181 + $0x2b0] sm:$0xf]
        %v366 = vld [vmem:[%s181 + $0x2b4] sm:$0xf]
        %v367 = vld [vmem:[%s181 + $0x2b8] sm:$0xf]
        %v368 = vld [vmem:[%s181 + $0x2bc] sm:$0xf]
        %v369 = vld [vmem:[%s181 + $0x2c0] sm:$0xf]
        %v370 = vld [vmem:[%s181 + $0x2c4] sm:$0xf]
        %v371 = vld [vmem:[%s181 + $0x2c8] sm:$0xf]
        %v372 = vld [vmem:[%s181 + $0x2cc] sm:$0xf]
        %v373 = vld [vmem:[%s181 + $0x2d0] sm:$0xf]
        %v374 = vld [vmem:[%s181 + $0x2d4] sm:$0xf]
        %v375 = vld [vmem:[%s181 + $0x2d8] sm:$0xf]
        %v376 = vld [vmem:[%s181 + $0x2dc] sm:$0xf]
        %v377 = vld [vmem:[%s181 + $0x2e0] sm:$0xf]
        %v378 = vld [vmem:[%s181 + $0x2e4] sm:$0xf]
        %v379 = vld [vmem:[%s181 + $0x2e8] sm:$0xf]
        %v380 = vld [vmem:[%s181 + $0x2ec] sm:$0xf]
        %v381 = vld [vmem:[%s181 + $0x2f0] sm:$0xf]
        %v382 = vld [vmem:[%s181 + $0x2f4] sm:$0xf]
        %v383 = vld [vmem:[%s181 + $0x2f8] sm:$0xf]
        %v384 = vld [vmem:[%s181 + $0x2fc] sm:$0xf]
        %v385 = vld [vmem:[%s181 + $0x300] sm:$0xf]
        %v386 = vld [vmem:[%s181 + $0x304] sm:$0xf]
        %v387 = vld [vmem:[%s181 + $0x308] sm:$0xf]
        %v388 = vld [vmem:[%s181 + $0x30c] sm:$0xf]
        %v389 = vld [vmem:[%s181 + $0x310] sm:$0xf]
        %v390 = vld [vmem:[%s181 + $0x314] sm:$0xf]
        %v391 = vld [vmem:[%s181 + $0x318] sm:$0xf]
        %v392 = vld [vmem:[%s181 + $0x31c] sm:$0xf]
        %v393 = vld [vmem:[%s181 + $0x320] sm:$0xf]
        %v394 = vld [vmem:[%s181 + $0x324] sm:$0xf]
        %v395 = vld [vmem:[%s181 + $0x328] sm:$0xf]
        %v396 = vld [vmem:[%s181 + $0x32c] sm:$0xf]
        %v397 = vld [vmem:[%s181 + $0x330] sm:$0xf]
        %v398 = vld [vmem:[%s181 + $0x334] sm:$0xf]
        %v399 = vld [vmem:[%s181 + $0x338] sm:$0xf]
        %v400 = vld [vmem:[%s181 + $0x33c] sm:$0xf]
        %v401 = vld [vmem:[%s181 + $0x340] sm:$0xf]
        %v402 = vld [vmem:[%s181 + $0x344] sm:$0xf]
        %v403 = vld [vmem:[%s181 + $0x348] sm:$0xf]
        %v404 = vld [vmem:[%s181 + $0x34c] sm:$0xf]
        %v405 = vld [vmem:[%s181 + $0x350] sm:$0xf]
        %v406 = vld [vmem:[%s181 + $0x354] sm:$0xf]
        %v407 = vld [vmem:[%s181 + $0x358] sm:$0xf]
        %v408 = vld [vmem:[%s181 + $0x35c] sm:$0xf]
        %v409 = vld [vmem:[%s181 + $0x360] sm:$0xf]
        %v410 = vld [vmem:[%s181 + $0x364] sm:$0xf]
        %v411 = vld [vmem:[%s181 + $0x368] sm:$0xf]
        %v412 = vld [vmem:[%s181 + $0x36c] sm:$0xf]
        %v413 = vld [vmem:[%s181 + $0x370] sm:$0xf]
        %v414 = vld [vmem:[%s181 + $0x374] sm:$0xf]
        %v415 = vld [vmem:[%s181 + $0x378] sm:$0xf]
        %v416 = vld [vmem:[%s181 + $0x37c] sm:$0xf]
        %v417 = vld [vmem:[%s181 + $0x380] sm:$0xf]
        %v418 = vld [vmem:[%s181 + $0x384] sm:$0xf]
        %v419 = vld [vmem:[%s181 + $0x388] sm:$0xf]
        %v420 = vld [vmem:[%s181 + $0x38c] sm:$0xf]
        %v421 = vld [vmem:[%s181 + $0x390] sm:$0xf]
        %v422 = vld [vmem:[%s181 + $0x394] sm:$0xf]
        %v423 = vld [vmem:[%s181 + $0x398] sm:$0xf]
        %v424 = vld [vmem:[%s181 + $0x39c] sm:$0xf]
        %v425 = vld [vmem:[%s181 + $0x3a0] sm:$0xf]
        %v426 = vld [vmem:[%s181 + $0x3a4] sm:$0xf]
        %v427 = vld [vmem:[%s181 + $0x3a8] sm:$0xf]
        %v428 = vld [vmem:[%s181 + $0x3ac] sm:$0xf]
        %v429 = vld [vmem:[%s181 + $0x3b0] sm:$0xf]
        %v430 = vld [vmem:[%s181 + $0x3b4] sm:$0xf]
        %v431 = vld [vmem:[%s181 + $0x3b8] sm:$0xf]
        %v432 = vld [vmem:[%s181 + $0x3bc] sm:$0xf]
        %v433 = vld [vmem:[%s181 + $0x3c0] sm:$0xf]
        %v434 = vld [vmem:[%s181 + $0x3c4] sm:$0xf]
        %v435 = vld [vmem:[%s181 + $0x3c8] sm:$0xf]
        %v436 = vld [vmem:[%s181 + $0x3cc] sm:$0xf]
        %v437 = vld [vmem:[%s181 + $0x3d0] sm:$0xf]
        %v438 = vld [vmem:[%s181 + $0x3d4] sm:$0xf]
        %v439 = vld [vmem:[%s181 + $0x3d8] sm:$0xf]
        %v440 = vld [vmem:[%s181 + $0x3dc] sm:$0xf]
        %v441 = vld [vmem:[%s181 + $0x3e0] sm:$0xf]
        %v442 = vld [vmem:[%s181 + $0x3e4] sm:$0xf]
        %v443 = vld [vmem:[%s181 + $0x3e8] sm:$0xf]
        %v444 = vld [vmem:[%s181 + $0x3ec] sm:$0xf]
        %v445 = vld [vmem:[%s181 + $0x3f0] sm:$0xf]
        %v446 = vld [vmem:[%s181 + $0x3f4] sm:$0xf]
        %v447 = vld [vmem:[%s181 + $0x3f8] sm:$0xf]
        %v448 = vld [vmem:[%s181 + $0x3fc] sm:$0xf]
        %v449 = vld [vmem:[%s1] sm:$0xf]
        %v450 = vld [vmem:[%s1 + $0x4] sm:$0xf]
        %v451 = vld [vmem:[%s1 + $0x8] sm:$0xf]
        %v452 = vld [vmem:[%s1 + $0xc] sm:$0xf]
        %v453 = vld [vmem:[%s1 + $0x10] sm:$0xf]
        %v454 = vld [vmem:[%s1 + $0x14] sm:$0xf]
        %v455 = vld [vmem:[%s1 + $0x18] sm:$0xf]
        %v456 = vld [vmem:[%s1 + $0x1c] sm:$0xf]
        %v457 = vld [vmem:[%s1 + $0x20] sm:$0xf]
        %v458 = vld [vmem:[%s1 + $0x24] sm:$0xf]
        %v459 = vld [vmem:[%s1 + $0x28] sm:$0x1]
        %v460 = vld [vmem:[%s2] sm:$0x1]
        %v462 = vlaneseq
        %v463 = vshrl.u32 %v462, 7
        %v464 = vsub.s32 0, %v463
        %v465 = vrot.slane %v460, %v464
        %v723 = vunpack.c.l.b16 %v193
        %v724 = vunpack.c.l.b16 %v194
        %v725 = vunpack.c.l.b16 %v195
        %v726 = vunpack.c.l.b16 %v196
        %v727 = vunpack.c.l.b16 %v197
        %v728 = vunpack.c.l.b16 %v198
        %v729 = vunpack.c.l.b16 %v199
        %v730 = vunpack.c.l.b16 %v200
        %v731 = vunpack.c.l.b16 %v201
        %v732 = vunpack.c.l.b16 %v202
        %v733 = vunpack.c.l.b16 %v203
        %v734 = vunpack.c.l.b16 %v204
        %v735 = vunpack.c.l.b16 %v205
        %v736 = vunpack.c.l.b16 %v206
        %v737 = vunpack.c.l.b16 %v207
        %v738 = vunpack.c.l.b16 %v208
        %v739 = vunpack.c.l.b16 %v209
        %v740 = vunpack.c.l.b16 %v210
        %v741 = vunpack.c.l.b16 %v211
        %v742 = vunpack.c.l.b16 %v212
        %v743 = vunpack.c.l.b16 %v213
        %v744 = vunpack.c.l.b16 %v214
        %v745 = vunpack.c.l.b16 %v215
        %v746 = vunpack.c.l.b16 %v216
        %v747 = vunpack.c.l.b16 %v217
        %v748 = vunpack.c.l.b16 %v218
        %v749 = vunpack.c.l.b16 %v219
        %v750 = vunpack.c.l.b16 %v220
        %v751 = vunpack.c.l.b16 %v221
        %v752 = vunpack.c.l.b16 %v222
        %v753 = vunpack.c.l.b16 %v223
        %v754 = vunpack.c.l.b16 %v224
        %v755 = vunpack.c.l.b16 %v225
        %v756 = vunpack.c.l.b16 %v226
        %v757 = vunpack.c.l.b16 %v227
        %v758 = vunpack.c.l.b16 %v228
        %v759 = vunpack.c.l.b16 %v229
        %v760 = vunpack.c.l.b16 %v230
        %v761 = vunpack.c.l.b16 %v231
        %v762 = vunpack.c.l.b16 %v232
        %v763 = vunpack.c.l.b16 %v233
        %v764 = vunpack.c.l.b16 %v234
        %v765 = vunpack.c.l.b16 %v235
        %v766 = vunpack.c.l.b16 %v236
        %v767 = vunpack.c.l.b16 %v237
        %v768 = vunpack.c.l.b16 %v238
        %v769 = vunpack.c.l.b16 %v239
        %v770 = vunpack.c.l.b16 %v240
        %v771 = vunpack.c.l.b16 %v241
        %v772 = vunpack.c.l.b16 %v242
        %v773 = vunpack.c.l.b16 %v243
        %v774 = vunpack.c.l.b16 %v244
        %v775 = vunpack.c.l.b16 %v245
        %v776 = vunpack.c.l.b16 %v246
        %v777 = vunpack.c.l.b16 %v247
        %v778 = vunpack.c.l.b16 %v248
        %v779 = vunpack.c.l.b16 %v249
        %v780 = vunpack.c.l.b16 %v250
        %v781 = vunpack.c.l.b16 %v251
        %v782 = vunpack.c.l.b16 %v252
        %v783 = vunpack.c.l.b16 %v253
        %v784 = vunpack.c.l.b16 %v254
        %v785 = vunpack.c.l.b16 %v255
        %v786 = vunpack.c.l.b16 %v256
        %v787 = vunpack.c.l.b16 %v257
        %v788 = vunpack.c.l.b16 %v258
        %v789 = vunpack.c.l.b16 %v259
        %v790 = vunpack.c.l.b16 %v260
        %v791 = vunpack.c.l.b16 %v261
        %v792 = vunpack.c.l.b16 %v262
        %v793 = vunpack.c.l.b16 %v263
        %v794 = vunpack.c.l.b16 %v264
        %v795 = vunpack.c.l.b16 %v265
        %v796 = vunpack.c.l.b16 %v266
        %v797 = vunpack.c.l.b16 %v267
        %v798 = vunpack.c.l.b16 %v268
        %v799 = vunpack.c.l.b16 %v269
        %v800 = vunpack.c.l.b16 %v270
        %v801 = vunpack.c.l.b16 %v271
        %v802 = vunpack.c.l.b16 %v272
        %v803 = vunpack.c.l.b16 %v273
        %v804 = vunpack.c.l.b16 %v274
        %v805 = vunpack.c.l.b16 %v275
        %v806 = vunpack.c.l.b16 %v276
        %v807 = vunpack.c.l.b16 %v277
        %v808 = vunpack.c.l.b16 %v278
        %v809 = vunpack.c.l.b16 %v279
        %v810 = vunpack.c.l.b16 %v280
        %v811 = vunpack.c.l.b16 %v281
        %v812 = vunpack.c.l.b16 %v282
        %v813 = vunpack.c.l.b16 %v283
        %v814 = vunpack.c.l.b16 %v284
        %v815 = vunpack.c.l.b16 %v285
        %v816 = vunpack.c.l.b16 %v286
        %v817 = vunpack.c.l.b16 %v287
        %v818 = vunpack.c.l.b16 %v288
        %v819 = vunpack.c.l.b16 %v289
        %v820 = vunpack.c.l.b16 %v290
        %v821 = vunpack.c.l.b16 %v291
        %v822 = vunpack.c.l.b16 %v292
        %v823 = vunpack.c.l.b16 %v293
        %v824 = vunpack.c.l.b16 %v294
        %v825 = vunpack.c.l.b16 %v295
        %v826 = vunpack.c.l.b16 %v296
        %v827 = vunpack.c.l.b16 %v297
        %v828 = vunpack.c.l.b16 %v298
        %v829 = vunpack.c.l.b16 %v299
        %v830 = vunpack.c.l.b16 %v300
        %v831 = vunpack.c.l.b16 %v301
        %v832 = vunpack.c.l.b16 %v302
        %v833 = vunpack.c.l.b16 %v303
        %v834 = vunpack.c.l.b16 %v304
        %v835 = vunpack.c.l.b16 %v305
        %v836 = vunpack.c.l.b16 %v306
        %v837 = vunpack.c.l.b16 %v307
        %v838 = vunpack.c.l.b16 %v308
        %v839 = vunpack.c.l.b16 %v309
        %v840 = vunpack.c.l.b16 %v310
        %v841 = vunpack.c.l.b16 %v311
        %v842 = vunpack.c.l.b16 %v312
        %v843 = vunpack.c.l.b16 %v313
        %v844 = vunpack.c.l.b16 %v314
        %v845 = vunpack.c.l.b16 %v315
        %v846 = vunpack.c.l.b16 %v316
        %v847 = vunpack.c.l.b16 %v317
        %v848 = vunpack.c.l.b16 %v318
        %v849 = vunpack.c.l.b16 %v319
        %v850 = vunpack.c.l.b16 %v320
        %v851 = vunpack.c.l.b16 %v321
        %v852 = vunpack.c.l.b16 %v322
        %v853 = vunpack.c.l.b16 %v323
        %v854 = vunpack.c.l.b16 %v324
        %v855 = vunpack.c.l.b16 %v325
        %v856 = vunpack.c.l.b16 %v326
        %v857 = vunpack.c.l.b16 %v327
        %v858 = vunpack.c.l.b16 %v328
        %v859 = vunpack.c.l.b16 %v329
        %v860 = vunpack.c.l.b16 %v330
        %v861 = vunpack.c.l.b16 %v331
        %v862 = vunpack.c.l.b16 %v332
        %v863 = vunpack.c.l.b16 %v333
        %v864 = vunpack.c.l.b16 %v334
        %v865 = vunpack.c.l.b16 %v335
        %v866 = vunpack.c.l.b16 %v336
        %v867 = vunpack.c.l.b16 %v337
        %v868 = vunpack.c.l.b16 %v338
        %v869 = vunpack.c.l.b16 %v339
        %v870 = vunpack.c.l.b16 %v340
        %v871 = vunpack.c.l.b16 %v341
        %v872 = vunpack.c.l.b16 %v342
        %v873 = vunpack.c.l.b16 %v343
        %v874 = vunpack.c.l.b16 %v344
        %v875 = vunpack.c.l.b16 %v345
        %v876 = vunpack.c.l.b16 %v346
        %v877 = vunpack.c.l.b16 %v347
        %v878 = vunpack.c.l.b16 %v348
        %v879 = vunpack.c.l.b16 %v349
        %v880 = vunpack.c.l.b16 %v350
        %v881 = vunpack.c.l.b16 %v351
        %v882 = vunpack.c.l.b16 %v352
        %v883 = vunpack.c.l.b16 %v353
        %v884 = vunpack.c.l.b16 %v354
        %v885 = vunpack.c.l.b16 %v355
        %v886 = vunpack.c.l.b16 %v356
        %v887 = vunpack.c.l.b16 %v357
        %v888 = vunpack.c.l.b16 %v358
        %v889 = vunpack.c.l.b16 %v359
        %v890 = vunpack.c.l.b16 %v360
        %v891 = vunpack.c.l.b16 %v361
        %v892 = vunpack.c.l.b16 %v362
        %v893 = vunpack.c.l.b16 %v363
        %v894 = vunpack.c.l.b16 %v364
        %v895 = vunpack.c.l.b16 %v365
        %v896 = vunpack.c.l.b16 %v366
        %v897 = vunpack.c.l.b16 %v367
        %v898 = vunpack.c.l.b16 %v368
        %v899 = vunpack.c.l.b16 %v369
        %v900 = vunpack.c.l.b16 %v370
        %v901 = vunpack.c.l.b16 %v371
        %v902 = vunpack.c.l.b16 %v372
        %v903 = vunpack.c.l.b16 %v373
        %v904 = vunpack.c.l.b16 %v374
        %v905 = vunpack.c.l.b16 %v375
        %v906 = vunpack.c.l.b16 %v376
        %v907 = vunpack.c.l.b16 %v377
        %v908 = vunpack.c.l.b16 %v378
        %v909 = vunpack.c.l.b16 %v379
        %v910 = vunpack.c.l.b16 %v380
        %v911 = vunpack.c.l.b16 %v381
        %v912 = vunpack.c.l.b16 %v382
        %v913 = vunpack.c.l.b16 %v383
        %v914 = vunpack.c.l.b16 %v384
        %v915 = vunpack.c.l.b16 %v385
        %v916 = vunpack.c.l.b16 %v386
        %v917 = vunpack.c.l.b16 %v387
        %v918 = vunpack.c.l.b16 %v388
        %v919 = vunpack.c.l.b16 %v389
        %v920 = vunpack.c.l.b16 %v390
        %v921 = vunpack.c.l.b16 %v391
        %v922 = vunpack.c.l.b16 %v392
        %v923 = vunpack.c.l.b16 %v393
        %v924 = vunpack.c.l.b16 %v394
        %v925 = vunpack.c.l.b16 %v395
        %v926 = vunpack.c.l.b16 %v396
        %v927 = vunpack.c.l.b16 %v397
        %v928 = vunpack.c.l.b16 %v398
        %v929 = vunpack.c.l.b16 %v399
        %v930 = vunpack.c.l.b16 %v400
        %v931 = vunpack.c.l.b16 %v401
        %v932 = vunpack.c.l.b16 %v402
        %v933 = vunpack.c.l.b16 %v403
        %v934 = vunpack.c.l.b16 %v404
        %v935 = vunpack.c.l.b16 %v405
        %v936 = vunpack.c.l.b16 %v406
        %v937 = vunpack.c.l.b16 %v407
        %v938 = vunpack.c.l.b16 %v408
        %v939 = vunpack.c.l.b16 %v409
        %v940 = vunpack.c.l.b16 %v410
        %v941 = vunpack.c.l.b16 %v411
        %v942 = vunpack.c.l.b16 %v412
        %v943 = vunpack.c.l.b16 %v413
        %v944 = vunpack.c.l.b16 %v414
        %v945 = vunpack.c.l.b16 %v415
        %v946 = vunpack.c.l.b16 %v416
        %v947 = vunpack.c.l.b16 %v417
        %v948 = vunpack.c.l.b16 %v418
        %v949 = vunpack.c.l.b16 %v419
        %v950 = vunpack.c.l.b16 %v420
        %v951 = vunpack.c.l.b16 %v421
        %v952 = vunpack.c.l.b16 %v422
        %v953 = vunpack.c.l.b16 %v423
        %v954 = vunpack.c.l.b16 %v424
        %v955 = vunpack.c.l.b16 %v425
        %v956 = vunpack.c.l.b16 %v426
        %v957 = vunpack.c.l.b16 %v427
        %v958 = vunpack.c.l.b16 %v428
        %v959 = vunpack.c.l.b16 %v429
        %v960 = vunpack.c.l.b16 %v430
        %v961 = vunpack.c.l.b16 %v431
        %v962 = vunpack.c.l.b16 %v432
        %v963 = vunpack.c.l.b16 %v433
        %v964 = vunpack.c.l.b16 %v434
        %v965 = vunpack.c.l.b16 %v435
        %v966 = vunpack.c.l.b16 %v436
        %v967 = vunpack.c.l.b16 %v437
        %v968 = vunpack.c.l.b16 %v438
        %v969 = vunpack.c.l.b16 %v439
        %v970 = vunpack.c.l.b16 %v440
        %v971 = vunpack.c.l.b16 %v441
        %v972 = vunpack.c.l.b16 %v442
        %v973 = vunpack.c.l.b16 %v443
        %v974 = vunpack.c.l.b16 %v444
        %v975 = vunpack.c.l.b16 %v445
        %v976 = vunpack.c.l.b16 %v446
        %v977 = vunpack.c.l.b16 %v447
        %v978 = vunpack.c.l.b16 %v448
        %v979 = vpack.c.b16 %v724, %v723
        %v980 = vpack.c.b16 %v726, %v725
        %v981 = vpack.c.b16 %v728, %v727
        %v982 = vpack.c.b16 %v730, %v729
        %v983 = vpack.c.b16 %v732, %v731
        %v984 = vpack.c.b16 %v734, %v733
        %v985 = vpack.c.b16 %v736, %v735
        %v986 = vpack.c.b16 %v738, %v737
        %v987 = vpack.c.b16 %v740, %v739
        %v988 = vpack.c.b16 %v742, %v741
        %v989 = vpack.c.b16 %v744, %v743
        %v990 = vpack.c.b16 %v746, %v745
        %v991 = vpack.c.b16 %v748, %v747
        %v992 = vpack.c.b16 %v750, %v749
        %v993 = vpack.c.b16 %v752, %v751
        %v994 = vpack.c.b16 %v754, %v753
        %v995 = vpack.c.b16 %v756, %v755
        %v996 = vpack.c.b16 %v758, %v757
        %v997 = vpack.c.b16 %v760, %v759
        %v998 = vpack.c.b16 %v762, %v761
        %v999 = vpack.c.b16 %v764, %v763
        %v1000 = vpack.c.b16 %v766, %v765
        %v1001 = vpack.c.b16 %v768, %v767
        %v1002 = vpack.c.b16 %v770, %v769
        %v1003 = vpack.c.b16 %v772, %v771
        %v1004 = vpack.c.b16 %v774, %v773
        %v1005 = vpack.c.b16 %v776, %v775
        %v1006 = vpack.c.b16 %v778, %v777
        %v1007 = vpack.c.b16 %v780, %v779
        %v1008 = vpack.c.b16 %v782, %v781
        %v1009 = vpack.c.b16 %v784, %v783
        %v1010 = vpack.c.b16 %v786, %v785
        %v1011 = vpack.c.b16 %v788, %v787
        %v1012 = vpack.c.b16 %v790, %v789
        %v1013 = vpack.c.b16 %v792, %v791
        %v1014 = vpack.c.b16 %v794, %v793
        %v1015 = vpack.c.b16 %v796, %v795
        %v1016 = vpack.c.b16 %v798, %v797
        %v1017 = vpack.c.b16 %v800, %v799
        %v1018 = vpack.c.b16 %v802, %v801
        %v1019 = vpack.c.b16 %v804, %v803
        %v1020 = vpack.c.b16 %v806, %v805
        %v1021 = vpack.c.b16 %v808, %v807
        %v1022 = vpack.c.b16 %v810, %v809
        %v1023 = vpack.c.b16 %v812, %v811
        %v1024 = vpack.c.b16 %v814, %v813
        %v1025 = vpack.c.b16 %v816, %v815
        %v1026 = vpack.c.b16 %v818, %v817
        %v1027 = vpack.c.b16 %v820, %v819
        %v1028 = vpack.c.b16 %v822, %v821
        %v1029 = vpack.c.b16 %v824, %v823
        %v1030 = vpack.c.b16 %v826, %v825
        %v1031 = vpack.c.b16 %v828, %v827
        %v1032 = vpack.c.b16 %v830, %v829
        %v1033 = vpack.c.b16 %v832, %v831
        %v1034 = vpack.c.b16 %v834, %v833
        %v1035 = vpack.c.b16 %v836, %v835
        %v1036 = vpack.c.b16 %v838, %v837
        %v1037 = vpack.c.b16 %v840, %v839
        %v1038 = vpack.c.b16 %v842, %v841
        %v1039 = vpack.c.b16 %v844, %v843
        %v1040 = vpack.c.b16 %v846, %v845
        %v1041 = vpack.c.b16 %v848, %v847
        %v1042 = vpack.c.b16 %v850, %v849
        %v1043 = vpack.c.b16 %v852, %v851
        %v1044 = vpack.c.b16 %v854, %v853
        %v1045 = vpack.c.b16 %v856, %v855
        %v1046 = vpack.c.b16 %v858, %v857
        %v1047 = vpack.c.b16 %v860, %v859
        %v1048 = vpack.c.b16 %v862, %v861
        %v1049 = vpack.c.b16 %v864, %v863
        %v1050 = vpack.c.b16 %v866, %v865
        %v1051 = vpack.c.b16 %v868, %v867
        %v1052 = vpack.c.b16 %v870, %v869
        %v1053 = vpack.c.b16 %v872, %v871
        %v1054 = vpack.c.b16 %v874, %v873
        %v1055 = vpack.c.b16 %v876, %v875
        %v1056 = vpack.c.b16 %v878, %v877
        %v1057 = vpack.c.b16 %v880, %v879
        %v1058 = vpack.c.b16 %v882, %v881
        %v1059 = vpack.c.b16 %v884, %v883
        %v1060 = vpack.c.b16 %v886, %v885
        %v1061 = vpack.c.b16 %v888, %v887
        %v1062 = vpack.c.b16 %v890, %v889
        %v1063 = vpack.c.b16 %v892, %v891
        %v1064 = vpack.c.b16 %v894, %v893
        %v1065 = vpack.c.b16 %v896, %v895
        %v1066 = vpack.c.b16 %v898, %v897
        %v1067 = vpack.c.b16 %v900, %v899
        %v1068 = vpack.c.b16 %v902, %v901
        %v1069 = vpack.c.b16 %v904, %v903
        %v1070 = vpack.c.b16 %v906, %v905
        %v1071 = vpack.c.b16 %v908, %v907
        %v1072 = vpack.c.b16 %v910, %v909
        %v1073 = vpack.c.b16 %v912, %v911
        %v1074 = vpack.c.b16 %v914, %v913
        %v1075 = vpack.c.b16 %v916, %v915
        %v1076 = vpack.c.b16 %v918, %v917
        %v1077 = vpack.c.b16 %v920, %v919
        %v1078 = vpack.c.b16 %v922, %v921
        %v1079 = vpack.c.b16 %v924, %v923
        %v1080 = vpack.c.b16 %v926, %v925
        %v1081 = vpack.c.b16 %v928, %v927
        %v1082 = vpack.c.b16 %v930, %v929
        %v1083 = vpack.c.b16 %v932, %v931
        %v1084 = vpack.c.b16 %v934, %v933
        %v1085 = vpack.c.b16 %v936, %v935
        %v1086 = vpack.c.b16 %v938, %v937
        %v1087 = vpack.c.b16 %v940, %v939
        %v1088 = vpack.c.b16 %v942, %v941
        %v1089 = vpack.c.b16 %v944, %v943
        %v1090 = vpack.c.b16 %v946, %v945
        %v1091 = vpack.c.b16 %v948, %v947
        %v1092 = vpack.c.b16 %v950, %v949
        %v1093 = vpack.c.b16 %v952, %v951
        %v1094 = vpack.c.b16 %v954, %v953
        %v1095 = vpack.c.b16 %v956, %v955
        %v1096 = vpack.c.b16 %v958, %v957
        %v1097 = vpack.c.b16 %v960, %v959
        %v1098 = vpack.c.b16 %v962, %v961
        %v1099 = vpack.c.b16 %v964, %v963
        %v1100 = vpack.c.b16 %v966, %v965
        %v1101 = vpack.c.b16 %v968, %v967
        %v1102 = vpack.c.b16 %v970, %v969
        %v1103 = vpack.c.b16 %v972, %v971
        %v1104 = vpack.c.b16 %v974, %v973
        %v1105 = vpack.c.b16 %v976, %v975
        %v1106 = vpack.c.b16 %v978, %v977
        %v1118 = vunpack.c.l.b16 %v449
        %v1119 = vunpack.c.l.b16 %v450
        %v1120 = vunpack.c.l.b16 %v451
        %v1121 = vunpack.c.l.b16 %v452
        %v1122 = vunpack.c.l.b16 %v453
        %v1123 = vunpack.c.l.b16 %v454
        %v1124 = vunpack.c.l.b16 %v455
        %v1125 = vunpack.c.l.b16 %v456
        %v1126 = vunpack.c.l.b16 %v457
        %v1127 = vunpack.c.l.b16 %v458
        %v1128 = vunpack.c.l.b16 %v459
        %v1129 = vpack.c.b16 %v1119, %v1118
        %v1130 = vpack.c.b16 %v1121, %v1120
        %v1131 = vpack.c.b16 %v1123, %v1122
        %v1132 = vpack.c.b16 %v1125, %v1124
        %v1133 = vpack.c.b16 %v1127, %v1126
        %v1134 = vpack.c.b16 %v1128, %v1128
        %vm1140 = vcmask 662528
        %v1142 = vsel %vm1140, %v979, 0
        %v1145 = vsel %vm1140, %v980, 0
        %v1148 = vsel %vm1140, %v981, 0
        %v1151 = vsel %vm1140, %v982, 0
        %v1154 = vsel %vm1140, %v983, 0
        %v1157 = vsel %vm1140, %v984, 0
        %v1160 = vsel %vm1140, %v985, 0
        %v1163 = vsel %vm1140, %v986, 0
        %v1166 = vsel %vm1140, %v987, 0
        %v1169 = vsel %vm1140, %v988, 0
        %v1172 = vsel %vm1140, %v989, 0
        %v1175 = vsel %vm1140, %v990, 0
        %v1178 = vsel %vm1140, %v991, 0
        %v1181 = vsel %vm1140, %v992, 0
        %v1184 = vsel %vm1140, %v993, 0
        %v1187 = vsel %vm1140, %v994, 0
        %v1190 = vsel %vm1140, %v995, 0
        %v1193 = vsel %vm1140, %v996, 0
        %v1196 = vsel %vm1140, %v997, 0
        %v1199 = vsel %vm1140, %v998, 0
        %v1202 = vsel %vm1140, %v999, 0
        %v1205 = vsel %vm1140, %v1000, 0
        %v1208 = vsel %vm1140, %v1001, 0
        %v1211 = vsel %vm1140, %v1002, 0
        %v1214 = vsel %vm1140, %v1003, 0
        %v1217 = vsel %vm1140, %v1004, 0
        %v1220 = vsel %vm1140, %v1005, 0
        %v1223 = vsel %vm1140, %v1006, 0
        %v1226 = vsel %vm1140, %v1007, 0
        %v1229 = vsel %vm1140, %v1008, 0
        %v1232 = vsel %vm1140, %v1009, 0
        %v1235 = vsel %vm1140, %v1010, 0
        %v1238 = vsel %vm1140, %v1011, 0
        %v1241 = vsel %vm1140, %v1012, 0
        %v1244 = vsel %vm1140, %v1013, 0
        %v1247 = vsel %vm1140, %v1014, 0
        %v1250 = vsel %vm1140, %v1015, 0
        %v1253 = vsel %vm1140, %v1016, 0
        %v1256 = vsel %vm1140, %v1017, 0
        %v1259 = vsel %vm1140, %v1018, 0
        %v1262 = vsel %vm1140, %v1019, 0
        %v1265 = vsel %vm1140, %v1020, 0
        %v1268 = vsel %vm1140, %v1021, 0
        %v1271 = vsel %vm1140, %v1022, 0
        %v1274 = vsel %vm1140, %v1023, 0
        %v1277 = vsel %vm1140, %v1024, 0
        %v1280 = vsel %vm1140, %v1025, 0
        %v1283 = vsel %vm1140, %v1026, 0
        %v1286 = vsel %vm1140, %v1027, 0
        %v1289 = vsel %vm1140, %v1028, 0
        %v1292 = vsel %vm1140, %v1029, 0
        %v1295 = vsel %vm1140, %v1030, 0
        %v1298 = vsel %vm1140, %v1031, 0
        %v1301 = vsel %vm1140, %v1032, 0
        %v1304 = vsel %vm1140, %v1033, 0
        %v1307 = vsel %vm1140, %v1034, 0
        %v1310 = vsel %vm1140, %v1035, 0
        %v1313 = vsel %vm1140, %v1036, 0
        %v1316 = vsel %vm1140, %v1037, 0
        %v1319 = vsel %vm1140, %v1038, 0
        %v1322 = vsel %vm1140, %v1039, 0
        %v1325 = vsel %vm1140, %v1040, 0
        %v1328 = vsel %vm1140, %v1041, 0
        %v1331 = vsel %vm1140, %v1042, 0
        %v1334 = vsel %vm1140, %v1043, 0
        %v1337 = vsel %vm1140, %v1044, 0
        %v1340 = vsel %vm1140, %v1045, 0
        %v1343 = vsel %vm1140, %v1046, 0
        %v1346 = vsel %vm1140, %v1047, 0
        %v1349 = vsel %vm1140, %v1048, 0
        %v1352 = vsel %vm1140, %v1049, 0
        %v1355 = vsel %vm1140, %v1050, 0
        %v1358 = vsel %vm1140, %v1051, 0
        %v1361 = vsel %vm1140, %v1052, 0
        %v1364 = vsel %vm1140, %v1053, 0
        %v1367 = vsel %vm1140, %v1054, 0
        %v1370 = vsel %vm1140, %v1055, 0
        %v1373 = vsel %vm1140, %v1056, 0
        %v1376 = vsel %vm1140, %v1057, 0
        %v1379 = vsel %vm1140, %v1058, 0
        %v1382 = vsel %vm1140, %v1059, 0
        %v1385 = vsel %vm1140, %v1060, 0
        %v1388 = vsel %vm1140, %v1061, 0
        %v1391 = vsel %vm1140, %v1062, 0
        %v1394 = vsel %vm1140, %v1063, 0
        %v1397 = vsel %vm1140, %v1064, 0
        %v1400 = vsel %vm1140, %v1065, 0
        %v1403 = vsel %vm1140, %v1066, 0
        %v1406 = vsel %vm1140, %v1067, 0
        %v1409 = vsel %vm1140, %v1068, 0
        %v1412 = vsel %vm1140, %v1069, 0
        %v1415 = vsel %vm1140, %v1070, 0
        %v1418 = vsel %vm1140, %v1071, 0
        %v1421 = vsel %vm1140, %v1072, 0
        %v1424 = vsel %vm1140, %v1073, 0
        %v1427 = vsel %vm1140, %v1074, 0
        %v1430 = vsel %vm1140, %v1075, 0
        %v1433 = vsel %vm1140, %v1076, 0
        %v1436 = vsel %vm1140, %v1077, 0
        %v1439 = vsel %vm1140, %v1078, 0
        %v1442 = vsel %vm1140, %v1079, 0
        %v1445 = vsel %vm1140, %v1080, 0
        %v1448 = vsel %vm1140, %v1081, 0
        %v1451 = vsel %vm1140, %v1082, 0
        %v1454 = vsel %vm1140, %v1083, 0
        %v1457 = vsel %vm1140, %v1084, 0
        %v1460 = vsel %vm1140, %v1085, 0
        %v1463 = vsel %vm1140, %v1086, 0
        %v1466 = vsel %vm1140, %v1087, 0
        %v1469 = vsel %vm1140, %v1088, 0
        %v1472 = vsel %vm1140, %v1089, 0
        %v1475 = vsel %vm1140, %v1090, 0
        %v1478 = vsel %vm1140, %v1091, 0
        %v1481 = vsel %vm1140, %v1092, 0
        %v1484 = vsel %vm1140, %v1093, 0
        %v1487 = vsel %vm1140, %v1094, 0
        %v1490 = vsel %vm1140, %v1095, 0
        %v1493 = vsel %vm1140, %v1096, 0
        %v1496 = vsel %vm1140, %v1097, 0
        %v1499 = vsel %vm1140, %v1098, 0
        %v1502 = vsel %vm1140, %v1099, 0
        %v1505 = vsel %vm1140, %v1100, 0
        %v1508 = vsel %vm1140, %v1101, 0
        %v1511 = vsel %vm1140, %v1102, 0
        %v1514 = vsel %vm1140, %v1103, 0
        %v1517 = vsel %vm1140, %v1104, 0
        %v1520 = vsel %vm1140, %v1105, 0
        %v1523 = vsel %vm1140, %v1106, 0
        %vm1525 = vcmask 1040384
        %v1526 = vsel 0, 4294967295, 65535
        %v1527 = vsel %vm1525, %v1526, 0
        %v1529 = vand.u32 %v1134, %v1527
        %1531 = vmatprep.subr.bf16.mxu0 0
        %1532 = vmatpush1.bf16.msra.mxu0 %v1129
        %1533 = vmatprep.subr.bf16.mxu0 0
        %1534 = vmatpush1.bf16.msra.mxu0 %v1130
        %1535 = vmatprep.subr.bf16.mxu0 0
        %1536 = vmatpush1.bf16.msra.mxu0 %v1131
        %1537 = vmatprep.subr.bf16.mxu0 0
        %1538 = vmatpush1.bf16.msra.mxu0 %v1132
        %1539 = vmatprep.subr.bf16.mxu0 0
        %1540 = vmatpush1.bf16.msra.mxu0 %v1133
        %1541 = vmatprep.subr.bf16.mxu0 0
        %1542 = vmatpush1.bf16.msra.mxu0 %v1529
        %1543 = vmatprep.subr.bf16.mxu0 0
        %1544 = vmatpush1.bf16.msra.mxu0 0
        %1545 = vmatprep.subr.bf16.mxu0 0
        %1546 = vmatpush1.bf16.msra.mxu0 0
        %1547 = vmatprep.subr.bf16.mxu0 0
        %1548 = vmatpush1.bf16.msra.mxu0 0
        %1549 = vmatprep.subr.bf16.mxu0 0
        %1550 = vmatpush1.bf16.msra.mxu0 0
        %1551 = vmatprep.subr.bf16.mxu0 0
        %1552 = vmatpush1.bf16.msra.mxu0 0
        %1553 = vmatprep.subr.bf16.mxu0 0
        %1554 = vmatpush1.bf16.msra.mxu0 0
        %1555 = vmatprep.subr.bf16.mxu0 0
        %1556 = vmatpush1.bf16.msra.mxu0 0
        %1557 = vmatprep.subr.bf16.mxu0 0
        %1558 = vmatpush1.bf16.msra.mxu0 0
        %1559 = vmatprep.subr.bf16.mxu0 0
        %1560 = vmatpush1.bf16.msra.mxu0 0
        %1561 = vmatprep.subr.bf16.mxu0 0
        %1562 = vmatpush1.bf16.msra.mxu0 0
        %1563 = vmatprep.mubr.bf16.mxu0 0
        %1564 = vmatmul.mubr.bf16.gmra.mrb[0].mxu0 %v1142
        %v1565 = vpop.f32.mrb[0].mxu0
        %v1566 = vadd.f32 %v465, %v1565
        %v1567 = vpop.f32.mrb[0].mxu0
        %v1568 = vpop.f32.mrb[0].mxu0
        %v1569 = vadd.f32 %v465, %v1568
        %v1570 = vpop.f32.mrb[0].mxu0
        %1571 = vmatprep.mubr.bf16.mxu0 0
        %1572 = vmatmul.mubr.bf16.gmra.mrb[0].mxu0 %v1145
        %v1573 = vpop.f32.mrb[0].mxu0
        %v1574 = vadd.f32 %v465, %v1573
        %v1575 = vpop.f32.mrb[0].mxu0
        %v1576 = vpop.f32.mrb[0].mxu0
        %v1577 = vadd.f32 %v465, %v1576
        %v1578 = vpop.f32.mrb[0].mxu0
        %1579 = vmatprep.mubr.bf16.mxu0 0
        %1580 = vmatmul.mubr.bf16.gmra.mrb[0].mxu0 %v1148
        %v1581 = vpop.f32.mrb[0].mxu0
        %v1582 = vadd.f32 %v465, %v1581
        %v1583 = vpop.f32.mrb[0].mxu0
        %v1584 = vpop.f32.mrb[0].mxu0
        %v1585 = vadd.f32 %v465, %v1584
        %v1586 = vpop.f32.mrb[0].mxu0
        %1587 = vmatprep.mubr.bf16.mxu0 0
        %1588 = vmatmul.mubr.bf16.gmra.mrb[0].mxu0 %v1151
        %v1589 = vpop.f32.mrb[0].mxu0
        %v1590 = vadd.f32 %v465, %v1589
        %v1591 = vpop.f32.mrb[0].mxu0
        %v1592 = vpop.f32.mrb[0].mxu0
        %v1593 = vadd.f32 %v465, %v1592
        %v1594 = vpop.f32.mrb[0].mxu0
        %1595 = vmatprep.mubr.bf16.mxu0 0
        %1596 = vmatmul.mubr.bf16.gmra.mrb[0].mxu0 %v1154
        %v1597 = vpop.f32.mrb[0].mxu0
        %v1598 = vadd.f32 %v465, %v1597
        %v1599 = vpop.f32.mrb[0].mxu0
        %v1600 = vpop.f32.mrb[0].mxu0
        %v1601 = vadd.f32 %v465, %v1600
        %v1602 = vpop.f32.mrb[0].mxu0
        %1603 = vmatprep.mubr.bf16.mxu0 0
        %1604 = vmatmul.mubr.bf16.gmra.mrb[0].mxu0 %v1157
        %v1605 = vpop.f32.mrb[0].mxu0
        %v1606 = vadd.f32 %v465, %v1605
        %v1607 = vpop.f32.mrb[0].mxu0
        %v1608 = vpop.f32.mrb[0].mxu0
        %v1609 = vadd.f32 %v465, %v1608
        %v1610 = vpop.f32.mrb[0].mxu0
        %1611 = vmatprep.mubr.bf16.mxu0 0
        %1612 = vmatmul.mubr.bf16.gmra.mrb[0].mxu0 %v1160
        %v1613 = vpop.f32.mrb[0].mxu0
        %v1614 = vadd.f32 %v465, %v1613
        %v1615 = vpop.f32.mrb[0].mxu0
        %v1616 = vpop.f32.mrb[0].mxu0
        %v1617 = vadd.f32 %v465, %v1616
        %v1618 = vpop.f32.mrb[0].mxu0
        %1619 = vmatprep.mubr.bf16.mxu0 0
        %1620 = vmatmul.mubr.bf16.gmra.mrb[0].mxu0 %v1163
        %v1621 = vpop.f32.mrb[0].mxu0
        %v1622 = vadd.f32 %v465, %v1621
        %v1623 = vpop.f32.mrb[0].mxu0
        %v1624 = vpop.f32.mrb[0].mxu0
        %v1625 = vadd.f32 %v465, %v1624
        %v1626 = vpop.f32.mrb[0].mxu0
        %1627 = vmatprep.mubr.bf16.mxu0 0
        %1628 = vmatmul.mubr.bf16.gmra.mrb[0].mxu0 %v1166
        %v1629 = vpop.f32.mrb[0].mxu0
        %v1630 = vadd.f32 %v465, %v1629
        %v1631 = vpop.f32.mrb[0].mxu0
        %v1632 = vpop.f32.mrb[0].mxu0
        %v1633 = vadd.f32 %v465, %v1632
        %v1634 = vpop.f32.mrb[0].mxu0
        %1635 = vmatprep.mubr.bf16.mxu0 0
        %1636 = vmatmul.mubr.bf16.gmra.mrb[0].mxu0 %v1169
        %v1637 = vpop.f32.mrb[0].mxu0
        %v1638 = vadd.f32 %v465, %v1637
        %v1639 = vpop.f32.mrb[0].mxu0
        %v1640 = vpop.f32.mrb[0].mxu0
        %v1641 = vadd.f32 %v465, %v1640
        %v1642 = vpop.f32.mrb[0].mxu0
        %1643 = vmatprep.mubr.bf16.mxu0 0
        %1644 = vmatmul.mubr.bf16.gmra.mrb[0].mxu0 %v1172
        %v1645 = vpop.f32.mrb[0].mxu0
        %v1646 = vadd.f32 %v465, %v1645
        %v1647 = vpop.f32.mrb[0].mxu0
        %v1648 = vpop.f32.mrb[0].mxu0
        %v1649 = vadd.f32 %v465, %v1648
        %v1650 = vpop.f32.mrb[0].mxu0
        %1651 = vmatprep.mubr.bf16.mxu0 0
        %1652 = vmatmul.mubr.bf16.gmra.mrb[0].mxu0 %v1175
        %v1653 = vpop.f32.mrb[0].mxu0
        %v1654 = vadd.f32 %v465, %v1653
        %v1655 = vpop.f32.mrb[0].mxu0
        %v1656 = vpop.f32.mrb[0].mxu0
        %v1657 = vadd.f32 %v465, %v1656
        %v1658 = vpop.f32.mrb[0].mxu0
        %1659 = vmatprep.mubr.bf16.mxu0 0
        %1660 = vmatmul.mubr.bf16.gmra.mrb[0].mxu0 %v1178
        %v1661 = vpop.f32.mrb[0].mxu0
        %v1662 = vadd.f32 %v465, %v1661
        %v1663 = vpop.f32.mrb[0].mxu0
        %v1664 = vpop.f32.mrb[0].mxu0
        %v1665 = vadd.f32 %v465, %v1664
        %v1666 = vpop.f32.mrb[0].mxu0
        %1667 = vmatprep.mubr.bf16.mxu0 0
        %1668 = vmatmul.mubr.bf16.gmra.mrb[0].mxu0 %v1181
        %v1669 = vpop.f32.mrb[0].mxu0
        %v1670 = vadd.f32 %v465, %v1669
        %v1671 = vpop.f32.mrb[0].mxu0
        %v1672 = vpop.f32.mrb[0].mxu0
        %v1673 = vadd.f32 %v465, %v1672
        %v1674 = vpop.f32.mrb[0].mxu0
        %1675 = vmatprep.mubr.bf16.mxu0 0
        %1676 = vmatmul.mubr.bf16.gmra.mrb[0].mxu0 %v1184
        %v1677 = vpop.f32.mrb[0].mxu0
        %v1678 = vadd.f32 %v465, %v1677
        %v1679 = vpop.f32.mrb[0].mxu0
        %v1680 = vpop.f32.mrb[0].mxu0
        %v1681 = vadd.f32 %v465, %v1680
        %v1682 = vpop.f32.mrb[0].mxu0
        %1683 = vmatprep.mubr.bf16.mxu0 0
        %1684 = vmatmul.mubr.bf16.gmra.mrb[0].mxu0 %v1187
        %v1685 = vpop.f32.mrb[0].mxu0
        %v1686 = vadd.f32 %v465, %v1685
        %v1687 = vpop.f32.mrb[0].mxu0
        %v1688 = vpop.f32.mrb[0].mxu0
        %v1689 = vadd.f32 %v465, %v1688
        %v1690 = vpop.f32.mrb[0].mxu0
        %1691 = vmatprep.mubr.bf16.mxu0 0
        %1692 = vmatmul.mubr.bf16.gmra.mrb[0].mxu0 %v1190
        %v1693 = vpop.f32.mrb[0].mxu0
        %v1694 = vadd.f32 %v465, %v1693
        %v1695 = vpop.f32.mrb[0].mxu0
        %v1696 = vpop.f32.mrb[0].mxu0
        %v1697 = vadd.f32 %v465, %v1696
        %v1698 = vpop.f32.mrb[0].mxu0
        %1699 = vmatprep.mubr.bf16.mxu0 0
        %1700 = vmatmul.mubr.bf16.gmra.mrb[0].mxu0 %v1193
        %v1701 = vpop.f32.mrb[0].mxu0
        %v1702 = vadd.f32 %v465, %v1701
        %v1703 = vpop.f32.mrb[0].mxu0
        %v1704 = vpop.f32.mrb[0].mxu0
        %v1705 = vadd.f32 %v465, %v1704
        %v1706 = vpop.f32.mrb[0].mxu0
        %1707 = vmatprep.mubr.bf16.mxu0 0
        %1708 = vmatmul.mubr.bf16.gmra.mrb[0].mxu0 %v1196
        %v1709 = vpop.f32.mrb[0].mxu0
        %v1710 = vadd.f32 %v465, %v1709
        %v1711 = vpop.f32.mrb[0].mxu0
        %v1712 = vpop.f32.mrb[0].mxu0
        %v1713 = vadd.f32 %v465, %v1712
        %v1714 = vpop.f32.mrb[0].mxu0
        %1715 = vmatprep.mubr.bf16.mxu0 0
        %1716 = vmatmul.mubr.bf16.gmra.mrb[0].mxu0 %v1199
        %v1717 = vpop.f32.mrb[0].mxu0
        %v1718 = vadd.f32 %v465, %v1717
        %v1719 = vpop.f32.mrb[0].mxu0
        %v1720 = vpop.f32.mrb[0].mxu0
        %v1721 = vadd.f32 %v465, %v1720
        %v1722 = vpop.f32.mrb[0].mxu0
        %1723 = vmatprep.mubr.bf16.mxu0 0
        %1724 = vmatmul.mubr.bf16.gmra.mrb[0].mxu0 %v1202
        %v1725 = vpop.f32.mrb[0].mxu0
        %v1726 = vadd.f32 %v465, %v1725
        %v1727 = vpop.f32.mrb[0].mxu0
        %v1728 = vpop.f32.mrb[0].mxu0
        %v1729 = vadd.f32 %v465, %v1728
        %v1730 = vpop.f32.mrb[0].mxu0
        %1731 = vmatprep.mubr.bf16.mxu0 0
        %1732 = vmatmul.mubr.bf16.gmra.mrb[0].mxu0 %v1205
        %v1733 = vpop.f32.mrb[0].mxu0
        %v1734 = vadd.f32 %v465, %v1733
        %v1735 = vpop.f32.mrb[0].mxu0
        %v1736 = vpop.f32.mrb[0].mxu0
        %v1737 = vadd.f32 %v465, %v1736
        %v1738 = vpop.f32.mrb[0].mxu0
        %1739 = vmatprep.mubr.bf16.mxu0 0
        %1740 = vmatmul.mubr.bf16.gmra.mrb[0].mxu0 %v1208
        %v1741 = vpop.f32.mrb[0].mxu0
        %v1742 = vadd.f32 %v465, %v1741
        %v1743 = vpop.f32.mrb[0].mxu0
        %v1744 = vpop.f32.mrb[0].mxu0
        %v1745 = vadd.f32 %v465, %v1744
        %v1746 = vpop.f32.mrb[0].mxu0
        %1747 = vmatprep.mubr.bf16.mxu0 0
        %1748 = vmatmul.mubr.bf16.gmra.mrb[0].mxu0 %v1211
        %v1749 = vpop.f32.mrb[0].mxu0
        %v1750 = vadd.f32 %v465, %v1749
        %v1751 = vpop.f32.mrb[0].mxu0
        %v1752 = vpop.f32.mrb[0].mxu0
        %v1753 = vadd.f32 %v465, %v1752
        %v1754 = vpop.f32.mrb[0].mxu0
        %1755 = vmatprep.mubr.bf16.mxu0 0
        %1756 = vmatmul.mubr.bf16.gmra.mrb[0].mxu0 %v1214
        %v1757 = vpop.f32.mrb[0].mxu0
        %v1758 = vadd.f32 %v465, %v1757
        %v1759 = vpop.f32.mrb[0].mxu0
        %v1760 = vpop.f32.mrb[0].mxu0
        %v1761 = vadd.f32 %v465, %v1760
        %v1762 = vpop.f32.mrb[0].mxu0
        %1763 = vmatprep.mubr.bf16.mxu0 0
        %1764 = vmatmul.mubr.bf16.gmra.mrb[0].mxu0 %v1217
        %v1765 = vpop.f32.mrb[0].mxu0
        %v1766 = vadd.f32 %v465, %v1765
        %v1767 = vpop.f32.mrb[0].mxu0
        %v1768 = vpop.f32.mrb[0].mxu0
        %v1769 = vadd.f32 %v465, %v1768
        %v1770 = vpop.f32.mrb[0].mxu0
        %1771 = vmatprep.mubr.bf16.mxu0 0
        %1772 = vmatmul.mubr.bf16.gmra.mrb[0].mxu0 %v1220
        %v1773 = vpop.f32.mrb[0].mxu0
        %v1774 = vadd.f32 %v465, %v1773
        %v1775 = vpop.f32.mrb[0].mxu0
        %v1776 = vpop.f32.mrb[0].mxu0
        %v1777 = vadd.f32 %v465, %v1776
        %v1778 = vpop.f32.mrb[0].mxu0
        %1779 = vmatprep.mubr.bf16.mxu0 0
        %1780 = vmatmul.mubr.bf16.gmra.mrb[0].mxu0 %v1223
        %v1781 = vpop.f32.mrb[0].mxu0
        %v1782 = vadd.f32 %v465, %v1781
        %v1783 = vpop.f32.mrb[0].mxu0
        %v1784 = vpop.f32.mrb[0].mxu0
        %v1785 = vadd.f32 %v465, %v1784
        %v1786 = vpop.f32.mrb[0].mxu0
        %1787 = vmatprep.mubr.bf16.mxu0 0
        %1788 = vmatmul.mubr.bf16.gmra.mrb[0].mxu0 %v1226
        %v1789 = vpop.f32.mrb[0].mxu0
        %v1790 = vadd.f32 %v465, %v1789
        %v1791 = vpop.f32.mrb[0].mxu0
        %v1792 = vpop.f32.mrb[0].mxu0
        %v1793 = vadd.f32 %v465, %v1792
        %v1794 = vpop.f32.mrb[0].mxu0
        %1795 = vmatprep.mubr.bf16.mxu0 0
        %1796 = vmatmul.mubr.bf16.gmra.mrb[0].mxu0 %v1229
        %v1797 = vpop.f32.mrb[0].mxu0
        %v1798 = vadd.f32 %v465, %v1797
        %v1799 = vpop.f32.mrb[0].mxu0
        %v1800 = vpop.f32.mrb[0].mxu0
        %v1801 = vadd.f32 %v465, %v1800
        %v1802 = vpop.f32.mrb[0].mxu0
        %1803 = vmatprep.mubr.bf16.mxu0 0
        %1804 = vmatmul.mubr.bf16.gmra.mrb[0].mxu0 %v1232
        %v1805 = vpop.f32.mrb[0].mxu0
        %v1806 = vadd.f32 %v465, %v1805
        %v1807 = vpop.f32.mrb[0].mxu0
        %v1808 = vpop.f32.mrb[0].mxu0
        %v1809 = vadd.f32 %v465, %v1808
        %v1810 = vpop.f32.mrb[0].mxu0
        %1811 = vmatprep.mubr.bf16.mxu0 0
        %1812 = vmatmul.mubr.bf16.gmra.mrb[0].mxu0 %v1235
        %v1813 = vpop.f32.mrb[0].mxu0
        %v1814 = vadd.f32 %v465, %v1813
        %v1815 = vpop.f32.mrb[0].mxu0
        %v1816 = vpop.f32.mrb[0].mxu0
        %v1817 = vadd.f32 %v465, %v1816
        %v1818 = vpop.f32.mrb[0].mxu0
        %1819 = vmatprep.mubr.bf16.mxu0 0
        %1820 = vmatmul.mubr.bf16.gmra.mrb[0].mxu0 %v1238
        %v1821 = vpop.f32.mrb[0].mxu0
        %v1822 = vadd.f32 %v465, %v1821
        %v1823 = vpop.f32.mrb[0].mxu0
        %v1824 = vpop.f32.mrb[0].mxu0
        %v1825 = vadd.f32 %v465, %v1824
        %v1826 = vpop.f32.mrb[0].mxu0
        %1827 = vmatprep.mubr.bf16.mxu0 0
        %1828 = vmatmul.mubr.bf16.gmra.mrb[0].mxu0 %v1241
        %v1829 = vpop.f32.mrb[0].mxu0
        %v1830 = vadd.f32 %v465, %v1829
        %v1831 = vpop.f32.mrb[0].mxu0
        %v1832 = vpop.f32.mrb[0].mxu0
        %v1833 = vadd.f32 %v465, %v1832
        %v1834 = vpop.f32.mrb[0].mxu0
        %1835 = vmatprep.mubr.bf16.mxu0 0
        %1836 = vmatmul.mubr.bf16.gmra.mrb[0].mxu0 %v1244
        %v1837 = vpop.f32.mrb[0].mxu0
        %v1838 = vadd.f32 %v465, %v1837
        %v1839 = vpop.f32.mrb[0].mxu0
        %v1840 = vpop.f32.mrb[0].mxu0
        %v1841 = vadd.f32 %v465, %v1840
        %v1842 = vpop.f32.mrb[0].mxu0
        %1843 = vmatprep.mubr.bf16.mxu0 0
        %1844 = vmatmul.mubr.bf16.gmra.mrb[0].mxu0 %v1247
        %v1845 = vpop.f32.mrb[0].mxu0
        %v1846 = vadd.f32 %v465, %v1845
        %v1847 = vpop.f32.mrb[0].mxu0
        %v1848 = vpop.f32.mrb[0].mxu0
        %v1849 = vadd.f32 %v465, %v1848
        %v1850 = vpop.f32.mrb[0].mxu0
        %1851 = vmatprep.mubr.bf16.mxu0 0
        %1852 = vmatmul.mubr.bf16.gmra.mrb[0].mxu0 %v1250
        %v1853 = vpop.f32.mrb[0].mxu0
        %v1854 = vadd.f32 %v465, %v1853
        %v1855 = vpop.f32.mrb[0].mxu0
        %v1856 = vpop.f32.mrb[0].mxu0
        %v1857 = vadd.f32 %v465, %v1856
        %v1858 = vpop.f32.mrb[0].mxu0
        %1859 = vmatprep.mubr.bf16.mxu0 0
        %1860 = vmatmul.mubr.bf16.gmra.mrb[0].mxu0 %v1253
        %v1861 = vpop.f32.mrb[0].mxu0
        %v1862 = vadd.f32 %v465, %v1861
        %v1863 = vpop.f32.mrb[0].mxu0
        %v1864 = vpop.f32.mrb[0].mxu0
        %v1865 = vadd.f32 %v465, %v1864
        %v1866 = vpop.f32.mrb[0].mxu0
        %1867 = vmatprep.mubr.bf16.mxu0 0
        %1868 = vmatmul.mubr.bf16.gmra.mrb[0].mxu0 %v1256
        %v1869 = vpop.f32.mrb[0].mxu0
        %v1870 = vadd.f32 %v465, %v1869
        %v1871 = vpop.f32.mrb[0].mxu0
        %v1872 = vpop.f32.mrb[0].mxu0
        %v1873 = vadd.f32 %v465, %v1872
        %v1874 = vpop.f32.mrb[0].mxu0
        %1875 = vmatprep.mubr.bf16.mxu0 0
        %1876 = vmatmul.mubr.bf16.gmra.mrb[0].mxu0 %v1259
        %v1877 = vpop.f32.mrb[0].mxu0
        %v1878 = vadd.f32 %v465, %v1877
        %v1879 = vpop.f32.mrb[0].mxu0
        %v1880 = vpop.f32.mrb[0].mxu0
        %v1881 = vadd.f32 %v465, %v1880
        %v1882 = vpop.f32.mrb[0].mxu0
        %1883 = vmatprep.mubr.bf16.mxu0 0
        %1884 = vmatmul.mubr.bf16.gmra.mrb[0].mxu0 %v1262
        %v1885 = vpop.f32.mrb[0].mxu0
        %v1886 = vadd.f32 %v465, %v1885
        %v1887 = vpop.f32.mrb[0].mxu0
        %v1888 = vpop.f32.mrb[0].mxu0
        %v1889 = vadd.f32 %v465, %v1888
        %v1890 = vpop.f32.mrb[0].mxu0
        %1891 = vmatprep.mubr.bf16.mxu0 0
        %1892 = vmatmul.mubr.bf16.gmra.mrb[0].mxu0 %v1265
        %v1893 = vpop.f32.mrb[0].mxu0
        %v1894 = vadd.f32 %v465, %v1893
        %v1895 = vpop.f32.mrb[0].mxu0
        %v1896 = vpop.f32.mrb[0].mxu0
        %v1897 = vadd.f32 %v465, %v1896
        %v1898 = vpop.f32.mrb[0].mxu0
        %1899 = vmatprep.mubr.bf16.mxu0 0
        %1900 = vmatmul.mubr.bf16.gmra.mrb[0].mxu0 %v1268
        %v1901 = vpop.f32.mrb[0].mxu0
        %v1902 = vadd.f32 %v465, %v1901
        %v1903 = vpop.f32.mrb[0].mxu0
        %v1904 = vpop.f32.mrb[0].mxu0
        %v1905 = vadd.f32 %v465, %v1904
        %v1906 = vpop.f32.mrb[0].mxu0
        %1907 = vmatprep.mubr.bf16.mxu0 0
        %1908 = vmatmul.mubr.bf16.gmra.mrb[0].mxu0 %v1271
        %v1909 = vpop.f32.mrb[0].mxu0
        %v1910 = vadd.f32 %v465, %v1909
        %v1911 = vpop.f32.mrb[0].mxu0
        %v1912 = vpop.f32.mrb[0].mxu0
        %v1913 = vadd.f32 %v465, %v1912
        %v1914 = vpop.f32.mrb[0].mxu0
        %1915 = vmatprep.mubr.bf16.mxu0 0
        %1916 = vmatmul.mubr.bf16.gmra.mrb[0].mxu0 %v1274
        %v1917 = vpop.f32.mrb[0].mxu0
        %v1918 = vadd.f32 %v465, %v1917
        %v1919 = vpop.f32.mrb[0].mxu0
        %v1920 = vpop.f32.mrb[0].mxu0
        %v1921 = vadd.f32 %v465, %v1920
        %v1922 = vpop.f32.mrb[0].mxu0
        %1923 = vmatprep.mubr.bf16.mxu0 0
        %1924 = vmatmul.mubr.bf16.gmra.mrb[0].mxu0 %v1277
        %v1925 = vpop.f32.mrb[0].mxu0
        %v1926 = vadd.f32 %v465, %v1925
        %v1927 = vpop.f32.mrb[0].mxu0
        %v1928 = vpop.f32.mrb[0].mxu0
        %v1929 = vadd.f32 %v465, %v1928
        %v1930 = vpop.f32.mrb[0].mxu0
        %1931 = vmatprep.mubr.bf16.mxu0 0
        %1932 = vmatmul.mubr.bf16.gmra.mrb[0].mxu0 %v1280
        %v1933 = vpop.f32.mrb[0].mxu0
        %v1934 = vadd.f32 %v465, %v1933
        %v1935 = vpop.f32.mrb[0].mxu0
        %v1936 = vpop.f32.mrb[0].mxu0
        %v1937 = vadd.f32 %v465, %v1936
        %v1938 = vpop.f32.mrb[0].mxu0
        %1939 = vmatprep.mubr.bf16.mxu0 0
        %1940 = vmatmul.mubr.bf16.gmra.mrb[0].mxu0 %v1283
        %v1941 = vpop.f32.mrb[0].mxu0
        %v1942 = vadd.f32 %v465, %v1941
        %v1943 = vpop.f32.mrb[0].mxu0
        %v1944 = vpop.f32.mrb[0].mxu0
        %v1945 = vadd.f32 %v465, %v1944
        %v1946 = vpop.f32.mrb[0].mxu0
        %1947 = vmatprep.mubr.bf16.mxu0 0
        %1948 = vmatmul.mubr.bf16.gmra.mrb[0].mxu0 %v1286
        %v1949 = vpop.f32.mrb[0].mxu0
        %v1950 = vadd.f32 %v465, %v1949
        %v1951 = vpop.f32.mrb[0].mxu0
        %v1952 = vpop.f32.mrb[0].mxu0
        %v1953 = vadd.f32 %v465, %v1952
        %v1954 = vpop.f32.mrb[0].mxu0
        %1955 = vmatprep.mubr.bf16.mxu0 0
        %1956 = vmatmul.mubr.bf16.gmra.mrb[0].mxu0 %v1289
        %v1957 = vpop.f32.mrb[0].mxu0
        %v1958 = vadd.f32 %v465, %v1957
        %v1959 = vpop.f32.mrb[0].mxu0
        %v1960 = vpop.f32.mrb[0].mxu0
        %v1961 = vadd.f32 %v465, %v1960
        %v1962 = vpop.f32.mrb[0].mxu0
        %1963 = vmatprep.mubr.bf16.mxu0 0
        %1964 = vmatmul.mubr.bf16.gmra.mrb[0].mxu0 %v1292
        %v1965 = vpop.f32.mrb[0].mxu0
        %v1966 = vadd.f32 %v465, %v1965
        %v1967 = vpop.f32.mrb[0].mxu0
        %v1968 = vpop.f32.mrb[0].mxu0
        %v1969 = vadd.f32 %v465, %v1968
        %v1970 = vpop.f32.mrb[0].mxu0
        %1971 = vmatprep.mubr.bf16.mxu0 0
        %1972 = vmatmul.mubr.bf16.gmra.mrb[0].mxu0 %v1295
        %v1973 = vpop.f32.mrb[0].mxu0
        %v1974 = vadd.f32 %v465, %v1973
        %v1975 = vpop.f32.mrb[0].mxu0
        %v1976 = vpop.f32.mrb[0].mxu0
        %v1977 = vadd.f32 %v465, %v1976
        %v1978 = vpop.f32.mrb[0].mxu0
        %1979 = vmatprep.mubr.bf16.mxu0 0
        %1980 = vmatmul.mubr.bf16.gmra.mrb[0].mxu0 %v1298
        %v1981 = vpop.f32.mrb[0].mxu0
        %v1982 = vadd.f32 %v465, %v1981
        %v1983 = vpop.f32.mrb[0].mxu0
        %v1984 = vpop.f32.mrb[0].mxu0
        %v1985 = vadd.f32 %v465, %v1984
        %v1986 = vpop.f32.mrb[0].mxu0
        %1987 = vmatprep.mubr.bf16.mxu0 0
        %1988 = vmatmul.mubr.bf16.gmra.mrb[0].mxu0 %v1301
        %v1989 = vpop.f32.mrb[0].mxu0
        %v1990 = vadd.f32 %v465, %v1989
        %v1991 = vpop.f32.mrb[0].mxu0
        %v1992 = vpop.f32.mrb[0].mxu0
        %v1993 = vadd.f32 %v465, %v1992
        %v1994 = vpop.f32.mrb[0].mxu0
        %1995 = vmatprep.mubr.bf16.mxu0 0
        %1996 = vmatmul.mubr.bf16.gmra.mrb[0].mxu0 %v1304
        %v1997 = vpop.f32.mrb[0].mxu0
        %v1998 = vadd.f32 %v465, %v1997
        %v1999 = vpop.f32.mrb[0].mxu0
        %v2000 = vpop.f32.mrb[0].mxu0
        %v2001 = vadd.f32 %v465, %v2000
        %v2002 = vpop.f32.mrb[0].mxu0
        %2003 = vmatprep.mubr.bf16.mxu0 0
        %2004 = vmatmul.mubr.bf16.gmra.mrb[0].mxu0 %v1307
        %v2005 = vpop.f32.mrb[0].mxu0
        %v2006 = vadd.f32 %v465, %v2005
        %v2007 = vpop.f32.mrb[0].mxu0
        %v2008 = vpop.f32.mrb[0].mxu0
        %v2009 = vadd.f32 %v465, %v2008
        %v2010 = vpop.f32.mrb[0].mxu0
        %2011 = vmatprep.mubr.bf16.mxu0 0
        %2012 = vmatmul.mubr.bf16.gmra.mrb[0].mxu0 %v1310
        %v2013 = vpop.f32.mrb[0].mxu0
        %v2014 = vadd.f32 %v465, %v2013
        %v2015 = vpop.f32.mrb[0].mxu0
        %v2016 = vpop.f32.mrb[0].mxu0
        %v2017 = vadd.f32 %v465, %v2016
        %v2018 = vpop.f32.mrb[0].mxu0
        %2019 = vmatprep.mubr.bf16.mxu0 0
        %2020 = vmatmul.mubr.bf16.gmra.mrb[0].mxu0 %v1313
        %v2021 = vpop.f32.mrb[0].mxu0
        %v2022 = vadd.f32 %v465, %v2021
        %v2023 = vpop.f32.mrb[0].mxu0
        %v2024 = vpop.f32.mrb[0].mxu0
        %v2025 = vadd.f32 %v465, %v2024
        %v2026 = vpop.f32.mrb[0].mxu0
        %2027 = vmatprep.mubr.bf16.mxu0 0
        %2028 = vmatmul.mubr.bf16.gmra.mrb[0].mxu0 %v1316
        %v2029 = vpop.f32.mrb[0].mxu0
        %v2030 = vadd.f32 %v465, %v2029
        %v2031 = vpop.f32.mrb[0].mxu0
        %v2032 = vpop.f32.mrb[0].mxu0
        %v2033 = vadd.f32 %v465, %v2032
        %v2034 = vpop.f32.mrb[0].mxu0
        %2035 = vmatprep.mubr.bf16.mxu0 0
        %2036 = vmatmul.mubr.bf16.gmra.mrb[0].mxu0 %v1319
        %v2037 = vpop.f32.mrb[0].mxu0
        %v2038 = vadd.f32 %v465, %v2037
        %v2039 = vpop.f32.mrb[0].mxu0
        %v2040 = vpop.f32.mrb[0].mxu0
        %v2041 = vadd.f32 %v465, %v2040
        %v2042 = vpop.f32.mrb[0].mxu0
        %2043 = vmatprep.mubr.bf16.mxu0 0
        %2044 = vmatmul.mubr.bf16.gmra.mrb[0].mxu0 %v1322
        %v2045 = vpop.f32.mrb[0].mxu0
        %v2046 = vadd.f32 %v465, %v2045
        %v2047 = vpop.f32.mrb[0].mxu0
        %v2048 = vpop.f32.mrb[0].mxu0
        %v2049 = vadd.f32 %v465, %v2048
        %v2050 = vpop.f32.mrb[0].mxu0
        %2051 = vmatprep.mubr.bf16.mxu0 0
        %2052 = vmatmul.mubr.bf16.gmra.mrb[0].mxu0 %v1325
        %v2053 = vpop.f32.mrb[0].mxu0
        %v2054 = vadd.f32 %v465, %v2053
        %v2055 = vpop.f32.mrb[0].mxu0
        %v2056 = vpop.f32.mrb[0].mxu0
        %v2057 = vadd.f32 %v465, %v2056
        %v2058 = vpop.f32.mrb[0].mxu0
        %2059 = vmatprep.mubr.bf16.mxu0 0
        %2060 = vmatmul.mubr.bf16.gmra.mrb[0].mxu0 %v1328
        %v2061 = vpop.f32.mrb[0].mxu0
        %v2062 = vadd.f32 %v465, %v2061
        %v2063 = vpop.f32.mrb[0].mxu0
        %v2064 = vpop.f32.mrb[0].mxu0
        %v2065 = vadd.f32 %v465, %v2064
        %v2066 = vpop.f32.mrb[0].mxu0
        %2067 = vmatprep.mubr.bf16.mxu0 0
        %2068 = vmatmul.mubr.bf16.gmra.mrb[0].mxu0 %v1331
        %v2069 = vpop.f32.mrb[0].mxu0
        %v2070 = vadd.f32 %v465, %v2069
        %v2071 = vpop.f32.mrb[0].mxu0
        %v2072 = vpop.f32.mrb[0].mxu0
        %v2073 = vadd.f32 %v465, %v2072
        %v2074 = vpop.f32.mrb[0].mxu0
        %2075 = vmatprep.mubr.bf16.mxu0 0
        %2076 = vmatmul.mubr.bf16.gmra.mrb[0].mxu0 %v1334
        %v2077 = vpop.f32.mrb[0].mxu0
        %v2078 = vadd.f32 %v465, %v2077
        %v2079 = vpop.f32.mrb[0].mxu0
        %v2080 = vpop.f32.mrb[0].mxu0
        %v2081 = vadd.f32 %v465, %v2080
        %v2082 = vpop.f32.mrb[0].mxu0
        %2083 = vmatprep.mubr.bf16.mxu0 0
        %2084 = vmatmul.mubr.bf16.gmra.mrb[0].mxu0 %v1337
        %v2085 = vpop.f32.mrb[0].mxu0
        %v2086 = vadd.f32 %v465, %v2085
        %v2087 = vpop.f32.mrb[0].mxu0
        %v2088 = vpop.f32.mrb[0].mxu0
        %v2089 = vadd.f32 %v465, %v2088
        %v2090 = vpop.f32.mrb[0].mxu0
        %2091 = vmatprep.mubr.bf16.mxu0 0
        %2092 = vmatmul.mubr.bf16.gmra.mrb[0].mxu0 %v1340
        %v2093 = vpop.f32.mrb[0].mxu0
        %v2094 = vadd.f32 %v465, %v2093
        %v2095 = vpop.f32.mrb[0].mxu0
        %v2096 = vpop.f32.mrb[0].mxu0
        %v2097 = vadd.f32 %v465, %v2096
        %v2098 = vpop.f32.mrb[0].mxu0
        %2099 = vmatprep.mubr.bf16.mxu0 0
        %2100 = vmatmul.mubr.bf16.gmra.mrb[0].mxu0 %v1343
        %v2101 = vpop.f32.mrb[0].mxu0
        %v2102 = vadd.f32 %v465, %v2101
        %v2103 = vpop.f32.mrb[0].mxu0
        %v2104 = vpop.f32.mrb[0].mxu0
        %v2105 = vadd.f32 %v465, %v2104
        %v2106 = vpop.f32.mrb[0].mxu0
        %2107 = vmatprep.mubr.bf16.mxu0 0
        %2108 = vmatmul.mubr.bf16.gmra.mrb[0].mxu0 %v1346
        %v2109 = vpop.f32.mrb[0].mxu0
        %v2110 = vadd.f32 %v465, %v2109
        %v2111 = vpop.f32.mrb[0].mxu0
        %v2112 = vpop.f32.mrb[0].mxu0
        %v2113 = vadd.f32 %v465, %v2112
        %v2114 = vpop.f32.mrb[0].mxu0
        %2115 = vmatprep.mubr.bf16.mxu0 0
        %2116 = vmatmul.mubr.bf16.gmra.mrb[0].mxu0 %v1349
        %v2117 = vpop.f32.mrb[0].mxu0
        %v2118 = vadd.f32 %v465, %v2117
        %v2119 = vpop.f32.mrb[0].mxu0
        %v2120 = vpop.f32.mrb[0].mxu0
        %v2121 = vadd.f32 %v465, %v2120
        %v2122 = vpop.f32.mrb[0].mxu0
        %2123 = vmatprep.mubr.bf16.mxu0 0
        %2124 = vmatmul.mubr.bf16.gmra.mrb[0].mxu0 %v1352
        %v2125 = vpop.f32.mrb[0].mxu0
        %v2126 = vadd.f32 %v465, %v2125
        %v2127 = vpop.f32.mrb[0].mxu0
        %v2128 = vpop.f32.mrb[0].mxu0
        %v2129 = vadd.f32 %v465, %v2128
        %v2130 = vpop.f32.mrb[0].mxu0
        %2131 = vmatprep.mubr.bf16.mxu0 0
        %2132 = vmatmul.mubr.bf16.gmra.mrb[0].mxu0 %v1355
        %v2133 = vpop.f32.mrb[0].mxu0
        %v2134 = vadd.f32 %v465, %v2133
        %v2135 = vpop.f32.mrb[0].mxu0
        %v2136 = vpop.f32.mrb[0].mxu0
        %v2137 = vadd.f32 %v465, %v2136
        %v2138 = vpop.f32.mrb[0].mxu0
        %2139 = vmatprep.mubr.bf16.mxu0 0
        %2140 = vmatmul.mubr.bf16.gmra.mrb[0].mxu0 %v1358
        %v2141 = vpop.f32.mrb[0].mxu0
        %v2142 = vadd.f32 %v465, %v2141
        %v2143 = vpop.f32.mrb[0].mxu0
        %v2144 = vpop.f32.mrb[0].mxu0
        %v2145 = vadd.f32 %v465, %v2144
        %v2146 = vpop.f32.mrb[0].mxu0
        %2147 = vmatprep.mubr.bf16.mxu0 0
        %2148 = vmatmul.mubr.bf16.gmra.mrb[0].mxu0 %v1361
        %v2149 = vpop.f32.mrb[0].mxu0
        %v2150 = vadd.f32 %v465, %v2149
        %v2151 = vpop.f32.mrb[0].mxu0
        %v2152 = vpop.f32.mrb[0].mxu0
        %v2153 = vadd.f32 %v465, %v2152
        %v2154 = vpop.f32.mrb[0].mxu0
        %2155 = vmatprep.mubr.bf16.mxu0 0
        %2156 = vmatmul.mubr.bf16.gmra.mrb[0].mxu0 %v1364
        %v2157 = vpop.f32.mrb[0].mxu0
        %v2158 = vadd.f32 %v465, %v2157
        %v2159 = vpop.f32.mrb[0].mxu0
        %v2160 = vpop.f32.mrb[0].mxu0
        %v2161 = vadd.f32 %v465, %v2160
        %v2162 = vpop.f32.mrb[0].mxu0
        %2163 = vmatprep.mubr.bf16.mxu0 0
        %2164 = vmatmul.mubr.bf16.gmra.mrb[0].mxu0 %v1367
        %v2165 = vpop.f32.mrb[0].mxu0
        %v2166 = vadd.f32 %v465, %v2165
        %v2167 = vpop.f32.mrb[0].mxu0
        %v2168 = vpop.f32.mrb[0].mxu0
        %v2169 = vadd.f32 %v465, %v2168
        %v2170 = vpop.f32.mrb[0].mxu0
        %2171 = vmatprep.mubr.bf16.mxu0 0
        %2172 = vmatmul.mubr.bf16.gmra.mrb[0].mxu0 %v1370
        %v2173 = vpop.f32.mrb[0].mxu0
        %v2174 = vadd.f32 %v465, %v2173
        %v2175 = vpop.f32.mrb[0].mxu0
        %v2176 = vpop.f32.mrb[0].mxu0
        %v2177 = vadd.f32 %v465, %v2176
        %v2178 = vpop.f32.mrb[0].mxu0
        %2179 = vmatprep.mubr.bf16.mxu0 0
        %2180 = vmatmul.mubr.bf16.gmra.mrb[0].mxu0 %v1373
        %v2181 = vpop.f32.mrb[0].mxu0
        %v2182 = vadd.f32 %v465, %v2181
        %v2183 = vpop.f32.mrb[0].mxu0
        %v2184 = vpop.f32.mrb[0].mxu0
        %v2185 = vadd.f32 %v465, %v2184
        %v2186 = vpop.f32.mrb[0].mxu0
        %2187 = vmatprep.mubr.bf16.mxu0 0
        %2188 = vmatmul.mubr.bf16.gmra.mrb[0].mxu0 %v1376
        %v2189 = vpop.f32.mrb[0].mxu0
        %v2190 = vadd.f32 %v465, %v2189
        %v2191 = vpop.f32.mrb[0].mxu0
        %v2192 = vpop.f32.mrb[0].mxu0
        %v2193 = vadd.f32 %v465, %v2192
        %v2194 = vpop.f32.mrb[0].mxu0
        %2195 = vmatprep.mubr.bf16.mxu0 0
        %2196 = vmatmul.mubr.bf16.gmra.mrb[0].mxu0 %v1379
        %v2197 = vpop.f32.mrb[0].mxu0
        %v2198 = vadd.f32 %v465, %v2197
        %v2199 = vpop.f32.mrb[0].mxu0
        %v2200 = vpop.f32.mrb[0].mxu0
        %v2201 = vadd.f32 %v465, %v2200
        %v2202 = vpop.f32.mrb[0].mxu0
        %2203 = vmatprep.mubr.bf16.mxu0 0
        %2204 = vmatmul.mubr.bf16.gmra.mrb[0].mxu0 %v1382
        %v2205 = vpop.f32.mrb[0].mxu0
        %v2206 = vadd.f32 %v465, %v2205
        %v2207 = vpop.f32.mrb[0].mxu0
        %v2208 = vpop.f32.mrb[0].mxu0
        %v2209 = vadd.f32 %v465, %v2208
        %v2210 = vpop.f32.mrb[0].mxu0
        %2211 = vmatprep.mubr.bf16.mxu0 0
        %2212 = vmatmul.mubr.bf16.gmra.mrb[0].mxu0 %v1385
        %v2213 = vpop.f32.mrb[0].mxu0
        %v2214 = vadd.f32 %v465, %v2213
        %v2215 = vpop.f32.mrb[0].mxu0
        %v2216 = vpop.f32.mrb[0].mxu0
        %v2217 = vadd.f32 %v465, %v2216
        %v2218 = vpop.f32.mrb[0].mxu0
        %2219 = vmatprep.mubr.bf16.mxu0 0
        %2220 = vmatmul.mubr.bf16.gmra.mrb[0].mxu0 %v1388
        %v2221 = vpop.f32.mrb[0].mxu0
        %v2222 = vadd.f32 %v465, %v2221
        %v2223 = vpop.f32.mrb[0].mxu0
        %v2224 = vpop.f32.mrb[0].mxu0
        %v2225 = vadd.f32 %v465, %v2224
        %v2226 = vpop.f32.mrb[0].mxu0
        %2227 = vmatprep.mubr.bf16.mxu0 0
        %2228 = vmatmul.mubr.bf16.gmra.mrb[0].mxu0 %v1391
        %v2229 = vpop.f32.mrb[0].mxu0
        %v2230 = vadd.f32 %v465, %v2229
        %v2231 = vpop.f32.mrb[0].mxu0
        %v2232 = vpop.f32.mrb[0].mxu0
        %v2233 = vadd.f32 %v465, %v2232
        %v2234 = vpop.f32.mrb[0].mxu0
        %2235 = vmatprep.mubr.bf16.mxu0 0
        %2236 = vmatmul.mubr.bf16.gmra.mrb[0].mxu0 %v1394
        %v2237 = vpop.f32.mrb[0].mxu0
        %v2238 = vadd.f32 %v465, %v2237
        %v2239 = vpop.f32.mrb[0].mxu0
        %v2240 = vpop.f32.mrb[0].mxu0
        %v2241 = vadd.f32 %v465, %v2240
        %v2242 = vpop.f32.mrb[0].mxu0
        %2243 = vmatprep.mubr.bf16.mxu0 0
        %2244 = vmatmul.mubr.bf16.gmra.mrb[0].mxu0 %v1397
        %v2245 = vpop.f32.mrb[0].mxu0
        %v2246 = vadd.f32 %v465, %v2245
        %v2247 = vpop.f32.mrb[0].mxu0
        %v2248 = vpop.f32.mrb[0].mxu0
        %v2249 = vadd.f32 %v465, %v2248
        %v2250 = vpop.f32.mrb[0].mxu0
        %2251 = vmatprep.mubr.bf16.mxu0 0
        %2252 = vmatmul.mubr.bf16.gmra.mrb[0].mxu0 %v1400
        %v2253 = vpop.f32.mrb[0].mxu0
        %v2254 = vadd.f32 %v465, %v2253
        %v2255 = vpop.f32.mrb[0].mxu0
        %v2256 = vpop.f32.mrb[0].mxu0
        %v2257 = vadd.f32 %v465, %v2256
        %v2258 = vpop.f32.mrb[0].mxu0
        %2259 = vmatprep.mubr.bf16.mxu0 0
        %2260 = vmatmul.mubr.bf16.gmra.mrb[0].mxu0 %v1403
        %v2261 = vpop.f32.mrb[0].mxu0
        %v2262 = vadd.f32 %v465, %v2261
        %v2263 = vpop.f32.mrb[0].mxu0
        %v2264 = vpop.f32.mrb[0].mxu0
        %v2265 = vadd.f32 %v465, %v2264
        %v2266 = vpop.f32.mrb[0].mxu0
        %2267 = vmatprep.mubr.bf16.mxu0 0
        %2268 = vmatmul.mubr.bf16.gmra.mrb[0].mxu0 %v1406
        %v2269 = vpop.f32.mrb[0].mxu0
        %v2270 = vadd.f32 %v465, %v2269
        %v2271 = vpop.f32.mrb[0].mxu0
        %v2272 = vpop.f32.mrb[0].mxu0
        %v2273 = vadd.f32 %v465, %v2272
        %v2274 = vpop.f32.mrb[0].mxu0
        %2275 = vmatprep.mubr.bf16.mxu0 0
        %2276 = vmatmul.mubr.bf16.gmra.mrb[0].mxu0 %v1409
        %v2277 = vpop.f32.mrb[0].mxu0
        %v2278 = vadd.f32 %v465, %v2277
        %v2279 = vpop.f32.mrb[0].mxu0
        %v2280 = vpop.f32.mrb[0].mxu0
        %v2281 = vadd.f32 %v465, %v2280
        %v2282 = vpop.f32.mrb[0].mxu0
        %2283 = vmatprep.mubr.bf16.mxu0 0
        %2284 = vmatmul.mubr.bf16.gmra.mrb[0].mxu0 %v1412
        %v2285 = vpop.f32.mrb[0].mxu0
        %v2286 = vadd.f32 %v465, %v2285
        %v2287 = vpop.f32.mrb[0].mxu0
        %v2288 = vpop.f32.mrb[0].mxu0
        %v2289 = vadd.f32 %v465, %v2288
        %v2290 = vpop.f32.mrb[0].mxu0
        %2291 = vmatprep.mubr.bf16.mxu0 0
        %2292 = vmatmul.mubr.bf16.gmra.mrb[0].mxu0 %v1415
        %v2293 = vpop.f32.mrb[0].mxu0
        %v2294 = vadd.f32 %v465, %v2293
        %v2295 = vpop.f32.mrb[0].mxu0
        %v2296 = vpop.f32.mrb[0].mxu0
        %v2297 = vadd.f32 %v465, %v2296
        %v2298 = vpop.f32.mrb[0].mxu0
        %2299 = vmatprep.mubr.bf16.mxu0 0
        %2300 = vmatmul.mubr.bf16.gmra.mrb[0].mxu0 %v1418
        %v2301 = vpop.f32.mrb[0].mxu0
        %v2302 = vadd.f32 %v465, %v2301
        %v2303 = vpop.f32.mrb[0].mxu0
        %v2304 = vpop.f32.mrb[0].mxu0
        %v2305 = vadd.f32 %v465, %v2304
        %v2306 = vpop.f32.mrb[0].mxu0
        %2307 = vmatprep.mubr.bf16.mxu0 0
        %2308 = vmatmul.mubr.bf16.gmra.mrb[0].mxu0 %v1421
        %v2309 = vpop.f32.mrb[0].mxu0
        %v2310 = vadd.f32 %v465, %v2309
        %v2311 = vpop.f32.mrb[0].mxu0
        %v2312 = vpop.f32.mrb[0].mxu0
        %v2313 = vadd.f32 %v465, %v2312
        %v2314 = vpop.f32.mrb[0].mxu0
        %2315 = vmatprep.mubr.bf16.mxu0 0
        %2316 = vmatmul.mubr.bf16.gmra.mrb[0].mxu0 %v1424
        %v2317 = vpop.f32.mrb[0].mxu0
        %v2318 = vadd.f32 %v465, %v2317
        %v2319 = vpop.f32.mrb[0].mxu0
        %v2320 = vpop.f32.mrb[0].mxu0
        %v2321 = vadd.f32 %v465, %v2320
        %v2322 = vpop.f32.mrb[0].mxu0
        %2323 = vmatprep.mubr.bf16.mxu0 0
        %2324 = vmatmul.mubr.bf16.gmra.mrb[0].mxu0 %v1427
        %v2325 = vpop.f32.mrb[0].mxu0
        %v2326 = vadd.f32 %v465, %v2325
        %v2327 = vpop.f32.mrb[0].mxu0
        %v2328 = vpop.f32.mrb[0].mxu0
        %v2329 = vadd.f32 %v465, %v2328
        %v2330 = vpop.f32.mrb[0].mxu0
        %2331 = vmatprep.mubr.bf16.mxu0 0
        %2332 = vmatmul.mubr.bf16.gmra.mrb[0].mxu0 %v1430
        %v2333 = vpop.f32.mrb[0].mxu0
        %v2334 = vadd.f32 %v465, %v2333
        %v2335 = vpop.f32.mrb[0].mxu0
        %v2336 = vpop.f32.mrb[0].mxu0
        %v2337 = vadd.f32 %v465, %v2336
        %v2338 = vpop.f32.mrb[0].mxu0
        %2339 = vmatprep.mubr.bf16.mxu0 0
        %2340 = vmatmul.mubr.bf16.gmra.mrb[0].mxu0 %v1433
        %v2341 = vpop.f32.mrb[0].mxu0
        %v2342 = vadd.f32 %v465, %v2341
        %v2343 = vpop.f32.mrb[0].mxu0
        %v2344 = vpop.f32.mrb[0].mxu0
        %v2345 = vadd.f32 %v465, %v2344
        %v2346 = vpop.f32.mrb[0].mxu0
        %2347 = vmatprep.mubr.bf16.mxu0 0
        %2348 = vmatmul.mubr.bf16.gmra.mrb[0].mxu0 %v1436
        %v2349 = vpop.f32.mrb[0].mxu0
        %v2350 = vadd.f32 %v465, %v2349
        %v2351 = vpop.f32.mrb[0].mxu0
        %v2352 = vpop.f32.mrb[0].mxu0
        %v2353 = vadd.f32 %v465, %v2352
        %v2354 = vpop.f32.mrb[0].mxu0
        %2355 = vmatprep.mubr.bf16.mxu0 0
        %2356 = vmatmul.mubr.bf16.gmra.mrb[0].mxu0 %v1439
        %v2357 = vpop.f32.mrb[0].mxu0
        %v2358 = vadd.f32 %v465, %v2357
        %v2359 = vpop.f32.mrb[0].mxu0
        %v2360 = vpop.f32.mrb[0].mxu0
        %v2361 = vadd.f32 %v465, %v2360
        %v2362 = vpop.f32.mrb[0].mxu0
        %2363 = vmatprep.mubr.bf16.mxu0 0
        %2364 = vmatmul.mubr.bf16.gmra.mrb[0].mxu0 %v1442
        %v2365 = vpop.f32.mrb[0].mxu0
        %v2366 = vadd.f32 %v465, %v2365
        %v2367 = vpop.f32.mrb[0].mxu0
        %v2368 = vpop.f32.mrb[0].mxu0
        %v2369 = vadd.f32 %v465, %v2368
        %v2370 = vpop.f32.mrb[0].mxu0
        %2371 = vmatprep.mubr.bf16.mxu0 0
        %2372 = vmatmul.mubr.bf16.gmra.mrb[0].mxu0 %v1445
        %v2373 = vpop.f32.mrb[0].mxu0
        %v2374 = vadd.f32 %v465, %v2373
        %v2375 = vpop.f32.mrb[0].mxu0
        %v2376 = vpop.f32.mrb[0].mxu0
        %v2377 = vadd.f32 %v465, %v2376
        %v2378 = vpop.f32.mrb[0].mxu0
        %2379 = vmatprep.mubr.bf16.mxu0 0
        %2380 = vmatmul.mubr.bf16.gmra.mrb[0].mxu0 %v1448
        %v2381 = vpop.f32.mrb[0].mxu0
        %v2382 = vadd.f32 %v465, %v2381
        %v2383 = vpop.f32.mrb[0].mxu0
        %v2384 = vpop.f32.mrb[0].mxu0
        %v2385 = vadd.f32 %v465, %v2384
        %v2386 = vpop.f32.mrb[0].mxu0
        %2387 = vmatprep.mubr.bf16.mxu0 0
        %2388 = vmatmul.mubr.bf16.gmra.mrb[0].mxu0 %v1451
        %v2389 = vpop.f32.mrb[0].mxu0
        %v2390 = vadd.f32 %v465, %v2389
        %v2391 = vpop.f32.mrb[0].mxu0
        %v2392 = vpop.f32.mrb[0].mxu0
        %v2393 = vadd.f32 %v465, %v2392
        %v2394 = vpop.f32.mrb[0].mxu0
        %2395 = vmatprep.mubr.bf16.mxu0 0
        %2396 = vmatmul.mubr.bf16.gmra.mrb[0].mxu0 %v1454
        %v2397 = vpop.f32.mrb[0].mxu0
        %v2398 = vadd.f32 %v465, %v2397
        %v2399 = vpop.f32.mrb[0].mxu0
        %v2400 = vpop.f32.mrb[0].mxu0
        %v2401 = vadd.f32 %v465, %v2400
        %v2402 = vpop.f32.mrb[0].mxu0
        %2403 = vmatprep.mubr.bf16.mxu0 0
        %2404 = vmatmul.mubr.bf16.gmra.mrb[0].mxu0 %v1457
        %v2405 = vpop.f32.mrb[0].mxu0
        %v2406 = vadd.f32 %v465, %v2405
        %v2407 = vpop.f32.mrb[0].mxu0
        %v2408 = vpop.f32.mrb[0].mxu0
        %v2409 = vadd.f32 %v465, %v2408
        %v2410 = vpop.f32.mrb[0].mxu0
        %2411 = vmatprep.mubr.bf16.mxu0 0
        %2412 = vmatmul.mubr.bf16.gmra.mrb[0].mxu0 %v1460
        %v2413 = vpop.f32.mrb[0].mxu0
        %v2414 = vadd.f32 %v465, %v2413
        %v2415 = vpop.f32.mrb[0].mxu0
        %v2416 = vpop.f32.mrb[0].mxu0
        %v2417 = vadd.f32 %v465, %v2416
        %v2418 = vpop.f32.mrb[0].mxu0
        %2419 = vmatprep.mubr.bf16.mxu0 0
        %2420 = vmatmul.mubr.bf16.gmra.mrb[0].mxu0 %v1463
        %v2421 = vpop.f32.mrb[0].mxu0
        %v2422 = vadd.f32 %v465, %v2421
        %v2423 = vpop.f32.mrb[0].mxu0
        %v2424 = vpop.f32.mrb[0].mxu0
        %v2425 = vadd.f32 %v465, %v2424
        %v2426 = vpop.f32.mrb[0].mxu0
        %2427 = vmatprep.mubr.bf16.mxu0 0
        %2428 = vmatmul.mubr.bf16.gmra.mrb[0].mxu0 %v1466
        %v2429 = vpop.f32.mrb[0].mxu0
        %v2430 = vadd.f32 %v465, %v2429
        %v2431 = vpop.f32.mrb[0].mxu0
        %v2432 = vpop.f32.mrb[0].mxu0
        %v2433 = vadd.f32 %v465, %v2432
        %v2434 = vpop.f32.mrb[0].mxu0
        %2435 = vmatprep.mubr.bf16.mxu0 0
        %2436 = vmatmul.mubr.bf16.gmra.mrb[0].mxu0 %v1469
        %v2437 = vpop.f32.mrb[0].mxu0
        %v2438 = vadd.f32 %v465, %v2437
        %v2439 = vpop.f32.mrb[0].mxu0
        %v2440 = vpop.f32.mrb[0].mxu0
        %v2441 = vadd.f32 %v465, %v2440
        %v2442 = vpop.f32.mrb[0].mxu0
        %2443 = vmatprep.mubr.bf16.mxu0 0
        %2444 = vmatmul.mubr.bf16.gmra.mrb[0].mxu0 %v1472
        %v2445 = vpop.f32.mrb[0].mxu0
        %v2446 = vadd.f32 %v465, %v2445
        %v2447 = vpop.f32.mrb[0].mxu0
        %v2448 = vpop.f32.mrb[0].mxu0
        %v2449 = vadd.f32 %v465, %v2448
        %v2450 = vpop.f32.mrb[0].mxu0
        %2451 = vmatprep.mubr.bf16.mxu0 0
        %2452 = vmatmul.mubr.bf16.gmra.mrb[0].mxu0 %v1475
        %v2453 = vpop.f32.mrb[0].mxu0
        %v2454 = vadd.f32 %v465, %v2453
        %v2455 = vpop.f32.mrb[0].mxu0
        %v2456 = vpop.f32.mrb[0].mxu0
        %v2457 = vadd.f32 %v465, %v2456
        %v2458 = vpop.f32.mrb[0].mxu0
        %2459 = vmatprep.mubr.bf16.mxu0 0
        %2460 = vmatmul.mubr.bf16.gmra.mrb[0].mxu0 %v1478
        %v2461 = vpop.f32.mrb[0].mxu0
        %v2462 = vadd.f32 %v465, %v2461
        %v2463 = vpop.f32.mrb[0].mxu0
        %v2464 = vpop.f32.mrb[0].mxu0
        %v2465 = vadd.f32 %v465, %v2464
        %v2466 = vpop.f32.mrb[0].mxu0
        %2467 = vmatprep.mubr.bf16.mxu0 0
        %2468 = vmatmul.mubr.bf16.gmra.mrb[0].mxu0 %v1481
        %v2469 = vpop.f32.mrb[0].mxu0
        %v2470 = vadd.f32 %v465, %v2469
        %v2471 = vpop.f32.mrb[0].mxu0
        %v2472 = vpop.f32.mrb[0].mxu0
        %v2473 = vadd.f32 %v465, %v2472
        %v2474 = vpop.f32.mrb[0].mxu0
        %2475 = vmatprep.mubr.bf16.mxu0 0
        %2476 = vmatmul.mubr.bf16.gmra.mrb[0].mxu0 %v1484
        %v2477 = vpop.f32.mrb[0].mxu0
        %v2478 = vadd.f32 %v465, %v2477
        %v2479 = vpop.f32.mrb[0].mxu0
        %v2480 = vpop.f32.mrb[0].mxu0
        %v2481 = vadd.f32 %v465, %v2480
        %v2482 = vpop.f32.mrb[0].mxu0
        %2483 = vmatprep.mubr.bf16.mxu0 0
        %2484 = vmatmul.mubr.bf16.gmra.mrb[0].mxu0 %v1487
        %v2485 = vpop.f32.mrb[0].mxu0
        %v2486 = vadd.f32 %v465, %v2485
        %v2487 = vpop.f32.mrb[0].mxu0
        %v2488 = vpop.f32.mrb[0].mxu0
        %v2489 = vadd.f32 %v465, %v2488
        %v2490 = vpop.f32.mrb[0].mxu0
        %2491 = vmatprep.mubr.bf16.mxu0 0
        %2492 = vmatmul.mubr.bf16.gmra.mrb[0].mxu0 %v1490
        %v2493 = vpop.f32.mrb[0].mxu0
        %v2494 = vadd.f32 %v465, %v2493
        %v2495 = vpop.f32.mrb[0].mxu0
        %v2496 = vpop.f32.mrb[0].mxu0
        %v2497 = vadd.f32 %v465, %v2496
        %v2498 = vpop.f32.mrb[0].mxu0
        %2499 = vmatprep.mubr.bf16.mxu0 0
        %2500 = vmatmul.mubr.bf16.gmra.mrb[0].mxu0 %v1493
        %v2501 = vpop.f32.mrb[0].mxu0
        %v2502 = vadd.f32 %v465, %v2501
        %v2503 = vpop.f32.mrb[0].mxu0
        %v2504 = vpop.f32.mrb[0].mxu0
        %v2505 = vadd.f32 %v465, %v2504
        %v2506 = vpop.f32.mrb[0].mxu0
        %2507 = vmatprep.mubr.bf16.mxu0 0
        %2508 = vmatmul.mubr.bf16.gmra.mrb[0].mxu0 %v1496
        %v2509 = vpop.f32.mrb[0].mxu0
        %v2510 = vadd.f32 %v465, %v2509
        %v2511 = vpop.f32.mrb[0].mxu0
        %v2512 = vpop.f32.mrb[0].mxu0
        %v2513 = vadd.f32 %v465, %v2512
        %v2514 = vpop.f32.mrb[0].mxu0
        %2515 = vmatprep.mubr.bf16.mxu0 0
        %2516 = vmatmul.mubr.bf16.gmra.mrb[0].mxu0 %v1499
        %v2517 = vpop.f32.mrb[0].mxu0
        %v2518 = vadd.f32 %v465, %v2517
        %v2519 = vpop.f32.mrb[0].mxu0
        %v2520 = vpop.f32.mrb[0].mxu0
        %v2521 = vadd.f32 %v465, %v2520
        %v2522 = vpop.f32.mrb[0].mxu0
        %2523 = vmatprep.mubr.bf16.mxu0 0
        %2524 = vmatmul.mubr.bf16.gmra.mrb[0].mxu0 %v1502
        %v2525 = vpop.f32.mrb[0].mxu0
        %v2526 = vadd.f32 %v465, %v2525
        %v2527 = vpop.f32.mrb[0].mxu0
        %v2528 = vpop.f32.mrb[0].mxu0
        %v2529 = vadd.f32 %v465, %v2528
        %v2530 = vpop.f32.mrb[0].mxu0
        %2531 = vmatprep.mubr.bf16.mxu0 0
        %2532 = vmatmul.mubr.bf16.gmra.mrb[0].mxu0 %v1505
        %v2533 = vpop.f32.mrb[0].mxu0
        %v2534 = vadd.f32 %v465, %v2533
        %v2535 = vpop.f32.mrb[0].mxu0
        %v2536 = vpop.f32.mrb[0].mxu0
        %v2537 = vadd.f32 %v465, %v2536
        %v2538 = vpop.f32.mrb[0].mxu0
        %2539 = vmatprep.mubr.bf16.mxu0 0
        %2540 = vmatmul.mubr.bf16.gmra.mrb[0].mxu0 %v1508
        %v2541 = vpop.f32.mrb[0].mxu0
        %v2542 = vadd.f32 %v465, %v2541
        %v2543 = vpop.f32.mrb[0].mxu0
        %v2544 = vpop.f32.mrb[0].mxu0
        %v2545 = vadd.f32 %v465, %v2544
        %v2546 = vpop.f32.mrb[0].mxu0
        %2547 = vmatprep.mubr.bf16.mxu0 0
        %2548 = vmatmul.mubr.bf16.gmra.mrb[0].mxu0 %v1511
        %v2549 = vpop.f32.mrb[0].mxu0
        %v2550 = vadd.f32 %v465, %v2549
        %v2551 = vpop.f32.mrb[0].mxu0
        %v2552 = vpop.f32.mrb[0].mxu0
        %v2553 = vadd.f32 %v465, %v2552
        %v2554 = vpop.f32.mrb[0].mxu0
        %2555 = vmatprep.mubr.bf16.mxu0 0
        %2556 = vmatmul.mubr.bf16.gmra.mrb[0].mxu0 %v1514
        %v2557 = vpop.f32.mrb[0].mxu0
        %v2558 = vadd.f32 %v465, %v2557
        %v2559 = vpop.f32.mrb[0].mxu0
        %v2560 = vpop.f32.mrb[0].mxu0
        %v2561 = vadd.f32 %v465, %v2560
        %v2562 = vpop.f32.mrb[0].mxu0
        %2563 = vmatprep.mubr.bf16.mxu0 0
        %2564 = vmatmul.mubr.bf16.gmra.mrb[0].mxu0 %v1517
        %v2565 = vpop.f32.mrb[0].mxu0
        %v2566 = vadd.f32 %v465, %v2565
        %v2567 = vpop.f32.mrb[0].mxu0
        %v2568 = vpop.f32.mrb[0].mxu0
        %v2569 = vadd.f32 %v465, %v2568
        %v2570 = vpop.f32.mrb[0].mxu0
        %2571 = vmatprep.mubr.bf16.mxu0 0
        %2572 = vmatmul.mubr.bf16.gmra.mrb[0].mxu0 %v1520
        %v2573 = vpop.f32.mrb[0].mxu0
        %v2574 = vadd.f32 %v465, %v2573
        %v2575 = vpop.f32.mrb[0].mxu0
        %v2576 = vpop.f32.mrb[0].mxu0
        %v2577 = vadd.f32 %v465, %v2576
        %v2578 = vpop.f32.mrb[0].mxu0
        %2579 = vmatprep.mubr.bf16.mxu0 0
        %2580 = vmatmul.mubr.bf16.gmra.mrb[0].mxu0 %v1523
        %v2581 = vpop.f32.mrb[0].mxu0
        %v2582 = vadd.f32 %v465, %v2581
        %v2583 = vpop.f32.mrb[0].mxu0
        %v2584 = vpop.f32.mrb[0].mxu0
        %v2585 = vadd.f32 %v465, %v2584
        %v2586 = vpop.f32.mrb[0].mxu0
        %2587 = vdwg.mxu0
        %v2588 = vmax.f32 %v1566, 0.0
        %v2589 = vmax.f32 %v1569, 0.0
        %v2590 = vmax.f32 %v1574, 0.0
        %v2591 = vmax.f32 %v1577, 0.0
        %v2592 = vmax.f32 %v1582, 0.0
        %v2593 = vmax.f32 %v1585, 0.0
        %v2594 = vmax.f32 %v1590, 0.0
        %v2595 = vmax.f32 %v1593, 0.0
        %v2596 = vmax.f32 %v1598, 0.0
        %v2597 = vmax.f32 %v1601, 0.0
        %v2598 = vmax.f32 %v1606, 0.0
        %v2599 = vmax.f32 %v1609, 0.0
        %v2600 = vmax.f32 %v1614, 0.0
        %v2601 = vmax.f32 %v1617, 0.0
        %v2602 = vmax.f32 %v1622, 0.0
        %v2603 = vmax.f32 %v1625, 0.0
        %v2604 = vmax.f32 %v1630, 0.0
        %v2605 = vmax.f32 %v1633, 0.0
        %v2606 = vmax.f32 %v1638, 0.0
        %v2607 = vmax.f32 %v1641, 0.0
        %v2608 = vmax.f32 %v1646, 0.0
        %v2609 = vmax.f32 %v1649, 0.0
        %v2610 = vmax.f32 %v1654, 0.0
        %v2611 = vmax.f32 %v1657, 0.0
        %v2612 = vmax.f32 %v1662, 0.0
        %v2613 = vmax.f32 %v1665, 0.0
        %v2614 = vmax.f32 %v1670, 0.0
        %v2615 = vmax.f32 %v1673, 0.0
        %v2616 = vmax.f32 %v1678, 0.0
        %v2617 = vmax.f32 %v1681, 0.0
        %v2618 = vmax.f32 %v1686, 0.0
        %v2619 = vmax.f32 %v1689, 0.0
        %v2620 = vmax.f32 %v1694, 0.0
        %v2621 = vmax.f32 %v1697, 0.0
        %v2622 = vmax.f32 %v1702, 0.0
        %v2623 = vmax.f32 %v1705, 0.0
        %v2624 = vmax.f32 %v1710, 0.0
        %v2625 = vmax.f32 %v1713, 0.0
        %v2626 = vmax.f32 %v1718, 0.0
        %v2627 = vmax.f32 %v1721, 0.0
        %v2628 = vmax.f32 %v1726, 0.0
        %v2629 = vmax.f32 %v1729, 0.0
        %v2630 = vmax.f32 %v1734, 0.0
        %v2631 = vmax.f32 %v1737, 0.0
        %v2632 = vmax.f32 %v1742, 0.0
        %v2633 = vmax.f32 %v1745, 0.0
        %v2634 = vmax.f32 %v1750, 0.0
        %v2635 = vmax.f32 %v1753, 0.0
        %v2636 = vmax.f32 %v1758, 0.0
        %v2637 = vmax.f32 %v1761, 0.0
        %v2638 = vmax.f32 %v1766, 0.0
        %v2639 = vmax.f32 %v1769, 0.0
        %v2640 = vmax.f32 %v1774, 0.0
        %v2641 = vmax.f32 %v1777, 0.0
        %v2642 = vmax.f32 %v1782, 0.0
        %v2643 = vmax.f32 %v1785, 0.0
        %v2644 = vmax.f32 %v1790, 0.0
        %v2645 = vmax.f32 %v1793, 0.0
        %v2646 = vmax.f32 %v1798, 0.0
        %v2647 = vmax.f32 %v1801, 0.0
        %v2648 = vmax.f32 %v1806, 0.0
        %v2649 = vmax.f32 %v1809, 0.0
        %v2650 = vmax.f32 %v1814, 0.0
        %v2651 = vmax.f32 %v1817, 0.0
        %v2652 = vmax.f32 %v1822, 0.0
        %v2653 = vmax.f32 %v1825, 0.0
        %v2654 = vmax.f32 %v1830, 0.0
        %v2655 = vmax.f32 %v1833, 0.0
        %v2656 = vmax.f32 %v1838, 0.0
        %v2657 = vmax.f32 %v1841, 0.0
        %v2658 = vmax.f32 %v1846, 0.0
        %v2659 = vmax.f32 %v1849, 0.0
        %v2660 = vmax.f32 %v1854, 0.0
        %v2661 = vmax.f32 %v1857, 0.0
        %v2662 = vmax.f32 %v1862, 0.0
        %v2663 = vmax.f32 %v1865, 0.0
        %v2664 = vmax.f32 %v1870, 0.0
        %v2665 = vmax.f32 %v1873, 0.0
        %v2666 = vmax.f32 %v1878, 0.0
        %v2667 = vmax.f32 %v1881, 0.0
        %v2668 = vmax.f32 %v1886, 0.0
        %v2669 = vmax.f32 %v1889, 0.0
        %v2670 = vmax.f32 %v1894, 0.0
        %v2671 = vmax.f32 %v1897, 0.0
        %v2672 = vmax.f32 %v1902, 0.0
        %v2673 = vmax.f32 %v1905, 0.0
        %v2674 = vmax.f32 %v1910, 0.0
        %v2675 = vmax.f32 %v1913, 0.0
        %v2676 = vmax.f32 %v1918, 0.0
        %v2677 = vmax.f32 %v1921, 0.0
        %v2678 = vmax.f32 %v1926, 0.0
        %v2679 = vmax.f32 %v1929, 0.0
        %v2680 = vmax.f32 %v1934, 0.0
        %v2681 = vmax.f32 %v1937, 0.0
        %v2682 = vmax.f32 %v1942, 0.0
        %v2683 = vmax.f32 %v1945, 0.0
        %v2684 = vmax.f32 %v1950, 0.0
        %v2685 = vmax.f32 %v1953, 0.0
        %v2686 = vmax.f32 %v1958, 0.0
        %v2687 = vmax.f32 %v1961, 0.0
        %v2688 = vmax.f32 %v1966, 0.0
        %v2689 = vmax.f32 %v1969, 0.0
        %v2690 = vmax.f32 %v1974, 0.0
        %v2691 = vmax.f32 %v1977, 0.0
        %v2692 = vmax.f32 %v1982, 0.0
        %v2693 = vmax.f32 %v1985, 0.0
        %v2694 = vmax.f32 %v1990, 0.0
        %v2695 = vmax.f32 %v1993, 0.0
        %v2696 = vmax.f32 %v1998, 0.0
        %v2697 = vmax.f32 %v2001, 0.0
        %v2698 = vmax.f32 %v2006, 0.0
        %v2699 = vmax.f32 %v2009, 0.0
        %v2700 = vmax.f32 %v2014, 0.0
        %v2701 = vmax.f32 %v2017, 0.0
        %v2702 = vmax.f32 %v2022, 0.0
        %v2703 = vmax.f32 %v2025, 0.0
        %v2704 = vmax.f32 %v2030, 0.0
        %v2705 = vmax.f32 %v2033, 0.0
        %v2706 = vmax.f32 %v2038, 0.0
        %v2707 = vmax.f32 %v2041, 0.0
        %v2708 = vmax.f32 %v2046, 0.0
        %v2709 = vmax.f32 %v2049, 0.0
        %v2710 = vmax.f32 %v2054, 0.0
        %v2711 = vmax.f32 %v2057, 0.0
        %v2712 = vmax.f32 %v2062, 0.0
        %v2713 = vmax.f32 %v2065, 0.0
        %v2714 = vmax.f32 %v2070, 0.0
        %v2715 = vmax.f32 %v2073, 0.0
        %v2716 = vmax.f32 %v2078, 0.0
        %v2717 = vmax.f32 %v2081, 0.0
        %v2718 = vmax.f32 %v2086, 0.0
        %v2719 = vmax.f32 %v2089, 0.0
        %v2720 = vmax.f32 %v2094, 0.0
        %v2721 = vmax.f32 %v2097, 0.0
        %v2722 = vmax.f32 %v2102, 0.0
        %v2723 = vmax.f32 %v2105, 0.0
        %v2724 = vmax.f32 %v2110, 0.0
        %v2725 = vmax.f32 %v2113, 0.0
        %v2726 = vmax.f32 %v2118, 0.0
        %v2727 = vmax.f32 %v2121, 0.0
        %v2728 = vmax.f32 %v2126, 0.0
        %v2729 = vmax.f32 %v2129, 0.0
        %v2730 = vmax.f32 %v2134, 0.0
        %v2731 = vmax.f32 %v2137, 0.0
        %v2732 = vmax.f32 %v2142, 0.0
        %v2733 = vmax.f32 %v2145, 0.0
        %v2734 = vmax.f32 %v2150, 0.0
        %v2735 = vmax.f32 %v2153, 0.0
        %v2736 = vmax.f32 %v2158, 0.0
        %v2737 = vmax.f32 %v2161, 0.0
        %v2738 = vmax.f32 %v2166, 0.0
        %v2739 = vmax.f32 %v2169, 0.0
        %v2740 = vmax.f32 %v2174, 0.0
        %v2741 = vmax.f32 %v2177, 0.0
        %v2742 = vmax.f32 %v2182, 0.0
        %v2743 = vmax.f32 %v2185, 0.0
        %v2744 = vmax.f32 %v2190, 0.0
        %v2745 = vmax.f32 %v2193, 0.0
        %v2746 = vmax.f32 %v2198, 0.0
        %v2747 = vmax.f32 %v2201, 0.0
        %v2748 = vmax.f32 %v2206, 0.0
        %v2749 = vmax.f32 %v2209, 0.0
        %v2750 = vmax.f32 %v2214, 0.0
        %v2751 = vmax.f32 %v2217, 0.0
        %v2752 = vmax.f32 %v2222, 0.0
        %v2753 = vmax.f32 %v2225, 0.0
        %v2754 = vmax.f32 %v2230, 0.0
        %v2755 = vmax.f32 %v2233, 0.0
        %v2756 = vmax.f32 %v2238, 0.0
        %v2757 = vmax.f32 %v2241, 0.0
        %v2758 = vmax.f32 %v2246, 0.0
        %v2759 = vmax.f32 %v2249, 0.0
        %v2760 = vmax.f32 %v2254, 0.0
        %v2761 = vmax.f32 %v2257, 0.0
        %v2762 = vmax.f32 %v2262, 0.0
        %v2763 = vmax.f32 %v2265, 0.0
        %v2764 = vmax.f32 %v2270, 0.0
        %v2765 = vmax.f32 %v2273, 0.0
        %v2766 = vmax.f32 %v2278, 0.0
        %v2767 = vmax.f32 %v2281, 0.0
        %v2768 = vmax.f32 %v2286, 0.0
        %v2769 = vmax.f32 %v2289, 0.0
        %v2770 = vmax.f32 %v2294, 0.0
        %v2771 = vmax.f32 %v2297, 0.0
        %v2772 = vmax.f32 %v2302, 0.0
        %v2773 = vmax.f32 %v2305, 0.0
        %v2774 = vmax.f32 %v2310, 0.0
        %v2775 = vmax.f32 %v2313, 0.0
        %v2776 = vmax.f32 %v2318, 0.0
        %v2777 = vmax.f32 %v2321, 0.0
        %v2778 = vmax.f32 %v2326, 0.0
        %v2779 = vmax.f32 %v2329, 0.0
        %v2780 = vmax.f32 %v2334, 0.0
        %v2781 = vmax.f32 %v2337, 0.0
        %v2782 = vmax.f32 %v2342, 0.0
        %v2783 = vmax.f32 %v2345, 0.0
        %v2784 = vmax.f32 %v2350, 0.0
        %v2785 = vmax.f32 %v2353, 0.0
        %v2786 = vmax.f32 %v2358, 0.0
        %v2787 = vmax.f32 %v2361, 0.0
        %v2788 = vmax.f32 %v2366, 0.0
        %v2789 = vmax.f32 %v2369, 0.0
        %v2790 = vmax.f32 %v2374, 0.0
        %v2791 = vmax.f32 %v2377, 0.0
        %v2792 = vmax.f32 %v2382, 0.0
        %v2793 = vmax.f32 %v2385, 0.0
        %v2794 = vmax.f32 %v2390, 0.0
        %v2795 = vmax.f32 %v2393, 0.0
        %v2796 = vmax.f32 %v2398, 0.0
        %v2797 = vmax.f32 %v2401, 0.0
        %v2798 = vmax.f32 %v2406, 0.0
        %v2799 = vmax.f32 %v2409, 0.0
        %v2800 = vmax.f32 %v2414, 0.0
        %v2801 = vmax.f32 %v2417, 0.0
        %v2802 = vmax.f32 %v2422, 0.0
        %v2803 = vmax.f32 %v2425, 0.0
        %v2804 = vmax.f32 %v2430, 0.0
        %v2805 = vmax.f32 %v2433, 0.0
        %v2806 = vmax.f32 %v2438, 0.0
        %v2807 = vmax.f32 %v2441, 0.0
        %v2808 = vmax.f32 %v2446, 0.0
        %v2809 = vmax.f32 %v2449, 0.0
        %v2810 = vmax.f32 %v2454, 0.0
        %v2811 = vmax.f32 %v2457, 0.0
        %v2812 = vmax.f32 %v2462, 0.0
        %v2813 = vmax.f32 %v2465, 0.0
        %v2814 = vmax.f32 %v2470, 0.0
        %v2815 = vmax.f32 %v2473, 0.0
        %v2816 = vmax.f32 %v2478, 0.0
        %v2817 = vmax.f32 %v2481, 0.0
        %v2818 = vmax.f32 %v2486, 0.0
        %v2819 = vmax.f32 %v2489, 0.0
        %v2820 = vmax.f32 %v2494, 0.0
        %v2821 = vmax.f32 %v2497, 0.0
        %v2822 = vmax.f32 %v2502, 0.0
        %v2823 = vmax.f32 %v2505, 0.0
        %v2824 = vmax.f32 %v2510, 0.0
        %v2825 = vmax.f32 %v2513, 0.0
        %v2826 = vmax.f32 %v2518, 0.0
        %v2827 = vmax.f32 %v2521, 0.0
        %v2828 = vmax.f32 %v2526, 0.0
        %v2829 = vmax.f32 %v2529, 0.0
        %v2830 = vmax.f32 %v2534, 0.0
        %v2831 = vmax.f32 %v2537, 0.0
        %v2832 = vmax.f32 %v2542, 0.0
        %v2833 = vmax.f32 %v2545, 0.0
        %v2834 = vmax.f32 %v2550, 0.0
        %v2835 = vmax.f32 %v2553, 0.0
        %v2836 = vmax.f32 %v2558, 0.0
        %v2837 = vmax.f32 %v2561, 0.0
        %v2838 = vmax.f32 %v2566, 0.0
        %v2839 = vmax.f32 %v2569, 0.0
        %v2840 = vmax.f32 %v2574, 0.0
        %v2841 = vmax.f32 %v2577, 0.0
        %v2842 = vmax.f32 %v2582, 0.0
        %v2843 = vmax.f32 %v2585, 0.0
        %v2844 = vpack.c.bf16 %v2589, %v2588
        %v2845 = vpack.c.bf16 %v2591, %v2590
        %v2846 = vpack.c.bf16 %v2593, %v2592
        %v2847 = vpack.c.bf16 %v2595, %v2594
        %v2848 = vpack.c.bf16 %v2597, %v2596
        %v2849 = vpack.c.bf16 %v2599, %v2598
        %v2850 = vpack.c.bf16 %v2601, %v2600
        %v2851 = vpack.c.bf16 %v2603, %v2602
        %v2852 = vpack.c.bf16 %v2605, %v2604
        %v2853 = vpack.c.bf16 %v2607, %v2606
        %v2854 = vpack.c.bf16 %v2609, %v2608
        %v2855 = vpack.c.bf16 %v2611, %v2610
        %v2856 = vpack.c.bf16 %v2613, %v2612
        %v2857 = vpack.c.bf16 %v2615, %v2614
        %v2858 = vpack.c.bf16 %v2617, %v2616
        %v2859 = vpack.c.bf16 %v2619, %v2618
        %v2860 = vpack.c.bf16 %v2621, %v2620
        %v2861 = vpack.c.bf16 %v2623, %v2622
        %v2862 = vpack.c.bf16 %v2625, %v2624
        %v2863 = vpack.c.bf16 %v2627, %v2626
        %v2864 = vpack.c.bf16 %v2629, %v2628
        %v2865 = vpack.c.bf16 %v2631, %v2630
        %v2866 = vpack.c.bf16 %v2633, %v2632
        %v2867 = vpack.c.bf16 %v2635, %v2634
        %v2868 = vpack.c.bf16 %v2637, %v2636
        %v2869 = vpack.c.bf16 %v2639, %v2638
        %v2870 = vpack.c.bf16 %v2641, %v2640
        %v2871 = vpack.c.bf16 %v2643, %v2642
        %v2872 = vpack.c.bf16 %v2645, %v2644
        %v2873 = vpack.c.bf16 %v2647, %v2646
        %v2874 = vpack.c.bf16 %v2649, %v2648
        %v2875 = vpack.c.bf16 %v2651, %v2650
        %v2876 = vpack.c.bf16 %v2653, %v2652
        %v2877 = vpack.c.bf16 %v2655, %v2654
        %v2878 = vpack.c.bf16 %v2657, %v2656
        %v2879 = vpack.c.bf16 %v2659, %v2658
        %v2880 = vpack.c.bf16 %v2661, %v2660
        %v2881 = vpack.c.bf16 %v2663, %v2662
        %v2882 = vpack.c.bf16 %v2665, %v2664
        %v2883 = vpack.c.bf16 %v2667, %v2666
        %v2884 = vpack.c.bf16 %v2669, %v2668
        %v2885 = vpack.c.bf16 %v2671, %v2670
        %v2886 = vpack.c.bf16 %v2673, %v2672
        %v2887 = vpack.c.bf16 %v2675, %v2674
        %v2888 = vpack.c.bf16 %v2677, %v2676
        %v2889 = vpack.c.bf16 %v2679, %v2678
        %v2890 = vpack.c.bf16 %v2681, %v2680
        %v2891 = vpack.c.bf16 %v2683, %v2682
        %v2892 = vpack.c.bf16 %v2685, %v2684
        %v2893 = vpack.c.bf16 %v2687, %v2686
        %v2894 = vpack.c.bf16 %v2689, %v2688
        %v2895 = vpack.c.bf16 %v2691, %v2690
        %v2896 = vpack.c.bf16 %v2693, %v2692
        %v2897 = vpack.c.bf16 %v2695, %v2694
        %v2898 = vpack.c.bf16 %v2697, %v2696
        %v2899 = vpack.c.bf16 %v2699, %v2698
        %v2900 = vpack.c.bf16 %v2701, %v2700
        %v2901 = vpack.c.bf16 %v2703, %v2702
        %v2902 = vpack.c.bf16 %v2705, %v2704
        %v2903 = vpack.c.bf16 %v2707, %v2706
        %v2904 = vpack.c.bf16 %v2709, %v2708
        %v2905 = vpack.c.bf16 %v2711, %v2710
        %v2906 = vpack.c.bf16 %v2713, %v2712
        %v2907 = vpack.c.bf16 %v2715, %v2714
        %v2908 = vpack.c.bf16 %v2717, %v2716
        %v2909 = vpack.c.bf16 %v2719, %v2718
        %v2910 = vpack.c.bf16 %v2721, %v2720
        %v2911 = vpack.c.bf16 %v2723, %v2722
        %v2912 = vpack.c.bf16 %v2725, %v2724
        %v2913 = vpack.c.bf16 %v2727, %v2726
        %v2914 = vpack.c.bf16 %v2729, %v2728
        %v2915 = vpack.c.bf16 %v2731, %v2730
        %v2916 = vpack.c.bf16 %v2733, %v2732
        %v2917 = vpack.c.bf16 %v2735, %v2734
        %v2918 = vpack.c.bf16 %v2737, %v2736
        %v2919 = vpack.c.bf16 %v2739, %v2738
        %v2920 = vpack.c.bf16 %v2741, %v2740
        %v2921 = vpack.c.bf16 %v2743, %v2742
        %v2922 = vpack.c.bf16 %v2745, %v2744
        %v2923 = vpack.c.bf16 %v2747, %v2746
        %v2924 = vpack.c.bf16 %v2749, %v2748
        %v2925 = vpack.c.bf16 %v2751, %v2750
        %v2926 = vpack.c.bf16 %v2753, %v2752
        %v2927 = vpack.c.bf16 %v2755, %v2754
        %v2928 = vpack.c.bf16 %v2757, %v2756
        %v2929 = vpack.c.bf16 %v2759, %v2758
        %v2930 = vpack.c.bf16 %v2761, %v2760
        %v2931 = vpack.c.bf16 %v2763, %v2762
        %v2932 = vpack.c.bf16 %v2765, %v2764
        %v2933 = vpack.c.bf16 %v2767, %v2766
        %v2934 = vpack.c.bf16 %v2769, %v2768
        %v2935 = vpack.c.bf16 %v2771, %v2770
        %v2936 = vpack.c.bf16 %v2773, %v2772
        %v2937 = vpack.c.bf16 %v2775, %v2774
        %v2938 = vpack.c.bf16 %v2777, %v2776
        %v2939 = vpack.c.bf16 %v2779, %v2778
        %v2940 = vpack.c.bf16 %v2781, %v2780
        %v2941 = vpack.c.bf16 %v2783, %v2782
        %v2942 = vpack.c.bf16 %v2785, %v2784
        %v2943 = vpack.c.bf16 %v2787, %v2786
        %v2944 = vpack.c.bf16 %v2789, %v2788
        %v2945 = vpack.c.bf16 %v2791, %v2790
        %v2946 = vpack.c.bf16 %v2793, %v2792
        %v2947 = vpack.c.bf16 %v2795, %v2794
        %v2948 = vpack.c.bf16 %v2797, %v2796
        %v2949 = vpack.c.bf16 %v2799, %v2798
        %v2950 = vpack.c.bf16 %v2801, %v2800
        %v2951 = vpack.c.bf16 %v2803, %v2802
        %v2952 = vpack.c.bf16 %v2805, %v2804
        %v2953 = vpack.c.bf16 %v2807, %v2806
        %v2954 = vpack.c.bf16 %v2809, %v2808
        %v2955 = vpack.c.bf16 %v2811, %v2810
        %v2956 = vpack.c.bf16 %v2813, %v2812
        %v2957 = vpack.c.bf16 %v2815, %v2814
        %v2958 = vpack.c.bf16 %v2817, %v2816
        %v2959 = vpack.c.bf16 %v2819, %v2818
        %v2960 = vpack.c.bf16 %v2821, %v2820
        %v2961 = vpack.c.bf16 %v2823, %v2822
        %v2962 = vpack.c.bf16 %v2825, %v2824
        %v2963 = vpack.c.bf16 %v2827, %v2826
        %v2964 = vpack.c.bf16 %v2829, %v2828
        %v2965 = vpack.c.bf16 %v2831, %v2830
        %v2966 = vpack.c.bf16 %v2833, %v2832
        %v2967 = vpack.c.bf16 %v2835, %v2834
        %v2968 = vpack.c.bf16 %v2837, %v2836
        %v2969 = vpack.c.bf16 %v2839, %v2838
        %v2970 = vpack.c.bf16 %v2841, %v2840
        %v2971 = vpack.c.bf16 %v2843, %v2842
        %v3100 = vunpack.c.l.b16 %v2844
        %v3101 = vunpack.c.h.b16 %v2844
        %v3102 = vunpack.c.l.b16 %v2845
        %v3103 = vunpack.c.h.b16 %v2845
        %v3104 = vunpack.c.l.b16 %v2846
        %v3105 = vunpack.c.h.b16 %v2846
        %v3106 = vunpack.c.l.b16 %v2847
        %v3107 = vunpack.c.h.b16 %v2847
        %v3108 = vunpack.c.l.b16 %v2848
        %v3109 = vunpack.c.h.b16 %v2848
        %v3110 = vunpack.c.l.b16 %v2849
        %v3111 = vunpack.c.h.b16 %v2849
        %v3112 = vunpack.c.l.b16 %v2850
        %v3113 = vunpack.c.h.b16 %v2850
        %v3114 = vunpack.c.l.b16 %v2851
        %v3115 = vunpack.c.h.b16 %v2851
        %v3116 = vunpack.c.l.b16 %v2852
        %v3117 = vunpack.c.h.b16 %v2852
        %v3118 = vunpack.c.l.b16 %v2853
        %v3119 = vunpack.c.h.b16 %v2853
        %v3120 = vunpack.c.l.b16 %v2854
        %v3121 = vunpack.c.h.b16 %v2854
        %v3122 = vunpack.c.l.b16 %v2855
        %v3123 = vunpack.c.h.b16 %v2855
        %v3124 = vunpack.c.l.b16 %v2856
        %v3125 = vunpack.c.h.b16 %v2856
        %v3126 = vunpack.c.l.b16 %v2857
        %v3127 = vunpack.c.h.b16 %v2857
        %v3128 = vunpack.c.l.b16 %v2858
        %v3129 = vunpack.c.h.b16 %v2858
        %v3130 = vunpack.c.l.b16 %v2859
        %v3131 = vunpack.c.h.b16 %v2859
        %v3132 = vunpack.c.l.b16 %v2860
        %v3133 = vunpack.c.h.b16 %v2860
        %v3134 = vunpack.c.l.b16 %v2861
        %v3135 = vunpack.c.h.b16 %v2861
        %v3136 = vunpack.c.l.b16 %v2862
        %v3137 = vunpack.c.h.b16 %v2862
        %v3138 = vunpack.c.l.b16 %v2863
        %v3139 = vunpack.c.h.b16 %v2863
        %v3140 = vunpack.c.l.b16 %v2864
        %v3141 = vunpack.c.h.b16 %v2864
        %v3142 = vunpack.c.l.b16 %v2865
        %v3143 = vunpack.c.h.b16 %v2865
        %v3144 = vunpack.c.l.b16 %v2866
        %v3145 = vunpack.c.h.b16 %v2866
        %v3146 = vunpack.c.l.b16 %v2867
        %v3147 = vunpack.c.h.b16 %v2867
        %v3148 = vunpack.c.l.b16 %v2868
        %v3149 = vunpack.c.h.b16 %v2868
        %v3150 = vunpack.c.l.b16 %v2869
        %v3151 = vunpack.c.h.b16 %v2869
        %v3152 = vunpack.c.l.b16 %v2870
        %v3153 = vunpack.c.h.b16 %v2870
        %v3154 = vunpack.c.l.b16 %v2871
        %v3155 = vunpack.c.h.b16 %v2871
        %v3156 = vunpack.c.l.b16 %v2872
        %v3157 = vunpack.c.h.b16 %v2872
        %v3158 = vunpack.c.l.b16 %v2873
        %v3159 = vunpack.c.h.b16 %v2873
        %v3160 = vunpack.c.l.b16 %v2874
        %v3161 = vunpack.c.h.b16 %v2874
        %v3162 = vunpack.c.l.b16 %v2875
        %v3163 = vunpack.c.h.b16 %v2875
        %v3164 = vunpack.c.l.b16 %v2876
        %v3165 = vunpack.c.h.b16 %v2876
        %v3166 = vunpack.c.l.b16 %v2877
        %v3167 = vunpack.c.h.b16 %v2877
        %v3168 = vunpack.c.l.b16 %v2878
        %v3169 = vunpack.c.h.b16 %v2878
        %v3170 = vunpack.c.l.b16 %v2879
        %v3171 = vunpack.c.h.b16 %v2879
        %v3172 = vunpack.c.l.b16 %v2880
        %v3173 = vunpack.c.h.b16 %v2880
        %v3174 = vunpack.c.l.b16 %v2881
        %v3175 = vunpack.c.h.b16 %v2881
        %v3176 = vunpack.c.l.b16 %v2882
        %v3177 = vunpack.c.h.b16 %v2882
        %v3178 = vunpack.c.l.b16 %v2883
        %v3179 = vunpack.c.h.b16 %v2883
        %v3180 = vunpack.c.l.b16 %v2884
        %v3181 = vunpack.c.h.b16 %v2884
        %v3182 = vunpack.c.l.b16 %v2885
        %v3183 = vunpack.c.h.b16 %v2885
        %v3184 = vunpack.c.l.b16 %v2886
        %v3185 = vunpack.c.h.b16 %v2886
        %v3186 = vunpack.c.l.b16 %v2887
        %v3187 = vunpack.c.h.b16 %v2887
        %v3188 = vunpack.c.l.b16 %v2888
        %v3189 = vunpack.c.h.b16 %v2888
        %v3190 = vunpack.c.l.b16 %v2889
        %v3191 = vunpack.c.h.b16 %v2889
        %v3192 = vunpack.c.l.b16 %v2890
        %v3193 = vunpack.c.h.b16 %v2890
        %v3194 = vunpack.c.l.b16 %v2891
        %v3195 = vunpack.c.h.b16 %v2891
        %v3196 = vunpack.c.l.b16 %v2892
        %v3197 = vunpack.c.h.b16 %v2892
        %v3198 = vunpack.c.l.b16 %v2893
        %v3199 = vunpack.c.h.b16 %v2893
        %v3200 = vunpack.c.l.b16 %v2894
        %v3201 = vunpack.c.h.b16 %v2894
        %v3202 = vunpack.c.l.b16 %v2895
        %v3203 = vunpack.c.h.b16 %v2895
        %v3204 = vunpack.c.l.b16 %v2896
        %v3205 = vunpack.c.h.b16 %v2896
        %v3206 = vunpack.c.l.b16 %v2897
        %v3207 = vunpack.c.h.b16 %v2897
        %v3208 = vunpack.c.l.b16 %v2898
        %v3209 = vunpack.c.h.b16 %v2898
        %v3210 = vunpack.c.l.b16 %v2899
        %v3211 = vunpack.c.h.b16 %v2899
        %v3212 = vunpack.c.l.b16 %v2900
        %v3213 = vunpack.c.h.b16 %v2900
        %v3214 = vunpack.c.l.b16 %v2901
        %v3215 = vunpack.c.h.b16 %v2901
        %v3216 = vunpack.c.l.b16 %v2902
        %v3217 = vunpack.c.h.b16 %v2902
        %v3218 = vunpack.c.l.b16 %v2903
        %v3219 = vunpack.c.h.b16 %v2903
        %v3220 = vunpack.c.l.b16 %v2904
        %v3221 = vunpack.c.h.b16 %v2904
        %v3222 = vunpack.c.l.b16 %v2905
        %v3223 = vunpack.c.h.b16 %v2905
        %v3224 = vunpack.c.l.b16 %v2906
        %v3225 = vunpack.c.h.b16 %v2906
        %v3226 = vunpack.c.l.b16 %v2907
        %v3227 = vunpack.c.h.b16 %v2907
        %v3228 = vunpack.c.l.b16 %v2908
        %v3229 = vunpack.c.h.b16 %v2908
        %v3230 = vunpack.c.l.b16 %v2909
        %v3231 = vunpack.c.h.b16 %v2909
        %v3232 = vunpack.c.l.b16 %v2910
        %v3233 = vunpack.c.h.b16 %v2910
        %v3234 = vunpack.c.l.b16 %v2911
        %v3235 = vunpack.c.h.b16 %v2911
        %v3236 = vunpack.c.l.b16 %v2912
        %v3237 = vunpack.c.h.b16 %v2912
        %v3238 = vunpack.c.l.b16 %v2913
        %v3239 = vunpack.c.h.b16 %v2913
        %v3240 = vunpack.c.l.b16 %v2914
        %v3241 = vunpack.c.h.b16 %v2914
        %v3242 = vunpack.c.l.b16 %v2915
        %v3243 = vunpack.c.h.b16 %v2915
        %v3244 = vunpack.c.l.b16 %v2916
        %v3245 = vunpack.c.h.b16 %v2916
        %v3246 = vunpack.c.l.b16 %v2917
        %v3247 = vunpack.c.h.b16 %v2917
        %v3248 = vunpack.c.l.b16 %v2918
        %v3249 = vunpack.c.h.b16 %v2918
        %v3250 = vunpack.c.l.b16 %v2919
        %v3251 = vunpack.c.h.b16 %v2919
        %v3252 = vunpack.c.l.b16 %v2920
        %v3253 = vunpack.c.h.b16 %v2920
        %v3254 = vunpack.c.l.b16 %v2921
        %v3255 = vunpack.c.h.b16 %v2921
        %v3256 = vunpack.c.l.b16 %v2922
        %v3257 = vunpack.c.h.b16 %v2922
        %v3258 = vunpack.c.l.b16 %v2923
        %v3259 = vunpack.c.h.b16 %v2923
        %v3260 = vunpack.c.l.b16 %v2924
        %v3261 = vunpack.c.h.b16 %v2924
        %v3262 = vunpack.c.l.b16 %v2925
        %v3263 = vunpack.c.h.b16 %v2925
        %v3264 = vunpack.c.l.b16 %v2926
        %v3265 = vunpack.c.h.b16 %v2926
        %v3266 = vunpack.c.l.b16 %v2927
        %v3267 = vunpack.c.h.b16 %v2927
        %v3268 = vunpack.c.l.b16 %v2928
        %v3269 = vunpack.c.h.b16 %v2928
        %v3270 = vunpack.c.l.b16 %v2929
        %v3271 = vunpack.c.h.b16 %v2929
        %v3272 = vunpack.c.l.b16 %v2930
        %v3273 = vunpack.c.h.b16 %v2930
        %v3274 = vunpack.c.l.b16 %v2931
        %v3275 = vunpack.c.h.b16 %v2931
        %v3276 = vunpack.c.l.b16 %v2932
        %v3277 = vunpack.c.h.b16 %v2932
        %v3278 = vunpack.c.l.b16 %v2933
        %v3279 = vunpack.c.h.b16 %v2933
        %v3280 = vunpack.c.l.b16 %v2934
        %v3281 = vunpack.c.h.b16 %v2934
        %v3282 = vunpack.c.l.b16 %v2935
        %v3283 = vunpack.c.h.b16 %v2935
        %v3284 = vunpack.c.l.b16 %v2936
        %v3285 = vunpack.c.h.b16 %v2936
        %v3286 = vunpack.c.l.b16 %v2937
        %v3287 = vunpack.c.h.b16 %v2937
        %v3288 = vunpack.c.l.b16 %v2938
        %v3289 = vunpack.c.h.b16 %v2938
        %v3290 = vunpack.c.l.b16 %v2939
        %v3291 = vunpack.c.h.b16 %v2939
        %v3292 = vunpack.c.l.b16 %v2940
        %v3293 = vunpack.c.h.b16 %v2940
        %v3294 = vunpack.c.l.b16 %v2941
        %v3295 = vunpack.c.h.b16 %v2941
        %v3296 = vunpack.c.l.b16 %v2942
        %v3297 = vunpack.c.h.b16 %v2942
        %v3298 = vunpack.c.l.b16 %v2943
        %v3299 = vunpack.c.h.b16 %v2943
        %v3300 = vunpack.c.l.b16 %v2944
        %v3301 = vunpack.c.h.b16 %v2944
        %v3302 = vunpack.c.l.b16 %v2945
        %v3303 = vunpack.c.h.b16 %v2945
        %v3304 = vunpack.c.l.b16 %v2946
        %v3305 = vunpack.c.h.b16 %v2946
        %v3306 = vunpack.c.l.b16 %v2947
        %v3307 = vunpack.c.h.b16 %v2947
        %v3308 = vunpack.c.l.b16 %v2948
        %v3309 = vunpack.c.h.b16 %v2948
        %v3310 = vunpack.c.l.b16 %v2949
        %v3311 = vunpack.c.h.b16 %v2949
        %v3312 = vunpack.c.l.b16 %v2950
        %v3313 = vunpack.c.h.b16 %v2950
        %v3314 = vunpack.c.l.b16 %v2951
        %v3315 = vunpack.c.h.b16 %v2951
        %v3316 = vunpack.c.l.b16 %v2952
        %v3317 = vunpack.c.h.b16 %v2952
        %v3318 = vunpack.c.l.b16 %v2953
        %v3319 = vunpack.c.h.b16 %v2953
        %v3320 = vunpack.c.l.b16 %v2954
        %v3321 = vunpack.c.h.b16 %v2954
        %v3322 = vunpack.c.l.b16 %v2955
        %v3323 = vunpack.c.h.b16 %v2955
        %v3324 = vunpack.c.l.b16 %v2956
        %v3325 = vunpack.c.h.b16 %v2956
        %v3326 = vunpack.c.l.b16 %v2957
        %v3327 = vunpack.c.h.b16 %v2957
        %v3328 = vunpack.c.l.b16 %v2958
        %v3329 = vunpack.c.h.b16 %v2958
        %v3330 = vunpack.c.l.b16 %v2959
        %v3331 = vunpack.c.h.b16 %v2959
        %v3332 = vunpack.c.l.b16 %v2960
        %v3333 = vunpack.c.h.b16 %v2960
        %v3334 = vunpack.c.l.b16 %v2961
        %v3335 = vunpack.c.h.b16 %v2961
        %v3336 = vunpack.c.l.b16 %v2962
        %v3337 = vunpack.c.h.b16 %v2962
        %v3338 = vunpack.c.l.b16 %v2963
        %v3339 = vunpack.c.h.b16 %v2963
        %v3340 = vunpack.c.l.b16 %v2964
        %v3341 = vunpack.c.h.b16 %v2964
        %v3342 = vunpack.c.l.b16 %v2965
        %v3343 = vunpack.c.h.b16 %v2965
        %v3344 = vunpack.c.l.b16 %v2966
        %v3345 = vunpack.c.h.b16 %v2966
        %v3346 = vunpack.c.l.b16 %v2967
        %v3347 = vunpack.c.h.b16 %v2967
        %v3348 = vunpack.c.l.b16 %v2968
        %v3349 = vunpack.c.h.b16 %v2968
        %v3350 = vunpack.c.l.b16 %v2969
        %v3351 = vunpack.c.h.b16 %v2969
        %v3352 = vunpack.c.l.b16 %v2970
        %v3353 = vunpack.c.h.b16 %v2970
        %v3354 = vunpack.c.l.b16 %v2971
        %v3355 = vunpack.c.h.b16 %v2971
        %v3356 = vpack.c.b16 %v3100, %v3100
        %v3357 = vpack.c.b16 %v3101, %v3101
        %v3358 = vpack.c.b16 %v3102, %v3102
        %v3359 = vpack.c.b16 %v3103, %v3103
        %v3360 = vpack.c.b16 %v3104, %v3104
        %v3361 = vpack.c.b16 %v3105, %v3105
        %v3362 = vpack.c.b16 %v3106, %v3106
        %v3363 = vpack.c.b16 %v3107, %v3107
        %v3364 = vpack.c.b16 %v3108, %v3108
        %v3365 = vpack.c.b16 %v3109, %v3109
        %v3366 = vpack.c.b16 %v3110, %v3110
        %v3367 = vpack.c.b16 %v3111, %v3111
        %v3368 = vpack.c.b16 %v3112, %v3112
        %v3369 = vpack.c.b16 %v3113, %v3113
        %v3370 = vpack.c.b16 %v3114, %v3114
        %v3371 = vpack.c.b16 %v3115, %v3115
        %v3372 = vpack.c.b16 %v3116, %v3116
        %v3373 = vpack.c.b16 %v3117, %v3117
        %v3374 = vpack.c.b16 %v3118, %v3118
        %v3375 = vpack.c.b16 %v3119, %v3119
        %v3376 = vpack.c.b16 %v3120, %v3120
        %v3377 = vpack.c.b16 %v3121, %v3121
        %v3378 = vpack.c.b16 %v3122, %v3122
        %v3379 = vpack.c.b16 %v3123, %v3123
        %v3380 = vpack.c.b16 %v3124, %v3124
        %v3381 = vpack.c.b16 %v3125, %v3125
        %v3382 = vpack.c.b16 %v3126, %v3126
        %v3383 = vpack.c.b16 %v3127, %v3127
        %v3384 = vpack.c.b16 %v3128, %v3128
        %v3385 = vpack.c.b16 %v3129, %v3129
        %v3386 = vpack.c.b16 %v3130, %v3130
        %v3387 = vpack.c.b16 %v3131, %v3131
        %v3388 = vpack.c.b16 %v3132, %v3132
        %v3389 = vpack.c.b16 %v3133, %v3133
        %v3390 = vpack.c.b16 %v3134, %v3134
        %v3391 = vpack.c.b16 %v3135, %v3135
        %v3392 = vpack.c.b16 %v3136, %v3136
        %v3393 = vpack.c.b16 %v3137, %v3137
        %v3394 = vpack.c.b16 %v3138, %v3138
        %v3395 = vpack.c.b16 %v3139, %v3139
        %v3396 = vpack.c.b16 %v3140, %v3140
        %v3397 = vpack.c.b16 %v3141, %v3141
        %v3398 = vpack.c.b16 %v3142, %v3142
        %v3399 = vpack.c.b16 %v3143, %v3143
        %v3400 = vpack.c.b16 %v3144, %v3144
        %v3401 = vpack.c.b16 %v3145, %v3145
        %v3402 = vpack.c.b16 %v3146, %v3146
        %v3403 = vpack.c.b16 %v3147, %v3147
        %v3404 = vpack.c.b16 %v3148, %v3148
        %v3405 = vpack.c.b16 %v3149, %v3149
        %v3406 = vpack.c.b16 %v3150, %v3150
        %v3407 = vpack.c.b16 %v3151, %v3151
        %v3408 = vpack.c.b16 %v3152, %v3152
        %v3409 = vpack.c.b16 %v3153, %v3153
        %v3410 = vpack.c.b16 %v3154, %v3154
        %v3411 = vpack.c.b16 %v3155, %v3155
        %v3412 = vpack.c.b16 %v3156, %v3156
        %v3413 = vpack.c.b16 %v3157, %v3157
        %v3414 = vpack.c.b16 %v3158, %v3158
        %v3415 = vpack.c.b16 %v3159, %v3159
        %v3416 = vpack.c.b16 %v3160, %v3160
        %v3417 = vpack.c.b16 %v3161, %v3161
        %v3418 = vpack.c.b16 %v3162, %v3162
        %v3419 = vpack.c.b16 %v3163, %v3163
        %v3420 = vpack.c.b16 %v3164, %v3164
        %v3421 = vpack.c.b16 %v3165, %v3165
        %v3422 = vpack.c.b16 %v3166, %v3166
        %v3423 = vpack.c.b16 %v3167, %v3167
        %v3424 = vpack.c.b16 %v3168, %v3168
        %v3425 = vpack.c.b16 %v3169, %v3169
        %v3426 = vpack.c.b16 %v3170, %v3170
        %v3427 = vpack.c.b16 %v3171, %v3171
        %v3428 = vpack.c.b16 %v3172, %v3172
        %v3429 = vpack.c.b16 %v3173, %v3173
        %v3430 = vpack.c.b16 %v3174, %v3174
        %v3431 = vpack.c.b16 %v3175, %v3175
        %v3432 = vpack.c.b16 %v3176, %v3176
        %v3433 = vpack.c.b16 %v3177, %v3177
        %v3434 = vpack.c.b16 %v3178, %v3178
        %v3435 = vpack.c.b16 %v3179, %v3179
        %v3436 = vpack.c.b16 %v3180, %v3180
        %v3437 = vpack.c.b16 %v3181, %v3181
        %v3438 = vpack.c.b16 %v3182, %v3182
        %v3439 = vpack.c.b16 %v3183, %v3183
        %v3440 = vpack.c.b16 %v3184, %v3184
        %v3441 = vpack.c.b16 %v3185, %v3185
        %v3442 = vpack.c.b16 %v3186, %v3186
        %v3443 = vpack.c.b16 %v3187, %v3187
        %v3444 = vpack.c.b16 %v3188, %v3188
        %v3445 = vpack.c.b16 %v3189, %v3189
        %v3446 = vpack.c.b16 %v3190, %v3190
        %v3447 = vpack.c.b16 %v3191, %v3191
        %v3448 = vpack.c.b16 %v3192, %v3192
        %v3449 = vpack.c.b16 %v3193, %v3193
        %v3450 = vpack.c.b16 %v3194, %v3194
        %v3451 = vpack.c.b16 %v3195, %v3195
        %v3452 = vpack.c.b16 %v3196, %v3196
        %v3453 = vpack.c.b16 %v3197, %v3197
        %v3454 = vpack.c.b16 %v3198, %v3198
        %v3455 = vpack.c.b16 %v3199, %v3199
        %v3456 = vpack.c.b16 %v3200, %v3200
        %v3457 = vpack.c.b16 %v3201, %v3201
        %v3458 = vpack.c.b16 %v3202, %v3202
        %v3459 = vpack.c.b16 %v3203, %v3203
        %v3460 = vpack.c.b16 %v3204, %v3204
        %v3461 = vpack.c.b16 %v3205, %v3205
        %v3462 = vpack.c.b16 %v3206, %v3206
        %v3463 = vpack.c.b16 %v3207, %v3207
        %v3464 = vpack.c.b16 %v3208, %v3208
        %v3465 = vpack.c.b16 %v3209, %v3209
        %v3466 = vpack.c.b16 %v3210, %v3210
        %v3467 = vpack.c.b16 %v3211, %v3211
        %v3468 = vpack.c.b16 %v3212, %v3212
        %v3469 = vpack.c.b16 %v3213, %v3213
        %v3470 = vpack.c.b16 %v3214, %v3214
        %v3471 = vpack.c.b16 %v3215, %v3215
        %v3472 = vpack.c.b16 %v3216, %v3216
        %v3473 = vpack.c.b16 %v3217, %v3217
        %v3474 = vpack.c.b16 %v3218, %v3218
        %v3475 = vpack.c.b16 %v3219, %v3219
        %v3476 = vpack.c.b16 %v3220, %v3220
        %v3477 = vpack.c.b16 %v3221, %v3221
        %v3478 = vpack.c.b16 %v3222, %v3222
        %v3479 = vpack.c.b16 %v3223, %v3223
        %v3480 = vpack.c.b16 %v3224, %v3224
        %v3481 = vpack.c.b16 %v3225, %v3225
        %v3482 = vpack.c.b16 %v3226, %v3226
        %v3483 = vpack.c.b16 %v3227, %v3227
        %v3484 = vpack.c.b16 %v3228, %v3228
        %v3485 = vpack.c.b16 %v3229, %v3229
        %v3486 = vpack.c.b16 %v3230, %v3230
        %v3487 = vpack.c.b16 %v3231, %v3231
        %v3488 = vpack.c.b16 %v3232, %v3232
        %v3489 = vpack.c.b16 %v3233, %v3233
        %v3490 = vpack.c.b16 %v3234, %v3234
        %v3491 = vpack.c.b16 %v3235, %v3235
        %v3492 = vpack.c.b16 %v3236, %v3236
        %v3493 = vpack.c.b16 %v3237, %v3237
        %v3494 = vpack.c.b16 %v3238, %v3238
        %v3495 = vpack.c.b16 %v3239, %v3239
        %v3496 = vpack.c.b16 %v3240, %v3240
        %v3497 = vpack.c.b16 %v3241, %v3241
        %v3498 = vpack.c.b16 %v3242, %v3242
        %v3499 = vpack.c.b16 %v3243, %v3243
        %v3500 = vpack.c.b16 %v3244, %v3244
        %v3501 = vpack.c.b16 %v3245, %v3245
        %v3502 = vpack.c.b16 %v3246, %v3246
        %v3503 = vpack.c.b16 %v3247, %v3247
        %v3504 = vpack.c.b16 %v3248, %v3248
        %v3505 = vpack.c.b16 %v3249, %v3249
        %v3506 = vpack.c.b16 %v3250, %v3250
        %v3507 = vpack.c.b16 %v3251, %v3251
        %v3508 = vpack.c.b16 %v3252, %v3252
        %v3509 = vpack.c.b16 %v3253, %v3253
        %v3510 = vpack.c.b16 %v3254, %v3254
        %v3511 = vpack.c.b16 %v3255, %v3255
        %v3512 = vpack.c.b16 %v3256, %v3256
        %v3513 = vpack.c.b16 %v3257, %v3257
        %v3514 = vpack.c.b16 %v3258, %v3258
        %v3515 = vpack.c.b16 %v3259, %v3259
        %v3516 = vpack.c.b16 %v3260, %v3260
        %v3517 = vpack.c.b16 %v3261, %v3261
        %v3518 = vpack.c.b16 %v3262, %v3262
        %v3519 = vpack.c.b16 %v3263, %v3263
        %v3520 = vpack.c.b16 %v3264, %v3264
        %v3521 = vpack.c.b16 %v3265, %v3265
        %v3522 = vpack.c.b16 %v3266, %v3266
        %v3523 = vpack.c.b16 %v3267, %v3267
        %v3524 = vpack.c.b16 %v3268, %v3268
        %v3525 = vpack.c.b16 %v3269, %v3269
        %v3526 = vpack.c.b16 %v3270, %v3270
        %v3527 = vpack.c.b16 %v3271, %v3271
        %v3528 = vpack.c.b16 %v3272, %v3272
        %v3529 = vpack.c.b16 %v3273, %v3273
        %v3530 = vpack.c.b16 %v3274, %v3274
        %v3531 = vpack.c.b16 %v3275, %v3275
        %v3532 = vpack.c.b16 %v3276, %v3276
        %v3533 = vpack.c.b16 %v3277, %v3277
        %v3534 = vpack.c.b16 %v3278, %v3278
        %v3535 = vpack.c.b16 %v3279, %v3279
        %v3536 = vpack.c.b16 %v3280, %v3280
        %v3537 = vpack.c.b16 %v3281, %v3281
        %v3538 = vpack.c.b16 %v3282, %v3282
        %v3539 = vpack.c.b16 %v3283, %v3283
        %v3540 = vpack.c.b16 %v3284, %v3284
        %v3541 = vpack.c.b16 %v3285, %v3285
        %v3542 = vpack.c.b16 %v3286, %v3286
        %v3543 = vpack.c.b16 %v3287, %v3287
        %v3544 = vpack.c.b16 %v3288, %v3288
        %v3545 = vpack.c.b16 %v3289, %v3289
        %v3546 = vpack.c.b16 %v3290, %v3290
        %v3547 = vpack.c.b16 %v3291, %v3291
        %v3548 = vpack.c.b16 %v3292, %v3292
        %v3549 = vpack.c.b16 %v3293, %v3293
        %v3550 = vpack.c.b16 %v3294, %v3294
        %v3551 = vpack.c.b16 %v3295, %v3295
        %v3552 = vpack.c.b16 %v3296, %v3296
        %v3553 = vpack.c.b16 %v3297, %v3297
        %v3554 = vpack.c.b16 %v3298, %v3298
        %v3555 = vpack.c.b16 %v3299, %v3299
        %v3556 = vpack.c.b16 %v3300, %v3300
        %v3557 = vpack.c.b16 %v3301, %v3301
        %v3558 = vpack.c.b16 %v3302, %v3302
        %v3559 = vpack.c.b16 %v3303, %v3303
        %v3560 = vpack.c.b16 %v3304, %v3304
        %v3561 = vpack.c.b16 %v3305, %v3305
        %v3562 = vpack.c.b16 %v3306, %v3306
        %v3563 = vpack.c.b16 %v3307, %v3307
        %v3564 = vpack.c.b16 %v3308, %v3308
        %v3565 = vpack.c.b16 %v3309, %v3309
        %v3566 = vpack.c.b16 %v3310, %v3310
        %v3567 = vpack.c.b16 %v3311, %v3311
        %v3568 = vpack.c.b16 %v3312, %v3312
        %v3569 = vpack.c.b16 %v3313, %v3313
        %v3570 = vpack.c.b16 %v3314, %v3314
        %v3571 = vpack.c.b16 %v3315, %v3315
        %v3572 = vpack.c.b16 %v3316, %v3316
        %v3573 = vpack.c.b16 %v3317, %v3317
        %v3574 = vpack.c.b16 %v3318, %v3318
        %v3575 = vpack.c.b16 %v3319, %v3319
        %v3576 = vpack.c.b16 %v3320, %v3320
        %v3577 = vpack.c.b16 %v3321, %v3321
        %v3578 = vpack.c.b16 %v3322, %v3322
        %v3579 = vpack.c.b16 %v3323, %v3323
        %v3580 = vpack.c.b16 %v3324, %v3324
        %v3581 = vpack.c.b16 %v3325, %v3325
        %v3582 = vpack.c.b16 %v3326, %v3326
        %v3583 = vpack.c.b16 %v3327, %v3327
        %v3584 = vpack.c.b16 %v3328, %v3328
        %v3585 = vpack.c.b16 %v3329, %v3329
        %v3586 = vpack.c.b16 %v3330, %v3330
        %v3587 = vpack.c.b16 %v3331, %v3331
        %v3588 = vpack.c.b16 %v3332, %v3332
        %v3589 = vpack.c.b16 %v3333, %v3333
        %v3590 = vpack.c.b16 %v3334, %v3334
        %v3591 = vpack.c.b16 %v3335, %v3335
        %v3592 = vpack.c.b16 %v3336, %v3336
        %v3593 = vpack.c.b16 %v3337, %v3337
        %v3594 = vpack.c.b16 %v3338, %v3338
        %v3595 = vpack.c.b16 %v3339, %v3339
        %v3596 = vpack.c.b16 %v3340, %v3340
        %v3597 = vpack.c.b16 %v3341, %v3341
        %v3598 = vpack.c.b16 %v3342, %v3342
        %v3599 = vpack.c.b16 %v3343, %v3343
        %v3600 = vpack.c.b16 %v3344, %v3344
        %v3601 = vpack.c.b16 %v3345, %v3345
        %v3602 = vpack.c.b16 %v3346, %v3346
        %v3603 = vpack.c.b16 %v3347, %v3347
        %v3604 = vpack.c.b16 %v3348, %v3348
        %v3605 = vpack.c.b16 %v3349, %v3349
        %v3606 = vpack.c.b16 %v3350, %v3350
        %v3607 = vpack.c.b16 %v3351, %v3351
        %v3608 = vpack.c.b16 %v3352, %v3352
        %v3609 = vpack.c.b16 %v3353, %v3353
        %v3610 = vpack.c.b16 %v3354, %v3354
        %v3611 = vpack.c.b16 %v3355, %v3355
        %vm3868 = vcmask 257024
        %3869 = vst.msk [vmem:[%s172] sm:$0xf] %vm3868, %v3356
        %3870 = vst.msk [vmem:[%s172 + $0x4] sm:$0xf] %vm3868, %v3357
        %3871 = vst.msk [vmem:[%s172 + $0x8] sm:$0xf] %vm3868, %v3358
        %3872 = vst.msk [vmem:[%s172 + $0xc] sm:$0xf] %vm3868, %v3359
        %3873 = vst.msk [vmem:[%s172 + $0x10] sm:$0xf] %vm3868, %v3360
        %3874 = vst.msk [vmem:[%s172 + $0x14] sm:$0xf] %vm3868, %v3361
        %3875 = vst.msk [vmem:[%s172 + $0x18] sm:$0xf] %vm3868, %v3362
        %3876 = vst.msk [vmem:[%s172 + $0x1c] sm:$0xf] %vm3868, %v3363
        %3877 = vst.msk [vmem:[%s172 + $0x20] sm:$0xf] %vm3868, %v3364
        %3878 = vst.msk [vmem:[%s172 + $0x24] sm:$0xf] %vm3868, %v3365
        %3879 = vst.msk [vmem:[%s172 + $0x28] sm:$0xf] %vm3868, %v3366
        %3880 = vst.msk [vmem:[%s172 + $0x2c] sm:$0xf] %vm3868, %v3367
        %3881 = vst.msk [vmem:[%s172 + $0x30] sm:$0xf] %vm3868, %v3368
        %3882 = vst.msk [vmem:[%s172 + $0x34] sm:$0xf] %vm3868, %v3369
        %3883 = vst.msk [vmem:[%s172 + $0x38] sm:$0xf] %vm3868, %v3370
        %3884 = vst.msk [vmem:[%s172 + $0x3c] sm:$0xf] %vm3868, %v3371
        %3885 = vst.msk [vmem:[%s172 + $0x40] sm:$0xf] %vm3868, %v3372
        %3886 = vst.msk [vmem:[%s172 + $0x44] sm:$0xf] %vm3868, %v3373
        %3887 = vst.msk [vmem:[%s172 + $0x48] sm:$0xf] %vm3868, %v3374
        %3888 = vst.msk [vmem:[%s172 + $0x4c] sm:$0xf] %vm3868, %v3375
        %3889 = vst.msk [vmem:[%s172 + $0x50] sm:$0xf] %vm3868, %v3376
        %3890 = vst.msk [vmem:[%s172 + $0x54] sm:$0xf] %vm3868, %v3377
        %3891 = vst.msk [vmem:[%s172 + $0x58] sm:$0xf] %vm3868, %v3378
        %3892 = vst.msk [vmem:[%s172 + $0x5c] sm:$0xf] %vm3868, %v3379
        %3893 = vst.msk [vmem:[%s172 + $0x60] sm:$0xf] %vm3868, %v3380
        %3894 = vst.msk [vmem:[%s172 + $0x64] sm:$0xf] %vm3868, %v3381
        %3895 = vst.msk [vmem:[%s172 + $0x68] sm:$0xf] %vm3868, %v3382
        %3896 = vst.msk [vmem:[%s172 + $0x6c] sm:$0xf] %vm3868, %v3383
        %3897 = vst.msk [vmem:[%s172 + $0x70] sm:$0xf] %vm3868, %v3384
        %3898 = vst.msk [vmem:[%s172 + $0x74] sm:$0xf] %vm3868, %v3385
        %3899 = vst.msk [vmem:[%s172 + $0x78] sm:$0xf] %vm3868, %v3386
        %3900 = vst.msk [vmem:[%s172 + $0x7c] sm:$0xf] %vm3868, %v3387
        %3901 = vst.msk [vmem:[%s172 + $0x80] sm:$0xf] %vm3868, %v3388
        %3902 = vst.msk [vmem:[%s172 + $0x84] sm:$0xf] %vm3868, %v3389
        %3903 = vst.msk [vmem:[%s172 + $0x88] sm:$0xf] %vm3868, %v3390
        %3904 = vst.msk [vmem:[%s172 + $0x8c] sm:$0xf] %vm3868, %v3391
        %3905 = vst.msk [vmem:[%s172 + $0x90] sm:$0xf] %vm3868, %v3392
        %3906 = vst.msk [vmem:[%s172 + $0x94] sm:$0xf] %vm3868, %v3393
        %3907 = vst.msk [vmem:[%s172 + $0x98] sm:$0xf] %vm3868, %v3394
        %3908 = vst.msk [vmem:[%s172 + $0x9c] sm:$0xf] %vm3868, %v3395
        %3909 = vst.msk [vmem:[%s172 + $0xa0] sm:$0xf] %vm3868, %v3396
        %3910 = vst.msk [vmem:[%s172 + $0xa4] sm:$0xf] %vm3868, %v3397
        %3911 = vst.msk [vmem:[%s172 + $0xa8] sm:$0xf] %vm3868, %v3398
        %3912 = vst.msk [vmem:[%s172 + $0xac] sm:$0xf] %vm3868, %v3399
        %3913 = vst.msk [vmem:[%s172 + $0xb0] sm:$0xf] %vm3868, %v3400
        %3914 = vst.msk [vmem:[%s172 + $0xb4] sm:$0xf] %vm3868, %v3401
        %3915 = vst.msk [vmem:[%s172 + $0xb8] sm:$0xf] %vm3868, %v3402
        %3916 = vst.msk [vmem:[%s172 + $0xbc] sm:$0xf] %vm3868, %v3403
        %3917 = vst.msk [vmem:[%s172 + $0xc0] sm:$0xf] %vm3868, %v3404
        %3918 = vst.msk [vmem:[%s172 + $0xc4] sm:$0xf] %vm3868, %v3405
        %3919 = vst.msk [vmem:[%s172 + $0xc8] sm:$0xf] %vm3868, %v3406
        %3920 = vst.msk [vmem:[%s172 + $0xcc] sm:$0xf] %vm3868, %v3407
        %3921 = vst.msk [vmem:[%s172 + $0xd0] sm:$0xf] %vm3868, %v3408
        %3922 = vst.msk [vmem:[%s172 + $0xd4] sm:$0xf] %vm3868, %v3409
        %3923 = vst.msk [vmem:[%s172 + $0xd8] sm:$0xf] %vm3868, %v3410
        %3924 = vst.msk [vmem:[%s172 + $0xdc] sm:$0xf] %vm3868, %v3411
        %3925 = vst.msk [vmem:[%s172 + $0xe0] sm:$0xf] %vm3868, %v3412
        %3926 = vst.msk [vmem:[%s172 + $0xe4] sm:$0xf] %vm3868, %v3413
        %3927 = vst.msk [vmem:[%s172 + $0xe8] sm:$0xf] %vm3868, %v3414
        %3928 = vst.msk [vmem:[%s172 + $0xec] sm:$0xf] %vm3868, %v3415
        %3929 = vst.msk [vmem:[%s172 + $0xf0] sm:$0xf] %vm3868, %v3416
        %3930 = vst.msk [vmem:[%s172 + $0xf4] sm:$0xf] %vm3868, %v3417
        %3931 = vst.msk [vmem:[%s172 + $0xf8] sm:$0xf] %vm3868, %v3418
        %3932 = vst.msk [vmem:[%s172 + $0xfc] sm:$0xf] %vm3868, %v3419
        %3933 = vst.msk [vmem:[%s172 + $0x100] sm:$0xf] %vm3868, %v3420
        %3934 = vst.msk [vmem:[%s172 + $0x104] sm:$0xf] %vm3868, %v3421
        %3935 = vst.msk [vmem:[%s172 + $0x108] sm:$0xf] %vm3868, %v3422
        %3936 = vst.msk [vmem:[%s172 + $0x10c] sm:$0xf] %vm3868, %v3423
        %3937 = vst.msk [vmem:[%s172 + $0x110] sm:$0xf] %vm3868, %v3424
        %3938 = vst.msk [vmem:[%s172 + $0x114] sm:$0xf] %vm3868, %v3425
        %3939 = vst.msk [vmem:[%s172 + $0x118] sm:$0xf] %vm3868, %v3426
        %3940 = vst.msk [vmem:[%s172 + $0x11c] sm:$0xf] %vm3868, %v3427
        %3941 = vst.msk [vmem:[%s172 + $0x120] sm:$0xf] %vm3868, %v3428
        %3942 = vst.msk [vmem:[%s172 + $0x124] sm:$0xf] %vm3868, %v3429
        %3943 = vst.msk [vmem:[%s172 + $0x128] sm:$0xf] %vm3868, %v3430
        %3944 = vst.msk [vmem:[%s172 + $0x12c] sm:$0xf] %vm3868, %v3431
        %3945 = vst.msk [vmem:[%s172 + $0x130] sm:$0xf] %vm3868, %v3432
        %3946 = vst.msk [vmem:[%s172 + $0x134] sm:$0xf] %vm3868, %v3433
        %3947 = vst.msk [vmem:[%s172 + $0x138] sm:$0xf] %vm3868, %v3434
        %3948 = vst.msk [vmem:[%s172 + $0x13c] sm:$0xf] %vm3868, %v3435
        %3949 = vst.msk [vmem:[%s172 + $0x140] sm:$0xf] %vm3868, %v3436
        %3950 = vst.msk [vmem:[%s172 + $0x144] sm:$0xf] %vm3868, %v3437
        %3951 = vst.msk [vmem:[%s172 + $0x148] sm:$0xf] %vm3868, %v3438
        %3952 = vst.msk [vmem:[%s172 + $0x14c] sm:$0xf] %vm3868, %v3439
        %3953 = vst.msk [vmem:[%s172 + $0x150] sm:$0xf] %vm3868, %v3440
        %3954 = vst.msk [vmem:[%s172 + $0x154] sm:$0xf] %vm3868, %v3441
        %3955 = vst.msk [vmem:[%s172 + $0x158] sm:$0xf] %vm3868, %v3442
        %3956 = vst.msk [vmem:[%s172 + $0x15c] sm:$0xf] %vm3868, %v3443
        %3957 = vst.msk [vmem:[%s172 + $0x160] sm:$0xf] %vm3868, %v3444
        %3958 = vst.msk [vmem:[%s172 + $0x164] sm:$0xf] %vm3868, %v3445
        %3959 = vst.msk [vmem:[%s172 + $0x168] sm:$0xf] %vm3868, %v3446
        %3960 = vst.msk [vmem:[%s172 + $0x16c] sm:$0xf] %vm3868, %v3447
        %3961 = vst.msk [vmem:[%s172 + $0x170] sm:$0xf] %vm3868, %v3448
        %3962 = vst.msk [vmem:[%s172 + $0x174] sm:$0xf] %vm3868, %v3449
        %3963 = vst.msk [vmem:[%s172 + $0x178] sm:$0xf] %vm3868, %v3450
        %3964 = vst.msk [vmem:[%s172 + $0x17c] sm:$0xf] %vm3868, %v3451
        %3965 = vst.msk [vmem:[%s172 + $0x180] sm:$0xf] %vm3868, %v3452
        %3966 = vst.msk [vmem:[%s172 + $0x184] sm:$0xf] %vm3868, %v3453
        %3967 = vst.msk [vmem:[%s172 + $0x188] sm:$0xf] %vm3868, %v3454
        %3968 = vst.msk [vmem:[%s172 + $0x18c] sm:$0xf] %vm3868, %v3455
        %3969 = vst.msk [vmem:[%s172 + $0x190] sm:$0xf] %vm3868, %v3456
        %3970 = vst.msk [vmem:[%s172 + $0x194] sm:$0xf] %vm3868, %v3457
        %3971 = vst.msk [vmem:[%s172 + $0x198] sm:$0xf] %vm3868, %v3458
        %3972 = vst.msk [vmem:[%s172 + $0x19c] sm:$0xf] %vm3868, %v3459
        %3973 = vst.msk [vmem:[%s172 + $0x1a0] sm:$0xf] %vm3868, %v3460
        %3974 = vst.msk [vmem:[%s172 + $0x1a4] sm:$0xf] %vm3868, %v3461
        %3975 = vst.msk [vmem:[%s172 + $0x1a8] sm:$0xf] %vm3868, %v3462
        %3976 = vst.msk [vmem:[%s172 + $0x1ac] sm:$0xf] %vm3868, %v3463
        %3977 = vst.msk [vmem:[%s172 + $0x1b0] sm:$0xf] %vm3868, %v3464
        %3978 = vst.msk [vmem:[%s172 + $0x1b4] sm:$0xf] %vm3868, %v3465
        %3979 = vst.msk [vmem:[%s172 + $0x1b8] sm:$0xf] %vm3868, %v3466
        %3980 = vst.msk [vmem:[%s172 + $0x1bc] sm:$0xf] %vm3868, %v3467
        %3981 = vst.msk [vmem:[%s172 + $0x1c0] sm:$0xf] %vm3868, %v3468
        %3982 = vst.msk [vmem:[%s172 + $0x1c4] sm:$0xf] %vm3868, %v3469
        %3983 = vst.msk [vmem:[%s172 + $0x1c8] sm:$0xf] %vm3868, %v3470
        %3984 = vst.msk [vmem:[%s172 + $0x1cc] sm:$0xf] %vm3868, %v3471
        %3985 = vst.msk [vmem:[%s172 + $0x1d0] sm:$0xf] %vm3868, %v3472
        %3986 = vst.msk [vmem:[%s172 + $0x1d4] sm:$0xf] %vm3868, %v3473
        %3987 = vst.msk [vmem:[%s172 + $0x1d8] sm:$0xf] %vm3868, %v3474
        %3988 = vst.msk [vmem:[%s172 + $0x1dc] sm:$0xf] %vm3868, %v3475
        %3989 = vst.msk [vmem:[%s172 + $0x1e0] sm:$0xf] %vm3868, %v3476
        %3990 = vst.msk [vmem:[%s172 + $0x1e4] sm:$0xf] %vm3868, %v3477
        %3991 = vst.msk [vmem:[%s172 + $0x1e8] sm:$0xf] %vm3868, %v3478
        %3992 = vst.msk [vmem:[%s172 + $0x1ec] sm:$0xf] %vm3868, %v3479
        %3993 = vst.msk [vmem:[%s172 + $0x1f0] sm:$0xf] %vm3868, %v3480
        %3994 = vst.msk [vmem:[%s172 + $0x1f4] sm:$0xf] %vm3868, %v3481
        %3995 = vst.msk [vmem:[%s172 + $0x1f8] sm:$0xf] %vm3868, %v3482
        %3996 = vst.msk [vmem:[%s172 + $0x1fc] sm:$0xf] %vm3868, %v3483
        %3997 = vst.msk [vmem:[%s172 + $0x200] sm:$0xf] %vm3868, %v3484
        %3998 = vst.msk [vmem:[%s172 + $0x204] sm:$0xf] %vm3868, %v3485
        %3999 = vst.msk [vmem:[%s172 + $0x208] sm:$0xf] %vm3868, %v3486
        %4000 = vst.msk [vmem:[%s172 + $0x20c] sm:$0xf] %vm3868, %v3487
        %4001 = vst.msk [vmem:[%s172 + $0x210] sm:$0xf] %vm3868, %v3488
        %4002 = vst.msk [vmem:[%s172 + $0x214] sm:$0xf] %vm3868, %v3489
        %4003 = vst.msk [vmem:[%s172 + $0x218] sm:$0xf] %vm3868, %v3490
        %4004 = vst.msk [vmem:[%s172 + $0x21c] sm:$0xf] %vm3868, %v3491
        %4005 = vst.msk [vmem:[%s172 + $0x220] sm:$0xf] %vm3868, %v3492
        %4006 = vst.msk [vmem:[%s172 + $0x224] sm:$0xf] %vm3868, %v3493
        %4007 = vst.msk [vmem:[%s172 + $0x228] sm:$0xf] %vm3868, %v3494
        %4008 = vst.msk [vmem:[%s172 + $0x22c] sm:$0xf] %vm3868, %v3495
        %4009 = vst.msk [vmem:[%s172 + $0x230] sm:$0xf] %vm3868, %v3496
        %4010 = vst.msk [vmem:[%s172 + $0x234] sm:$0xf] %vm3868, %v3497
        %4011 = vst.msk [vmem:[%s172 + $0x238] sm:$0xf] %vm3868, %v3498
        %4012 = vst.msk [vmem:[%s172 + $0x23c] sm:$0xf] %vm3868, %v3499
        %4013 = vst.msk [vmem:[%s172 + $0x240] sm:$0xf] %vm3868, %v3500
        %4014 = vst.msk [vmem:[%s172 + $0x244] sm:$0xf] %vm3868, %v3501
        %4015 = vst.msk [vmem:[%s172 + $0x248] sm:$0xf] %vm3868, %v3502
        %4016 = vst.msk [vmem:[%s172 + $0x24c] sm:$0xf] %vm3868, %v3503
        %4017 = vst.msk [vmem:[%s172 + $0x250] sm:$0xf] %vm3868, %v3504
        %4018 = vst.msk [vmem:[%s172 + $0x254] sm:$0xf] %vm3868, %v3505
        %4019 = vst.msk [vmem:[%s172 + $0x258] sm:$0xf] %vm3868, %v3506
        %4020 = vst.msk [vmem:[%s172 + $0x25c] sm:$0xf] %vm3868, %v3507
        %4021 = vst.msk [vmem:[%s172 + $0x260] sm:$0xf] %vm3868, %v3508
        %4022 = vst.msk [vmem:[%s172 + $0x264] sm:$0xf] %vm3868, %v3509
        %4023 = vst.msk [vmem:[%s172 + $0x268] sm:$0xf] %vm3868, %v3510
        %4024 = vst.msk [vmem:[%s172 + $0x26c] sm:$0xf] %vm3868, %v3511
        %4025 = vst.msk [vmem:[%s172 + $0x270] sm:$0xf] %vm3868, %v3512
        %4026 = vst.msk [vmem:[%s172 + $0x274] sm:$0xf] %vm3868, %v3513
        %4027 = vst.msk [vmem:[%s172 + $0x278] sm:$0xf] %vm3868, %v3514
        %4028 = vst.msk [vmem:[%s172 + $0x27c] sm:$0xf] %vm3868, %v3515
        %4029 = vst.msk [vmem:[%s172 + $0x280] sm:$0xf] %vm3868, %v3516
        %4030 = vst.msk [vmem:[%s172 + $0x284] sm:$0xf] %vm3868, %v3517
        %4031 = vst.msk [vmem:[%s172 + $0x288] sm:$0xf] %vm3868, %v3518
        %4032 = vst.msk [vmem:[%s172 + $0x28c] sm:$0xf] %vm3868, %v3519
        %4033 = vst.msk [vmem:[%s172 + $0x290] sm:$0xf] %vm3868, %v3520
        %4034 = vst.msk [vmem:[%s172 + $0x294] sm:$0xf] %vm3868, %v3521
        %4035 = vst.msk [vmem:[%s172 + $0x298] sm:$0xf] %vm3868, %v3522
        %4036 = vst.msk [vmem:[%s172 + $0x29c] sm:$0xf] %vm3868, %v3523
        %4037 = vst.msk [vmem:[%s172 + $0x2a0] sm:$0xf] %vm3868, %v3524
        %4038 = vst.msk [vmem:[%s172 + $0x2a4] sm:$0xf] %vm3868, %v3525
        %4039 = vst.msk [vmem:[%s172 + $0x2a8] sm:$0xf] %vm3868, %v3526
        %4040 = vst.msk [vmem:[%s172 + $0x2ac] sm:$0xf] %vm3868, %v3527
        %4041 = vst.msk [vmem:[%s172 + $0x2b0] sm:$0xf] %vm3868, %v3528
        %4042 = vst.msk [vmem:[%s172 + $0x2b4] sm:$0xf] %vm3868, %v3529
        %4043 = vst.msk [vmem:[%s172 + $0x2b8] sm:$0xf] %vm3868, %v3530
        %4044 = vst.msk [vmem:[%s172 + $0x2bc] sm:$0xf] %vm3868, %v3531
        %4045 = vst.msk [vmem:[%s172 + $0x2c0] sm:$0xf] %vm3868, %v3532
        %4046 = vst.msk [vmem:[%s172 + $0x2c4] sm:$0xf] %vm3868, %v3533
        %4047 = vst.msk [vmem:[%s172 + $0x2c8] sm:$0xf] %vm3868, %v3534
        %4048 = vst.msk [vmem:[%s172 + $0x2cc] sm:$0xf] %vm3868, %v3535
        %4049 = vst.msk [vmem:[%s172 + $0x2d0] sm:$0xf] %vm3868, %v3536
        %4050 = vst.msk [vmem:[%s172 + $0x2d4] sm:$0xf] %vm3868, %v3537
        %4051 = vst.msk [vmem:[%s172 + $0x2d8] sm:$0xf] %vm3868, %v3538
        %4052 = vst.msk [vmem:[%s172 + $0x2dc] sm:$0xf] %vm3868, %v3539
        %4053 = vst.msk [vmem:[%s172 + $0x2e0] sm:$0xf] %vm3868, %v3540
        %4054 = vst.msk [vmem:[%s172 + $0x2e4] sm:$0xf] %vm3868, %v3541
        %4055 = vst.msk [vmem:[%s172 + $0x2e8] sm:$0xf] %vm3868, %v3542
        %4056 = vst.msk [vmem:[%s172 + $0x2ec] sm:$0xf] %vm3868, %v3543
        %4057 = vst.msk [vmem:[%s172 + $0x2f0] sm:$0xf] %vm3868, %v3544
        %4058 = vst.msk [vmem:[%s172 + $0x2f4] sm:$0xf] %vm3868, %v3545
        %4059 = vst.msk [vmem:[%s172 + $0x2f8] sm:$0xf] %vm3868, %v3546
        %4060 = vst.msk [vmem:[%s172 + $0x2fc] sm:$0xf] %vm3868, %v3547
        %4061 = vst.msk [vmem:[%s172 + $0x300] sm:$0xf] %vm3868, %v3548
        %4062 = vst.msk [vmem:[%s172 + $0x304] sm:$0xf] %vm3868, %v3549
        %4063 = vst.msk [vmem:[%s172 + $0x308] sm:$0xf] %vm3868, %v3550
        %4064 = vst.msk [vmem:[%s172 + $0x30c] sm:$0xf] %vm3868, %v3551
        %4065 = vst.msk [vmem:[%s172 + $0x310] sm:$0xf] %vm3868, %v3552
        %4066 = vst.msk [vmem:[%s172 + $0x314] sm:$0xf] %vm3868, %v3553
        %4067 = vst.msk [vmem:[%s172 + $0x318] sm:$0xf] %vm3868, %v3554
        %4068 = vst.msk [vmem:[%s172 + $0x31c] sm:$0xf] %vm3868, %v3555
        %4069 = vst.msk [vmem:[%s172 + $0x320] sm:$0xf] %vm3868, %v3556
        %4070 = vst.msk [vmem:[%s172 + $0x324] sm:$0xf] %vm3868, %v3557
        %4071 = vst.msk [vmem:[%s172 + $0x328] sm:$0xf] %vm3868, %v3558
        %4072 = vst.msk [vmem:[%s172 + $0x32c] sm:$0xf] %vm3868, %v3559
        %4073 = vst.msk [vmem:[%s172 + $0x330] sm:$0xf] %vm3868, %v3560
        %4074 = vst.msk [vmem:[%s172 + $0x334] sm:$0xf] %vm3868, %v3561
        %4075 = vst.msk [vmem:[%s172 + $0x338] sm:$0xf] %vm3868, %v3562
        %4076 = vst.msk [vmem:[%s172 + $0x33c] sm:$0xf] %vm3868, %v3563
        %4077 = vst.msk [vmem:[%s172 + $0x340] sm:$0xf] %vm3868, %v3564
        %4078 = vst.msk [vmem:[%s172 + $0x344] sm:$0xf] %vm3868, %v3565
        %4079 = vst.msk [vmem:[%s172 + $0x348] sm:$0xf] %vm3868, %v3566
        %4080 = vst.msk [vmem:[%s172 + $0x34c] sm:$0xf] %vm3868, %v3567
        %4081 = vst.msk [vmem:[%s172 + $0x350] sm:$0xf] %vm3868, %v3568
        %4082 = vst.msk [vmem:[%s172 + $0x354] sm:$0xf] %vm3868, %v3569
        %4083 = vst.msk [vmem:[%s172 + $0x358] sm:$0xf] %vm3868, %v3570
        %4084 = vst.msk [vmem:[%s172 + $0x35c] sm:$0xf] %vm3868, %v3571
        %4085 = vst.msk [vmem:[%s172 + $0x360] sm:$0xf] %vm3868, %v3572
        %4086 = vst.msk [vmem:[%s172 + $0x364] sm:$0xf] %vm3868, %v3573
        %4087 = vst.msk [vmem:[%s172 + $0x368] sm:$0xf] %vm3868, %v3574
        %4088 = vst.msk [vmem:[%s172 + $0x36c] sm:$0xf] %vm3868, %v3575
        %4089 = vst.msk [vmem:[%s172 + $0x370] sm:$0xf] %vm3868, %v3576
        %4090 = vst.msk [vmem:[%s172 + $0x374] sm:$0xf] %vm3868, %v3577
        %4091 = vst.msk [vmem:[%s172 + $0x378] sm:$0xf] %vm3868, %v3578
        %4092 = vst.msk [vmem:[%s172 + $0x37c] sm:$0xf] %vm3868, %v3579
        %4093 = vst.msk [vmem:[%s172 + $0x380] sm:$0xf] %vm3868, %v3580
        %4094 = vst.msk [vmem:[%s172 + $0x384] sm:$0xf] %vm3868, %v3581
        %4095 = vst.msk [vmem:[%s172 + $0x388] sm:$0xf] %vm3868, %v3582
        %4096 = vst.msk [vmem:[%s172 + $0x38c] sm:$0xf] %vm3868, %v3583
        %4097 = vst.msk [vmem:[%s172 + $0x390] sm:$0xf] %vm3868, %v3584
        %4098 = vst.msk [vmem:[%s172 + $0x394] sm:$0xf] %vm3868, %v3585
        %4099 = vst.msk [vmem:[%s172 + $0x398] sm:$0xf] %vm3868, %v3586
        %4100 = vst.msk [vmem:[%s172 + $0x39c] sm:$0xf] %vm3868, %v3587
        %4101 = vst.msk [vmem:[%s172 + $0x3a0] sm:$0xf] %vm3868, %v3588
        %4102 = vst.msk [vmem:[%s172 + $0x3a4] sm:$0xf] %vm3868, %v3589
        %4103 = vst.msk [vmem:[%s172 + $0x3a8] sm:$0xf] %vm3868, %v3590
        %4104 = vst.msk [vmem:[%s172 + $0x3ac] sm:$0xf] %vm3868, %v3591
        %4105 = vst.msk [vmem:[%s172 + $0x3b0] sm:$0xf] %vm3868, %v3592
        %4106 = vst.msk [vmem:[%s172 + $0x3b4] sm:$0xf] %vm3868, %v3593
        %4107 = vst.msk [vmem:[%s172 + $0x3b8] sm:$0xf] %vm3868, %v3594
        %4108 = vst.msk [vmem:[%s172 + $0x3bc] sm:$0xf] %vm3868, %v3595
        %4109 = vst.msk [vmem:[%s172 + $0x3c0] sm:$0xf] %vm3868, %v3596
        %4110 = vst.msk [vmem:[%s172 + $0x3c4] sm:$0xf] %vm3868, %v3597
        %4111 = vst.msk [vmem:[%s172 + $0x3c8] sm:$0xf] %vm3868, %v3598
        %4112 = vst.msk [vmem:[%s172 + $0x3cc] sm:$0xf] %vm3868, %v3599
        %4113 = vst.msk [vmem:[%s172 + $0x3d0] sm:$0xf] %vm3868, %v3600
        %4114 = vst.msk [vmem:[%s172 + $0x3d4] sm:$0xf] %vm3868, %v3601
        %4115 = vst.msk [vmem:[%s172 + $0x3d8] sm:$0xf] %vm3868, %v3602
        %4116 = vst.msk [vmem:[%s172 + $0x3dc] sm:$0xf] %vm3868, %v3603
        %4117 = vst.msk [vmem:[%s172 + $0x3e0] sm:$0xf] %vm3868, %v3604
        %4118 = vst.msk [vmem:[%s172 + $0x3e4] sm:$0xf] %vm3868, %v3605
        %4119 = vst.msk [vmem:[%s172 + $0x3e8] sm:$0xf] %vm3868, %v3606
        %4120 = vst.msk [vmem:[%s172 + $0x3ec] sm:$0xf] %vm3868, %v3607
        %4121 = vst.msk [vmem:[%s172 + $0x3f0] sm:$0xf] %vm3868, %v3608
        %4122 = vst.msk [vmem:[%s172 + $0x3f4] sm:$0xf] %vm3868, %v3609
        %4123 = vst.msk [vmem:[%s172 + $0x3f8] sm:$0xf] %vm3868, %v3610
        %4124 = vst.msk [vmem:[%s172 + $0x3fc] sm:$0xf] %vm3868, %v3611
        %s4125 = sand.u32 %s90, 1
        %s4126 = sand.u32 %s90, 1
        %s4127 = smul.addr %s4126, 1024
        %s4128 = scalar_lea.vmem [#allocation2], %s4127
        // Predicated region
        $region33: #{forward.5} parent=31 // pred_check
          %p4129 = pneg %p100
        $region34: #{forward.5} parent=31 // pred_check_branch
          %4131 = sbr.rel (%p4129) target = $region36
        $region35: #{forward.5} parent=31 // pred_region
          %s4132 = smul.u32 256, %s14
          %s4133 = ssub.s32 2916, %s4132
          %p4134 = scmp.lt.s32.totalorder %s4133, 256
          %s4135 = scalar_select %p4134, %s4133, 256
          %s4136 = smul.u32 64, %s4135
          %p4137 = scmp.ne.s32.totalorder 0, %s4136
          %s4138 = smul.addr %s4132, 4
          %s4139 = scalar_lea.vmem %s3, %s4138
          // Predicated region
          $region37: #{forward.5} parent=35 // pred_check
            %p4140 = pneg %p4137
          $region38: #{forward.5} parent=35 // pred_check_branch
            %4142 = sbr.rel (%p4140) target = $region40
          $region39: #{forward.5} parent=35 // pred_region
            // Predicated region
            $region41: #{forward.5} parent=39 // pred_check
              _
            $region42: #{forward.5} parent=39 // pred_check_branch
              %4144 = sbr.rel target = $region44
            $region43: #{forward.5} parent=39 // pred_region
              // Predicated region
              $region63: #{forward.5} parent=43 // pred_check
                _
              $region64: #{forward.5} parent=43 // pred_check_branch
                %4319 = sbr.rel (0) target = $region66
              $region65: #{forward.5} parent=43 // pred_region
                %s4321 = sshrl.u32 %s4135, 6
                // While loop
                $region67: #{forward.5} parent=65 // loop_pre_header
                  _
                $region68: #{forward.5} parent=65 // loop_header
                  %s4323 = sphi 0, %s4325
                  %p4324 = scmp.ge.s32.totalorder %s4323, %s4321
                  %s4328 = sphi 0, %s4461
                  %s4329 = sphi %s4128, %s4464
                  %s4330 = sphi %s4139, %s4465
                $region69: #{forward.5} parent=65 // loop_header_branch
                  %4327 = sbr.rel (%p4324) target = $region73
                $region70: #{forward.5} parent=65 // loop_body
                  %v4331 = vld [vmem:[%s4329] sm:$0xf]
                  %4332 = vst [vmem:[%s4330] sm:$0xf] %v4331
                  %v4333 = vld [vmem:[%s4329 + $0x4] sm:$0xf]
                  %4334 = vst [vmem:[%s4330 + $0x4] sm:$0xf] %v4333
                  %v4335 = vld [vmem:[%s4329 + $0x8] sm:$0xf]
                  %4336 = vst [vmem:[%s4330 + $0x8] sm:$0xf] %v4335
                  %v4337 = vld [vmem:[%s4329 + $0xc] sm:$0xf]
                  %4338 = vst [vmem:[%s4330 + $0xc] sm:$0xf] %v4337
                  %v4339 = vld [vmem:[%s4329 + $0x10] sm:$0xf]
                  %4340 = vst [vmem:[%s4330 + $0x10] sm:$0xf] %v4339
                  %v4341 = vld [vmem:[%s4329 + $0x14] sm:$0xf]
                  %4342 = vst [vmem:[%s4330 + $0x14] sm:$0xf] %v4341
                  %v4343 = vld [vmem:[%s4329 + $0x18] sm:$0xf]
                  %4344 = vst [vmem:[%s4330 + $0x18] sm:$0xf] %v4343
                  %v4345 = vld [vmem:[%s4329 + $0x1c] sm:$0xf]
                  %4346 = vst [vmem:[%s4330 + $0x1c] sm:$0xf] %v4345
                  %v4347 = vld [vmem:[%s4329 + $0x20] sm:$0xf]
                  %4348 = vst [vmem:[%s4330 + $0x20] sm:$0xf] %v4347
                  %v4349 = vld [vmem:[%s4329 + $0x24] sm:$0xf]
                  %4350 = vst [vmem:[%s4330 + $0x24] sm:$0xf] %v4349
                  %v4351 = vld [vmem:[%s4329 + $0x28] sm:$0xf]
                  %4352 = vst [vmem:[%s4330 + $0x28] sm:$0xf] %v4351
                  %v4353 = vld [vmem:[%s4329 + $0x2c] sm:$0xf]
                  %4354 = vst [vmem:[%s4330 + $0x2c] sm:$0xf] %v4353
                  %v4355 = vld [vmem:[%s4329 + $0x30] sm:$0xf]
                  %4356 = vst [vmem:[%s4330 + $0x30] sm:$0xf] %v4355
                  %v4357 = vld [vmem:[%s4329 + $0x34] sm:$0xf]
                  %4358 = vst [vmem:[%s4330 + $0x34] sm:$0xf] %v4357
                  %v4359 = vld [vmem:[%s4329 + $0x38] sm:$0xf]
                  %4360 = vst [vmem:[%s4330 + $0x38] sm:$0xf] %v4359
                  %v4361 = vld [vmem:[%s4329 + $0x3c] sm:$0xf]
                  %4362 = vst [vmem:[%s4330 + $0x3c] sm:$0xf] %v4361
                  %v4363 = vld [vmem:[%s4329 + $0x40] sm:$0xf]
                  %4364 = vst [vmem:[%s4330 + $0x40] sm:$0xf] %v4363
                  %v4365 = vld [vmem:[%s4329 + $0x44] sm:$0xf]
                  %4366 = vst [vmem:[%s4330 + $0x44] sm:$0xf] %v4365
                  %v4367 = vld [vmem:[%s4329 + $0x48] sm:$0xf]
                  %4368 = vst [vmem:[%s4330 + $0x48] sm:$0xf] %v4367
                  %v4369 = vld [vmem:[%s4329 + $0x4c] sm:$0xf]
                  %4370 = vst [vmem:[%s4330 + $0x4c] sm:$0xf] %v4369
                  %v4371 = vld [vmem:[%s4329 + $0x50] sm:$0xf]
                  %4372 = vst [vmem:[%s4330 + $0x50] sm:$0xf] %v4371
                  %v4373 = vld [vmem:[%s4329 + $0x54] sm:$0xf]
                  %4374 = vst [vmem:[%s4330 + $0x54] sm:$0xf] %v4373
                  %v4375 = vld [vmem:[%s4329 + $0x58] sm:$0xf]
                  %4376 = vst [vmem:[%s4330 + $0x58] sm:$0xf] %v4375
                  %v4377 = vld [vmem:[%s4329 + $0x5c] sm:$0xf]
                  %4378 = vst [vmem:[%s4330 + $0x5c] sm:$0xf] %v4377
                  %v4379 = vld [vmem:[%s4329 + $0x60] sm:$0xf]
                  %4380 = vst [vmem:[%s4330 + $0x60] sm:$0xf] %v4379
                  %v4381 = vld [vmem:[%s4329 + $0x64] sm:$0xf]
                  %4382 = vst [vmem:[%s4330 + $0x64] sm:$0xf] %v4381
                  %v4383 = vld [vmem:[%s4329 + $0x68] sm:$0xf]
                  %4384 = vst [vmem:[%s4330 + $0x68] sm:$0xf] %v4383
                  %v4385 = vld [vmem:[%s4329 + $0x6c] sm:$0xf]
                  %4386 = vst [vmem:[%s4330 + $0x6c] sm:$0xf] %v4385
                  %v4387 = vld [vmem:[%s4329 + $0x70] sm:$0xf]
                  %4388 = vst [vmem:[%s4330 + $0x70] sm:$0xf] %v4387
                  %v4389 = vld [vmem:[%s4329 + $0x74] sm:$0xf]
                  %4390 = vst [vmem:[%s4330 + $0x74] sm:$0xf] %v4389
                  %v4391 = vld [vmem:[%s4329 + $0x78] sm:$0xf]
                  %4392 = vst [vmem:[%s4330 + $0x78] sm:$0xf] %v4391
                  %v4393 = vld [vmem:[%s4329 + $0x7c] sm:$0xf]
                  %4394 = vst [vmem:[%s4330 + $0x7c] sm:$0xf] %v4393
                  %v4395 = vld [vmem:[%s4329 + $0x80] sm:$0xf]
                  %4396 = vst [vmem:[%s4330 + $0x80] sm:$0xf] %v4395
                  %v4397 = vld [vmem:[%s4329 + $0x84] sm:$0xf]
                  %4398 = vst [vmem:[%s4330 + $0x84] sm:$0xf] %v4397
                  %v4399 = vld [vmem:[%s4329 + $0x88] sm:$0xf]
                  %4400 = vst [vmem:[%s4330 + $0x88] sm:$0xf] %v4399
                  %v4401 = vld [vmem:[%s4329 + $0x8c] sm:$0xf]
                  %4402 = vst [vmem:[%s4330 + $0x8c] sm:$0xf] %v4401
                  %v4403 = vld [vmem:[%s4329 + $0x90] sm:$0xf]
                  %4404 = vst [vmem:[%s4330 + $0x90] sm:$0xf] %v4403
                  %v4405 = vld [vmem:[%s4329 + $0x94] sm:$0xf]
                  %4406 = vst [vmem:[%s4330 + $0x94] sm:$0xf] %v4405
                  %v4407 = vld [vmem:[%s4329 + $0x98] sm:$0xf]
                  %4408 = vst [vmem:[%s4330 + $0x98] sm:$0xf] %v4407
                  %v4409 = vld [vmem:[%s4329 + $0x9c] sm:$0xf]
                  %4410 = vst [vmem:[%s4330 + $0x9c] sm:$0xf] %v4409
                  %v4411 = vld [vmem:[%s4329 + $0xa0] sm:$0xf]
                  %4412 = vst [vmem:[%s4330 + $0xa0] sm:$0xf] %v4411
                  %v4413 = vld [vmem:[%s4329 + $0xa4] sm:$0xf]
                  %4414 = vst [vmem:[%s4330 + $0xa4] sm:$0xf] %v4413
                  %v4415 = vld [vmem:[%s4329 + $0xa8] sm:$0xf]
                  %4416 = vst [vmem:[%s4330 + $0xa8] sm:$0xf] %v4415
                  %v4417 = vld [vmem:[%s4329 + $0xac] sm:$0xf]
                  %4418 = vst [vmem:[%s4330 + $0xac] sm:$0xf] %v4417
                  %v4419 = vld [vmem:[%s4329 + $0xb0] sm:$0xf]
                  %4420 = vst [vmem:[%s4330 + $0xb0] sm:$0xf] %v4419
                  %v4421 = vld [vmem:[%s4329 + $0xb4] sm:$0xf]
                  %4422 = vst [vmem:[%s4330 + $0xb4] sm:$0xf] %v4421
                  %v4423 = vld [vmem:[%s4329 + $0xb8] sm:$0xf]
                  %4424 = vst [vmem:[%s4330 + $0xb8] sm:$0xf] %v4423
                  %v4425 = vld [vmem:[%s4329 + $0xbc] sm:$0xf]
                  %4426 = vst [vmem:[%s4330 + $0xbc] sm:$0xf] %v4425
                  %v4427 = vld [vmem:[%s4329 + $0xc0] sm:$0xf]
                  %4428 = vst [vmem:[%s4330 + $0xc0] sm:$0xf] %v4427
                  %v4429 = vld [vmem:[%s4329 + $0xc4] sm:$0xf]
                  %4430 = vst [vmem:[%s4330 + $0xc4] sm:$0xf] %v4429
                  %v4431 = vld [vmem:[%s4329 + $0xc8] sm:$0xf]
                  %4432 = vst [vmem:[%s4330 + $0xc8] sm:$0xf] %v4431
                  %v4433 = vld [vmem:[%s4329 + $0xcc] sm:$0xf]
                  %4434 = vst [vmem:[%s4330 + $0xcc] sm:$0xf] %v4433
                  %v4435 = vld [vmem:[%s4329 + $0xd0] sm:$0xf]
                  %4436 = vst [vmem:[%s4330 + $0xd0] sm:$0xf] %v4435
                  %v4437 = vld [vmem:[%s4329 + $0xd4] sm:$0xf]
                  %4438 = vst [vmem:[%s4330 + $0xd4] sm:$0xf] %v4437
                  %v4439 = vld [vmem:[%s4329 + $0xd8] sm:$0xf]
                  %4440 = vst [vmem:[%s4330 + $0xd8] sm:$0xf] %v4439
                  %v4441 = vld [vmem:[%s4329 + $0xdc] sm:$0xf]
                  %4442 = vst [vmem:[%s4330 + $0xdc] sm:$0xf] %v4441
                  %v4443 = vld [vmem:[%s4329 + $0xe0] sm:$0xf]
                  %4444 = vst [vmem:[%s4330 + $0xe0] sm:$0xf] %v4443
                  %v4445 = vld [vmem:[%s4329 + $0xe4] sm:$0xf]
                  %4446 = vst [vmem:[%s4330 + $0xe4] sm:$0xf] %v4445
                  %v4447 = vld [vmem:[%s4329 + $0xe8] sm:$0xf]
                  %4448 = vst [vmem:[%s4330 + $0xe8] sm:$0xf] %v4447
                  %v4449 = vld [vmem:[%s4329 + $0xec] sm:$0xf]
                  %4450 = vst [vmem:[%s4330 + $0xec] sm:$0xf] %v4449
                  %v4451 = vld [vmem:[%s4329 + $0xf0] sm:$0xf]
                  %4452 = vst [vmem:[%s4330 + $0xf0] sm:$0xf] %v4451
                  %v4453 = vld [vmem:[%s4329 + $0xf4] sm:$0xf]
                  %4454 = vst [vmem:[%s4330 + $0xf4] sm:$0xf] %v4453
                  %v4455 = vld [vmem:[%s4329 + $0xf8] sm:$0xf]
                  %4456 = vst [vmem:[%s4330 + $0xf8] sm:$0xf] %v4455
                  %v4457 = vld [vmem:[%s4329 + $0xfc] sm:$0xf]
                  %4458 = vst [vmem:[%s4330 + $0xfc] sm:$0xf] %v4457
                  %s4459 = sadd.s32 1, %s4328
                  %p4460 = scmp.ge.s32.totalorder %s4459, %s4321
                  %s4461 = scalar_select %p4460, 0, %s4459
                  %s4462 = smul.u32 %s4461, 256
                  %s4463 = smul.u32 %s4461, 256
                  %s4464 = scalar_lea.vmem %s4128, %s4462 [#allocation2]
                  %s4465 = scalar_lea.vmem %s4139, %s4463
                $region71: #{forward.5} parent=65 // loop_footer
                  %s4325 = sadd.s32 %s4323, 1
                $region72: #{forward.5} parent=65 // loop_footer_branch
                  %4322 = sbr.rel target = $region68
                $region73: #{forward.5} parent=65 // loop_exit
                  _
                %s4466 = sshrl.u32 %s4135, 6
                %s4467 = sand.u32 %s4135, 63
                %s4468 = smul.u32 %s4466, 64
                %s4469 = smul.u32 4, %s4468
                %s4470 = scalar_lea.vmem %s4128, %s4469 [#allocation2]
                %s4471 = smul.u32 4, %s4468
                %s4472 = scalar_lea.vmem %s4139, %s4471
                // While loop
                $region74: #{forward.5} parent=65 // loop_pre_header
                  _
                $region75: #{forward.5} parent=65 // loop_header
                  %s4474 = sphi 0, %s4476
                  %p4475 = scmp.ge.s32.totalorder %s4474, %s4467
                  %s4479 = sphi 0, %s4486
                  %s4480 = sphi %s4470, %s4489
                  %s4481 = sphi %s4472, %s4490
                $region76: #{forward.5} parent=65 // loop_header_branch
                  %4478 = sbr.rel (%p4475) target = $region80
                $region77: #{forward.5} parent=65 // loop_body
                  %v4482 = vld [vmem:[%s4480] sm:$0xf]
                  %4483 = vst [vmem:[%s4481] sm:$0xf] %v4482
                  %s4484 = sadd.s32 1, %s4479
                  %p4485 = scmp.ge.s32.totalorder %s4484, %s4467
                  %s4486 = scalar_select %p4485, 0, %s4484
                  %s4487 = smul.u32 %s4486, 4
                  %s4488 = smul.u32 %s4486, 4
                  %s4489 = scalar_lea.vmem %s4470, %s4487 [#allocation2]
                  %s4490 = scalar_lea.vmem %s4472, %s4488
                $region78: #{forward.5} parent=65 // loop_footer
                  %s4476 = sadd.s32 %s4474, 1
                $region79: #{forward.5} parent=65 // loop_footer_branch
                  %4473 = sbr.rel target = $region75
                $region80: #{forward.5} parent=65 // loop_exit
                  _
              $region66: #{forward.5} parent=43 // pred_fallthru
                _
            $region44: #{forward.5} parent=39 // pred_fallthru
              _
            // Predicated region
            $region45: #{forward.5} parent=39 // pred_check
              _
            $region46: #{forward.5} parent=39 // pred_check_branch
              %4146 = sbr.rel (0) target = $region48
            $region47: #{forward.5} parent=39 // pred_region
              %s4148 = sshrl.u32 %s4135, 6
              // While loop
              $region49: #{forward.5} parent=47 // loop_pre_header
                _
              $region50: #{forward.5} parent=47 // loop_header
                %s4150 = sphi 0, %s4152
                %p4151 = scmp.ge.s32.totalorder %s4150, %s4148
                %s4155 = sphi 0, %s4288
                %s4156 = sphi %s4128, %s4291
                %s4157 = sphi %s4139, %s4292
              $region51: #{forward.5} parent=47 // loop_header_branch
                %4154 = sbr.rel (%p4151) target = $region55
              $region52: #{forward.5} parent=47 // loop_body
                %v4158 = vld [vmem:[%s4156] sm:$0xf]
                %4159 = vst [vmem:[%s4157] sm:$0xf] %v4158
                %v4160 = vld [vmem:[%s4156 + $0x4] sm:$0xf]
                %4161 = vst [vmem:[%s4157 + $0x4] sm:$0xf] %v4160
                %v4162 = vld [vmem:[%s4156 + $0x8] sm:$0xf]
                %4163 = vst [vmem:[%s4157 + $0x8] sm:$0xf] %v4162
                %v4164 = vld [vmem:[%s4156 + $0xc] sm:$0xf]
                %4165 = vst [vmem:[%s4157 + $0xc] sm:$0xf] %v4164
                %v4166 = vld [vmem:[%s4156 + $0x10] sm:$0xf]
                %4167 = vst [vmem:[%s4157 + $0x10] sm:$0xf] %v4166
                %v4168 = vld [vmem:[%s4156 + $0x14] sm:$0xf]
                %4169 = vst [vmem:[%s4157 + $0x14] sm:$0xf] %v4168
                %v4170 = vld [vmem:[%s4156 + $0x18] sm:$0xf]
                %4171 = vst [vmem:[%s4157 + $0x18] sm:$0xf] %v4170
                %v4172 = vld [vmem:[%s4156 + $0x1c] sm:$0xf]
                %4173 = vst [vmem:[%s4157 + $0x1c] sm:$0xf] %v4172
                %v4174 = vld [vmem:[%s4156 + $0x20] sm:$0xf]
                %4175 = vst [vmem:[%s4157 + $0x20] sm:$0xf] %v4174
                %v4176 = vld [vmem:[%s4156 + $0x24] sm:$0xf]
                %4177 = vst [vmem:[%s4157 + $0x24] sm:$0xf] %v4176
                %v4178 = vld [vmem:[%s4156 + $0x28] sm:$0xf]
                %4179 = vst [vmem:[%s4157 + $0x28] sm:$0xf] %v4178
                %v4180 = vld [vmem:[%s4156 + $0x2c] sm:$0xf]
                %4181 = vst [vmem:[%s4157 + $0x2c] sm:$0xf] %v4180
                %v4182 = vld [vmem:[%s4156 + $0x30] sm:$0xf]
                %4183 = vst [vmem:[%s4157 + $0x30] sm:$0xf] %v4182
                %v4184 = vld [vmem:[%s4156 + $0x34] sm:$0xf]
                %4185 = vst [vmem:[%s4157 + $0x34] sm:$0xf] %v4184
                %v4186 = vld [vmem:[%s4156 + $0x38] sm:$0xf]
                %4187 = vst [vmem:[%s4157 + $0x38] sm:$0xf] %v4186
                %v4188 = vld [vmem:[%s4156 + $0x3c] sm:$0xf]
                %4189 = vst [vmem:[%s4157 + $0x3c] sm:$0xf] %v4188
                %v4190 = vld [vmem:[%s4156 + $0x40] sm:$0xf]
                %4191 = vst [vmem:[%s4157 + $0x40] sm:$0xf] %v4190
                %v4192 = vld [vmem:[%s4156 + $0x44] sm:$0xf]
                %4193 = vst [vmem:[%s4157 + $0x44] sm:$0xf] %v4192
                %v4194 = vld [vmem:[%s4156 + $0x48] sm:$0xf]
                %4195 = vst [vmem:[%s4157 + $0x48] sm:$0xf] %v4194
                %v4196 = vld [vmem:[%s4156 + $0x4c] sm:$0xf]
                %4197 = vst [vmem:[%s4157 + $0x4c] sm:$0xf] %v4196
                %v4198 = vld [vmem:[%s4156 + $0x50] sm:$0xf]
                %4199 = vst [vmem:[%s4157 + $0x50] sm:$0xf] %v4198
                %v4200 = vld [vmem:[%s4156 + $0x54] sm:$0xf]
                %4201 = vst [vmem:[%s4157 + $0x54] sm:$0xf] %v4200
                %v4202 = vld [vmem:[%s4156 + $0x58] sm:$0xf]
                %4203 = vst [vmem:[%s4157 + $0x58] sm:$0xf] %v4202
                %v4204 = vld [vmem:[%s4156 + $0x5c] sm:$0xf]
                %4205 = vst [vmem:[%s4157 + $0x5c] sm:$0xf] %v4204
                %v4206 = vld [vmem:[%s4156 + $0x60] sm:$0xf]
                %4207 = vst [vmem:[%s4157 + $0x60] sm:$0xf] %v4206
                %v4208 = vld [vmem:[%s4156 + $0x64] sm:$0xf]
                %4209 = vst [vmem:[%s4157 + $0x64] sm:$0xf] %v4208
                %v4210 = vld [vmem:[%s4156 + $0x68] sm:$0xf]
                %4211 = vst [vmem:[%s4157 + $0x68] sm:$0xf] %v4210
                %v4212 = vld [vmem:[%s4156 + $0x6c] sm:$0xf]
                %4213 = vst [vmem:[%s4157 + $0x6c] sm:$0xf] %v4212
                %v4214 = vld [vmem:[%s4156 + $0x70] sm:$0xf]
                %4215 = vst [vmem:[%s4157 + $0x70] sm:$0xf] %v4214
                %v4216 = vld [vmem:[%s4156 + $0x74] sm:$0xf]
                %4217 = vst [vmem:[%s4157 + $0x74] sm:$0xf] %v4216
                %v4218 = vld [vmem:[%s4156 + $0x78] sm:$0xf]
                %4219 = vst [vmem:[%s4157 + $0x78] sm:$0xf] %v4218
                %v4220 = vld [vmem:[%s4156 + $0x7c] sm:$0xf]
                %4221 = vst [vmem:[%s4157 + $0x7c] sm:$0xf] %v4220
                %v4222 = vld [vmem:[%s4156 + $0x80] sm:$0xf]
                %4223 = vst [vmem:[%s4157 + $0x80] sm:$0xf] %v4222
                %v4224 = vld [vmem:[%s4156 + $0x84] sm:$0xf]
                %4225 = vst [vmem:[%s4157 + $0x84] sm:$0xf] %v4224
                %v4226 = vld [vmem:[%s4156 + $0x88] sm:$0xf]
                %4227 = vst [vmem:[%s4157 + $0x88] sm:$0xf] %v4226
                %v4228 = vld [vmem:[%s4156 + $0x8c] sm:$0xf]
                %4229 = vst [vmem:[%s4157 + $0x8c] sm:$0xf] %v4228
                %v4230 = vld [vmem:[%s4156 + $0x90] sm:$0xf]
                %4231 = vst [vmem:[%s4157 + $0x90] sm:$0xf] %v4230
                %v4232 = vld [vmem:[%s4156 + $0x94] sm:$0xf]
                %4233 = vst [vmem:[%s4157 + $0x94] sm:$0xf] %v4232
                %v4234 = vld [vmem:[%s4156 + $0x98] sm:$0xf]
                %4235 = vst [vmem:[%s4157 + $0x98] sm:$0xf] %v4234
                %v4236 = vld [vmem:[%s4156 + $0x9c] sm:$0xf]
                %4237 = vst [vmem:[%s4157 + $0x9c] sm:$0xf] %v4236
                %v4238 = vld [vmem:[%s4156 + $0xa0] sm:$0xf]
                %4239 = vst [vmem:[%s4157 + $0xa0] sm:$0xf] %v4238
                %v4240 = vld [vmem:[%s4156 + $0xa4] sm:$0xf]
                %4241 = vst [vmem:[%s4157 + $0xa4] sm:$0xf] %v4240
                %v4242 = vld [vmem:[%s4156 + $0xa8] sm:$0xf]
                %4243 = vst [vmem:[%s4157 + $0xa8] sm:$0xf] %v4242
                %v4244 = vld [vmem:[%s4156 + $0xac] sm:$0xf]
                %4245 = vst [vmem:[%s4157 + $0xac] sm:$0xf] %v4244
                %v4246 = vld [vmem:[%s4156 + $0xb0] sm:$0xf]
                %4247 = vst [vmem:[%s4157 + $0xb0] sm:$0xf] %v4246
                %v4248 = vld [vmem:[%s4156 + $0xb4] sm:$0xf]
                %4249 = vst [vmem:[%s4157 + $0xb4] sm:$0xf] %v4248
                %v4250 = vld [vmem:[%s4156 + $0xb8] sm:$0xf]
                %4251 = vst [vmem:[%s4157 + $0xb8] sm:$0xf] %v4250
                %v4252 = vld [vmem:[%s4156 + $0xbc] sm:$0xf]
                %4253 = vst [vmem:[%s4157 + $0xbc] sm:$0xf] %v4252
                %v4254 = vld [vmem:[%s4156 + $0xc0] sm:$0xf]
                %4255 = vst [vmem:[%s4157 + $0xc0] sm:$0xf] %v4254
                %v4256 = vld [vmem:[%s4156 + $0xc4] sm:$0xf]
                %4257 = vst [vmem:[%s4157 + $0xc4] sm:$0xf] %v4256
                %v4258 = vld [vmem:[%s4156 + $0xc8] sm:$0xf]
                %4259 = vst [vmem:[%s4157 + $0xc8] sm:$0xf] %v4258
                %v4260 = vld [vmem:[%s4156 + $0xcc] sm:$0xf]
                %4261 = vst [vmem:[%s4157 + $0xcc] sm:$0xf] %v4260
                %v4262 = vld [vmem:[%s4156 + $0xd0] sm:$0xf]
                %4263 = vst [vmem:[%s4157 + $0xd0] sm:$0xf] %v4262
                %v4264 = vld [vmem:[%s4156 + $0xd4] sm:$0xf]
                %4265 = vst [vmem:[%s4157 + $0xd4] sm:$0xf] %v4264
                %v4266 = vld [vmem:[%s4156 + $0xd8] sm:$0xf]
                %4267 = vst [vmem:[%s4157 + $0xd8] sm:$0xf] %v4266
                %v4268 = vld [vmem:[%s4156 + $0xdc] sm:$0xf]
                %4269 = vst [vmem:[%s4157 + $0xdc] sm:$0xf] %v4268
                %v4270 = vld [vmem:[%s4156 + $0xe0] sm:$0xf]
                %4271 = vst [vmem:[%s4157 + $0xe0] sm:$0xf] %v4270
                %v4272 = vld [vmem:[%s4156 + $0xe4] sm:$0xf]
                %4273 = vst [vmem:[%s4157 + $0xe4] sm:$0xf] %v4272
                %v4274 = vld [vmem:[%s4156 + $0xe8] sm:$0xf]
                %4275 = vst [vmem:[%s4157 + $0xe8] sm:$0xf] %v4274
                %v4276 = vld [vmem:[%s4156 + $0xec] sm:$0xf]
                %4277 = vst [vmem:[%s4157 + $0xec] sm:$0xf] %v4276
                %v4278 = vld [vmem:[%s4156 + $0xf0] sm:$0xf]
                %4279 = vst [vmem:[%s4157 + $0xf0] sm:$0xf] %v4278
                %v4280 = vld [vmem:[%s4156 + $0xf4] sm:$0xf]
                %4281 = vst [vmem:[%s4157 + $0xf4] sm:$0xf] %v4280
                %v4282 = vld [vmem:[%s4156 + $0xf8] sm:$0xf]
                %4283 = vst [vmem:[%s4157 + $0xf8] sm:$0xf] %v4282
                %v4284 = vld [vmem:[%s4156 + $0xfc] sm:$0xf]
                %4285 = vst [vmem:[%s4157 + $0xfc] sm:$0xf] %v4284
                %s4286 = sadd.s32 1, %s4155
                %p4287 = scmp.ge.s32.totalorder %s4286, %s4148
                %s4288 = scalar_select %p4287, 0, %s4286
                %s4289 = smul.u32 %s4288, 256
                %s4290 = smul.u32 %s4288, 256
                %s4291 = scalar_lea.vmem %s4128, %s4289 [#allocation2]
                %s4292 = scalar_lea.vmem %s4139, %s4290
              $region53: #{forward.5} parent=47 // loop_footer
                %s4152 = sadd.s32 %s4150, 1
              $region54: #{forward.5} parent=47 // loop_footer_branch
                %4149 = sbr.rel target = $region50
              $region55: #{forward.5} parent=47 // loop_exit
                _
              %s4293 = sshrl.u32 %s4135, 6
              %s4294 = sand.u32 %s4135, 63
              %s4295 = smul.u32 %s4293, 64
              %s4296 = smul.u32 4, %s4295
              %s4297 = scalar_lea.vmem %s4128, %s4296 [#allocation2]
              %s4298 = smul.u32 4, %s4295
              %s4299 = scalar_lea.vmem %s4139, %s4298
              // While loop
              $region56: #{forward.5} parent=47 // loop_pre_header
                _
              $region57: #{forward.5} parent=47 // loop_header
                %s4301 = sphi 0, %s4303
                %p4302 = scmp.ge.s32.totalorder %s4301, %s4294
                %s4306 = sphi 0, %s4313
                %s4307 = sphi %s4297, %s4316
                %s4308 = sphi %s4299, %s4317
              $region58: #{forward.5} parent=47 // loop_header_branch
                %4305 = sbr.rel (%p4302) target = $region62
              $region59: #{forward.5} parent=47 // loop_body
                %v4309 = vld [vmem:[%s4307] sm:$0xf]
                %4310 = vst [vmem:[%s4308] sm:$0xf] %v4309
                %s4311 = sadd.s32 1, %s4306
                %p4312 = scmp.ge.s32.totalorder %s4311, %s4294
                %s4313 = scalar_select %p4312, 0, %s4311
                %s4314 = smul.u32 %s4313, 4
                %s4315 = smul.u32 %s4313, 4
                %s4316 = scalar_lea.vmem %s4297, %s4314 [#allocation2]
                %s4317 = scalar_lea.vmem %s4299, %s4315
              $region60: #{forward.5} parent=47 // loop_footer
                %s4303 = sadd.s32 %s4301, 1
              $region61: #{forward.5} parent=47 // loop_footer_branch
                %4300 = sbr.rel target = $region57
              $region62: #{forward.5} parent=47 // loop_exit
                _
            $region48: #{forward.5} parent=39 // pred_fallthru
              _
          $region40: #{forward.5} parent=35 // pred_fallthru
            _
          %4491 = vnop
        $region36: #{forward.5} parent=31 // pred_fallthru
          _
      $region32: #{forward.5} parent=5 // pred_fallthru
        _
      %p4492 = scmp.le.s32.totalorder 2, %s9
      // Predicated region
      $region81: #{forward.5} parent=5 // pred_check
        %p4493 = pneg %p4492
      $region82: #{forward.5} parent=5 // pred_check_branch
        %4495 = sbr.rel (%p4493) target = $region84
      $region83: #{forward.5} parent=5 // pred_region
        %s4496 = ssub.s32 %s9, 2
        // Predicated region
        $region85: #{forward.5} parent=83 // pred_check
          %p4497 = pneg %p106
        $region86: #{forward.5} parent=83 // pred_check_branch
          %4499 = sbr.rel (%p4497) target = $region88
        $region87: #{forward.5} parent=83 // pred_region
          %s4500 = sand.u32 %s91, 1
          %s4501 = sand.u32 %s91, 1
          %s4502 = smul.addr %s4501, 1024
          %s4503 = scalar_lea.vmem [#allocation2], %s4502
        $region88: #{forward.5} parent=83 // pred_fallthru
          _
      $region84: #{forward.5} parent=5 // pred_fallthru
        _
    $region6: #{forward.5} parent=1 // loop_footer
      %s13 = sadd.s32 1, %s9
    $region7: #{forward.5} parent=1 // loop_footer_branch
      %8 = sbr.rel target = $region3
    $region8: #{forward.5} parent=1 // loop_exit
      _

// kernel: forward.6
$region0: #{forward.6}
  #allocation0 [shape = 'u32[]', space=smem, size = 0x4, offset = 0x4, fixed_abs, tag = 'smem constant byte address 0x4 - core index']
  #allocation1 [shape = 'u32[144,128]{1,0:T(1,128)}', space=vmem, size = 0x12000, scoped, tag = 'internal scratch']
  %s0 = inlined_call_operand.vmem [shape: bf16[256,864], index: 0, kind: input, shape index: {}]
  %s1 = inlined_call_operand.vmem [shape: bf16[864,64], index: 1, kind: input, shape index: {}]
  %s2 = inlined_call_operand.vmem [shape: f32[1,64], index: 2, kind: input, shape index: {}]
  %s3 = inlined_call_operand.vmem [shape: bf16[256,64], index: 3, kind: output, shape index: {}]
  %s4 = sld [smem:[#allocation0]]
  $region22: #{forward.6} parent=0
    _
  %s6 = ssub.s32 1, %s4
  %s7 = scalar_select 0, %s6, %s4
  // Predicated region
  $region2: #{forward.6} parent=0 // pred_check
    _
  $region3: #{forward.6} parent=0 // pred_check_branch
    %9 = sbr.rel (0) target = $region5
  $region4: #{forward.6} parent=0 // pred_region
    _
  $region5: #{forward.6} parent=0 // pred_fallthru
    _
  // Predicated region
  $region6: #{forward.6} parent=0 // pred_check
    _
  $region7: #{forward.6} parent=0 // pred_check_branch
    %11 = sbr.rel (0) target = $region9
  $region8: #{forward.6} parent=0 // pred_region
    _
  $region9: #{forward.6} parent=0 // pred_fallthru
    _
  // Predicated region
  $region10: #{forward.6} parent=0 // pred_check
    _
  $region11: #{forward.6} parent=0 // pred_check_branch
    %13 = sbr.rel (0) target = $region13
  $region12: #{forward.6} parent=0 // pred_region
    _
  $region13: #{forward.6} parent=0 // pred_fallthru
    _
  %v15 = vld [vmem:[%s0] sm:$0xff]
  %v16 = vld [vmem:[%s0 + $0x8] sm:$0xff]
  %v17 = vld [vmem:[%s0 + $0x10] sm:$0xff]
  %v18 = vld [vmem:[%s0 + $0x18] sm:$0xf]
  %v19 = vld [vmem:[%s0 + $0x1c] sm:$0xff]
  %v20 = vld [vmem:[%s0 + $0x24] sm:$0xff]
  %v21 = vld [vmem:[%s0 + $0x2c] sm:$0xff]
  %v22 = vld [vmem:[%s0 + $0x34] sm:$0xf]
  %v23 = vld [vmem:[%s0 + $0x38] sm:$0xff]
  %v24 = vld [vmem:[%s0 + $0x40] sm:$0xff]
  %v25 = vld [vmem:[%s0 + $0x48] sm:$0xff]
  %v26 = vld [vmem:[%s0 + $0x50] sm:$0xf]
  %v27 = vld [vmem:[%s0 + $0x54] sm:$0xff]
  %v28 = vld [vmem:[%s0 + $0x5c] sm:$0xff]
  %v29 = vld [vmem:[%s0 + $0x64] sm:$0xff]
  %v30 = vld [vmem:[%s0 + $0x6c] sm:$0xf]
  %v31 = vld [vmem:[%s0 + $0x70] sm:$0xff]
  %v32 = vld [vmem:[%s0 + $0x78] sm:$0xff]
  %v33 = vld [vmem:[%s0 + $0x80] sm:$0xff]
  %v34 = vld [vmem:[%s0 + $0x88] sm:$0xf]
  %v35 = vld [vmem:[%s0 + $0x8c] sm:$0xff]
  %v36 = vld [vmem:[%s0 + $0x94] sm:$0xff]
  %v37 = vld [vmem:[%s0 + $0x9c] sm:$0xff]
  %v38 = vld [vmem:[%s0 + $0xa4] sm:$0xf]
  %v39 = vld [vmem:[%s0 + $0xa8] sm:$0xff]
  %v40 = vld [vmem:[%s0 + $0xb0] sm:$0xff]
  %v41 = vld [vmem:[%s0 + $0xb8] sm:$0xff]
  %v42 = vld [vmem:[%s0 + $0xc0] sm:$0xf]
  %v43 = vld [vmem:[%s0 + $0xc4] sm:$0xff]
  %v44 = vld [vmem:[%s0 + $0xcc] sm:$0xff]
  %v45 = vld [vmem:[%s0 + $0xd4] sm:$0xff]
  %v46 = vld [vmem:[%s0 + $0xdc] sm:$0xf]
  %v47 = vld [vmem:[%s0 + $0xe0] sm:$0xff]
  %v48 = vld [vmem:[%s0 + $0xe8] sm:$0xff]
  %v49 = vld [vmem:[%s0 + $0xf0] sm:$0xff]
  %v50 = vld [vmem:[%s0 + $0xf8] sm:$0xf]
  %v51 = vld [vmem:[%s0 + $0xfc] sm:$0xff]
  %v52 = vld [vmem:[%s0 + $0x104] sm:$0xff]
  %v53 = vld [vmem:[%s0 + $0x10c] sm:$0xff]
  %v54 = vld [vmem:[%s0 + $0x114] sm:$0xf]
  %v55 = vld [vmem:[%s0 + $0x118] sm:$0xff]
  %v56 = vld [vmem:[%s0 + $0x120] sm:$0xff]
  %v57 = vld [vmem:[%s0 + $0x128] sm:$0xff]
  %v58 = vld [vmem:[%s0 + $0x130] sm:$0xf]
  %v59 = vld [vmem:[%s0 + $0x134] sm:$0xff]
  %v60 = vld [vmem:[%s0 + $0x13c] sm:$0xff]
  %v61 = vld [vmem:[%s0 + $0x144] sm:$0xff]
  %v62 = vld [vmem:[%s0 + $0x14c] sm:$0xf]
  %v63 = vld [vmem:[%s0 + $0x150] sm:$0xff]
  %v64 = vld [vmem:[%s0 + $0x158] sm:$0xff]
  %v65 = vld [vmem:[%s0 + $0x160] sm:$0xff]
  %v66 = vld [vmem:[%s0 + $0x168] sm:$0xf]
  %v67 = vld [vmem:[%s0 + $0x16c] sm:$0xff]
  %v68 = vld [vmem:[%s0 + $0x174] sm:$0xff]
  %v69 = vld [vmem:[%s0 + $0x17c] sm:$0xff]
  %v70 = vld [vmem:[%s0 + $0x184] sm:$0xf]
  %v71 = vld [vmem:[%s0 + $0x188] sm:$0xff]
  %v72 = vld [vmem:[%s0 + $0x190] sm:$0xff]
  %v73 = vld [vmem:[%s0 + $0x198] sm:$0xff]
  %v74 = vld [vmem:[%s0 + $0x1a0] sm:$0xf]
  %v75 = vld [vmem:[%s0 + $0x1a4] sm:$0xff]
  %v76 = vld [vmem:[%s0 + $0x1ac] sm:$0xff]
  %v77 = vld [vmem:[%s0 + $0x1b4] sm:$0xff]
  %v78 = vld [vmem:[%s0 + $0x1bc] sm:$0xf]
  %v79 = vld [vmem:[%s0 + $0x1c0] sm:$0xff]
  %v80 = vld [vmem:[%s0 + $0x1c8] sm:$0xff]
  %v81 = vld [vmem:[%s0 + $0x1d0] sm:$0xff]
  %v82 = vld [vmem:[%s0 + $0x1d8] sm:$0xf]
  %v83 = vld [vmem:[%s0 + $0x1dc] sm:$0xff]
  %v84 = vld [vmem:[%s0 + $0x1e4] sm:$0xff]
  %v85 = vld [vmem:[%s0 + $0x1ec] sm:$0xff]
  %v86 = vld [vmem:[%s0 + $0x1f4] sm:$0xf]
  %v87 = vld [vmem:[%s0 + $0x1f8] sm:$0xff]
  %v88 = vld [vmem:[%s0 + $0x200] sm:$0xff]
  %v89 = vld [vmem:[%s0 + $0x208] sm:$0xff]
  %v90 = vld [vmem:[%s0 + $0x210] sm:$0xf]
  %v91 = vld [vmem:[%s0 + $0x214] sm:$0xff]
  %v92 = vld [vmem:[%s0 + $0x21c] sm:$0xff]
  %v93 = vld [vmem:[%s0 + $0x224] sm:$0xff]
  %v94 = vld [vmem:[%s0 + $0x22c] sm:$0xf]
  %v95 = vld [vmem:[%s0 + $0x230] sm:$0xff]
  %v96 = vld [vmem:[%s0 + $0x238] sm:$0xff]
  %v97 = vld [vmem:[%s0 + $0x240] sm:$0xff]
  %v98 = vld [vmem:[%s0 + $0x248] sm:$0xf]
  %v99 = vld [vmem:[%s0 + $0x24c] sm:$0xff]
  %v100 = vld [vmem:[%s0 + $0x254] sm:$0xff]
  %v101 = vld [vmem:[%s0 + $0x25c] sm:$0xff]
  %v102 = vld [vmem:[%s0 + $0x264] sm:$0xf]
  %v103 = vld [vmem:[%s0 + $0x268] sm:$0xff]
  %v104 = vld [vmem:[%s0 + $0x270] sm:$0xff]
  %v105 = vld [vmem:[%s0 + $0x278] sm:$0xff]
  %v106 = vld [vmem:[%s0 + $0x280] sm:$0xf]
  %v107 = vld [vmem:[%s0 + $0x284] sm:$0xff]
  %v108 = vld [vmem:[%s0 + $0x28c] sm:$0xff]
  %v109 = vld [vmem:[%s0 + $0x294] sm:$0xff]
  %v110 = vld [vmem:[%s0 + $0x29c] sm:$0xf]
  %v111 = vld [vmem:[%s0 + $0x2a0] sm:$0xff]
  %v112 = vld [vmem:[%s0 + $0x2a8] sm:$0xff]
  %v113 = vld [vmem:[%s0 + $0x2b0] sm:$0xff]
  %v114 = vld [vmem:[%s0 + $0x2b8] sm:$0xf]
  %v115 = vld [vmem:[%s0 + $0x2bc] sm:$0xff]
  %v116 = vld [vmem:[%s0 + $0x2c4] sm:$0xff]
  %v117 = vld [vmem:[%s0 + $0x2cc] sm:$0xff]
  %v118 = vld [vmem:[%s0 + $0x2d4] sm:$0xf]
  %v119 = vld [vmem:[%s0 + $0x2d8] sm:$0xff]
  %v120 = vld [vmem:[%s0 + $0x2e0] sm:$0xff]
  %v121 = vld [vmem:[%s0 + $0x2e8] sm:$0xff]
  %v122 = vld [vmem:[%s0 + $0x2f0] sm:$0xf]
  %v123 = vld [vmem:[%s0 + $0x2f4] sm:$0xff]
  %v124 = vld [vmem:[%s0 + $0x2fc] sm:$0xff]
  %v125 = vld [vmem:[%s0 + $0x304] sm:$0xff]
  %v126 = vld [vmem:[%s0 + $0x30c] sm:$0xf]
  %v127 = vld [vmem:[%s0 + $0x310] sm:$0xff]
  %v128 = vld [vmem:[%s0 + $0x318] sm:$0xff]
  %v129 = vld [vmem:[%s0 + $0x320] sm:$0xff]
  %v130 = vld [vmem:[%s0 + $0x328] sm:$0xf]
  %v131 = vld [vmem:[%s0 + $0x32c] sm:$0xff]
  %v132 = vld [vmem:[%s0 + $0x334] sm:$0xff]
  %v133 = vld [vmem:[%s0 + $0x33c] sm:$0xff]
  %v134 = vld [vmem:[%s0 + $0x344] sm:$0xf]
  %v135 = vld [vmem:[%s0 + $0x348] sm:$0xff]
  %v136 = vld [vmem:[%s0 + $0x350] sm:$0xff]
  %v137 = vld [vmem:[%s0 + $0x358] sm:$0xff]
  %v138 = vld [vmem:[%s0 + $0x360] sm:$0xf]
  %v139 = vld [vmem:[%s0 + $0x364] sm:$0xff]
  %v140 = vld [vmem:[%s0 + $0x36c] sm:$0xff]
  %v141 = vld [vmem:[%s0 + $0x374] sm:$0xff]
  %v142 = vld [vmem:[%s0 + $0x37c] sm:$0xf]
  %v143 = vld [vmem:[%s1] sm:$0xf]
  %v144 = vld [vmem:[%s1 + $0x4] sm:$0xf]
  %v145 = vld [vmem:[%s1 + $0x8] sm:$0xf]
  %v146 = vld [vmem:[%s1 + $0xc] sm:$0xf]
  %v147 = vld [vmem:[%s1 + $0x10] sm:$0xf]
  %v148 = vld [vmem:[%s1 + $0x14] sm:$0xf]
  %v149 = vld [vmem:[%s1 + $0x18] sm:$0xf]
  %v150 = vld [vmem:[%s1 + $0x1c] sm:$0xf]
  %v151 = vld [vmem:[%s1 + $0x20] sm:$0xf]
  %v152 = vld [vmem:[%s1 + $0x24] sm:$0xf]
  %v153 = vld [vmem:[%s1 + $0x28] sm:$0xf]
  %v154 = vld [vmem:[%s1 + $0x2c] sm:$0xf]
  %v155 = vld [vmem:[%s1 + $0x30] sm:$0xf]
  %v156 = vld [vmem:[%s1 + $0x34] sm:$0xf]
  %v157 = vld [vmem:[%s1 + $0x38] sm:$0xf]
  %v158 = vld [vmem:[%s1 + $0x3c] sm:$0xf]
  %v159 = vld [vmem:[%s1 + $0x40] sm:$0xf]
  %v160 = vld [vmem:[%s1 + $0x44] sm:$0xf]
  %v161 = vld [vmem:[%s1 + $0x48] sm:$0xf]
  %v162 = vld [vmem:[%s1 + $0x4c] sm:$0xf]
  %v163 = vld [vmem:[%s1 + $0x50] sm:$0xf]
  %v164 = vld [vmem:[%s1 + $0x54] sm:$0xf]
  %v165 = vld [vmem:[%s1 + $0x58] sm:$0xf]
  %v166 = vld [vmem:[%s1 + $0x5c] sm:$0xf]
  %v167 = vld [vmem:[%s1 + $0x60] sm:$0xf]
  %v168 = vld [vmem:[%s1 + $0x64] sm:$0xf]
  %v169 = vld [vmem:[%s1 + $0x68] sm:$0xf]
  %v170 = vld [vmem:[%s1 + $0x6c] sm:$0xf]
  %v171 = vld [vmem:[%s1 + $0x70] sm:$0xf]
  %v172 = vld [vmem:[%s1 + $0x74] sm:$0xf]
  %v173 = vld [vmem:[%s1 + $0x78] sm:$0xf]
  %v174 = vld [vmem:[%s1 + $0x7c] sm:$0xf]
  %v175 = vld [vmem:[%s1 + $0x80] sm:$0xf]
  %v176 = vld [vmem:[%s1 + $0x84] sm:$0xf]
  %v177 = vld [vmem:[%s1 + $0x88] sm:$0xf]
  %v178 = vld [vmem:[%s1 + $0x8c] sm:$0xf]
  %v179 = vld [vmem:[%s1 + $0x90] sm:$0xf]
  %v180 = vld [vmem:[%s1 + $0x94] sm:$0xf]
  %v181 = vld [vmem:[%s1 + $0x98] sm:$0xf]
  %v182 = vld [vmem:[%s1 + $0x9c] sm:$0xf]
  %v183 = vld [vmem:[%s1 + $0xa0] sm:$0xf]
  %v184 = vld [vmem:[%s1 + $0xa4] sm:$0xf]
  %v185 = vld [vmem:[%s1 + $0xa8] sm:$0xf]
  %v186 = vld [vmem:[%s1 + $0xac] sm:$0xf]
  %v187 = vld [vmem:[%s1 + $0xb0] sm:$0xf]
  %v188 = vld [vmem:[%s1 + $0xb4] sm:$0xf]
  %v189 = vld [vmem:[%s1 + $0xb8] sm:$0xf]
  %v190 = vld [vmem:[%s1 + $0xbc] sm:$0xf]
  %v191 = vld [vmem:[%s1 + $0xc0] sm:$0xf]
  %v192 = vld [vmem:[%s1 + $0xc4] sm:$0xf]
  %v193 = vld [vmem:[%s1 + $0xc8] sm:$0xf]
  %v194 = vld [vmem:[%s1 + $0xcc] sm:$0xf]
  %v195 = vld [vmem:[%s1 + $0xd0] sm:$0xf]
  %v196 = vld [vmem:[%s1 + $0xd4] sm:$0xf]
  %v197 = vld [vmem:[%s1 + $0xd8] sm:$0xf]
  %v198 = vld [vmem:[%s1 + $0xdc] sm:$0xf]
  %v199 = vld [vmem:[%s1 + $0xe0] sm:$0xf]
  %v200 = vld [vmem:[%s1 + $0xe4] sm:$0xf]
  %v201 = vld [vmem:[%s1 + $0xe8] sm:$0xf]
  %v202 = vld [vmem:[%s1 + $0xec] sm:$0xf]
  %v203 = vld [vmem:[%s1 + $0xf0] sm:$0xf]
  %v204 = vld [vmem:[%s1 + $0xf4] sm:$0xf]
  %v205 = vld [vmem:[%s1 + $0xf8] sm:$0xf]
  %v206 = vld [vmem:[%s1 + $0xfc] sm:$0xf]
  %v207 = vld [vmem:[%s1 + $0x100] sm:$0xf]
  %v208 = vld [vmem:[%s1 + $0x104] sm:$0xf]
  %v209 = vld [vmem:[%s1 + $0x108] sm:$0xf]
  %v210 = vld [vmem:[%s1 + $0x10c] sm:$0xf]
  %v211 = vld [vmem:[%s1 + $0x110] sm:$0xf]
  %v212 = vld [vmem:[%s1 + $0x114] sm:$0xf]
  %v213 = vld [vmem:[%s1 + $0x118] sm:$0xf]
  %v214 = vld [vmem:[%s1 + $0x11c] sm:$0xf]
  %v215 = vld [vmem:[%s1 + $0x120] sm:$0xf]
  %v216 = vld [vmem:[%s1 + $0x124] sm:$0xf]
  %v217 = vld [vmem:[%s1 + $0x128] sm:$0xf]
  %v218 = vld [vmem:[%s1 + $0x12c] sm:$0xf]
  %v219 = vld [vmem:[%s1 + $0x130] sm:$0xf]
  %v220 = vld [vmem:[%s1 + $0x134] sm:$0xf]
  %v221 = vld [vmem:[%s1 + $0x138] sm:$0xf]
  %v222 = vld [vmem:[%s1 + $0x13c] sm:$0xf]
  %v223 = vld [vmem:[%s1 + $0x140] sm:$0xf]
  %v224 = vld [vmem:[%s1 + $0x144] sm:$0xf]
  %v225 = vld [vmem:[%s1 + $0x148] sm:$0xf]
  %v226 = vld [vmem:[%s1 + $0x14c] sm:$0xf]
  %v227 = vld [vmem:[%s1 + $0x150] sm:$0xf]
  %v228 = vld [vmem:[%s1 + $0x154] sm:$0xf]
  %v229 = vld [vmem:[%s1 + $0x158] sm:$0xf]
  %v230 = vld [vmem:[%s1 + $0x15c] sm:$0xf]
  %v231 = vld [vmem:[%s1 + $0x160] sm:$0xf]
  %v232 = vld [vmem:[%s1 + $0x164] sm:$0xf]
  %v233 = vld [vmem:[%s1 + $0x168] sm:$0xf]
  %v234 = vld [vmem:[%s1 + $0x16c] sm:$0xf]
  %v235 = vld [vmem:[%s1 + $0x170] sm:$0xf]
  %v236 = vld [vmem:[%s1 + $0x174] sm:$0xf]
  %v237 = vld [vmem:[%s1 + $0x178] sm:$0xf]
  %v238 = vld [vmem:[%s1 + $0x17c] sm:$0xf]
  %v239 = vld [vmem:[%s1 + $0x180] sm:$0xf]
  %v240 = vld [vmem:[%s1 + $0x184] sm:$0xf]
  %v241 = vld [vmem:[%s1 + $0x188] sm:$0xf]
  %v242 = vld [vmem:[%s1 + $0x18c] sm:$0xf]
  %v243 = vld [vmem:[%s1 + $0x190] sm:$0xf]
  %v244 = vld [vmem:[%s1 + $0x194] sm:$0xf]
  %v245 = vld [vmem:[%s1 + $0x198] sm:$0xf]
  %v246 = vld [vmem:[%s1 + $0x19c] sm:$0xf]
  %v247 = vld [vmem:[%s1 + $0x1a0] sm:$0xf]
  %v248 = vld [vmem:[%s1 + $0x1a4] sm:$0xf]
  %v249 = vld [vmem:[%s1 + $0x1a8] sm:$0xf]
  %v250 = vld [vmem:[%s1 + $0x1ac] sm:$0xf]
  %v251 = vld [vmem:[%s2] sm:$0x1]
  %v253 = vlaneseq
  %v254 = vshrl.u32 %v253, 7
  %v255 = vsub.s32 0, %v254
  %v256 = vrot.slane %v251, %v255
  %v386 = vunpack.c.l.b16 %v15
  %v387 = vunpack.c.h.b16 %v15
  %v388 = vunpack.c.l.b16 %v16
  %v389 = vunpack.c.h.b16 %v16
  %v390 = vunpack.c.l.b16 %v17
  %v391 = vunpack.c.h.b16 %v17
  %v392 = vunpack.c.l.b16 %v18
  %v393 = vunpack.c.l.b16 %v19
  %v394 = vunpack.c.h.b16 %v19
  %v395 = vunpack.c.l.b16 %v20
  %v396 = vunpack.c.h.b16 %v20
  %v397 = vunpack.c.l.b16 %v21
  %v398 = vunpack.c.h.b16 %v21
  %v399 = vunpack.c.l.b16 %v22
  %v400 = vunpack.c.l.b16 %v23
  %v401 = vunpack.c.h.b16 %v23
  %v402 = vunpack.c.l.b16 %v24
  %v403 = vunpack.c.h.b16 %v24
  %v404 = vunpack.c.l.b16 %v25
  %v405 = vunpack.c.h.b16 %v25
  %v406 = vunpack.c.l.b16 %v26
  %v407 = vunpack.c.l.b16 %v27
  %v408 = vunpack.c.h.b16 %v27
  %v409 = vunpack.c.l.b16 %v28
  %v410 = vunpack.c.h.b16 %v28
  %v411 = vunpack.c.l.b16 %v29
  %v412 = vunpack.c.h.b16 %v29
  %v413 = vunpack.c.l.b16 %v30
  %v414 = vunpack.c.l.b16 %v31
  %v415 = vunpack.c.h.b16 %v31
  %v416 = vunpack.c.l.b16 %v32
  %v417 = vunpack.c.h.b16 %v32
  %v418 = vunpack.c.l.b16 %v33
  %v419 = vunpack.c.h.b16 %v33
  %v420 = vunpack.c.l.b16 %v34
  %v421 = vunpack.c.l.b16 %v35
  %v422 = vunpack.c.h.b16 %v35
  %v423 = vunpack.c.l.b16 %v36
  %v424 = vunpack.c.h.b16 %v36
  %v425 = vunpack.c.l.b16 %v37
  %v426 = vunpack.c.h.b16 %v37
  %v427 = vunpack.c.l.b16 %v38
  %v428 = vunpack.c.l.b16 %v39
  %v429 = vunpack.c.h.b16 %v39
  %v430 = vunpack.c.l.b16 %v40
  %v431 = vunpack.c.h.b16 %v40
  %v432 = vunpack.c.l.b16 %v41
  %v433 = vunpack.c.h.b16 %v41
  %v434 = vunpack.c.l.b16 %v42
  %v435 = vunpack.c.l.b16 %v43
  %v436 = vunpack.c.h.b16 %v43
  %v437 = vunpack.c.l.b16 %v44
  %v438 = vunpack.c.h.b16 %v44
  %v439 = vunpack.c.l.b16 %v45
  %v440 = vunpack.c.h.b16 %v45
  %v441 = vunpack.c.l.b16 %v46
  %v442 = vunpack.c.l.b16 %v47
  %v443 = vunpack.c.h.b16 %v47
  %v444 = vunpack.c.l.b16 %v48
  %v445 = vunpack.c.h.b16 %v48
  %v446 = vunpack.c.l.b16 %v49
  %v447 = vunpack.c.h.b16 %v49
  %v448 = vunpack.c.l.b16 %v50
  %v449 = vunpack.c.l.b16 %v51
  %v450 = vunpack.c.h.b16 %v51
  %v451 = vunpack.c.l.b16 %v52
  %v452 = vunpack.c.h.b16 %v52
  %v453 = vunpack.c.l.b16 %v53
  %v454 = vunpack.c.h.b16 %v53
  %v455 = vunpack.c.l.b16 %v54
  %v456 = vunpack.c.l.b16 %v55
  %v457 = vunpack.c.h.b16 %v55
  %v458 = vunpack.c.l.b16 %v56
  %v459 = vunpack.c.h.b16 %v56
  %v460 = vunpack.c.l.b16 %v57
  %v461 = vunpack.c.h.b16 %v57
  %v462 = vunpack.c.l.b16 %v58
  %v463 = vunpack.c.l.b16 %v59
  %v464 = vunpack.c.h.b16 %v59
  %v465 = vunpack.c.l.b16 %v60
  %v466 = vunpack.c.h.b16 %v60
  %v467 = vunpack.c.l.b16 %v61
  %v468 = vunpack.c.h.b16 %v61
  %v469 = vunpack.c.l.b16 %v62
  %v470 = vunpack.c.l.b16 %v63
  %v471 = vunpack.c.h.b16 %v63
  %v472 = vunpack.c.l.b16 %v64
  %v473 = vunpack.c.h.b16 %v64
  %v474 = vunpack.c.l.b16 %v65
  %v475 = vunpack.c.h.b16 %v65
  %v476 = vunpack.c.l.b16 %v66
  %v477 = vunpack.c.l.b16 %v67
  %v478 = vunpack.c.h.b16 %v67
  %v479 = vunpack.c.l.b16 %v68
  %v480 = vunpack.c.h.b16 %v68
  %v481 = vunpack.c.l.b16 %v69
  %v482 = vunpack.c.h.b16 %v69
  %v483 = vunpack.c.l.b16 %v70
  %v484 = vunpack.c.l.b16 %v71
  %v485 = vunpack.c.h.b16 %v71
  %v486 = vunpack.c.l.b16 %v72
  %v487 = vunpack.c.h.b16 %v72
  %v488 = vunpack.c.l.b16 %v73
  %v489 = vunpack.c.h.b16 %v73
  %v490 = vunpack.c.l.b16 %v74
  %v491 = vunpack.c.l.b16 %v75
  %v492 = vunpack.c.h.b16 %v75
  %v493 = vunpack.c.l.b16 %v76
  %v494 = vunpack.c.h.b16 %v76
  %v495 = vunpack.c.l.b16 %v77
  %v496 = vunpack.c.h.b16 %v77
  %v497 = vunpack.c.l.b16 %v78
  %v498 = vunpack.c.l.b16 %v79
  %v499 = vunpack.c.h.b16 %v79
  %v500 = vunpack.c.l.b16 %v80
  %v501 = vunpack.c.h.b16 %v80
  %v502 = vunpack.c.l.b16 %v81
  %v503 = vunpack.c.h.b16 %v81
  %v504 = vunpack.c.l.b16 %v82
  %v505 = vunpack.c.l.b16 %v83
  %v506 = vunpack.c.h.b16 %v83
  %v507 = vunpack.c.l.b16 %v84
  %v508 = vunpack.c.h.b16 %v84
  %v509 = vunpack.c.l.b16 %v85
  %v510 = vunpack.c.h.b16 %v85
  %v511 = vunpack.c.l.b16 %v86
  %v512 = vunpack.c.l.b16 %v87
  %v513 = vunpack.c.h.b16 %v87
  %v514 = vunpack.c.l.b16 %v88
  %v515 = vunpack.c.h.b16 %v88
  %v516 = vunpack.c.l.b16 %v89
  %v517 = vunpack.c.h.b16 %v89
  %v518 = vunpack.c.l.b16 %v90
  %v519 = vunpack.c.l.b16 %v91
  %v520 = vunpack.c.h.b16 %v91
  %v521 = vunpack.c.l.b16 %v92
  %v522 = vunpack.c.h.b16 %v92
  %v523 = vunpack.c.l.b16 %v93
  %v524 = vunpack.c.h.b16 %v93
  %v525 = vunpack.c.l.b16 %v94
  %v526 = vunpack.c.l.b16 %v95
  %v527 = vunpack.c.h.b16 %v95
  %v528 = vunpack.c.l.b16 %v96
  %v529 = vunpack.c.h.b16 %v96
  %v530 = vunpack.c.l.b16 %v97
  %v531 = vunpack.c.h.b16 %v97
  %v532 = vunpack.c.l.b16 %v98
  %v533 = vunpack.c.l.b16 %v99
  %v534 = vunpack.c.h.b16 %v99
  %v535 = vunpack.c.l.b16 %v100
  %v536 = vunpack.c.h.b16 %v100
  %v537 = vunpack.c.l.b16 %v101
  %v538 = vunpack.c.h.b16 %v101
  %v539 = vunpack.c.l.b16 %v102
  %v540 = vunpack.c.l.b16 %v103
  %v541 = vunpack.c.h.b16 %v103
  %v542 = vunpack.c.l.b16 %v104
  %v543 = vunpack.c.h.b16 %v104
  %v544 = vunpack.c.l.b16 %v105
  %v545 = vunpack.c.h.b16 %v105
  %v546 = vunpack.c.l.b16 %v106
  %v547 = vunpack.c.l.b16 %v107
  %v548 = vunpack.c.h.b16 %v107
  %v549 = vunpack.c.l.b16 %v108
  %v550 = vunpack.c.h.b16 %v108
  %v551 = vunpack.c.l.b16 %v109
  %v552 = vunpack.c.h.b16 %v109
  %v553 = vunpack.c.l.b16 %v110
  %v554 = vunpack.c.l.b16 %v111
  %v555 = vunpack.c.h.b16 %v111
  %v556 = vunpack.c.l.b16 %v112
  %v557 = vunpack.c.h.b16 %v112
  %v558 = vunpack.c.l.b16 %v113
  %v559 = vunpack.c.h.b16 %v113
  %v560 = vunpack.c.l.b16 %v114
  %v561 = vunpack.c.l.b16 %v115
  %v562 = vunpack.c.h.b16 %v115
  %v563 = vunpack.c.l.b16 %v116
  %v564 = vunpack.c.h.b16 %v116
  %v565 = vunpack.c.l.b16 %v117
  %v566 = vunpack.c.h.b16 %v117
  %v567 = vunpack.c.l.b16 %v118
  %v568 = vunpack.c.l.b16 %v119
  %v569 = vunpack.c.h.b16 %v119
  %v570 = vunpack.c.l.b16 %v120
  %v571 = vunpack.c.h.b16 %v120
  %v572 = vunpack.c.l.b16 %v121
  %v573 = vunpack.c.h.b16 %v121
  %v574 = vunpack.c.l.b16 %v122
  %v575 = vunpack.c.l.b16 %v123
  %v576 = vunpack.c.h.b16 %v123
  %v577 = vunpack.c.l.b16 %v124
  %v578 = vunpack.c.h.b16 %v124
  %v579 = vunpack.c.l.b16 %v125
  %v580 = vunpack.c.h.b16 %v125
  %v581 = vunpack.c.l.b16 %v126
  %v582 = vunpack.c.l.b16 %v127
  %v583 = vunpack.c.h.b16 %v127
  %v584 = vunpack.c.l.b16 %v128
  %v585 = vunpack.c.h.b16 %v128
  %v586 = vunpack.c.l.b16 %v129
  %v587 = vunpack.c.h.b16 %v129
  %v588 = vunpack.c.l.b16 %v130
  %v589 = vunpack.c.l.b16 %v131
  %v590 = vunpack.c.h.b16 %v131
  %v591 = vunpack.c.l.b16 %v132
  %v592 = vunpack.c.h.b16 %v132
  %v593 = vunpack.c.l.b16 %v133
  %v594 = vunpack.c.h.b16 %v133
  %v595 = vunpack.c.l.b16 %v134
  %v596 = vunpack.c.l.b16 %v135
  %v597 = vunpack.c.h.b16 %v135
  %v598 = vunpack.c.l.b16 %v136
  %v599 = vunpack.c.h.b16 %v136
  %v600 = vunpack.c.l.b16 %v137
  %v601 = vunpack.c.h.b16 %v137
  %v602 = vunpack.c.l.b16 %v138
  %v603 = vunpack.c.l.b16 %v139
  %v604 = vunpack.c.h.b16 %v139
  %v605 = vunpack.c.l.b16 %v140
  %v606 = vunpack.c.h.b16 %v140
  %v607 = vunpack.c.l.b16 %v141
  %v608 = vunpack.c.h.b16 %v141
  %v609 = vunpack.c.l.b16 %v142
  %v610 = vpack.c.b16 %v393, %v386
  %v611 = vpack.c.b16 %v394, %v387
  %v612 = vpack.c.b16 %v395, %v388
  %v613 = vpack.c.b16 %v396, %v389
  %v614 = vpack.c.b16 %v397, %v390
  %v615 = vpack.c.b16 %v398, %v391
  %v616 = vpack.c.b16 %v399, %v392
  %v617 = vpack.c.b16 %v407, %v400
  %v618 = vpack.c.b16 %v408, %v401
  %v619 = vpack.c.b16 %v409, %v402
  %v620 = vpack.c.b16 %v410, %v403
  %v621 = vpack.c.b16 %v411, %v404
  %v622 = vpack.c.b16 %v412, %v405
  %v623 = vpack.c.b16 %v413, %v406
  %v624 = vpack.c.b16 %v421, %v414
  %v625 = vpack.c.b16 %v422, %v415
  %v626 = vpack.c.b16 %v423, %v416
  %v627 = vpack.c.b16 %v424, %v417
  %v628 = vpack.c.b16 %v425, %v418
  %v629 = vpack.c.b16 %v426, %v419
  %v630 = vpack.c.b16 %v427, %v420
  %v631 = vpack.c.b16 %v435, %v428
  %v632 = vpack.c.b16 %v436, %v429
  %v633 = vpack.c.b16 %v437, %v430
  %v634 = vpack.c.b16 %v438, %v431
  %v635 = vpack.c.b16 %v439, %v432
  %v636 = vpack.c.b16 %v440, %v433
  %v637 = vpack.c.b16 %v441, %v434
  %v638 = vpack.c.b16 %v449, %v442
  %v639 = vpack.c.b16 %v450, %v443
  %v640 = vpack.c.b16 %v451, %v444
  %v641 = vpack.c.b16 %v452, %v445
  %v642 = vpack.c.b16 %v453, %v446
  %v643 = vpack.c.b16 %v454, %v447
  %v644 = vpack.c.b16 %v455, %v448
  %v645 = vpack.c.b16 %v463, %v456
  %v646 = vpack.c.b16 %v464, %v457
  %v647 = vpack.c.b16 %v465, %v458
  %v648 = vpack.c.b16 %v466, %v459
  %v649 = vpack.c.b16 %v467, %v460
  %v650 = vpack.c.b16 %v468, %v461
  %v651 = vpack.c.b16 %v469, %v462
  %v652 = vpack.c.b16 %v477, %v470
  %v653 = vpack.c.b16 %v478, %v471
  %v654 = vpack.c.b16 %v479, %v472
  %v655 = vpack.c.b16 %v480, %v473
  %v656 = vpack.c.b16 %v481, %v474
  %v657 = vpack.c.b16 %v482, %v475
  %v658 = vpack.c.b16 %v483, %v476
  %v659 = vpack.c.b16 %v491, %v484
  %v660 = vpack.c.b16 %v492, %v485
  %v661 = vpack.c.b16 %v493, %v486
  %v662 = vpack.c.b16 %v494, %v487
  %v663 = vpack.c.b16 %v495, %v488
  %v664 = vpack.c.b16 %v496, %v489
  %v665 = vpack.c.b16 %v497, %v490
  %v666 = vpack.c.b16 %v505, %v498
  %v667 = vpack.c.b16 %v506, %v499
  %v668 = vpack.c.b16 %v507, %v500
  %v669 = vpack.c.b16 %v508, %v501
  %v670 = vpack.c.b16 %v509, %v502
  %v671 = vpack.c.b16 %v510, %v503
  %v672 = vpack.c.b16 %v511, %v504
  %v673 = vpack.c.b16 %v519, %v512
  %v674 = vpack.c.b16 %v520, %v513
  %v675 = vpack.c.b16 %v521, %v514
  %v676 = vpack.c.b16 %v522, %v515
  %v677 = vpack.c.b16 %v523, %v516
  %v678 = vpack.c.b16 %v524, %v517
  %v679 = vpack.c.b16 %v525, %v518
  %v680 = vpack.c.b16 %v533, %v526
  %v681 = vpack.c.b16 %v534, %v527
  %v682 = vpack.c.b16 %v535, %v528
  %v683 = vpack.c.b16 %v536, %v529
  %v684 = vpack.c.b16 %v537, %v530
  %v685 = vpack.c.b16 %v538, %v531
  %v686 = vpack.c.b16 %v539, %v532
  %v687 = vpack.c.b16 %v547, %v540
  %v688 = vpack.c.b16 %v548, %v541
  %v689 = vpack.c.b16 %v549, %v542
  %v690 = vpack.c.b16 %v550, %v543
  %v691 = vpack.c.b16 %v551, %v544
  %v692 = vpack.c.b16 %v552, %v545
  %v693 = vpack.c.b16 %v553, %v546
  %v694 = vpack.c.b16 %v561, %v554
  %v695 = vpack.c.b16 %v562, %v555
  %v696 = vpack.c.b16 %v563, %v556
  %v697 = vpack.c.b16 %v564, %v557
  %v698 = vpack.c.b16 %v565, %v558
  %v699 = vpack.c.b16 %v566, %v559
  %v700 = vpack.c.b16 %v567, %v560
  %v701 = vpack.c.b16 %v575, %v568
  %v702 = vpack.c.b16 %v576, %v569
  %v703 = vpack.c.b16 %v577, %v570
  %v704 = vpack.c.b16 %v578, %v571
  %v705 = vpack.c.b16 %v579, %v572
  %v706 = vpack.c.b16 %v580, %v573
  %v707 = vpack.c.b16 %v581, %v574
  %v708 = vpack.c.b16 %v589, %v582
  %v709 = vpack.c.b16 %v590, %v583
  %v710 = vpack.c.b16 %v591, %v584
  %v711 = vpack.c.b16 %v592, %v585
  %v712 = vpack.c.b16 %v593, %v586
  %v713 = vpack.c.b16 %v594, %v587
  %v714 = vpack.c.b16 %v595, %v588
  %v715 = vpack.c.b16 %v603, %v596
  %v716 = vpack.c.b16 %v604, %v597
  %v717 = vpack.c.b16 %v605, %v598
  %v718 = vpack.c.b16 %v606, %v599
  %v719 = vpack.c.b16 %v607, %v600
  %v720 = vpack.c.b16 %v608, %v601
  %v721 = vpack.c.b16 %v609, %v602
  %v926 = vunpack.c.l.b16 %v143
  %v927 = vunpack.c.l.b16 %v144
  %v928 = vunpack.c.l.b16 %v145
  %v929 = vunpack.c.l.b16 %v146
  %v930 = vunpack.c.l.b16 %v147
  %v931 = vunpack.c.l.b16 %v148
  %v932 = vunpack.c.l.b16 %v149
  %v933 = vunpack.c.l.b16 %v150
  %v934 = vunpack.c.l.b16 %v151
  %v935 = vunpack.c.l.b16 %v152
  %v936 = vunpack.c.l.b16 %v153
  %v937 = vunpack.c.l.b16 %v154
  %v938 = vunpack.c.l.b16 %v155
  %v939 = vunpack.c.l.b16 %v156
  %v940 = vunpack.c.l.b16 %v157
  %v941 = vunpack.c.l.b16 %v158
  %v942 = vunpack.c.l.b16 %v159
  %v943 = vunpack.c.l.b16 %v160
  %v944 = vunpack.c.l.b16 %v161
  %v945 = vunpack.c.l.b16 %v162
  %v946 = vunpack.c.l.b16 %v163
  %v947 = vunpack.c.l.b16 %v164
  %v948 = vunpack.c.l.b16 %v165
  %v949 = vunpack.c.l.b16 %v166
  %v950 = vunpack.c.l.b16 %v167
  %v951 = vunpack.c.l.b16 %v168
  %v952 = vunpack.c.l.b16 %v169
  %v953 = vunpack.c.l.b16 %v170
  %v954 = vunpack.c.l.b16 %v171
  %v955 = vunpack.c.l.b16 %v172
  %v956 = vunpack.c.l.b16 %v173
  %v957 = vunpack.c.l.b16 %v174
  %v958 = vunpack.c.l.b16 %v175
  %v959 = vunpack.c.l.b16 %v176
  %v960 = vunpack.c.l.b16 %v177
  %v961 = vunpack.c.l.b16 %v178
  %v962 = vunpack.c.l.b16 %v179
  %v963 = vunpack.c.l.b16 %v180
  %v964 = vunpack.c.l.b16 %v181
  %v965 = vunpack.c.l.b16 %v182
  %v966 = vunpack.c.l.b16 %v183
  %v967 = vunpack.c.l.b16 %v184
  %v968 = vunpack.c.l.b16 %v185
  %v969 = vunpack.c.l.b16 %v186
  %v970 = vunpack.c.l.b16 %v187
  %v971 = vunpack.c.l.b16 %v188
  %v972 = vunpack.c.l.b16 %v189
  %v973 = vunpack.c.l.b16 %v190
  %v974 = vunpack.c.l.b16 %v191
  %v975 = vunpack.c.l.b16 %v192
  %v976 = vunpack.c.l.b16 %v193
  %v977 = vunpack.c.l.b16 %v194
  %v978 = vunpack.c.l.b16 %v195
  %v979 = vunpack.c.l.b16 %v196
  %v980 = vunpack.c.l.b16 %v197
  %v981 = vunpack.c.l.b16 %v198
  %v982 = vunpack.c.l.b16 %v199
  %v983 = vunpack.c.l.b16 %v200
  %v984 = vunpack.c.l.b16 %v201
  %v985 = vunpack.c.l.b16 %v202
  %v986 = vunpack.c.l.b16 %v203
  %v987 = vunpack.c.l.b16 %v204
  %v988 = vunpack.c.l.b16 %v205
  %v989 = vunpack.c.l.b16 %v206
  %v990 = vunpack.c.l.b16 %v207
  %v991 = vunpack.c.l.b16 %v208
  %v992 = vunpack.c.l.b16 %v209
  %v993 = vunpack.c.l.b16 %v210
  %v994 = vunpack.c.l.b16 %v211
  %v995 = vunpack.c.l.b16 %v212
  %v996 = vunpack.c.l.b16 %v213
  %v997 = vunpack.c.l.b16 %v214
  %v998 = vunpack.c.l.b16 %v215
  %v999 = vunpack.c.l.b16 %v216
  %v1000 = vunpack.c.l.b16 %v217
  %v1001 = vunpack.c.l.b16 %v218
  %v1002 = vunpack.c.l.b16 %v219
  %v1003 = vunpack.c.l.b16 %v220
  %v1004 = vunpack.c.l.b16 %v221
  %v1005 = vunpack.c.l.b16 %v222
  %v1006 = vunpack.c.l.b16 %v223
  %v1007 = vunpack.c.l.b16 %v224
  %v1008 = vunpack.c.l.b16 %v225
  %v1009 = vunpack.c.l.b16 %v226
  %v1010 = vunpack.c.l.b16 %v227
  %v1011 = vunpack.c.l.b16 %v228
  %v1012 = vunpack.c.l.b16 %v229
  %v1013 = vunpack.c.l.b16 %v230
  %v1014 = vunpack.c.l.b16 %v231
  %v1015 = vunpack.c.l.b16 %v232
  %v1016 = vunpack.c.l.b16 %v233
  %v1017 = vunpack.c.l.b16 %v234
  %v1018 = vunpack.c.l.b16 %v235
  %v1019 = vunpack.c.l.b16 %v236
  %v1020 = vunpack.c.l.b16 %v237
  %v1021 = vunpack.c.l.b16 %v238
  %v1022 = vunpack.c.l.b16 %v239
  %v1023 = vunpack.c.l.b16 %v240
  %v1024 = vunpack.c.l.b16 %v241
  %v1025 = vunpack.c.l.b16 %v242
  %v1026 = vunpack.c.l.b16 %v243
  %v1027 = vunpack.c.l.b16 %v244
  %v1028 = vunpack.c.l.b16 %v245
  %v1029 = vunpack.c.l.b16 %v246
  %v1030 = vunpack.c.l.b16 %v247
  %v1031 = vunpack.c.l.b16 %v248
  %v1032 = vunpack.c.l.b16 %v249
  %v1033 = vunpack.c.l.b16 %v250
  %v1034 = vpack.c.b16 %v927, %v926
  %v1035 = vpack.c.b16 %v929, %v928
  %v1036 = vpack.c.b16 %v931, %v930
  %v1037 = vpack.c.b16 %v933, %v932
  %v1038 = vpack.c.b16 %v935, %v934
  %v1039 = vpack.c.b16 %v937, %v936
  %v1040 = vpack.c.b16 %v939, %v938
  %v1041 = vpack.c.b16 %v941, %v940
  %v1042 = vpack.c.b16 %v943, %v942
  %v1043 = vpack.c.b16 %v945, %v944
  %v1044 = vpack.c.b16 %v947, %v946
  %v1045 = vpack.c.b16 %v949, %v948
  %v1046 = vpack.c.b16 %v951, %v950
  %v1047 = vpack.c.b16 %v953, %v952
  %v1048 = vpack.c.b16 %v955, %v954
  %v1049 = vpack.c.b16 %v957, %v956
  %v1050 = vpack.c.b16 %v959, %v958
  %v1051 = vpack.c.b16 %v961, %v960
  %v1052 = vpack.c.b16 %v963, %v962
  %v1053 = vpack.c.b16 %v965, %v964
  %v1054 = vpack.c.b16 %v967, %v966
  %v1055 = vpack.c.b16 %v969, %v968
  %v1056 = vpack.c.b16 %v971, %v970
  %v1057 = vpack.c.b16 %v973, %v972
  %v1058 = vpack.c.b16 %v975, %v974
  %v1059 = vpack.c.b16 %v977, %v976
  %v1060 = vpack.c.b16 %v979, %v978
  %v1061 = vpack.c.b16 %v981, %v980
  %v1062 = vpack.c.b16 %v983, %v982
  %v1063 = vpack.c.b16 %v985, %v984
  %v1064 = vpack.c.b16 %v987, %v986
  %v1065 = vpack.c.b16 %v989, %v988
  %v1066 = vpack.c.b16 %v991, %v990
  %v1067 = vpack.c.b16 %v993, %v992
  %v1068 = vpack.c.b16 %v995, %v994
  %v1069 = vpack.c.b16 %v997, %v996
  %v1070 = vpack.c.b16 %v999, %v998
  %v1071 = vpack.c.b16 %v1001, %v1000
  %v1072 = vpack.c.b16 %v1003, %v1002
  %v1073 = vpack.c.b16 %v1005, %v1004
  %v1074 = vpack.c.b16 %v1007, %v1006
  %v1075 = vpack.c.b16 %v1009, %v1008
  %v1076 = vpack.c.b16 %v1011, %v1010
  %v1077 = vpack.c.b16 %v1013, %v1012
  %v1078 = vpack.c.b16 %v1015, %v1014
  %v1079 = vpack.c.b16 %v1017, %v1016
  %v1080 = vpack.c.b16 %v1019, %v1018
  %v1081 = vpack.c.b16 %v1021, %v1020
  %v1082 = vpack.c.b16 %v1023, %v1022
  %v1083 = vpack.c.b16 %v1025, %v1024
  %v1084 = vpack.c.b16 %v1027, %v1026
  %v1085 = vpack.c.b16 %v1029, %v1028
  %v1086 = vpack.c.b16 %v1031, %v1030
  %v1087 = vpack.c.b16 %v1033, %v1032
  %vm1142 = vcmask 785408
  %v1144 = vsel %vm1142, %v616, 0
  %v1147 = vsel %vm1142, %v623, 0
  %v1150 = vsel %vm1142, %v630, 0
  %v1153 = vsel %vm1142, %v637, 0
  %v1156 = vsel %vm1142, %v644, 0
  %v1159 = vsel %vm1142, %v651, 0
  %v1162 = vsel %vm1142, %v658, 0
  %v1165 = vsel %vm1142, %v665, 0
  %v1168 = vsel %vm1142, %v672, 0
  %v1171 = vsel %vm1142, %v679, 0
  %v1174 = vsel %vm1142, %v686, 0
  %v1177 = vsel %vm1142, %v693, 0
  %v1180 = vsel %vm1142, %v700, 0
  %v1183 = vsel %vm1142, %v707, 0
  %v1186 = vsel %vm1142, %v714, 0
  %v1189 = vsel %vm1142, %v721, 0
  %1191 = vmatprep.subr.bf16.mxu0 0
  %1192 = vmatpush1.bf16.msra.mxu0 %v1034
  %1193 = vmatprep.subr.bf16.mxu0 0
  %1194 = vmatpush1.bf16.msra.mxu0 %v1035
  %1195 = vmatprep.subr.bf16.mxu0 0
  %1196 = vmatpush1.bf16.msra.mxu0 %v1036
  %1197 = vmatprep.subr.bf16.mxu0 0
  %1198 = vmatpush1.bf16.msra.mxu0 %v1037
  %1199 = vmatprep.subr.bf16.mxu0 0
  %1200 = vmatpush1.bf16.msra.mxu0 %v1038
  %1201 = vmatprep.subr.bf16.mxu0 0
  %1202 = vmatpush1.bf16.msra.mxu0 %v1039
  %1203 = vmatprep.subr.bf16.mxu0 0
  %1204 = vmatpush1.bf16.msra.mxu0 %v1040
  %1205 = vmatprep.subr.bf16.mxu0 0
  %1206 = vmatpush1.bf16.msra.mxu0 %v1041
  %1207 = vmatprep.subr.bf16.mxu0 0
  %1208 = vmatpush1.bf16.msra.mxu0 %v1042
  %1209 = vmatprep.subr.bf16.mxu0 0
  %1210 = vmatpush1.bf16.msra.mxu0 %v1043
  %1211 = vmatprep.subr.bf16.mxu0 0
  %1212 = vmatpush1.bf16.msra.mxu0 %v1044
  %1213 = vmatprep.subr.bf16.mxu0 0
  %1214 = vmatpush1.bf16.msra.mxu0 %v1045
  %1215 = vmatprep.subr.bf16.mxu0 0
  %1216 = vmatpush1.bf16.msra.mxu0 %v1046
  %1217 = vmatprep.subr.bf16.mxu0 0
  %1218 = vmatpush1.bf16.msra.mxu0 %v1047
  %1219 = vmatprep.subr.bf16.mxu0 0
  %1220 = vmatpush1.bf16.msra.mxu0 %v1048
  %1221 = vmatprep.subr.bf16.mxu0 0
  %1222 = vmatpush1.bf16.msra.mxu0 %v1049
  %1223 = vmatprep.mubr.bf16.mxu0 %v611
  %1224 = vmatmul.mubr.bf16.gmra.mrb[0].mxu0 %v610
  %v1225 = vpop.f32.mrb[0].mxu0
  %v1226 = vadd.f32 %v256, %v1225
  %v1227 = vpop.f32.mrb[0].mxu0
  %v1228 = vpop.f32.mrb[0].mxu0
  %v1229 = vadd.f32 %v256, %v1228
  %v1230 = vpop.f32.mrb[0].mxu0
  %1231 = vmatprep.mubr.bf16.mxu0 %v618
  %1232 = vmatmul.mubr.bf16.gmra.mrb[0].mxu0 %v617
  %v1233 = vpop.f32.mrb[0].mxu0
  %v1234 = vadd.f32 %v256, %v1233
  %v1235 = vpop.f32.mrb[0].mxu0
  %v1236 = vpop.f32.mrb[0].mxu0
  %v1237 = vadd.f32 %v256, %v1236
  %v1238 = vpop.f32.mrb[0].mxu0
  %1239 = vmatprep.mubr.bf16.mxu0 %v625
  %1240 = vmatmul.mubr.bf16.gmra.mrb[0].mxu0 %v624
  %v1241 = vpop.f32.mrb[0].mxu0
  %v1242 = vadd.f32 %v256, %v1241
  %v1243 = vpop.f32.mrb[0].mxu0
  %v1244 = vpop.f32.mrb[0].mxu0
  %v1245 = vadd.f32 %v256, %v1244
  %v1246 = vpop.f32.mrb[0].mxu0
  %1247 = vmatprep.mubr.bf16.mxu0 %v632
  %1248 = vmatmul.mubr.bf16.gmra.mrb[0].mxu0 %v631
  %v1249 = vpop.f32.mrb[0].mxu0
  %v1250 = vadd.f32 %v256, %v1249
  %v1251 = vpop.f32.mrb[0].mxu0
  %v1252 = vpop.f32.mrb[0].mxu0
  %v1253 = vadd.f32 %v256, %v1252
  %v1254 = vpop.f32.mrb[0].mxu0
  %1255 = vmatprep.mubr.bf16.mxu0 %v639
  %1256 = vmatmul.mubr.bf16.gmra.mrb[0].mxu0 %v638
  %v1257 = vpop.f32.mrb[0].mxu0
  %v1258 = vadd.f32 %v256, %v1257
  %v1259 = vpop.f32.mrb[0].mxu0
  %v1260 = vpop.f32.mrb[0].mxu0
  %v1261 = vadd.f32 %v256, %v1260
  %v1262 = vpop.f32.mrb[0].mxu0
  %1263 = vmatprep.mubr.bf16.mxu0 %v646
  %1264 = vmatmul.mubr.bf16.gmra.mrb[0].mxu0 %v645
  %v1265 = vpop.f32.mrb[0].mxu0
  %v1266 = vadd.f32 %v256, %v1265
  %v1267 = vpop.f32.mrb[0].mxu0
  %v1268 = vpop.f32.mrb[0].mxu0
  %v1269 = vadd.f32 %v256, %v1268
  %v1270 = vpop.f32.mrb[0].mxu0
  %1271 = vmatprep.mubr.bf16.mxu0 %v653
  %1272 = vmatmul.mubr.bf16.gmra.mrb[0].mxu0 %v652
  %v1273 = vpop.f32.mrb[0].mxu0
  %v1274 = vadd.f32 %v256, %v1273
  %v1275 = vpop.f32.mrb[0].mxu0
  %v1276 = vpop.f32.mrb[0].mxu0
  %v1277 = vadd.f32 %v256, %v1276
  %v1278 = vpop.f32.mrb[0].mxu0
  %1279 = vmatprep.mubr.bf16.mxu0 %v660
  %1280 = vmatmul.mubr.bf16.gmra.mrb[0].mxu0 %v659
  %v1281 = vpop.f32.mrb[0].mxu0
  %v1282 = vadd.f32 %v256, %v1281
  %v1283 = vpop.f32.mrb[0].mxu0
  %v1284 = vpop.f32.mrb[0].mxu0
  %v1285 = vadd.f32 %v256, %v1284
  %v1286 = vpop.f32.mrb[0].mxu0
  %1287 = vmatprep.mubr.bf16.mxu0 %v667
  %1288 = vmatmul.mubr.bf16.gmra.mrb[0].mxu0 %v666
  %v1289 = vpop.f32.mrb[0].mxu0
  %v1290 = vadd.f32 %v256, %v1289
  %v1291 = vpop.f32.mrb[0].mxu0
  %v1292 = vpop.f32.mrb[0].mxu0
  %v1293 = vadd.f32 %v256, %v1292
  %v1294 = vpop.f32.mrb[0].mxu0
  %1295 = vmatprep.mubr.bf16.mxu0 %v674
  %1296 = vmatmul.mubr.bf16.gmra.mrb[0].mxu0 %v673
  %v1297 = vpop.f32.mrb[0].mxu0
  %v1298 = vadd.f32 %v256, %v1297
  %v1299 = vpop.f32.mrb[0].mxu0
  %v1300 = vpop.f32.mrb[0].mxu0
  %v1301 = vadd.f32 %v256, %v1300
  %v1302 = vpop.f32.mrb[0].mxu0
  %1303 = vmatprep.mubr.bf16.mxu0 %v681
  %1304 = vmatmul.mubr.bf16.gmra.mrb[0].mxu0 %v680
  %v1305 = vpop.f32.mrb[0].mxu0
  %v1306 = vadd.f32 %v256, %v1305
  %v1307 = vpop.f32.mrb[0].mxu0
  %v1308 = vpop.f32.mrb[0].mxu0
  %v1309 = vadd.f32 %v256, %v1308
  %v1310 = vpop.f32.mrb[0].mxu0
  %1311 = vmatprep.mubr.bf16.mxu0 %v688
  %1312 = vmatmul.mubr.bf16.gmra.mrb[0].mxu0 %v687
  %v1313 = vpop.f32.mrb[0].mxu0
  %v1314 = vadd.f32 %v256, %v1313
  %v1315 = vpop.f32.mrb[0].mxu0
  %v1316 = vpop.f32.mrb[0].mxu0
  %v1317 = vadd.f32 %v256, %v1316
  %v1318 = vpop.f32.mrb[0].mxu0
  %1319 = vmatprep.mubr.bf16.mxu0 %v695
  %1320 = vmatmul.mubr.bf16.gmra.mrb[0].mxu0 %v694
  %v1321 = vpop.f32.mrb[0].mxu0
  %v1322 = vadd.f32 %v256, %v1321
  %v1323 = vpop.f32.mrb[0].mxu0
  %v1324 = vpop.f32.mrb[0].mxu0
  %v1325 = vadd.f32 %v256, %v1324
  %v1326 = vpop.f32.mrb[0].mxu0
  %1327 = vmatprep.mubr.bf16.mxu0 %v702
  %1328 = vmatmul.mubr.bf16.gmra.mrb[0].mxu0 %v701
  %v1329 = vpop.f32.mrb[0].mxu0
  %v1330 = vadd.f32 %v256, %v1329
  %v1331 = vpop.f32.mrb[0].mxu0
  %v1332 = vpop.f32.mrb[0].mxu0
  %v1333 = vadd.f32 %v256, %v1332
  %v1334 = vpop.f32.mrb[0].mxu0
  %1335 = vmatprep.mubr.bf16.mxu0 %v709
  %1336 = vmatmul.mubr.bf16.gmra.mrb[0].mxu0 %v708
  %v1337 = vpop.f32.mrb[0].mxu0
  %v1338 = vadd.f32 %v256, %v1337
  %v1339 = vpop.f32.mrb[0].mxu0
  %v1340 = vpop.f32.mrb[0].mxu0
  %v1341 = vadd.f32 %v256, %v1340
  %v1342 = vpop.f32.mrb[0].mxu0
  %1343 = vmatprep.mubr.bf16.mxu0 %v716
  %1344 = vmatmul.mubr.bf16.gmra.mrb[0].mxu0 %v715
  %v1345 = vpop.f32.mrb[0].mxu0
  %v1346 = vadd.f32 %v256, %v1345
  %v1347 = vpop.f32.mrb[0].mxu0
  %v1348 = vpop.f32.mrb[0].mxu0
  %v1349 = vadd.f32 %v256, %v1348
  %v1350 = vpop.f32.mrb[0].mxu0
  %1351 = vdwg.mxu0
  %1352 = vmatprep.subr.bf16.mxu0 0
  %1353 = vmatpush1.bf16.msra.mxu0 %v1050
  %1354 = vmatprep.subr.bf16.mxu0 0
  %1355 = vmatpush1.bf16.msra.mxu0 %v1051
  %1356 = vmatprep.subr.bf16.mxu0 0
  %1357 = vmatpush1.bf16.msra.mxu0 %v1052
  %1358 = vmatprep.subr.bf16.mxu0 0
  %1359 = vmatpush1.bf16.msra.mxu0 %v1053
  %1360 = vmatprep.subr.bf16.mxu0 0
  %1361 = vmatpush1.bf16.msra.mxu0 %v1054
  %1362 = vmatprep.subr.bf16.mxu0 0
  %1363 = vmatpush1.bf16.msra.mxu0 %v1055
  %1364 = vmatprep.subr.bf16.mxu0 0
  %1365 = vmatpush1.bf16.msra.mxu0 %v1056
  %1366 = vmatprep.subr.bf16.mxu0 0
  %1367 = vmatpush1.bf16.msra.mxu0 %v1057
  %1368 = vmatprep.subr.bf16.mxu0 0
  %1369 = vmatpush1.bf16.msra.mxu0 %v1058
  %1370 = vmatprep.subr.bf16.mxu0 0
  %1371 = vmatpush1.bf16.msra.mxu0 %v1059
  %1372 = vmatprep.subr.bf16.mxu0 0
  %1373 = vmatpush1.bf16.msra.mxu0 %v1060
  %1374 = vmatprep.subr.bf16.mxu0 0
  %1375 = vmatpush1.bf16.msra.mxu0 %v1061
  %1376 = vmatprep.subr.bf16.mxu0 0
  %1377 = vmatpush1.bf16.msra.mxu0 %v1062
  %1378 = vmatprep.subr.bf16.mxu0 0
  %1379 = vmatpush1.bf16.msra.mxu0 %v1063
  %1380 = vmatprep.subr.bf16.mxu0 0
  %1381 = vmatpush1.bf16.msra.mxu0 %v1064
  %1382 = vmatprep.subr.bf16.mxu0 0
  %1383 = vmatpush1.bf16.msra.mxu0 %v1065
  %1384 = vmatprep.mubr.bf16.mxu0 %v613
  %1385 = vmatmul.mubr.bf16.gmra.mrb[0].mxu0 %v612
  %v1386 = vpop.f32.mrb[0].mxu0
  %v1387 = vadd.f32 %v1226, %v1386
  %v1388 = vpop.f32.mrb[0].mxu0
  %v1389 = vpop.f32.mrb[0].mxu0
  %v1390 = vadd.f32 %v1229, %v1389
  %v1391 = vpop.f32.mrb[0].mxu0
  %1392 = vmatprep.mubr.bf16.mxu0 %v620
  %1393 = vmatmul.mubr.bf16.gmra.mrb[0].mxu0 %v619
  %v1394 = vpop.f32.mrb[0].mxu0
  %v1395 = vadd.f32 %v1234, %v1394
  %v1396 = vpop.f32.mrb[0].mxu0
  %v1397 = vpop.f32.mrb[0].mxu0
  %v1398 = vadd.f32 %v1237, %v1397
  %v1399 = vpop.f32.mrb[0].mxu0
  %1400 = vmatprep.mubr.bf16.mxu0 %v627
  %1401 = vmatmul.mubr.bf16.gmra.mrb[0].mxu0 %v626
  %v1402 = vpop.f32.mrb[0].mxu0
  %v1403 = vadd.f32 %v1242, %v1402
  %v1404 = vpop.f32.mrb[0].mxu0
  %v1405 = vpop.f32.mrb[0].mxu0
  %v1406 = vadd.f32 %v1245, %v1405
  %v1407 = vpop.f32.mrb[0].mxu0
  %1408 = vmatprep.mubr.bf16.mxu0 %v634
  %1409 = vmatmul.mubr.bf16.gmra.mrb[0].mxu0 %v633
  %v1410 = vpop.f32.mrb[0].mxu0
  %v1411 = vadd.f32 %v1250, %v1410
  %v1412 = vpop.f32.mrb[0].mxu0
  %v1413 = vpop.f32.mrb[0].mxu0
  %v1414 = vadd.f32 %v1253, %v1413
  %v1415 = vpop.f32.mrb[0].mxu0
  %1416 = vmatprep.mubr.bf16.mxu0 %v641
  %1417 = vmatmul.mubr.bf16.gmra.mrb[0].mxu0 %v640
  %v1418 = vpop.f32.mrb[0].mxu0
  %v1419 = vadd.f32 %v1258, %v1418
  %v1420 = vpop.f32.mrb[0].mxu0
  %v1421 = vpop.f32.mrb[0].mxu0
  %v1422 = vadd.f32 %v1261, %v1421
  %v1423 = vpop.f32.mrb[0].mxu0
  %1424 = vmatprep.mubr.bf16.mxu0 %v648
  %1425 = vmatmul.mubr.bf16.gmra.mrb[0].mxu0 %v647
  %v1426 = vpop.f32.mrb[0].mxu0
  %v1427 = vadd.f32 %v1266, %v1426
  %v1428 = vpop.f32.mrb[0].mxu0
  %v1429 = vpop.f32.mrb[0].mxu0
  %v1430 = vadd.f32 %v1269, %v1429
  %v1431 = vpop.f32.mrb[0].mxu0
  %1432 = vmatprep.mubr.bf16.mxu0 %v655
  %1433 = vmatmul.mubr.bf16.gmra.mrb[0].mxu0 %v654
  %v1434 = vpop.f32.mrb[0].mxu0
  %v1435 = vadd.f32 %v1274, %v1434
  %v1436 = vpop.f32.mrb[0].mxu0
  %v1437 = vpop.f32.mrb[0].mxu0
  %v1438 = vadd.f32 %v1277, %v1437
  %v1439 = vpop.f32.mrb[0].mxu0
  %1440 = vmatprep.mubr.bf16.mxu0 %v662
  %1441 = vmatmul.mubr.bf16.gmra.mrb[0].mxu0 %v661
  %v1442 = vpop.f32.mrb[0].mxu0
  %v1443 = vadd.f32 %v1282, %v1442
  %v1444 = vpop.f32.mrb[0].mxu0
  %v1445 = vpop.f32.mrb[0].mxu0
  %v1446 = vadd.f32 %v1285, %v1445
  %v1447 = vpop.f32.mrb[0].mxu0
  %1448 = vmatprep.mubr.bf16.mxu0 %v669
  %1449 = vmatmul.mubr.bf16.gmra.mrb[0].mxu0 %v668
  %v1450 = vpop.f32.mrb[0].mxu0
  %v1451 = vadd.f32 %v1290, %v1450
  %v1452 = vpop.f32.mrb[0].mxu0
  %v1453 = vpop.f32.mrb[0].mxu0
  %v1454 = vadd.f32 %v1293, %v1453
  %v1455 = vpop.f32.mrb[0].mxu0
  %1456 = vmatprep.mubr.bf16.mxu0 %v676
  %1457 = vmatmul.mubr.bf16.gmra.mrb[0].mxu0 %v675
  %v1458 = vpop.f32.mrb[0].mxu0
  %v1459 = vadd.f32 %v1298, %v1458
  %v1460 = vpop.f32.mrb[0].mxu0
  %v1461 = vpop.f32.mrb[0].mxu0
  %v1462 = vadd.f32 %v1301, %v1461
  %v1463 = vpop.f32.mrb[0].mxu0
  %1464 = vmatprep.mubr.bf16.mxu0 %v683
  %1465 = vmatmul.mubr.bf16.gmra.mrb[0].mxu0 %v682
  %v1466 = vpop.f32.mrb[0].mxu0
  %v1467 = vadd.f32 %v1306, %v1466
  %v1468 = vpop.f32.mrb[0].mxu0
  %v1469 = vpop.f32.mrb[0].mxu0
  %v1470 = vadd.f32 %v1309, %v1469
  %v1471 = vpop.f32.mrb[0].mxu0
  %1472 = vmatprep.mubr.bf16.mxu0 %v690
  %1473 = vmatmul.mubr.bf16.gmra.mrb[0].mxu0 %v689
  %v1474 = vpop.f32.mrb[0].mxu0
  %v1475 = vadd.f32 %v1314, %v1474
  %v1476 = vpop.f32.mrb[0].mxu0
  %v1477 = vpop.f32.mrb[0].mxu0
  %v1478 = vadd.f32 %v1317, %v1477
  %v1479 = vpop.f32.mrb[0].mxu0
  %1480 = vmatprep.mubr.bf16.mxu0 %v697
  %1481 = vmatmul.mubr.bf16.gmra.mrb[0].mxu0 %v696
  %v1482 = vpop.f32.mrb[0].mxu0
  %v1483 = vadd.f32 %v1322, %v1482
  %v1484 = vpop.f32.mrb[0].mxu0
  %v1485 = vpop.f32.mrb[0].mxu0
  %v1486 = vadd.f32 %v1325, %v1485
  %v1487 = vpop.f32.mrb[0].mxu0
  %1488 = vmatprep.mubr.bf16.mxu0 %v704
  %1489 = vmatmul.mubr.bf16.gmra.mrb[0].mxu0 %v703
  %v1490 = vpop.f32.mrb[0].mxu0
  %v1491 = vadd.f32 %v1330, %v1490
  %v1492 = vpop.f32.mrb[0].mxu0
  %v1493 = vpop.f32.mrb[0].mxu0
  %v1494 = vadd.f32 %v1333, %v1493
  %v1495 = vpop.f32.mrb[0].mxu0
  %1496 = vmatprep.mubr.bf16.mxu0 %v711
  %1497 = vmatmul.mubr.bf16.gmra.mrb[0].mxu0 %v710
  %v1498 = vpop.f32.mrb[0].mxu0
  %v1499 = vadd.f32 %v1338, %v1498
  %v1500 = vpop.f32.mrb[0].mxu0
  %v1501 = vpop.f32.mrb[0].mxu0
  %v1502 = vadd.f32 %v1341, %v1501
  %v1503 = vpop.f32.mrb[0].mxu0
  %1504 = vmatprep.mubr.bf16.mxu0 %v718
  %1505 = vmatmul.mubr.bf16.gmra.mrb[0].mxu0 %v717
  %v1506 = vpop.f32.mrb[0].mxu0
  %v1507 = vadd.f32 %v1346, %v1506
  %v1508 = vpop.f32.mrb[0].mxu0
  %v1509 = vpop.f32.mrb[0].mxu0
  %v1510 = vadd.f32 %v1349, %v1509
  %v1511 = vpop.f32.mrb[0].mxu0
  %1512 = vdwg.mxu0
  %1513 = vmatprep.subr.bf16.mxu0 0
  %1514 = vmatpush1.bf16.msra.mxu0 %v1066
  %1515 = vmatprep.subr.bf16.mxu0 0
  %1516 = vmatpush1.bf16.msra.mxu0 %v1067
  %1517 = vmatprep.subr.bf16.mxu0 0
  %1518 = vmatpush1.bf16.msra.mxu0 %v1068
  %1519 = vmatprep.subr.bf16.mxu0 0
  %1520 = vmatpush1.bf16.msra.mxu0 %v1069
  %1521 = vmatprep.subr.bf16.mxu0 0
  %1522 = vmatpush1.bf16.msra.mxu0 %v1070
  %1523 = vmatprep.subr.bf16.mxu0 0
  %1524 = vmatpush1.bf16.msra.mxu0 %v1071
  %1525 = vmatprep.subr.bf16.mxu0 0
  %1526 = vmatpush1.bf16.msra.mxu0 %v1072
  %1527 = vmatprep.subr.bf16.mxu0 0
  %1528 = vmatpush1.bf16.msra.mxu0 %v1073
  %1529 = vmatprep.subr.bf16.mxu0 0
  %1530 = vmatpush1.bf16.msra.mxu0 %v1074
  %1531 = vmatprep.subr.bf16.mxu0 0
  %1532 = vmatpush1.bf16.msra.mxu0 %v1075
  %1533 = vmatprep.subr.bf16.mxu0 0
  %1534 = vmatpush1.bf16.msra.mxu0 %v1076
  %1535 = vmatprep.subr.bf16.mxu0 0
  %1536 = vmatpush1.bf16.msra.mxu0 %v1077
  %1537 = vmatprep.subr.bf16.mxu0 0
  %1538 = vmatpush1.bf16.msra.mxu0 %v1078
  %1539 = vmatprep.subr.bf16.mxu0 0
  %1540 = vmatpush1.bf16.msra.mxu0 %v1079
  %1541 = vmatprep.subr.bf16.mxu0 0
  %1542 = vmatpush1.bf16.msra.mxu0 %v1080
  %1543 = vmatprep.subr.bf16.mxu0 0
  %1544 = vmatpush1.bf16.msra.mxu0 %v1081
  %1545 = vmatprep.mubr.bf16.mxu0 %v615
  %1546 = vmatmul.mubr.bf16.gmra.mrb[0].mxu0 %v614
  %v1547 = vpop.f32.mrb[0].mxu0
  %v1548 = vadd.f32 %v1387, %v1547
  %v1549 = vpop.f32.mrb[0].mxu0
  %v1550 = vpop.f32.mrb[0].mxu0
  %v1551 = vadd.f32 %v1390, %v1550
  %v1552 = vpop.f32.mrb[0].mxu0
  %1553 = vmatprep.mubr.bf16.mxu0 %v622
  %1554 = vmatmul.mubr.bf16.gmra.mrb[0].mxu0 %v621
  %v1555 = vpop.f32.mrb[0].mxu0
  %v1556 = vadd.f32 %v1395, %v1555
  %v1557 = vpop.f32.mrb[0].mxu0
  %v1558 = vpop.f32.mrb[0].mxu0
  %v1559 = vadd.f32 %v1398, %v1558
  %v1560 = vpop.f32.mrb[0].mxu0
  %1561 = vmatprep.mubr.bf16.mxu0 %v629
  %1562 = vmatmul.mubr.bf16.gmra.mrb[0].mxu0 %v628
  %v1563 = vpop.f32.mrb[0].mxu0
  %v1564 = vadd.f32 %v1403, %v1563
  %v1565 = vpop.f32.mrb[0].mxu0
  %v1566 = vpop.f32.mrb[0].mxu0
  %v1567 = vadd.f32 %v1406, %v1566
  %v1568 = vpop.f32.mrb[0].mxu0
  %1569 = vmatprep.mubr.bf16.mxu0 %v636
  %1570 = vmatmul.mubr.bf16.gmra.mrb[0].mxu0 %v635
  %v1571 = vpop.f32.mrb[0].mxu0
  %v1572 = vadd.f32 %v1411, %v1571
  %v1573 = vpop.f32.mrb[0].mxu0
  %v1574 = vpop.f32.mrb[0].mxu0
  %v1575 = vadd.f32 %v1414, %v1574
  %v1576 = vpop.f32.mrb[0].mxu0
  %1577 = vmatprep.mubr.bf16.mxu0 %v643
  %1578 = vmatmul.mubr.bf16.gmra.mrb[0].mxu0 %v642
  %v1579 = vpop.f32.mrb[0].mxu0
  %v1580 = vadd.f32 %v1419, %v1579
  %v1581 = vpop.f32.mrb[0].mxu0
  %v1582 = vpop.f32.mrb[0].mxu0
  %v1583 = vadd.f32 %v1422, %v1582
  %v1584 = vpop.f32.mrb[0].mxu0
  %1585 = vmatprep.mubr.bf16.mxu0 %v650
  %1586 = vmatmul.mubr.bf16.gmra.mrb[0].mxu0 %v649
  %v1587 = vpop.f32.mrb[0].mxu0
  %v1588 = vadd.f32 %v1427, %v1587
  %v1589 = vpop.f32.mrb[0].mxu0
  %v1590 = vpop.f32.mrb[0].mxu0
  %v1591 = vadd.f32 %v1430, %v1590
  %v1592 = vpop.f32.mrb[0].mxu0
  %1593 = vmatprep.mubr.bf16.mxu0 %v657
  %1594 = vmatmul.mubr.bf16.gmra.mrb[0].mxu0 %v656
  %v1595 = vpop.f32.mrb[0].mxu0
  %v1596 = vadd.f32 %v1435, %v1595
  %v1597 = vpop.f32.mrb[0].mxu0
  %v1598 = vpop.f32.mrb[0].mxu0
  %v1599 = vadd.f32 %v1438, %v1598
  %v1600 = vpop.f32.mrb[0].mxu0
  %1601 = vmatprep.mubr.bf16.mxu0 %v664
  %1602 = vmatmul.mubr.bf16.gmra.mrb[0].mxu0 %v663
  %v1603 = vpop.f32.mrb[0].mxu0
  %v1604 = vadd.f32 %v1443, %v1603
  %v1605 = vpop.f32.mrb[0].mxu0
  %v1606 = vpop.f32.mrb[0].mxu0
  %v1607 = vadd.f32 %v1446, %v1606
  %v1608 = vpop.f32.mrb[0].mxu0
  %1609 = vmatprep.mubr.bf16.mxu0 %v671
  %1610 = vmatmul.mubr.bf16.gmra.mrb[0].mxu0 %v670
  %v1611 = vpop.f32.mrb[0].mxu0
  %v1612 = vadd.f32 %v1451, %v1611
  %v1613 = vpop.f32.mrb[0].mxu0
  %v1614 = vpop.f32.mrb[0].mxu0
  %v1615 = vadd.f32 %v1454, %v1614
  %v1616 = vpop.f32.mrb[0].mxu0
  %1617 = vmatprep.mubr.bf16.mxu0 %v678
  %1618 = vmatmul.mubr.bf16.gmra.mrb[0].mxu0 %v677
  %v1619 = vpop.f32.mrb[0].mxu0
  %v1620 = vadd.f32 %v1459, %v1619
  %v1621 = vpop.f32.mrb[0].mxu0
  %v1622 = vpop.f32.mrb[0].mxu0
  %v1623 = vadd.f32 %v1462, %v1622
  %v1624 = vpop.f32.mrb[0].mxu0
  %1625 = vmatprep.mubr.bf16.mxu0 %v685
  %1626 = vmatmul.mubr.bf16.gmra.mrb[0].mxu0 %v684
  %v1627 = vpop.f32.mrb[0].mxu0
  %v1628 = vadd.f32 %v1467, %v1627
  %v1629 = vpop.f32.mrb[0].mxu0
  %v1630 = vpop.f32.mrb[0].mxu0
  %v1631 = vadd.f32 %v1470, %v1630
  %v1632 = vpop.f32.mrb[0].mxu0
  %1633 = vmatprep.mubr.bf16.mxu0 %v692
  %1634 = vmatmul.mubr.bf16.gmra.mrb[0].mxu0 %v691
  %v1635 = vpop.f32.mrb[0].mxu0
  %v1636 = vadd.f32 %v1475, %v1635
  %v1637 = vpop.f32.mrb[0].mxu0
  %v1638 = vpop.f32.mrb[0].mxu0
  %v1639 = vadd.f32 %v1478, %v1638
  %v1640 = vpop.f32.mrb[0].mxu0
  %1641 = vmatprep.mubr.bf16.mxu0 %v699
  %1642 = vmatmul.mubr.bf16.gmra.mrb[0].mxu0 %v698
  %v1643 = vpop.f32.mrb[0].mxu0
  %v1644 = vadd.f32 %v1483, %v1643
  %v1645 = vpop.f32.mrb[0].mxu0
  %v1646 = vpop.f32.mrb[0].mxu0
  %v1647 = vadd.f32 %v1486, %v1646
  %v1648 = vpop.f32.mrb[0].mxu0
  %1649 = vmatprep.mubr.bf16.mxu0 %v706
  %1650 = vmatmul.mubr.bf16.gmra.mrb[0].mxu0 %v705
  %v1651 = vpop.f32.mrb[0].mxu0
  %v1652 = vadd.f32 %v1491, %v1651
  %v1653 = vpop.f32.mrb[0].mxu0
  %v1654 = vpop.f32.mrb[0].mxu0
  %v1655 = vadd.f32 %v1494, %v1654
  %v1656 = vpop.f32.mrb[0].mxu0
  %1657 = vmatprep.mubr.bf16.mxu0 %v713
  %1658 = vmatmul.mubr.bf16.gmra.mrb[0].mxu0 %v712
  %v1659 = vpop.f32.mrb[0].mxu0
  %v1660 = vadd.f32 %v1499, %v1659
  %v1661 = vpop.f32.mrb[0].mxu0
  %v1662 = vpop.f32.mrb[0].mxu0
  %v1663 = vadd.f32 %v1502, %v1662
  %v1664 = vpop.f32.mrb[0].mxu0
  %1665 = vmatprep.mubr.bf16.mxu0 %v720
  %1666 = vmatmul.mubr.bf16.gmra.mrb[0].mxu0 %v719
  %v1667 = vpop.f32.mrb[0].mxu0
  %v1668 = vadd.f32 %v1507, %v1667
  %v1669 = vpop.f32.mrb[0].mxu0
  %v1670 = vpop.f32.mrb[0].mxu0
  %v1671 = vadd.f32 %v1510, %v1670
  %v1672 = vpop.f32.mrb[0].mxu0
  %1673 = vdwg.mxu0
  %1674 = vmatprep.subr.bf16.mxu0 0
  %1675 = vmatpush1.bf16.msra.mxu0 %v1082
  %1676 = vmatprep.subr.bf16.mxu0 0
  %1677 = vmatpush1.bf16.msra.mxu0 %v1083
  %1678 = vmatprep.subr.bf16.mxu0 0
  %1679 = vmatpush1.bf16.msra.mxu0 %v1084
  %1680 = vmatprep.subr.bf16.mxu0 0
  %1681 = vmatpush1.bf16.msra.mxu0 %v1085
  %1682 = vmatprep.subr.bf16.mxu0 0
  %1683 = vmatpush1.bf16.msra.mxu0 %v1086
  %1684 = vmatprep.subr.bf16.mxu0 0
  %1685 = vmatpush1.bf16.msra.mxu0 %v1087
  %1686 = vmatprep.subr.bf16.mxu0 0
  %1687 = vmatpush1.bf16.msra.mxu0 0
  %1688 = vmatprep.subr.bf16.mxu0 0
  %1689 = vmatpush1.bf16.msra.mxu0 0
  %1690 = vmatprep.subr.bf16.mxu0 0
  %1691 = vmatpush1.bf16.msra.mxu0 0
  %1692 = vmatprep.subr.bf16.mxu0 0
  %1693 = vmatpush1.bf16.msra.mxu0 0
  %1694 = vmatprep.subr.bf16.mxu0 0
  %1695 = vmatpush1.bf16.msra.mxu0 0
  %1696 = vmatprep.subr.bf16.mxu0 0
  %1697 = vmatpush1.bf16.msra.mxu0 0
  %1698 = vmatprep.subr.bf16.mxu0 0
  %1699 = vmatpush1.bf16.msra.mxu0 0
  %1700 = vmatprep.subr.bf16.mxu0 0
  %1701 = vmatpush1.bf16.msra.mxu0 0
  %1702 = vmatprep.subr.bf16.mxu0 0
  %1703 = vmatpush1.bf16.msra.mxu0 0
  %1704 = vmatprep.subr.bf16.mxu0 0
  %1705 = vmatpush1.bf16.msra.mxu0 0
  %1706 = vmatprep.mubr.bf16.mxu0 0
  %1707 = vmatmul.mubr.bf16.gmra.mrb[0].mxu0 %v1144
  %v1708 = vpop.f32.mrb[0].mxu0
  %v1709 = vadd.f32 %v1548, %v1708
  %v1710 = vpop.f32.mrb[0].mxu0
  %v1711 = vpop.f32.mrb[0].mxu0
  %v1712 = vadd.f32 %v1551, %v1711
  %v1713 = vpop.f32.mrb[0].mxu0
  %1714 = vmatprep.mubr.bf16.mxu0 0
  %1715 = vmatmul.mubr.bf16.gmra.mrb[0].mxu0 %v1147
  %v1716 = vpop.f32.mrb[0].mxu0
  %v1717 = vadd.f32 %v1556, %v1716
  %v1718 = vpop.f32.mrb[0].mxu0
  %v1719 = vpop.f32.mrb[0].mxu0
  %v1720 = vadd.f32 %v1559, %v1719
  %v1721 = vpop.f32.mrb[0].mxu0
  %1722 = vmatprep.mubr.bf16.mxu0 0
  %1723 = vmatmul.mubr.bf16.gmra.mrb[0].mxu0 %v1150
  %v1724 = vpop.f32.mrb[0].mxu0
  %v1725 = vadd.f32 %v1564, %v1724
  %v1726 = vpop.f32.mrb[0].mxu0
  %v1727 = vpop.f32.mrb[0].mxu0
  %v1728 = vadd.f32 %v1567, %v1727
  %v1729 = vpop.f32.mrb[0].mxu0
  %1730 = vmatprep.mubr.bf16.mxu0 0
  %1731 = vmatmul.mubr.bf16.gmra.mrb[0].mxu0 %v1153
  %v1732 = vpop.f32.mrb[0].mxu0
  %v1733 = vadd.f32 %v1572, %v1732
  %v1734 = vpop.f32.mrb[0].mxu0
  %v1735 = vpop.f32.mrb[0].mxu0
  %v1736 = vadd.f32 %v1575, %v1735
  %v1737 = vpop.f32.mrb[0].mxu0
  %1738 = vmatprep.mubr.bf16.mxu0 0
  %1739 = vmatmul.mubr.bf16.gmra.mrb[0].mxu0 %v1156
  %v1740 = vpop.f32.mrb[0].mxu0
  %v1741 = vadd.f32 %v1580, %v1740
  %v1742 = vpop.f32.mrb[0].mxu0
  %v1743 = vpop.f32.mrb[0].mxu0
  %v1744 = vadd.f32 %v1583, %v1743
  %v1745 = vpop.f32.mrb[0].mxu0
  %1746 = vmatprep.mubr.bf16.mxu0 0
  %1747 = vmatmul.mubr.bf16.gmra.mrb[0].mxu0 %v1159
  %v1748 = vpop.f32.mrb[0].mxu0
  %v1749 = vadd.f32 %v1588, %v1748
  %v1750 = vpop.f32.mrb[0].mxu0
  %v1751 = vpop.f32.mrb[0].mxu0
  %v1752 = vadd.f32 %v1591, %v1751
  %v1753 = vpop.f32.mrb[0].mxu0
  %1754 = vmatprep.mubr.bf16.mxu0 0
  %1755 = vmatmul.mubr.bf16.gmra.mrb[0].mxu0 %v1162
  %v1756 = vpop.f32.mrb[0].mxu0
  %v1757 = vadd.f32 %v1596, %v1756
  %v1758 = vpop.f32.mrb[0].mxu0
  %v1759 = vpop.f32.mrb[0].mxu0
  %v1760 = vadd.f32 %v1599, %v1759
  %v1761 = vpop.f32.mrb[0].mxu0
  %1762 = vmatprep.mubr.bf16.mxu0 0
  %1763 = vmatmul.mubr.bf16.gmra.mrb[0].mxu0 %v1165
  %v1764 = vpop.f32.mrb[0].mxu0
  %v1765 = vadd.f32 %v1604, %v1764
  %v1766 = vpop.f32.mrb[0].mxu0
  %v1767 = vpop.f32.mrb[0].mxu0
  %v1768 = vadd.f32 %v1607, %v1767
  %v1769 = vpop.f32.mrb[0].mxu0
  %1770 = vmatprep.mubr.bf16.mxu0 0
  %1771 = vmatmul.mubr.bf16.gmra.mrb[0].mxu0 %v1168
  %v1772 = vpop.f32.mrb[0].mxu0
  %v1773 = vadd.f32 %v1612, %v1772
  %v1774 = vpop.f32.mrb[0].mxu0
  %v1775 = vpop.f32.mrb[0].mxu0
  %v1776 = vadd.f32 %v1615, %v1775
  %v1777 = vpop.f32.mrb[0].mxu0
  %1778 = vmatprep.mubr.bf16.mxu0 0
  %1779 = vmatmul.mubr.bf16.gmra.mrb[0].mxu0 %v1171
  %v1780 = vpop.f32.mrb[0].mxu0
  %v1781 = vadd.f32 %v1620, %v1780
  %v1782 = vpop.f32.mrb[0].mxu0
  %v1783 = vpop.f32.mrb[0].mxu0
  %v1784 = vadd.f32 %v1623, %v1783
  %v1785 = vpop.f32.mrb[0].mxu0
  %1786 = vmatprep.mubr.bf16.mxu0 0
  %1787 = vmatmul.mubr.bf16.gmra.mrb[0].mxu0 %v1174
  %v1788 = vpop.f32.mrb[0].mxu0
  %v1789 = vadd.f32 %v1628, %v1788
  %v1790 = vpop.f32.mrb[0].mxu0
  %v1791 = vpop.f32.mrb[0].mxu0
  %v1792 = vadd.f32 %v1631, %v1791
  %v1793 = vpop.f32.mrb[0].mxu0
  %1794 = vmatprep.mubr.bf16.mxu0 0
  %1795 = vmatmul.mubr.bf16.gmra.mrb[0].mxu0 %v1177
  %v1796 = vpop.f32.mrb[0].mxu0
  %v1797 = vadd.f32 %v1636, %v1796
  %v1798 = vpop.f32.mrb[0].mxu0
  %v1799 = vpop.f32.mrb[0].mxu0
  %v1800 = vadd.f32 %v1639, %v1799
  %v1801 = vpop.f32.mrb[0].mxu0
  %1802 = vmatprep.mubr.bf16.mxu0 0
  %1803 = vmatmul.mubr.bf16.gmra.mrb[0].mxu0 %v1180
  %v1804 = vpop.f32.mrb[0].mxu0
  %v1805 = vadd.f32 %v1644, %v1804
  %v1806 = vpop.f32.mrb[0].mxu0
  %v1807 = vpop.f32.mrb[0].mxu0
  %v1808 = vadd.f32 %v1647, %v1807
  %v1809 = vpop.f32.mrb[0].mxu0
  %1810 = vmatprep.mubr.bf16.mxu0 0
  %1811 = vmatmul.mubr.bf16.gmra.mrb[0].mxu0 %v1183
  %v1812 = vpop.f32.mrb[0].mxu0
  %v1813 = vadd.f32 %v1652, %v1812
  %v1814 = vpop.f32.mrb[0].mxu0
  %v1815 = vpop.f32.mrb[0].mxu0
  %v1816 = vadd.f32 %v1655, %v1815
  %v1817 = vpop.f32.mrb[0].mxu0
  %1818 = vmatprep.mubr.bf16.mxu0 0
  %1819 = vmatmul.mubr.bf16.gmra.mrb[0].mxu0 %v1186
  %v1820 = vpop.f32.mrb[0].mxu0
  %v1821 = vadd.f32 %v1660, %v1820
  %v1822 = vpop.f32.mrb[0].mxu0
  %v1823 = vpop.f32.mrb[0].mxu0
  %v1824 = vadd.f32 %v1663, %v1823
  %v1825 = vpop.f32.mrb[0].mxu0
  %1826 = vmatprep.mubr.bf16.mxu0 0
  %1827 = vmatmul.mubr.bf16.gmra.mrb[0].mxu0 %v1189
  %v1828 = vpop.f32.mrb[0].mxu0
  %v1829 = vadd.f32 %v1668, %v1828
  %v1830 = vpop.f32.mrb[0].mxu0
  %v1831 = vpop.f32.mrb[0].mxu0
  %v1832 = vadd.f32 %v1671, %v1831
  %v1833 = vpop.f32.mrb[0].mxu0
  %1834 = vdwg.mxu0
  %v1835 = vmax.f32 %v1709, 0.0
  %v1836 = vmax.f32 %v1712, 0.0
  %v1837 = vmax.f32 %v1717, 0.0
  %v1838 = vmax.f32 %v1720, 0.0
  %v1839 = vmax.f32 %v1725, 0.0
  %v1840 = vmax.f32 %v1728, 0.0
  %v1841 = vmax.f32 %v1733, 0.0
  %v1842 = vmax.f32 %v1736, 0.0
  %v1843 = vmax.f32 %v1741, 0.0
  %v1844 = vmax.f32 %v1744, 0.0
  %v1845 = vmax.f32 %v1749, 0.0
  %v1846 = vmax.f32 %v1752, 0.0
  %v1847 = vmax.f32 %v1757, 0.0
  %v1848 = vmax.f32 %v1760, 0.0
  %v1849 = vmax.f32 %v1765, 0.0
  %v1850 = vmax.f32 %v1768, 0.0
  %v1851 = vmax.f32 %v1773, 0.0
  %v1852 = vmax.f32 %v1776, 0.0
  %v1853 = vmax.f32 %v1781, 0.0
  %v1854 = vmax.f32 %v1784, 0.0
  %v1855 = vmax.f32 %v1789, 0.0
  %v1856 = vmax.f32 %v1792, 0.0
  %v1857 = vmax.f32 %v1797, 0.0
  %v1858 = vmax.f32 %v1800, 0.0
  %v1859 = vmax.f32 %v1805, 0.0
  %v1860 = vmax.f32 %v1808, 0.0
  %v1861 = vmax.f32 %v1813, 0.0
  %v1862 = vmax.f32 %v1816, 0.0
  %v1863 = vmax.f32 %v1821, 0.0
  %v1864 = vmax.f32 %v1824, 0.0
  %v1865 = vmax.f32 %v1829, 0.0
  %v1866 = vmax.f32 %v1832, 0.0
  %v1867 = vpack.c.bf16 %v1836, %v1835
  %v1868 = vpack.c.bf16 %v1838, %v1837
  %v1869 = vpack.c.bf16 %v1840, %v1839
  %v1870 = vpack.c.bf16 %v1842, %v1841
  %v1871 = vpack.c.bf16 %v1844, %v1843
  %v1872 = vpack.c.bf16 %v1846, %v1845
  %v1873 = vpack.c.bf16 %v1848, %v1847
  %v1874 = vpack.c.bf16 %v1850, %v1849
  %v1875 = vpack.c.bf16 %v1852, %v1851
  %v1876 = vpack.c.bf16 %v1854, %v1853
  %v1877 = vpack.c.bf16 %v1856, %v1855
  %v1878 = vpack.c.bf16 %v1858, %v1857
  %v1879 = vpack.c.bf16 %v1860, %v1859
  %v1880 = vpack.c.bf16 %v1862, %v1861
  %v1881 = vpack.c.bf16 %v1864, %v1863
  %v1882 = vpack.c.bf16 %v1866, %v1865
  %v1899 = vunpack.c.l.b16 %v1867
  %v1900 = vunpack.c.h.b16 %v1867
  %v1901 = vunpack.c.l.b16 %v1868
  %v1902 = vunpack.c.h.b16 %v1868
  %v1903 = vunpack.c.l.b16 %v1869
  %v1904 = vunpack.c.h.b16 %v1869
  %v1905 = vunpack.c.l.b16 %v1870
  %v1906 = vunpack.c.h.b16 %v1870
  %v1907 = vunpack.c.l.b16 %v1871
  %v1908 = vunpack.c.h.b16 %v1871
  %v1909 = vunpack.c.l.b16 %v1872
  %v1910 = vunpack.c.h.b16 %v1872
  %v1911 = vunpack.c.l.b16 %v1873
  %v1912 = vunpack.c.h.b16 %v1873
  %v1913 = vunpack.c.l.b16 %v1874
  %v1914 = vunpack.c.h.b16 %v1874
  %v1915 = vunpack.c.l.b16 %v1875
  %v1916 = vunpack.c.h.b16 %v1875
  %v1917 = vunpack.c.l.b16 %v1876
  %v1918 = vunpack.c.h.b16 %v1876
  %v1919 = vunpack.c.l.b16 %v1877
  %v1920 = vunpack.c.h.b16 %v1877
  %v1921 = vunpack.c.l.b16 %v1878
  %v1922 = vunpack.c.h.b16 %v1878
  %v1923 = vunpack.c.l.b16 %v1879
  %v1924 = vunpack.c.h.b16 %v1879
  %v1925 = vunpack.c.l.b16 %v1880
  %v1926 = vunpack.c.h.b16 %v1880
  %v1927 = vunpack.c.l.b16 %v1881
  %v1928 = vunpack.c.h.b16 %v1881
  %v1929 = vunpack.c.l.b16 %v1882
  %v1930 = vunpack.c.h.b16 %v1882
  %v1931 = vpack.c.b16 %v1899, %v1899
  %v1932 = vpack.c.b16 %v1900, %v1900
  %v1933 = vpack.c.b16 %v1901, %v1901
  %v1934 = vpack.c.b16 %v1902, %v1902
  %v1935 = vpack.c.b16 %v1903, %v1903
  %v1936 = vpack.c.b16 %v1904, %v1904
  %v1937 = vpack.c.b16 %v1905, %v1905
  %v1938 = vpack.c.b16 %v1906, %v1906
  %v1939 = vpack.c.b16 %v1907, %v1907
  %v1940 = vpack.c.b16 %v1908, %v1908
  %v1941 = vpack.c.b16 %v1909, %v1909
  %v1942 = vpack.c.b16 %v1910, %v1910
  %v1943 = vpack.c.b16 %v1911, %v1911
  %v1944 = vpack.c.b16 %v1912, %v1912
  %v1945 = vpack.c.b16 %v1913, %v1913
  %v1946 = vpack.c.b16 %v1914, %v1914
  %v1947 = vpack.c.b16 %v1915, %v1915
  %v1948 = vpack.c.b16 %v1916, %v1916
  %v1949 = vpack.c.b16 %v1917, %v1917
  %v1950 = vpack.c.b16 %v1918, %v1918
  %v1951 = vpack.c.b16 %v1919, %v1919
  %v1952 = vpack.c.b16 %v1920, %v1920
  %v1953 = vpack.c.b16 %v1921, %v1921
  %v1954 = vpack.c.b16 %v1922, %v1922
  %v1955 = vpack.c.b16 %v1923, %v1923
  %v1956 = vpack.c.b16 %v1924, %v1924
  %v1957 = vpack.c.b16 %v1925, %v1925
  %v1958 = vpack.c.b16 %v1926, %v1926
  %v1959 = vpack.c.b16 %v1927, %v1927
  %v1960 = vpack.c.b16 %v1928, %v1928
  %v1961 = vpack.c.b16 %v1929, %v1929
  %v1962 = vpack.c.b16 %v1930, %v1930
  %vm1995 = vcmask 519168
  %1996 = vst.msk [vmem:[%s3] sm:$0xf] %vm1995, %v1931
  %1997 = vst.msk [vmem:[%s3 + $0x4] sm:$0xf] %vm1995, %v1932
  %1998 = vst.msk [vmem:[%s3 + $0x8] sm:$0xf] %vm1995, %v1933
  %1999 = vst.msk [vmem:[%s3 + $0xc] sm:$0xf] %vm1995, %v1934
  %2000 = vst.msk [vmem:[%s3 + $0x10] sm:$0xf] %vm1995, %v1935
  %2001 = vst.msk [vmem:[%s3 + $0x14] sm:$0xf] %vm1995, %v1936
  %2002 = vst.msk [vmem:[%s3 + $0x18] sm:$0xf] %vm1995, %v1937
  %2003 = vst.msk [vmem:[%s3 + $0x1c] sm:$0xf] %vm1995, %v1938
  %2004 = vst.msk [vmem:[%s3 + $0x20] sm:$0xf] %vm1995, %v1939
  %2005 = vst.msk [vmem:[%s3 + $0x24] sm:$0xf] %vm1995, %v1940
  %2006 = vst.msk [vmem:[%s3 + $0x28] sm:$0xf] %vm1995, %v1941
  %2007 = vst.msk [vmem:[%s3 + $0x2c] sm:$0xf] %vm1995, %v1942
  %2008 = vst.msk [vmem:[%s3 + $0x30] sm:$0xf] %vm1995, %v1943
  %2009 = vst.msk [vmem:[%s3 + $0x34] sm:$0xf] %vm1995, %v1944
  %2010 = vst.msk [vmem:[%s3 + $0x38] sm:$0xf] %vm1995, %v1945
  %2011 = vst.msk [vmem:[%s3 + $0x3c] sm:$0xf] %vm1995, %v1946
  %2012 = vst.msk [vmem:[%s3 + $0x40] sm:$0xf] %vm1995, %v1947
  %2013 = vst.msk [vmem:[%s3 + $0x44] sm:$0xf] %vm1995, %v1948
  %2014 = vst.msk [vmem:[%s3 + $0x48] sm:$0xf] %vm1995, %v1949
  %2015 = vst.msk [vmem:[%s3 + $0x4c] sm:$0xf] %vm1995, %v1950
  %2016 = vst.msk [vmem:[%s3 + $0x50] sm:$0xf] %vm1995, %v1951
  %2017 = vst.msk [vmem:[%s3 + $0x54] sm:$0xf] %vm1995, %v1952
  %2018 = vst.msk [vmem:[%s3 + $0x58] sm:$0xf] %vm1995, %v1953
  %2019 = vst.msk [vmem:[%s3 + $0x5c] sm:$0xf] %vm1995, %v1954
  %2020 = vst.msk [vmem:[%s3 + $0x60] sm:$0xf] %vm1995, %v1955
  %2021 = vst.msk [vmem:[%s3 + $0x64] sm:$0xf] %vm1995, %v1956
  %2022 = vst.msk [vmem:[%s3 + $0x68] sm:$0xf] %vm1995, %v1957
  %2023 = vst.msk [vmem:[%s3 + $0x6c] sm:$0xf] %vm1995, %v1958
  %2024 = vst.msk [vmem:[%s3 + $0x70] sm:$0xf] %vm1995, %v1959
  %2025 = vst.msk [vmem:[%s3 + $0x74] sm:$0xf] %vm1995, %v1960
  %2026 = vst.msk [vmem:[%s3 + $0x78] sm:$0xf] %vm1995, %v1961
  %2027 = vst.msk [vmem:[%s3 + $0x7c] sm:$0xf] %vm1995, %v1962
  // Predicated region
  $region14: #{forward.6} parent=0 // pred_check
    _
  $region15: #{forward.6} parent=0 // pred_check_branch
    %2029 = sbr.rel (0) target = $region17
  $region16: #{forward.6} parent=0 // pred_region
    _
  $region17: #{forward.6} parent=0 // pred_fallthru
    _
  // Predicated region
  $region18: #{forward.6} parent=0 // pred_check
    _
  $region19: #{forward.6} parent=0 // pred_check_branch
    %2031 = sbr.rel (0) target = $region21
  $region20: #{forward.6} parent=0 // pred_region
    _
  $region21: #{forward.6} parent=0 // pred_fallthru
    _

// kernel: forward.7
$region0: #{forward.7}
  #allocation0 [shape = 'u32[]', space=smem, size = 0x4, offset = 0x4, fixed_abs, tag = 'smem constant byte address 0x4 - core index']
  #allocation1 [shape = 'u32[144,128]{1,0:T(1,128)}', space=vmem, size = 0x12000, scoped, tag = 'internal scratch']
  %s0 = inlined_call_operand.vmem [shape: bf16[16,576], index: 0, kind: input, shape index: {}]
  %s1 = inlined_call_operand.vmem [shape: bf16[576,128], index: 1, kind: input, shape index: {}]
  %s2 = inlined_call_operand.vmem [shape: f32[1,128], index: 2, kind: input, shape index: {}]
  %s3 = inlined_call_operand.vmem [shape: bf16[16,128], index: 3, kind: output, shape index: {}]
  %s4 = sld [smem:[#allocation0]]
  $region22: #{forward.7} parent=0
    _
  %s6 = ssub.s32 1, %s4
  %s7 = scalar_select 0, %s6, %s4
  // Predicated region
  $region2: #{forward.7} parent=0 // pred_check
    _
  $region3: #{forward.7} parent=0 // pred_check_branch
    %9 = sbr.rel (0) target = $region5
  $region4: #{forward.7} parent=0 // pred_region
    _
  $region5: #{forward.7} parent=0 // pred_fallthru
    _
  // Predicated region
  $region6: #{forward.7} parent=0 // pred_check
    _
  $region7: #{forward.7} parent=0 // pred_check_branch
    %11 = sbr.rel (0) target = $region9
  $region8: #{forward.7} parent=0 // pred_region
    _
  $region9: #{forward.7} parent=0 // pred_fallthru
    _
  // Predicated region
  $region10: #{forward.7} parent=0 // pred_check
    _
  $region11: #{forward.7} parent=0 // pred_check_branch
    %13 = sbr.rel (0) target = $region13
  $region12: #{forward.7} parent=0 // pred_region
    _
  $region13: #{forward.7} parent=0 // pred_fallthru
    _
  %v15 = vld [vmem:[%s0] sm:$0xff]
  %v16 = vld [vmem:[%s0 + $0x8] sm:$0xff]
  %v17 = vld [vmem:[%s0 + $0x10] sm:$0xf]
  %v18 = vld [vmem:[%s0 + $0x14] sm:$0xff]
  %v19 = vld [vmem:[%s0 + $0x1c] sm:$0xff]
  %v20 = vld [vmem:[%s0 + $0x24] sm:$0xf]
  %v21 = vld [vmem:[%s1] sm:$0xf]
  %v22 = vld [vmem:[%s1 + $0x4] sm:$0xf]
  %v23 = vld [vmem:[%s1 + $0x8] sm:$0xf]
  %v24 = vld [vmem:[%s1 + $0xc] sm:$0xf]
  %v25 = vld [vmem:[%s1 + $0x10] sm:$0xf]
  %v26 = vld [vmem:[%s1 + $0x14] sm:$0xf]
  %v27 = vld [vmem:[%s1 + $0x18] sm:$0xf]
  %v28 = vld [vmem:[%s1 + $0x1c] sm:$0xf]
  %v29 = vld [vmem:[%s1 + $0x20] sm:$0xf]
  %v30 = vld [vmem:[%s1 + $0x24] sm:$0xf]
  %v31 = vld [vmem:[%s1 + $0x28] sm:$0xf]
  %v32 = vld [vmem:[%s1 + $0x2c] sm:$0xf]
  %v33 = vld [vmem:[%s1 + $0x30] sm:$0xf]
  %v34 = vld [vmem:[%s1 + $0x34] sm:$0xf]
  %v35 = vld [vmem:[%s1 + $0x38] sm:$0xf]
  %v36 = vld [vmem:[%s1 + $0x3c] sm:$0xf]
  %v37 = vld [vmem:[%s1 + $0x40] sm:$0xf]
  %v38 = vld [vmem:[%s1 + $0x44] sm:$0xf]
  %v39 = vld [vmem:[%s1 + $0x48] sm:$0xf]
  %v40 = vld [vmem:[%s1 + $0x4c] sm:$0xf]
  %v41 = vld [vmem:[%s1 + $0x50] sm:$0xf]
  %v42 = vld [vmem:[%s1 + $0x54] sm:$0xf]
  %v43 = vld [vmem:[%s1 + $0x58] sm:$0xf]
  %v44 = vld [vmem:[%s1 + $0x5c] sm:$0xf]
  %v45 = vld [vmem:[%s1 + $0x60] sm:$0xf]
  %v46 = vld [vmem:[%s1 + $0x64] sm:$0xf]
  %v47 = vld [vmem:[%s1 + $0x68] sm:$0xf]
  %v48 = vld [vmem:[%s1 + $0x6c] sm:$0xf]
  %v49 = vld [vmem:[%s1 + $0x70] sm:$0xf]
  %v50 = vld [vmem:[%s1 + $0x74] sm:$0xf]
  %v51 = vld [vmem:[%s1 + $0x78] sm:$0xf]
  %v52 = vld [vmem:[%s1 + $0x7c] sm:$0xf]
  %v53 = vld [vmem:[%s1 + $0x80] sm:$0xf]
  %v54 = vld [vmem:[%s1 + $0x84] sm:$0xf]
  %v55 = vld [vmem:[%s1 + $0x88] sm:$0xf]
  %v56 = vld [vmem:[%s1 + $0x8c] sm:$0xf]
  %v57 = vld [vmem:[%s1 + $0x90] sm:$0xf]
  %v58 = vld [vmem:[%s1 + $0x94] sm:$0xf]
  %v59 = vld [vmem:[%s1 + $0x98] sm:$0xf]
  %v60 = vld [vmem:[%s1 + $0x9c] sm:$0xf]
  %v61 = vld [vmem:[%s1 + $0xa0] sm:$0xf]
  %v62 = vld [vmem:[%s1 + $0xa4] sm:$0xf]
  %v63 = vld [vmem:[%s1 + $0xa8] sm:$0xf]
  %v64 = vld [vmem:[%s1 + $0xac] sm:$0xf]
  %v65 = vld [vmem:[%s1 + $0xb0] sm:$0xf]
  %v66 = vld [vmem:[%s1 + $0xb4] sm:$0xf]
  %v67 = vld [vmem:[%s1 + $0xb8] sm:$0xf]
  %v68 = vld [vmem:[%s1 + $0xbc] sm:$0xf]
  %v69 = vld [vmem:[%s1 + $0xc0] sm:$0xf]
  %v70 = vld [vmem:[%s1 + $0xc4] sm:$0xf]
  %v71 = vld [vmem:[%s1 + $0xc8] sm:$0xf]
  %v72 = vld [vmem:[%s1 + $0xcc] sm:$0xf]
  %v73 = vld [vmem:[%s1 + $0xd0] sm:$0xf]
  %v74 = vld [vmem:[%s1 + $0xd4] sm:$0xf]
  %v75 = vld [vmem:[%s1 + $0xd8] sm:$0xf]
  %v76 = vld [vmem:[%s1 + $0xdc] sm:$0xf]
  %v77 = vld [vmem:[%s1 + $0xe0] sm:$0xf]
  %v78 = vld [vmem:[%s1 + $0xe4] sm:$0xf]
  %v79 = vld [vmem:[%s1 + $0xe8] sm:$0xf]
  %v80 = vld [vmem:[%s1 + $0xec] sm:$0xf]
  %v81 = vld [vmem:[%s1 + $0xf0] sm:$0xf]
  %v82 = vld [vmem:[%s1 + $0xf4] sm:$0xf]
  %v83 = vld [vmem:[%s1 + $0xf8] sm:$0xf]
  %v84 = vld [vmem:[%s1 + $0xfc] sm:$0xf]
  %v85 = vld [vmem:[%s1 + $0x100] sm:$0xf]
  %v86 = vld [vmem:[%s1 + $0x104] sm:$0xf]
  %v87 = vld [vmem:[%s1 + $0x108] sm:$0xf]
  %v88 = vld [vmem:[%s1 + $0x10c] sm:$0xf]
  %v89 = vld [vmem:[%s1 + $0x110] sm:$0xf]
  %v90 = vld [vmem:[%s1 + $0x114] sm:$0xf]
  %v91 = vld [vmem:[%s1 + $0x118] sm:$0xf]
  %v92 = vld [vmem:[%s1 + $0x11c] sm:$0xf]
  %v93 = vld [vmem:[%s2] sm:$0x1]
  %v95 = vlaneseq
  %v96 = vshrl.u32 %v95, 7
  %v97 = vsub.s32 0, %v96
  %v98 = vrot.slane %v93, %v97
  %v106 = vunpack.c.l.b16 %v15
  %v107 = vunpack.c.h.b16 %v15
  %v108 = vunpack.c.l.b16 %v16
  %v109 = vunpack.c.h.b16 %v16
  %v110 = vunpack.c.l.b16 %v17
  %v111 = vunpack.c.l.b16 %v18
  %v112 = vunpack.c.h.b16 %v18
  %v113 = vunpack.c.l.b16 %v19
  %v114 = vunpack.c.h.b16 %v19
  %v115 = vunpack.c.l.b16 %v20
  %v116 = vpack.c.b16 %v111, %v106
  %v117 = vpack.c.b16 %v112, %v107
  %v118 = vpack.c.b16 %v113, %v108
  %v119 = vpack.c.b16 %v114, %v109
  %v120 = vpack.c.b16 %v115, %v110
  %v197 = vunpack.c.l.b16 %v21
  %v198 = vunpack.c.l.b16 %v22
  %v199 = vunpack.c.l.b16 %v23
  %v200 = vunpack.c.l.b16 %v24
  %v201 = vunpack.c.l.b16 %v25
  %v202 = vunpack.c.l.b16 %v26
  %v203 = vunpack.c.l.b16 %v27
  %v204 = vunpack.c.l.b16 %v28
  %v205 = vunpack.c.l.b16 %v29
  %v206 = vunpack.c.l.b16 %v30
  %v207 = vunpack.c.l.b16 %v31
  %v208 = vunpack.c.l.b16 %v32
  %v209 = vunpack.c.l.b16 %v33
  %v210 = vunpack.c.l.b16 %v34
  %v211 = vunpack.c.l.b16 %v35
  %v212 = vunpack.c.l.b16 %v36
  %v213 = vunpack.c.l.b16 %v37
  %v214 = vunpack.c.l.b16 %v38
  %v215 = vunpack.c.l.b16 %v39
  %v216 = vunpack.c.l.b16 %v40
  %v217 = vunpack.c.l.b16 %v41
  %v218 = vunpack.c.l.b16 %v42
  %v219 = vunpack.c.l.b16 %v43
  %v220 = vunpack.c.l.b16 %v44
  %v221 = vunpack.c.l.b16 %v45
  %v222 = vunpack.c.l.b16 %v46
  %v223 = vunpack.c.l.b16 %v47
  %v224 = vunpack.c.l.b16 %v48
  %v225 = vunpack.c.l.b16 %v49
  %v226 = vunpack.c.l.b16 %v50
  %v227 = vunpack.c.l.b16 %v51
  %v228 = vunpack.c.l.b16 %v52
  %v229 = vunpack.c.l.b16 %v53
  %v230 = vunpack.c.l.b16 %v54
  %v231 = vunpack.c.l.b16 %v55
  %v232 = vunpack.c.l.b16 %v56
  %v233 = vunpack.c.l.b16 %v57
  %v234 = vunpack.c.l.b16 %v58
  %v235 = vunpack.c.l.b16 %v59
  %v236 = vunpack.c.l.b16 %v60
  %v237 = vunpack.c.l.b16 %v61
  %v238 = vunpack.c.l.b16 %v62
  %v239 = vunpack.c.l.b16 %v63
  %v240 = vunpack.c.l.b16 %v64
  %v241 = vunpack.c.l.b16 %v65
  %v242 = vunpack.c.l.b16 %v66
  %v243 = vunpack.c.l.b16 %v67
  %v244 = vunpack.c.l.b16 %v68
  %v245 = vunpack.c.l.b16 %v69
  %v246 = vunpack.c.l.b16 %v70
  %v247 = vunpack.c.l.b16 %v71
  %v248 = vunpack.c.l.b16 %v72
  %v249 = vunpack.c.l.b16 %v73
  %v250 = vunpack.c.l.b16 %v74
  %v251 = vunpack.c.l.b16 %v75
  %v252 = vunpack.c.l.b16 %v76
  %v253 = vunpack.c.l.b16 %v77
  %v254 = vunpack.c.l.b16 %v78
  %v255 = vunpack.c.l.b16 %v79
  %v256 = vunpack.c.l.b16 %v80
  %v257 = vunpack.c.l.b16 %v81
  %v258 = vunpack.c.l.b16 %v82
  %v259 = vunpack.c.l.b16 %v83
  %v260 = vunpack.c.l.b16 %v84
  %v261 = vunpack.c.l.b16 %v85
  %v262 = vunpack.c.l.b16 %v86
  %v263 = vunpack.c.l.b16 %v87
  %v264 = vunpack.c.l.b16 %v88
  %v265 = vunpack.c.l.b16 %v89
  %v266 = vunpack.c.l.b16 %v90
  %v267 = vunpack.c.l.b16 %v91
  %v268 = vunpack.c.l.b16 %v92
  %v269 = vpack.c.b16 %v198, %v197
  %v270 = vpack.c.b16 %v200, %v199
  %v271 = vpack.c.b16 %v202, %v201
  %v272 = vpack.c.b16 %v204, %v203
  %v273 = vpack.c.b16 %v206, %v205
  %v274 = vpack.c.b16 %v208, %v207
  %v275 = vpack.c.b16 %v210, %v209
  %v276 = vpack.c.b16 %v212, %v211
  %v277 = vpack.c.b16 %v214, %v213
  %v278 = vpack.c.b16 %v216, %v215
  %v279 = vpack.c.b16 %v218, %v217
  %v280 = vpack.c.b16 %v220, %v219
  %v281 = vpack.c.b16 %v222, %v221
  %v282 = vpack.c.b16 %v224, %v223
  %v283 = vpack.c.b16 %v226, %v225
  %v284 = vpack.c.b16 %v228, %v227
  %v285 = vpack.c.b16 %v230, %v229
  %v286 = vpack.c.b16 %v232, %v231
  %v287 = vpack.c.b16 %v234, %v233
  %v288 = vpack.c.b16 %v236, %v235
  %v289 = vpack.c.b16 %v238, %v237
  %v290 = vpack.c.b16 %v240, %v239
  %v291 = vpack.c.b16 %v242, %v241
  %v292 = vpack.c.b16 %v244, %v243
  %v293 = vpack.c.b16 %v246, %v245
  %v294 = vpack.c.b16 %v248, %v247
  %v295 = vpack.c.b16 %v250, %v249
  %v296 = vpack.c.b16 %v252, %v251
  %v297 = vpack.c.b16 %v254, %v253
  %v298 = vpack.c.b16 %v256, %v255
  %v299 = vpack.c.b16 %v258, %v257
  %v300 = vpack.c.b16 %v260, %v259
  %v301 = vpack.c.b16 %v262, %v261
  %v302 = vpack.c.b16 %v264, %v263
  %v303 = vpack.c.b16 %v266, %v265
  %v304 = vpack.c.b16 %v268, %v267
  %vm341 = vcmask 523264
  %v343 = vsel %vm341, %v120, 0
  %345 = vmatprep.subr.bf16.mxu0 0
  %346 = vmatpush1.bf16.msra.mxu0 %v269
  %347 = vmatprep.subr.bf16.mxu0 0
  %348 = vmatpush1.bf16.msra.mxu0 %v270
  %349 = vmatprep.subr.bf16.mxu0 0
  %350 = vmatpush1.bf16.msra.mxu0 %v271
  %351 = vmatprep.subr.bf16.mxu0 0
  %352 = vmatpush1.bf16.msra.mxu0 %v272
  %353 = vmatprep.subr.bf16.mxu0 0
  %354 = vmatpush1.bf16.msra.mxu0 %v273
  %355 = vmatprep.subr.bf16.mxu0 0
  %356 = vmatpush1.bf16.msra.mxu0 %v274
  %357 = vmatprep.subr.bf16.mxu0 0
  %358 = vmatpush1.bf16.msra.mxu0 %v275
  %359 = vmatprep.subr.bf16.mxu0 0
  %360 = vmatpush1.bf16.msra.mxu0 %v276
  %361 = vmatprep.subr.bf16.mxu0 0
  %362 = vmatpush1.bf16.msra.mxu0 %v277
  %363 = vmatprep.subr.bf16.mxu0 0
  %364 = vmatpush1.bf16.msra.mxu0 %v278
  %365 = vmatprep.subr.bf16.mxu0 0
  %366 = vmatpush1.bf16.msra.mxu0 %v279
  %367 = vmatprep.subr.bf16.mxu0 0
  %368 = vmatpush1.bf16.msra.mxu0 %v280
  %369 = vmatprep.subr.bf16.mxu0 0
  %370 = vmatpush1.bf16.msra.mxu0 %v281
  %371 = vmatprep.subr.bf16.mxu0 0
  %372 = vmatpush1.bf16.msra.mxu0 %v282
  %373 = vmatprep.subr.bf16.mxu0 0
  %374 = vmatpush1.bf16.msra.mxu0 %v283
  %375 = vmatprep.subr.bf16.mxu0 0
  %376 = vmatpush1.bf16.msra.mxu0 %v284
  %377 = vmatprep.mubr.bf16.mxu0 %v117
  %378 = vmatmul.mubr.bf16.gmra.mrb[0].mxu0 %v116
  %v379 = vpop.f32.mrb[0].mxu0
  %v380 = vadd.f32 %v98, %v379
  %v381 = vpop.f32.mrb[0].mxu0
  %v382 = vpop.f32.mrb[0].mxu0
  %v383 = vadd.f32 %v98, %v382
  %v384 = vpop.f32.mrb[0].mxu0
  %385 = vdwg.mxu0
  %386 = vmatprep.subr.bf16.mxu0 0
  %387 = vmatpush1.bf16.msra.mxu0 %v285
  %388 = vmatprep.subr.bf16.mxu0 0
  %389 = vmatpush1.bf16.msra.mxu0 %v286
  %390 = vmatprep.subr.bf16.mxu0 0
  %391 = vmatpush1.bf16.msra.mxu0 %v287
  %392 = vmatprep.subr.bf16.mxu0 0
  %393 = vmatpush1.bf16.msra.mxu0 %v288
  %394 = vmatprep.subr.bf16.mxu0 0
  %395 = vmatpush1.bf16.msra.mxu0 %v289
  %396 = vmatprep.subr.bf16.mxu0 0
  %397 = vmatpush1.bf16.msra.mxu0 %v290
  %398 = vmatprep.subr.bf16.mxu0 0
  %399 = vmatpush1.bf16.msra.mxu0 %v291
  %400 = vmatprep.subr.bf16.mxu0 0
  %401 = vmatpush1.bf16.msra.mxu0 %v292
  %402 = vmatprep.subr.bf16.mxu0 0
  %403 = vmatpush1.bf16.msra.mxu0 %v293
  %404 = vmatprep.subr.bf16.mxu0 0
  %405 = vmatpush1.bf16.msra.mxu0 %v294
  %406 = vmatprep.subr.bf16.mxu0 0
  %407 = vmatpush1.bf16.msra.mxu0 %v295
  %408 = vmatprep.subr.bf16.mxu0 0
  %409 = vmatpush1.bf16.msra.mxu0 %v296
  %410 = vmatprep.subr.bf16.mxu0 0
  %411 = vmatpush1.bf16.msra.mxu0 %v297
  %412 = vmatprep.subr.bf16.mxu0 0
  %413 = vmatpush1.bf16.msra.mxu0 %v298
  %414 = vmatprep.subr.bf16.mxu0 0
  %415 = vmatpush1.bf16.msra.mxu0 %v299
  %416 = vmatprep.subr.bf16.mxu0 0
  %417 = vmatpush1.bf16.msra.mxu0 %v300
  %418 = vmatprep.mubr.bf16.mxu0 %v119
  %419 = vmatmul.mubr.bf16.gmra.mrb[0].mxu0 %v118
  %v420 = vpop.f32.mrb[0].mxu0
  %v421 = vadd.f32 %v380, %v420
  %v422 = vpop.f32.mrb[0].mxu0
  %v423 = vpop.f32.mrb[0].mxu0
  %v424 = vadd.f32 %v383, %v423
  %v425 = vpop.f32.mrb[0].mxu0
  %426 = vdwg.mxu0
  %427 = vmatprep.subr.bf16.mxu0 0
  %428 = vmatpush1.bf16.msra.mxu0 %v301
  %429 = vmatprep.subr.bf16.mxu0 0
  %430 = vmatpush1.bf16.msra.mxu0 %v302
  %431 = vmatprep.subr.bf16.mxu0 0
  %432 = vmatpush1.bf16.msra.mxu0 %v303
  %433 = vmatprep.subr.bf16.mxu0 0
  %434 = vmatpush1.bf16.msra.mxu0 %v304
  %435 = vmatprep.subr.bf16.mxu0 0
  %436 = vmatpush1.bf16.msra.mxu0 0
  %437 = vmatprep.subr.bf16.mxu0 0
  %438 = vmatpush1.bf16.msra.mxu0 0
  %439 = vmatprep.subr.bf16.mxu0 0
  %440 = vmatpush1.bf16.msra.mxu0 0
  %441 = vmatprep.subr.bf16.mxu0 0
  %442 = vmatpush1.bf16.msra.mxu0 0
  %443 = vmatprep.subr.bf16.mxu0 0
  %444 = vmatpush1.bf16.msra.mxu0 0
  %445 = vmatprep.subr.bf16.mxu0 0
  %446 = vmatpush1.bf16.msra.mxu0 0
  %447 = vmatprep.subr.bf16.mxu0 0
  %448 = vmatpush1.bf16.msra.mxu0 0
  %449 = vmatprep.subr.bf16.mxu0 0
  %450 = vmatpush1.bf16.msra.mxu0 0
  %451 = vmatprep.subr.bf16.mxu0 0
  %452 = vmatpush1.bf16.msra.mxu0 0
  %453 = vmatprep.subr.bf16.mxu0 0
  %454 = vmatpush1.bf16.msra.mxu0 0
  %455 = vmatprep.subr.bf16.mxu0 0
  %456 = vmatpush1.bf16.msra.mxu0 0
  %457 = vmatprep.subr.bf16.mxu0 0
  %458 = vmatpush1.bf16.msra.mxu0 0
  %459 = vmatprep.mubr.bf16.mxu0 0
  %460 = vmatmul.mubr.bf16.gmra.mrb[0].mxu0 %v343
  %v461 = vpop.f32.mrb[0].mxu0
  %v462 = vadd.f32 %v421, %v461
  %v463 = vpop.f32.mrb[0].mxu0
  %v464 = vpop.f32.mrb[0].mxu0
  %v465 = vadd.f32 %v424, %v464
  %v466 = vpop.f32.mrb[0].mxu0
  %467 = vdwg.mxu0
  %v468 = vmax.f32 %v462, 0.0
  %v469 = vmax.f32 %v465, 0.0
  %v470 = vpack.c.bf16 %v469, %v468
  %v472 = vunpack.c.l.b16 %v470
  %v473 = vunpack.c.h.b16 %v470
  %v474 = vpack.c.b16 %v472, %v472
  %v475 = vpack.c.b16 %v473, %v473
  %478 = vst [vmem:[%s3] sm:$0xf] %v474
  %479 = vst [vmem:[%s3 + $0x4] sm:$0xf] %v475
  // Predicated region
  $region14: #{forward.7} parent=0 // pred_check
    _
  $region15: #{forward.7} parent=0 // pred_check_branch
    %481 = sbr.rel (0) target = $region17
  $region16: #{forward.7} parent=0 // pred_region
    _
  $region17: #{forward.7} parent=0 // pred_fallthru
    _
  // Predicated region
  $region18: #{forward.7} parent=0 // pred_check
    _
  $region19: #{forward.7} parent=0 // pred_check_branch
    %483 = sbr.rel (0) target = $region21
  $region20: #{forward.7} parent=0 // pred_region
    _
  $region21: #{forward.7} parent=0 // pred_fallthru
    _

// kernel: forward.9
$region0: #{forward.9}
  #allocation0 [shape = 'u32[]', space=smem, size = 0x4, offset = 0x4, fixed_abs, tag = 'smem constant byte address 0x4 - core index']
  #allocation1 [shape = 'u32[144,128]{1,0:T(1,128)}', space=vmem, size = 0x12000, scoped, tag = 'internal scratch']
  #allocation2 [shape = 'f32[1,1]{1,0:T(1,128)S(1)}', space=vmem, size = 0x200, scoped, tag = 'scoped memory for forward.9']
  %s0 = inlined_call_operand.vmem [shape: f32[4,64], index: 0, kind: input, shape index: {}]
  %s1 = inlined_call_operand.vmem [shape: f32[64,128], index: 1, kind: input, shape index: {}]
  %s2 = inlined_call_operand.vmem [shape: f32[1,128], index: 2, kind: input, shape index: {}]
  %s3 = inlined_call_operand.vmem [shape: f32[128,48], index: 3, kind: input, shape index: {}]
  %s4 = inlined_call_operand.vmem [shape: f32[1,48], index: 4, kind: input, shape index: {}]
  %s5 = inlined_call_operand.vmem [shape: f32[1,48], index: 5, kind: input, shape index: {}]
  %s6 = inlined_call_operand.<no memory space> [shape: f32[1,1], index: 6, kind: input, shape index: {}]
  %s7 = inlined_call_operand.vmem [shape: f32[4,1], index: 7, kind: output, shape index: {}]
  %s8 = sld [smem:[#allocation0]]
  $region38: #{forward.9} parent=0
    _
  %s10 = ssub.s32 1, %s8
  %s11 = scalar_select 0, %s10, %s8
  %v12 = vstv %s6
  %13 = vst [vmem:[#allocation2] sm:$0x1] %v12
  // Predicated region
  $region2: #{forward.9} parent=0 // pred_check
    _
  $region3: #{forward.9} parent=0 // pred_check_branch
    %15 = sbr.rel (0) target = $region5
  $region4: #{forward.9} parent=0 // pred_region
    _
  $region5: #{forward.9} parent=0 // pred_fallthru
    _
  // Predicated region
  $region6: #{forward.9} parent=0 // pred_check
    _
  $region7: #{forward.9} parent=0 // pred_check_branch
    %17 = sbr.rel (0) target = $region9
  $region8: #{forward.9} parent=0 // pred_region
    _
  $region9: #{forward.9} parent=0 // pred_fallthru
    _
  // Predicated region
  $region10: #{forward.9} parent=0 // pred_check
    _
  $region11: #{forward.9} parent=0 // pred_check_branch
    %19 = sbr.rel (0) target = $region13
  $region12: #{forward.9} parent=0 // pred_region
    _
  $region13: #{forward.9} parent=0 // pred_fallthru
    _
  // Predicated region
  $region14: #{forward.9} parent=0 // pred_check
    _
  $region15: #{forward.9} parent=0 // pred_check_branch
    %21 = sbr.rel (0) target = $region17
  $region16: #{forward.9} parent=0 // pred_region
    _
  $region17: #{forward.9} parent=0 // pred_fallthru
    _
  // Predicated region
  $region18: #{forward.9} parent=0 // pred_check
    _
  $region19: #{forward.9} parent=0 // pred_check_branch
    %23 = sbr.rel (0) target = $region21
  $region20: #{forward.9} parent=0 // pred_region
    _
  $region21: #{forward.9} parent=0 // pred_fallthru
    _
  // Predicated region
  $region22: #{forward.9} parent=0 // pred_check
    _
  $region23: #{forward.9} parent=0 // pred_check_branch
    %25 = sbr.rel (0) target = $region25
  $region24: #{forward.9} parent=0 // pred_region
    _
  $region25: #{forward.9} parent=0 // pred_fallthru
    _
  // Predicated region
  $region26: #{forward.9} parent=0 // pred_check
    _
  $region27: #{forward.9} parent=0 // pred_check_branch
    %27 = sbr.rel (0) target = $region29
  $region28: #{forward.9} parent=0 // pred_region
    _
  $region29: #{forward.9} parent=0 // pred_fallthru
    _
  %v28 = vld [vmem:[%s0] sm:$0xf]
  %v29 = vld [vmem:[%s1] sm:$0xff]
  %v30 = vld [vmem:[%s1 + $0x8] sm:$0xff]
  %v31 = vld [vmem:[%s1 + $0x10] sm:$0xff]
  %v32 = vld [vmem:[%s1 + $0x18] sm:$0xff]
  %v33 = vld [vmem:[%s1 + $0x20] sm:$0xff]
  %v34 = vld [vmem:[%s1 + $0x28] sm:$0xff]
  %v35 = vld [vmem:[%s1 + $0x30] sm:$0xff]
  %v36 = vld [vmem:[%s1 + $0x38] sm:$0xff]
  %v37 = vld [vmem:[%s2] sm:$0x1]
  %v39 = vlaneseq
  %v40 = vshrl.u32 %v39, 7
  %v41 = vsub.s32 0, %v40
  %v42 = vrot.slane %v37, %v41
  %vm44 = vcmask 523264
  %v46 = vsel %vm44, %v28, 0
  %48 = vmatprep.subr.mxu0 0.0
  %49 = vmatpush1.msra.mxu0 %v29
  %50 = vmatprep.subr.mxu0 0.0
  %51 = vmatpush1.msra.mxu0 %v30
  %52 = vmatprep.subr.mxu0 0.0
  %53 = vmatpush1.msra.mxu0 %v31
  %54 = vmatprep.subr.mxu0 0.0
  %55 = vmatpush1.msra.mxu0 %v32
  %56 = vmatprep.subr.mxu0 0.0
  %57 = vmatpush1.msra.mxu0 %v33
  %58 = vmatprep.subr.mxu0 0.0
  %59 = vmatpush1.msra.mxu0 %v34
  %60 = vmatprep.subr.mxu0 0.0
  %61 = vmatpush1.msra.mxu0 %v35
  %62 = vmatprep.subr.mxu0 0.0
  %63 = vmatpush1.msra.mxu0 %v36
  %64 = vmatprep.subr.mxu0 0.0
  %65 = vmatpush1.msra.mxu0 0.0
  %66 = vmatprep.subr.mxu0 0.0
  %67 = vmatpush1.msra.mxu0 0.0
  %68 = vmatprep.subr.mxu0 0.0
  %69 = vmatpush1.msra.mxu0 0.0
  %70 = vmatprep.subr.mxu0 0.0
  %71 = vmatpush1.msra.mxu0 0.0
  %72 = vmatprep.subr.mxu0 0.0
  %73 = vmatpush1.msra.mxu0 0.0
  %74 = vmatprep.subr.mxu0 0.0
  %75 = vmatpush1.msra.mxu0 0.0
  %76 = vmatprep.subr.mxu0 0.0
  %77 = vmatpush1.msra.mxu0 0.0
  %78 = vmatprep.subr.mxu0 0.0
  %79 = vmatpush1.msra.mxu0 0.0
  %80 = vmatprep.subr.mxu0 0.0
  %81 = vmatpush1.msra.mxu0 0.0
  %82 = vmatprep.subr.mxu0 0.0
  %83 = vmatpush1.msra.mxu0 0.0
  %84 = vmatprep.subr.mxu0 0.0
  %85 = vmatpush1.msra.mxu0 0.0
  %86 = vmatprep.subr.mxu0 0.0
  %87 = vmatpush1.msra.mxu0 0.0
  %88 = vmatprep.subr.mxu0 0.0
  %89 = vmatpush1.msra.mxu0 0.0
  %90 = vmatprep.subr.mxu0 0.0
  %91 = vmatpush1.msra.mxu0 0.0
  %92 = vmatprep.subr.mxu0 0.0
  %93 = vmatpush1.msra.mxu0 0.0
  %94 = vmatprep.subr.mxu0 0.0
  %95 = vmatpush1.msra.mxu0 0.0
  %96 = vmatprep.subr.mxu0 0.0
  %97 = vmatpush1.msra.mxu0 0.0
  %98 = vmatprep.subr.mxu0 0.0
  %99 = vmatpush1.msra.mxu0 0.0
  %100 = vmatprep.subr.mxu0 0.0
  %101 = vmatpush1.msra.mxu0 0.0
  %102 = vmatprep.subr.mxu0 0.0
  %103 = vmatpush1.msra.mxu0 0.0
  %104 = vmatprep.subr.mxu0 0.0
  %105 = vmatpush1.msra.mxu0 0.0
  %106 = vmatprep.subr.mxu0 0.0
  %107 = vmatpush1.msra.mxu0 0.0
  %108 = vmatprep.subr.mxu0 0.0
  %109 = vmatpush1.msra.mxu0 0.0
  %110 = vmatprep.subr.mxu0 0.0
  %111 = vmatpush1.msra.mxu0 0.0
  %112 = vmatprep.mubr.f32.mxu0 0.0
  %113 = vmatmul.mubr.f32.gmra.mrb[0].mxu0 %v46
  %v114 = vpop.f32.mrb[0].mxu0
  %v115 = vadd.f32 %v42, %v114
  %v116 = vpop.f32.mrb[0].mxu0
  %117 = vdwg.mxu0
  %v118 = vmax.f32 %v115, 0.0
  %v119 = vld [vmem:[%s3] sm:$0xff]
  %v120 = vld [vmem:[%s3 + $0x8] sm:$0xff]
  %v121 = vld [vmem:[%s3 + $0x10] sm:$0xff]
  %v122 = vld [vmem:[%s3 + $0x18] sm:$0xff]
  %v123 = vld [vmem:[%s3 + $0x20] sm:$0xff]
  %v124 = vld [vmem:[%s3 + $0x28] sm:$0xff]
  %v125 = vld [vmem:[%s3 + $0x30] sm:$0xff]
  %v126 = vld [vmem:[%s3 + $0x38] sm:$0xff]
  %v127 = vld [vmem:[%s3 + $0x40] sm:$0xff]
  %v128 = vld [vmem:[%s3 + $0x48] sm:$0xff]
  %v129 = vld [vmem:[%s3 + $0x50] sm:$0xff]
  %v130 = vld [vmem:[%s3 + $0x58] sm:$0xff]
  %v131 = vld [vmem:[%s3 + $0x60] sm:$0xff]
  %v132 = vld [vmem:[%s3 + $0x68] sm:$0xff]
  %v133 = vld [vmem:[%s3 + $0x70] sm:$0xff]
  %v134 = vld [vmem:[%s3 + $0x78] sm:$0xff]
  %v135 = vld [vmem:[%s4] sm:$0x1]
  %v137 = vlaneseq
  %v138 = vshrl.u32 %v137, 7
  %v139 = vsub.s32 0, %v138
  %v140 = vrot.slane %v135, %v139
  %142 = vmatprep.subr.mxu0 0.0
  %143 = vmatpush1.msra.mxu0 %v119
  %144 = vmatprep.subr.mxu0 0.0
  %145 = vmatpush1.msra.mxu0 %v120
  %146 = vmatprep.subr.mxu0 0.0
  %147 = vmatpush1.msra.mxu0 %v121
  %148 = vmatprep.subr.mxu0 0.0
  %149 = vmatpush1.msra.mxu0 %v122
  %150 = vmatprep.subr.mxu0 0.0
  %151 = vmatpush1.msra.mxu0 %v123
  %152 = vmatprep.subr.mxu0 0.0
  %153 = vmatpush1.msra.mxu0 %v124
  %154 = vmatprep.subr.mxu0 0.0
  %155 = vmatpush1.msra.mxu0 %v125
  %156 = vmatprep.subr.mxu0 0.0
  %157 = vmatpush1.msra.mxu0 %v126
  %158 = vmatprep.subr.mxu0 0.0
  %159 = vmatpush1.msra.mxu0 %v127
  %160 = vmatprep.subr.mxu0 0.0
  %161 = vmatpush1.msra.mxu0 %v128
  %162 = vmatprep.subr.mxu0 0.0
  %163 = vmatpush1.msra.mxu0 %v129
  %164 = vmatprep.subr.mxu0 0.0
  %165 = vmatpush1.msra.mxu0 %v130
  %166 = vmatprep.subr.mxu0 0.0
  %167 = vmatpush1.msra.mxu0 %v131
  %168 = vmatprep.subr.mxu0 0.0
  %169 = vmatpush1.msra.mxu0 %v132
  %170 = vmatprep.subr.mxu0 0.0
  %171 = vmatpush1.msra.mxu0 %v133
  %172 = vmatprep.subr.mxu0 0.0
  %173 = vmatpush1.msra.mxu0 %v134
  %174 = vmatprep.subr.mxu0 0.0
  %175 = vmatpush1.msra.mxu0 0.0
  %176 = vmatprep.subr.mxu0 0.0
  %177 = vmatpush1.msra.mxu0 0.0
  %178 = vmatprep.subr.mxu0 0.0
  %179 = vmatpush1.msra.mxu0 0.0
  %180 = vmatprep.subr.mxu0 0.0
  %181 = vmatpush1.msra.mxu0 0.0
  %182 = vmatprep.subr.mxu0 0.0
  %183 = vmatpush1.msra.mxu0 0.0
  %184 = vmatprep.subr.mxu0 0.0
  %185 = vmatpush1.msra.mxu0 0.0
  %186 = vmatprep.subr.mxu0 0.0
  %187 = vmatpush1.msra.mxu0 0.0
  %188 = vmatprep.subr.mxu0 0.0
  %189 = vmatpush1.msra.mxu0 0.0
  %190 = vmatprep.subr.mxu0 0.0
  %191 = vmatpush1.msra.mxu0 0.0
  %192 = vmatprep.subr.mxu0 0.0
  %193 = vmatpush1.msra.mxu0 0.0
  %194 = vmatprep.subr.mxu0 0.0
  %195 = vmatpush1.msra.mxu0 0.0
  %196 = vmatprep.subr.mxu0 0.0
  %197 = vmatpush1.msra.mxu0 0.0
  %198 = vmatprep.subr.mxu0 0.0
  %199 = vmatpush1.msra.mxu0 0.0
  %200 = vmatprep.subr.mxu0 0.0
  %201 = vmatpush1.msra.mxu0 0.0
  %202 = vmatprep.subr.mxu0 0.0
  %203 = vmatpush1.msra.mxu0 0.0
  %204 = vmatprep.subr.mxu0 0.0
  %205 = vmatpush1.msra.mxu0 0.0
  %206 = vmatprep.mubr.f32.mxu0 0.0
  %207 = vmatmul.mubr.f32.gmra.mrb[0].mxu0 %v118
  %v208 = vpop.f32.mrb[0].mxu0
  %v209 = vadd.f32 %v140, %v208
  %v210 = vpop.f32.mrb[0].mxu0
  %211 = vdwg.mxu0
  %v212 = vmax.f32 %v209, 0.0
  %v213 = vld [vmem:[%s5] sm:$0x1]
  %v215 = vlaneseq
  %v216 = vshrl.u32 %v215, 7
  %v217 = vsub.s32 0, %v216
  %v218 = vrot.slane %v213, %v217
  %v220 = vmul.f32 %v212, %v218
  %vm221 = vcmask 388096
  %v222 = vsel %vm221, %v220, 0.0
  %223 = vadd.xlane.f32.xlu0 %v222
  %v224 = vpop.xlane.xlu0 %223
  %v225 = vld [vmem:[#allocation2] sm:$0x1]
  %v227 = vlaneseq
  %v228 = vshrl.u32 %v227, 7
  %v229 = vsub.s32 0, %v228
  %v230 = vrot.slane %v225, %v229
  %v232 = vadd.f32 %v224, %v230
  %vm233 = vcmask 3072
  %234 = vst.msk [vmem:[%s7] sm:$0xf] %vm233, %v232
  // Predicated region
  $region30: #{forward.9} parent=0 // pred_check
    _
  $region31: #{forward.9} parent=0 // pred_check_branch
    %236 = sbr.rel (0) target = $region33
  $region32: #{forward.9} parent=0 // pred_region
    _
  $region33: #{forward.9} parent=0 // pred_fallthru
    _
  // Predicated region
  $region34: #{forward.9} parent=0 // pred_check
    _
  $region35: #{forward.9} parent=0 // pred_check_branch
    %238 = sbr.rel (0) target = $region37
  $region36: #{forward.9} parent=0 // pred_region
    _
  $region37: #{forward.9} parent=0 // pred_fallthru
    _

// kernel: forward.8
$region0: #{forward.8}
  #allocation0 [shape = 'u32[]', space=smem, size = 0x4, offset = 0x4, fixed_abs, tag = 'smem constant byte address 0x4 - core index']
  #allocation1 [shape = 'u32[144,128]{1,0:T(1,128)}', space=vmem, size = 0x12000, scoped, tag = 'internal scratch']
  %s0 = inlined_call_operand.vmem [shape: bf16[16,1152], index: 0, kind: input, shape index: {}]
  %s1 = inlined_call_operand.vmem [shape: bf16[1152,64], index: 1, kind: input, shape index: {}]
  %s2 = inlined_call_operand.vmem [shape: f32[1,64], index: 2, kind: input, shape index: {}]
  %s3 = inlined_call_operand.vmem [shape: bf16[16,64], index: 3, kind: output, shape index: {}]
  %s4 = sld [smem:[#allocation0]]
  $region22: #{forward.8} parent=0
    _
  %s6 = ssub.s32 1, %s4
  %s7 = scalar_select 0, %s6, %s4
  // Predicated region
  $region2: #{forward.8} parent=0 // pred_check
    _
  $region3: #{forward.8} parent=0 // pred_check_branch
    %9 = sbr.rel (0) target = $region5
  $region4: #{forward.8} parent=0 // pred_region
    _
  $region5: #{forward.8} parent=0 // pred_fallthru
    _
  // Predicated region
  $region6: #{forward.8} parent=0 // pred_check
    _
  $region7: #{forward.8} parent=0 // pred_check_branch
    %11 = sbr.rel (0) target = $region9
  $region8: #{forward.8} parent=0 // pred_region
    _
  $region9: #{forward.8} parent=0 // pred_fallthru
    _
  // Predicated region
  $region10: #{forward.8} parent=0 // pred_check
    _
  $region11: #{forward.8} parent=0 // pred_check_branch
    %13 = sbr.rel (0) target = $region13
  $region12: #{forward.8} parent=0 // pred_region
    _
  $region13: #{forward.8} parent=0 // pred_fallthru
    _
  %v15 = vld [vmem:[%s0] sm:$0xff]
  %v16 = vld [vmem:[%s0 + $0x8] sm:$0xff]
  %v17 = vld [vmem:[%s0 + $0x10] sm:$0xff]
  %v18 = vld [vmem:[%s0 + $0x18] sm:$0xff]
  %v19 = vld [vmem:[%s0 + $0x20] sm:$0xf]
  %v20 = vld [vmem:[%s0 + $0x24] sm:$0xff]
  %v21 = vld [vmem:[%s0 + $0x2c] sm:$0xff]
  %v22 = vld [vmem:[%s0 + $0x34] sm:$0xff]
  %v23 = vld [vmem:[%s0 + $0x3c] sm:$0xff]
  %v24 = vld [vmem:[%s0 + $0x44] sm:$0xf]
  %v25 = vld [vmem:[%s1] sm:$0xf]
  %v26 = vld [vmem:[%s1 + $0x4] sm:$0xf]
  %v27 = vld [vmem:[%s1 + $0x8] sm:$0xf]
  %v28 = vld [vmem:[%s1 + $0xc] sm:$0xf]
  %v29 = vld [vmem:[%s1 + $0x10] sm:$0xf]
  %v30 = vld [vmem:[%s1 + $0x14] sm:$0xf]
  %v31 = vld [vmem:[%s1 + $0x18] sm:$0xf]
  %v32 = vld [vmem:[%s1 + $0x1c] sm:$0xf]
  %v33 = vld [vmem:[%s1 + $0x20] sm:$0xf]
  %v34 = vld [vmem:[%s1 + $0x24] sm:$0xf]
  %v35 = vld [vmem:[%s1 + $0x28] sm:$0xf]
  %v36 = vld [vmem:[%s1 + $0x2c] sm:$0xf]
  %v37 = vld [vmem:[%s1 + $0x30] sm:$0xf]
  %v38 = vld [vmem:[%s1 + $0x34] sm:$0xf]
  %v39 = vld [vmem:[%s1 + $0x38] sm:$0xf]
  %v40 = vld [vmem:[%s1 + $0x3c] sm:$0xf]
  %v41 = vld [vmem:[%s1 + $0x40] sm:$0xf]
  %v42 = vld [vmem:[%s1 + $0x44] sm:$0xf]
  %v43 = vld [vmem:[%s1 + $0x48] sm:$0xf]
  %v44 = vld [vmem:[%s1 + $0x4c] sm:$0xf]
  %v45 = vld [vmem:[%s1 + $0x50] sm:$0xf]
  %v46 = vld [vmem:[%s1 + $0x54] sm:$0xf]
  %v47 = vld [vmem:[%s1 + $0x58] sm:$0xf]
  %v48 = vld [vmem:[%s1 + $0x5c] sm:$0xf]
  %v49 = vld [vmem:[%s1 + $0x60] sm:$0xf]
  %v50 = vld [vmem:[%s1 + $0x64] sm:$0xf]
  %v51 = vld [vmem:[%s1 + $0x68] sm:$0xf]
  %v52 = vld [vmem:[%s1 + $0x6c] sm:$0xf]
  %v53 = vld [vmem:[%s1 + $0x70] sm:$0xf]
  %v54 = vld [vmem:[%s1 + $0x74] sm:$0xf]
  %v55 = vld [vmem:[%s1 + $0x78] sm:$0xf]
  %v56 = vld [vmem:[%s1 + $0x7c] sm:$0xf]
  %v57 = vld [vmem:[%s1 + $0x80] sm:$0xf]
  %v58 = vld [vmem:[%s1 + $0x84] sm:$0xf]
  %v59 = vld [vmem:[%s1 + $0x88] sm:$0xf]
  %v60 = vld [vmem:[%s1 + $0x8c] sm:$0xf]
  %v61 = vld [vmem:[%s1 + $0x90] sm:$0xf]
  %v62 = vld [vmem:[%s1 + $0x94] sm:$0xf]
  %v63 = vld [vmem:[%s1 + $0x98] sm:$0xf]
  %v64 = vld [vmem:[%s1 + $0x9c] sm:$0xf]
  %v65 = vld [vmem:[%s1 + $0xa0] sm:$0xf]
  %v66 = vld [vmem:[%s1 + $0xa4] sm:$0xf]
  %v67 = vld [vmem:[%s1 + $0xa8] sm:$0xf]
  %v68 = vld [vmem:[%s1 + $0xac] sm:$0xf]
  %v69 = vld [vmem:[%s1 + $0xb0] sm:$0xf]
  %v70 = vld [vmem:[%s1 + $0xb4] sm:$0xf]
  %v71 = vld [vmem:[%s1 + $0xb8] sm:$0xf]
  %v72 = vld [vmem:[%s1 + $0xbc] sm:$0xf]
  %v73 = vld [vmem:[%s1 + $0xc0] sm:$0xf]
  %v74 = vld [vmem:[%s1 + $0xc4] sm:$0xf]
  %v75 = vld [vmem:[%s1 + $0xc8] sm:$0xf]
  %v76 = vld [vmem:[%s1 + $0xcc] sm:$0xf]
  %v77 = vld [vmem:[%s1 + $0xd0] sm:$0xf]
  %v78 = vld [vmem:[%s1 + $0xd4] sm:$0xf]
  %v79 = vld [vmem:[%s1 + $0xd8] sm:$0xf]
  %v80 = vld [vmem:[%s1 + $0xdc] sm:$0xf]
  %v81 = vld [vmem:[%s1 + $0xe0] sm:$0xf]
  %v82 = vld [vmem:[%s1 + $0xe4] sm:$0xf]
  %v83 = vld [vmem:[%s1 + $0xe8] sm:$0xf]
  %v84 = vld [vmem:[%s1 + $0xec] sm:$0xf]
  %v85 = vld [vmem:[%s1 + $0xf0] sm:$0xf]
  %v86 = vld [vmem:[%s1 + $0xf4] sm:$0xf]
  %v87 = vld [vmem:[%s1 + $0xf8] sm:$0xf]
  %v88 = vld [vmem:[%s1 + $0xfc] sm:$0xf]
  %v89 = vld [vmem:[%s1 + $0x100] sm:$0xf]
  %v90 = vld [vmem:[%s1 + $0x104] sm:$0xf]
  %v91 = vld [vmem:[%s1 + $0x108] sm:$0xf]
  %v92 = vld [vmem:[%s1 + $0x10c] sm:$0xf]
  %v93 = vld [vmem:[%s1 + $0x110] sm:$0xf]
  %v94 = vld [vmem:[%s1 + $0x114] sm:$0xf]
  %v95 = vld [vmem:[%s1 + $0x118] sm:$0xf]
  %v96 = vld [vmem:[%s1 + $0x11c] sm:$0xf]
  %v97 = vld [vmem:[%s1 + $0x120] sm:$0xf]
  %v98 = vld [vmem:[%s1 + $0x124] sm:$0xf]
  %v99 = vld [vmem:[%s1 + $0x128] sm:$0xf]
  %v100 = vld [vmem:[%s1 + $0x12c] sm:$0xf]
  %v101 = vld [vmem:[%s1 + $0x130] sm:$0xf]
  %v102 = vld [vmem:[%s1 + $0x134] sm:$0xf]
  %v103 = vld [vmem:[%s1 + $0x138] sm:$0xf]
  %v104 = vld [vmem:[%s1 + $0x13c] sm:$0xf]
  %v105 = vld [vmem:[%s1 + $0x140] sm:$0xf]
  %v106 = vld [vmem:[%s1 + $0x144] sm:$0xf]
  %v107 = vld [vmem:[%s1 + $0x148] sm:$0xf]
  %v108 = vld [vmem:[%s1 + $0x14c] sm:$0xf]
  %v109 = vld [vmem:[%s1 + $0x150] sm:$0xf]
  %v110 = vld [vmem:[%s1 + $0x154] sm:$0xf]
  %v111 = vld [vmem:[%s1 + $0x158] sm:$0xf]
  %v112 = vld [vmem:[%s1 + $0x15c] sm:$0xf]
  %v113 = vld [vmem:[%s1 + $0x160] sm:$0xf]
  %v114 = vld [vmem:[%s1 + $0x164] sm:$0xf]
  %v115 = vld [vmem:[%s1 + $0x168] sm:$0xf]
  %v116 = vld [vmem:[%s1 + $0x16c] sm:$0xf]
  %v117 = vld [vmem:[%s1 + $0x170] sm:$0xf]
  %v118 = vld [vmem:[%s1 + $0x174] sm:$0xf]
  %v119 = vld [vmem:[%s1 + $0x178] sm:$0xf]
  %v120 = vld [vmem:[%s1 + $0x17c] sm:$0xf]
  %v121 = vld [vmem:[%s1 + $0x180] sm:$0xf]
  %v122 = vld [vmem:[%s1 + $0x184] sm:$0xf]
  %v123 = vld [vmem:[%s1 + $0x188] sm:$0xf]
  %v124 = vld [vmem:[%s1 + $0x18c] sm:$0xf]
  %v125 = vld [vmem:[%s1 + $0x190] sm:$0xf]
  %v126 = vld [vmem:[%s1 + $0x194] sm:$0xf]
  %v127 = vld [vmem:[%s1 + $0x198] sm:$0xf]
  %v128 = vld [vmem:[%s1 + $0x19c] sm:$0xf]
  %v129 = vld [vmem:[%s1 + $0x1a0] sm:$0xf]
  %v130 = vld [vmem:[%s1 + $0x1a4] sm:$0xf]
  %v131 = vld [vmem:[%s1 + $0x1a8] sm:$0xf]
  %v132 = vld [vmem:[%s1 + $0x1ac] sm:$0xf]
  %v133 = vld [vmem:[%s1 + $0x1b0] sm:$0xf]
  %v134 = vld [vmem:[%s1 + $0x1b4] sm:$0xf]
  %v135 = vld [vmem:[%s1 + $0x1b8] sm:$0xf]
  %v136 = vld [vmem:[%s1 + $0x1bc] sm:$0xf]
  %v137 = vld [vmem:[%s1 + $0x1c0] sm:$0xf]
  %v138 = vld [vmem:[%s1 + $0x1c4] sm:$0xf]
  %v139 = vld [vmem:[%s1 + $0x1c8] sm:$0xf]
  %v140 = vld [vmem:[%s1 + $0x1cc] sm:$0xf]
  %v141 = vld [vmem:[%s1 + $0x1d0] sm:$0xf]
  %v142 = vld [vmem:[%s1 + $0x1d4] sm:$0xf]
  %v143 = vld [vmem:[%s1 + $0x1d8] sm:$0xf]
  %v144 = vld [vmem:[%s1 + $0x1dc] sm:$0xf]
  %v145 = vld [vmem:[%s1 + $0x1e0] sm:$0xf]
  %v146 = vld [vmem:[%s1 + $0x1e4] sm:$0xf]
  %v147 = vld [vmem:[%s1 + $0x1e8] sm:$0xf]
  %v148 = vld [vmem:[%s1 + $0x1ec] sm:$0xf]
  %v149 = vld [vmem:[%s1 + $0x1f0] sm:$0xf]
  %v150 = vld [vmem:[%s1 + $0x1f4] sm:$0xf]
  %v151 = vld [vmem:[%s1 + $0x1f8] sm:$0xf]
  %v152 = vld [vmem:[%s1 + $0x1fc] sm:$0xf]
  %v153 = vld [vmem:[%s1 + $0x200] sm:$0xf]
  %v154 = vld [vmem:[%s1 + $0x204] sm:$0xf]
  %v155 = vld [vmem:[%s1 + $0x208] sm:$0xf]
  %v156 = vld [vmem:[%s1 + $0x20c] sm:$0xf]
  %v157 = vld [vmem:[%s1 + $0x210] sm:$0xf]
  %v158 = vld [vmem:[%s1 + $0x214] sm:$0xf]
  %v159 = vld [vmem:[%s1 + $0x218] sm:$0xf]
  %v160 = vld [vmem:[%s1 + $0x21c] sm:$0xf]
  %v161 = vld [vmem:[%s1 + $0x220] sm:$0xf]
  %v162 = vld [vmem:[%s1 + $0x224] sm:$0xf]
  %v163 = vld [vmem:[%s1 + $0x228] sm:$0xf]
  %v164 = vld [vmem:[%s1 + $0x22c] sm:$0xf]
  %v165 = vld [vmem:[%s1 + $0x230] sm:$0xf]
  %v166 = vld [vmem:[%s1 + $0x234] sm:$0xf]
  %v167 = vld [vmem:[%s1 + $0x238] sm:$0xf]
  %v168 = vld [vmem:[%s1 + $0x23c] sm:$0xf]
  %v169 = vld [vmem:[%s2] sm:$0x1]
  %v171 = vlaneseq
  %v172 = vshrl.u32 %v171, 7
  %v173 = vsub.s32 0, %v172
  %v174 = vrot.slane %v169, %v173
  %v186 = vunpack.c.l.b16 %v15
  %v187 = vunpack.c.h.b16 %v15
  %v188 = vunpack.c.l.b16 %v16
  %v189 = vunpack.c.h.b16 %v16
  %v190 = vunpack.c.l.b16 %v17
  %v191 = vunpack.c.h.b16 %v17
  %v192 = vunpack.c.l.b16 %v18
  %v193 = vunpack.c.h.b16 %v18
  %v194 = vunpack.c.l.b16 %v19
  %v195 = vunpack.c.l.b16 %v20
  %v196 = vunpack.c.h.b16 %v20
  %v197 = vunpack.c.l.b16 %v21
  %v198 = vunpack.c.h.b16 %v21
  %v199 = vunpack.c.l.b16 %v22
  %v200 = vunpack.c.h.b16 %v22
  %v201 = vunpack.c.l.b16 %v23
  %v202 = vunpack.c.h.b16 %v23
  %v203 = vunpack.c.l.b16 %v24
  %v204 = vpack.c.b16 %v195, %v186
  %v205 = vpack.c.b16 %v196, %v187
  %v206 = vpack.c.b16 %v197, %v188
  %v207 = vpack.c.b16 %v198, %v189
  %v208 = vpack.c.b16 %v199, %v190
  %v209 = vpack.c.b16 %v200, %v191
  %v210 = vpack.c.b16 %v201, %v192
  %v211 = vpack.c.b16 %v202, %v193
  %v212 = vpack.c.b16 %v203, %v194
  %v366 = vunpack.c.l.b16 %v25
  %v367 = vunpack.c.l.b16 %v26
  %v368 = vunpack.c.l.b16 %v27
  %v369 = vunpack.c.l.b16 %v28
  %v370 = vunpack.c.l.b16 %v29
  %v371 = vunpack.c.l.b16 %v30
  %v372 = vunpack.c.l.b16 %v31
  %v373 = vunpack.c.l.b16 %v32
  %v374 = vunpack.c.l.b16 %v33
  %v375 = vunpack.c.l.b16 %v34
  %v376 = vunpack.c.l.b16 %v35
  %v377 = vunpack.c.l.b16 %v36
  %v378 = vunpack.c.l.b16 %v37
  %v379 = vunpack.c.l.b16 %v38
  %v380 = vunpack.c.l.b16 %v39
  %v381 = vunpack.c.l.b16 %v40
  %v382 = vunpack.c.l.b16 %v41
  %v383 = vunpack.c.l.b16 %v42
  %v384 = vunpack.c.l.b16 %v43
  %v385 = vunpack.c.l.b16 %v44
  %v386 = vunpack.c.l.b16 %v45
  %v387 = vunpack.c.l.b16 %v46
  %v388 = vunpack.c.l.b16 %v47
  %v389 = vunpack.c.l.b16 %v48
  %v390 = vunpack.c.l.b16 %v49
  %v391 = vunpack.c.l.b16 %v50
  %v392 = vunpack.c.l.b16 %v51
  %v393 = vunpack.c.l.b16 %v52
  %v394 = vunpack.c.l.b16 %v53
  %v395 = vunpack.c.l.b16 %v54
  %v396 = vunpack.c.l.b16 %v55
  %v397 = vunpack.c.l.b16 %v56
  %v398 = vunpack.c.l.b16 %v57
  %v399 = vunpack.c.l.b16 %v58
  %v400 = vunpack.c.l.b16 %v59
  %v401 = vunpack.c.l.b16 %v60
  %v402 = vunpack.c.l.b16 %v61
  %v403 = vunpack.c.l.b16 %v62
  %v404 = vunpack.c.l.b16 %v63
  %v405 = vunpack.c.l.b16 %v64
  %v406 = vunpack.c.l.b16 %v65
  %v407 = vunpack.c.l.b16 %v66
  %v408 = vunpack.c.l.b16 %v67
  %v409 = vunpack.c.l.b16 %v68
  %v410 = vunpack.c.l.b16 %v69
  %v411 = vunpack.c.l.b16 %v70
  %v412 = vunpack.c.l.b16 %v71
  %v413 = vunpack.c.l.b16 %v72
  %v414 = vunpack.c.l.b16 %v73
  %v415 = vunpack.c.l.b16 %v74
  %v416 = vunpack.c.l.b16 %v75
  %v417 = vunpack.c.l.b16 %v76
  %v418 = vunpack.c.l.b16 %v77
  %v419 = vunpack.c.l.b16 %v78
  %v420 = vunpack.c.l.b16 %v79
  %v421 = vunpack.c.l.b16 %v80
  %v422 = vunpack.c.l.b16 %v81
  %v423 = vunpack.c.l.b16 %v82
  %v424 = vunpack.c.l.b16 %v83
  %v425 = vunpack.c.l.b16 %v84
  %v426 = vunpack.c.l.b16 %v85
  %v427 = vunpack.c.l.b16 %v86
  %v428 = vunpack.c.l.b16 %v87
  %v429 = vunpack.c.l.b16 %v88
  %v430 = vunpack.c.l.b16 %v89
  %v431 = vunpack.c.l.b16 %v90
  %v432 = vunpack.c.l.b16 %v91
  %v433 = vunpack.c.l.b16 %v92
  %v434 = vunpack.c.l.b16 %v93
  %v435 = vunpack.c.l.b16 %v94
  %v436 = vunpack.c.l.b16 %v95
  %v437 = vunpack.c.l.b16 %v96
  %v438 = vunpack.c.l.b16 %v97
  %v439 = vunpack.c.l.b16 %v98
  %v440 = vunpack.c.l.b16 %v99
  %v441 = vunpack.c.l.b16 %v100
  %v442 = vunpack.c.l.b16 %v101
  %v443 = vunpack.c.l.b16 %v102
  %v444 = vunpack.c.l.b16 %v103
  %v445 = vunpack.c.l.b16 %v104
  %v446 = vunpack.c.l.b16 %v105
  %v447 = vunpack.c.l.b16 %v106
  %v448 = vunpack.c.l.b16 %v107
  %v449 = vunpack.c.l.b16 %v108
  %v450 = vunpack.c.l.b16 %v109
  %v451 = vunpack.c.l.b16 %v110
  %v452 = vunpack.c.l.b16 %v111
  %v453 = vunpack.c.l.b16 %v112
  %v454 = vunpack.c.l.b16 %v113
  %v455 = vunpack.c.l.b16 %v114
  %v456 = vunpack.c.l.b16 %v115
  %v457 = vunpack.c.l.b16 %v116
  %v458 = vunpack.c.l.b16 %v117
  %v459 = vunpack.c.l.b16 %v118
  %v460 = vunpack.c.l.b16 %v119
  %v461 = vunpack.c.l.b16 %v120
  %v462 = vunpack.c.l.b16 %v121
  %v463 = vunpack.c.l.b16 %v122
  %v464 = vunpack.c.l.b16 %v123
  %v465 = vunpack.c.l.b16 %v124
  %v466 = vunpack.c.l.b16 %v125
  %v467 = vunpack.c.l.b16 %v126
  %v468 = vunpack.c.l.b16 %v127
  %v469 = vunpack.c.l.b16 %v128
  %v470 = vunpack.c.l.b16 %v129
  %v471 = vunpack.c.l.b16 %v130
  %v472 = vunpack.c.l.b16 %v131
  %v473 = vunpack.c.l.b16 %v132
  %v474 = vunpack.c.l.b16 %v133
  %v475 = vunpack.c.l.b16 %v134
  %v476 = vunpack.c.l.b16 %v135
  %v477 = vunpack.c.l.b16 %v136
  %v478 = vunpack.c.l.b16 %v137
  %v479 = vunpack.c.l.b16 %v138
  %v480 = vunpack.c.l.b16 %v139
  %v481 = vunpack.c.l.b16 %v140
  %v482 = vunpack.c.l.b16 %v141
  %v483 = vunpack.c.l.b16 %v142
  %v484 = vunpack.c.l.b16 %v143
  %v485 = vunpack.c.l.b16 %v144
  %v486 = vunpack.c.l.b16 %v145
  %v487 = vunpack.c.l.b16 %v146
  %v488 = vunpack.c.l.b16 %v147
  %v489 = vunpack.c.l.b16 %v148
  %v490 = vunpack.c.l.b16 %v149
  %v491 = vunpack.c.l.b16 %v150
  %v492 = vunpack.c.l.b16 %v151
  %v493 = vunpack.c.l.b16 %v152
  %v494 = vunpack.c.l.b16 %v153
  %v495 = vunpack.c.l.b16 %v154
  %v496 = vunpack.c.l.b16 %v155
  %v497 = vunpack.c.l.b16 %v156
  %v498 = vunpack.c.l.b16 %v157
  %v499 = vunpack.c.l.b16 %v158
  %v500 = vunpack.c.l.b16 %v159
  %v501 = vunpack.c.l.b16 %v160
  %v502 = vunpack.c.l.b16 %v161
  %v503 = vunpack.c.l.b16 %v162
  %v504 = vunpack.c.l.b16 %v163
  %v505 = vunpack.c.l.b16 %v164
  %v506 = vunpack.c.l.b16 %v165
  %v507 = vunpack.c.l.b16 %v166
  %v508 = vunpack.c.l.b16 %v167
  %v509 = vunpack.c.l.b16 %v168
  %v510 = vpack.c.b16 %v367, %v366
  %v511 = vpack.c.b16 %v369, %v368
  %v512 = vpack.c.b16 %v371, %v370
  %v513 = vpack.c.b16 %v373, %v372
  %v514 = vpack.c.b16 %v375, %v374
  %v515 = vpack.c.b16 %v377, %v376
  %v516 = vpack.c.b16 %v379, %v378
  %v517 = vpack.c.b16 %v381, %v380
  %v518 = vpack.c.b16 %v383, %v382
  %v519 = vpack.c.b16 %v385, %v384
  %v520 = vpack.c.b16 %v387, %v386
  %v521 = vpack.c.b16 %v389, %v388
  %v522 = vpack.c.b16 %v391, %v390
  %v523 = vpack.c.b16 %v393, %v392
  %v524 = vpack.c.b16 %v395, %v394
  %v525 = vpack.c.b16 %v397, %v396
  %v526 = vpack.c.b16 %v399, %v398
  %v527 = vpack.c.b16 %v401, %v400
  %v528 = vpack.c.b16 %v403, %v402
  %v529 = vpack.c.b16 %v405, %v404
  %v530 = vpack.c.b16 %v407, %v406
  %v531 = vpack.c.b16 %v409, %v408
  %v532 = vpack.c.b16 %v411, %v410
  %v533 = vpack.c.b16 %v413, %v412
  %v534 = vpack.c.b16 %v415, %v414
  %v535 = vpack.c.b16 %v417, %v416
  %v536 = vpack.c.b16 %v419, %v418
  %v537 = vpack.c.b16 %v421, %v420
  %v538 = vpack.c.b16 %v423, %v422
  %v539 = vpack.c.b16 %v425, %v424
  %v540 = vpack.c.b16 %v427, %v426
  %v541 = vpack.c.b16 %v429, %v428
  %v542 = vpack.c.b16 %v431, %v430
  %v543 = vpack.c.b16 %v433, %v432
  %v544 = vpack.c.b16 %v435, %v434
  %v545 = vpack.c.b16 %v437, %v436
  %v546 = vpack.c.b16 %v439, %v438
  %v547 = vpack.c.b16 %v441, %v440
  %v548 = vpack.c.b16 %v443, %v442
  %v549 = vpack.c.b16 %v445, %v444
  %v550 = vpack.c.b16 %v447, %v446
  %v551 = vpack.c.b16 %v449, %v448
  %v552 = vpack.c.b16 %v451, %v450
  %v553 = vpack.c.b16 %v453, %v452
  %v554 = vpack.c.b16 %v455, %v454
  %v555 = vpack.c.b16 %v457, %v456
  %v556 = vpack.c.b16 %v459, %v458
  %v557 = vpack.c.b16 %v461, %v460
  %v558 = vpack.c.b16 %v463, %v462
  %v559 = vpack.c.b16 %v465, %v464
  %v560 = vpack.c.b16 %v467, %v466
  %v561 = vpack.c.b16 %v469, %v468
  %v562 = vpack.c.b16 %v471, %v470
  %v563 = vpack.c.b16 %v473, %v472
  %v564 = vpack.c.b16 %v475, %v474
  %v565 = vpack.c.b16 %v477, %v476
  %v566 = vpack.c.b16 %v479, %v478
  %v567 = vpack.c.b16 %v481, %v480
  %v568 = vpack.c.b16 %v483, %v482
  %v569 = vpack.c.b16 %v485, %v484
  %v570 = vpack.c.b16 %v487, %v486
  %v571 = vpack.c.b16 %v489, %v488
  %v572 = vpack.c.b16 %v491, %v490
  %v573 = vpack.c.b16 %v493, %v492
  %v574 = vpack.c.b16 %v495, %v494
  %v575 = vpack.c.b16 %v497, %v496
  %v576 = vpack.c.b16 %v499, %v498
  %v577 = vpack.c.b16 %v501, %v500
  %v578 = vpack.c.b16 %v503, %v502
  %v579 = vpack.c.b16 %v505, %v504
  %v580 = vpack.c.b16 %v507, %v506
  %v581 = vpack.c.b16 %v509, %v508
  %654 = vmatprep.subr.bf16.mxu0 0
  %655 = vmatpush1.bf16.msra.mxu0 %v510
  %656 = vmatprep.subr.bf16.mxu0 0
  %657 = vmatpush1.bf16.msra.mxu0 %v511
  %658 = vmatprep.subr.bf16.mxu0 0
  %659 = vmatpush1.bf16.msra.mxu0 %v512
  %660 = vmatprep.subr.bf16.mxu0 0
  %661 = vmatpush1.bf16.msra.mxu0 %v513
  %662 = vmatprep.subr.bf16.mxu0 0
  %663 = vmatpush1.bf16.msra.mxu0 %v514
  %664 = vmatprep.subr.bf16.mxu0 0
  %665 = vmatpush1.bf16.msra.mxu0 %v515
  %666 = vmatprep.subr.bf16.mxu0 0
  %667 = vmatpush1.bf16.msra.mxu0 %v516
  %668 = vmatprep.subr.bf16.mxu0 0
  %669 = vmatpush1.bf16.msra.mxu0 %v517
  %670 = vmatprep.subr.bf16.mxu0 0
  %671 = vmatpush1.bf16.msra.mxu0 %v518
  %672 = vmatprep.subr.bf16.mxu0 0
  %673 = vmatpush1.bf16.msra.mxu0 %v519
  %674 = vmatprep.subr.bf16.mxu0 0
  %675 = vmatpush1.bf16.msra.mxu0 %v520
  %676 = vmatprep.subr.bf16.mxu0 0
  %677 = vmatpush1.bf16.msra.mxu0 %v521
  %678 = vmatprep.subr.bf16.mxu0 0
  %679 = vmatpush1.bf16.msra.mxu0 %v522
  %680 = vmatprep.subr.bf16.mxu0 0
  %681 = vmatpush1.bf16.msra.mxu0 %v523
  %682 = vmatprep.subr.bf16.mxu0 0
  %683 = vmatpush1.bf16.msra.mxu0 %v524
  %684 = vmatprep.subr.bf16.mxu0 0
  %685 = vmatpush1.bf16.msra.mxu0 %v525
  %686 = vmatprep.mubr.bf16.mxu0 %v205
  %687 = vmatmul.mubr.bf16.gmra.mrb[0].mxu0 %v204
  %v688 = vpop.f32.mrb[0].mxu0
  %v689 = vadd.f32 %v174, %v688
  %v690 = vpop.f32.mrb[0].mxu0
  %v691 = vpop.f32.mrb[0].mxu0
  %v692 = vadd.f32 %v174, %v691
  %v693 = vpop.f32.mrb[0].mxu0
  %694 = vdwg.mxu0
  %695 = vmatprep.subr.bf16.mxu0 0
  %696 = vmatpush1.bf16.msra.mxu0 %v526
  %697 = vmatprep.subr.bf16.mxu0 0
  %698 = vmatpush1.bf16.msra.mxu0 %v527
  %699 = vmatprep.subr.bf16.mxu0 0
  %700 = vmatpush1.bf16.msra.mxu0 %v528
  %701 = vmatprep.subr.bf16.mxu0 0
  %702 = vmatpush1.bf16.msra.mxu0 %v529
  %703 = vmatprep.subr.bf16.mxu0 0
  %704 = vmatpush1.bf16.msra.mxu0 %v530
  %705 = vmatprep.subr.bf16.mxu0 0
  %706 = vmatpush1.bf16.msra.mxu0 %v531
  %707 = vmatprep.subr.bf16.mxu0 0
  %708 = vmatpush1.bf16.msra.mxu0 %v532
  %709 = vmatprep.subr.bf16.mxu0 0
  %710 = vmatpush1.bf16.msra.mxu0 %v533
  %711 = vmatprep.subr.bf16.mxu0 0
  %712 = vmatpush1.bf16.msra.mxu0 %v534
  %713 = vmatprep.subr.bf16.mxu0 0
  %714 = vmatpush1.bf16.msra.mxu0 %v535
  %715 = vmatprep.subr.bf16.mxu0 0
  %716 = vmatpush1.bf16.msra.mxu0 %v536
  %717 = vmatprep.subr.bf16.mxu0 0
  %718 = vmatpush1.bf16.msra.mxu0 %v537
  %719 = vmatprep.subr.bf16.mxu0 0
  %720 = vmatpush1.bf16.msra.mxu0 %v538
  %721 = vmatprep.subr.bf16.mxu0 0
  %722 = vmatpush1.bf16.msra.mxu0 %v539
  %723 = vmatprep.subr.bf16.mxu0 0
  %724 = vmatpush1.bf16.msra.mxu0 %v540
  %725 = vmatprep.subr.bf16.mxu0 0
  %726 = vmatpush1.bf16.msra.mxu0 %v541
  %727 = vmatprep.mubr.bf16.mxu0 %v207
  %728 = vmatmul.mubr.bf16.gmra.mrb[0].mxu0 %v206
  %v729 = vpop.f32.mrb[0].mxu0
  %v730 = vadd.f32 %v689, %v729
  %v731 = vpop.f32.mrb[0].mxu0
  %v732 = vpop.f32.mrb[0].mxu0
  %v733 = vadd.f32 %v692, %v732
  %v734 = vpop.f32.mrb[0].mxu0
  %735 = vdwg.mxu0
  %736 = vmatprep.subr.bf16.mxu0 0
  %737 = vmatpush1.bf16.msra.mxu0 %v542
  %738 = vmatprep.subr.bf16.mxu0 0
  %739 = vmatpush1.bf16.msra.mxu0 %v543
  %740 = vmatprep.subr.bf16.mxu0 0
  %741 = vmatpush1.bf16.msra.mxu0 %v544
  %742 = vmatprep.subr.bf16.mxu0 0
  %743 = vmatpush1.bf16.msra.mxu0 %v545
  %744 = vmatprep.subr.bf16.mxu0 0
  %745 = vmatpush1.bf16.msra.mxu0 %v546
  %746 = vmatprep.subr.bf16.mxu0 0
  %747 = vmatpush1.bf16.msra.mxu0 %v547
  %748 = vmatprep.subr.bf16.mxu0 0
  %749 = vmatpush1.bf16.msra.mxu0 %v548
  %750 = vmatprep.subr.bf16.mxu0 0
  %751 = vmatpush1.bf16.msra.mxu0 %v549
  %752 = vmatprep.subr.bf16.mxu0 0
  %753 = vmatpush1.bf16.msra.mxu0 %v550
  %754 = vmatprep.subr.bf16.mxu0 0
  %755 = vmatpush1.bf16.msra.mxu0 %v551
  %756 = vmatprep.subr.bf16.mxu0 0
  %757 = vmatpush1.bf16.msra.mxu0 %v552
  %758 = vmatprep.subr.bf16.mxu0 0
  %759 = vmatpush1.bf16.msra.mxu0 %v553
  %760 = vmatprep.subr.bf16.mxu0 0
  %761 = vmatpush1.bf16.msra.mxu0 %v554
  %762 = vmatprep.subr.bf16.mxu0 0
  %763 = vmatpush1.bf16.msra.mxu0 %v555
  %764 = vmatprep.subr.bf16.mxu0 0
  %765 = vmatpush1.bf16.msra.mxu0 %v556
  %766 = vmatprep.subr.bf16.mxu0 0
  %767 = vmatpush1.bf16.msra.mxu0 %v557
  %768 = vmatprep.mubr.bf16.mxu0 %v209
  %769 = vmatmul.mubr.bf16.gmra.mrb[0].mxu0 %v208
  %v770 = vpop.f32.mrb[0].mxu0
  %v771 = vadd.f32 %v730, %v770
  %v772 = vpop.f32.mrb[0].mxu0
  %v773 = vpop.f32.mrb[0].mxu0
  %v774 = vadd.f32 %v733, %v773
  %v775 = vpop.f32.mrb[0].mxu0
  %776 = vdwg.mxu0
  %777 = vmatprep.subr.bf16.mxu0 0
  %778 = vmatpush1.bf16.msra.mxu0 %v558
  %779 = vmatprep.subr.bf16.mxu0 0
  %780 = vmatpush1.bf16.msra.mxu0 %v559
  %781 = vmatprep.subr.bf16.mxu0 0
  %782 = vmatpush1.bf16.msra.mxu0 %v560
  %783 = vmatprep.subr.bf16.mxu0 0
  %784 = vmatpush1.bf16.msra.mxu0 %v561
  %785 = vmatprep.subr.bf16.mxu0 0
  %786 = vmatpush1.bf16.msra.mxu0 %v562
  %787 = vmatprep.subr.bf16.mxu0 0
  %788 = vmatpush1.bf16.msra.mxu0 %v563
  %789 = vmatprep.subr.bf16.mxu0 0
  %790 = vmatpush1.bf16.msra.mxu0 %v564
  %791 = vmatprep.subr.bf16.mxu0 0
  %792 = vmatpush1.bf16.msra.mxu0 %v565
  %793 = vmatprep.subr.bf16.mxu0 0
  %794 = vmatpush1.bf16.msra.mxu0 %v566
  %795 = vmatprep.subr.bf16.mxu0 0
  %796 = vmatpush1.bf16.msra.mxu0 %v567
  %797 = vmatprep.subr.bf16.mxu0 0
  %798 = vmatpush1.bf16.msra.mxu0 %v568
  %799 = vmatprep.subr.bf16.mxu0 0
  %800 = vmatpush1.bf16.msra.mxu0 %v569
  %801 = vmatprep.subr.bf16.mxu0 0
  %802 = vmatpush1.bf16.msra.mxu0 %v570
  %803 = vmatprep.subr.bf16.mxu0 0
  %804 = vmatpush1.bf16.msra.mxu0 %v571
  %805 = vmatprep.subr.bf16.mxu0 0
  %806 = vmatpush1.bf16.msra.mxu0 %v572
  %807 = vmatprep.subr.bf16.mxu0 0
  %808 = vmatpush1.bf16.msra.mxu0 %v573
  %809 = vmatprep.mubr.bf16.mxu0 %v211
  %810 = vmatmul.mubr.bf16.gmra.mrb[0].mxu0 %v210
  %v811 = vpop.f32.mrb[0].mxu0
  %v812 = vadd.f32 %v771, %v811
  %v813 = vpop.f32.mrb[0].mxu0
  %v814 = vpop.f32.mrb[0].mxu0
  %v815 = vadd.f32 %v774, %v814
  %v816 = vpop.f32.mrb[0].mxu0
  %817 = vdwg.mxu0
  %818 = vmatprep.subr.bf16.mxu0 0
  %819 = vmatpush1.bf16.msra.mxu0 %v574
  %820 = vmatprep.subr.bf16.mxu0 0
  %821 = vmatpush1.bf16.msra.mxu0 %v575
  %822 = vmatprep.subr.bf16.mxu0 0
  %823 = vmatpush1.bf16.msra.mxu0 %v576
  %824 = vmatprep.subr.bf16.mxu0 0
  %825 = vmatpush1.bf16.msra.mxu0 %v577
  %826 = vmatprep.subr.bf16.mxu0 0
  %827 = vmatpush1.bf16.msra.mxu0 %v578
  %828 = vmatprep.subr.bf16.mxu0 0
  %829 = vmatpush1.bf16.msra.mxu0 %v579
  %830 = vmatprep.subr.bf16.mxu0 0
  %831 = vmatpush1.bf16.msra.mxu0 %v580
  %832 = vmatprep.subr.bf16.mxu0 0
  %833 = vmatpush1.bf16.msra.mxu0 %v581
  %834 = vmatprep.subr.bf16.mxu0 0
  %835 = vmatpush1.bf16.msra.mxu0 0
  %836 = vmatprep.subr.bf16.mxu0 0
  %837 = vmatpush1.bf16.msra.mxu0 0
  %838 = vmatprep.subr.bf16.mxu0 0
  %839 = vmatpush1.bf16.msra.mxu0 0
  %840 = vmatprep.subr.bf16.mxu0 0
  %841 = vmatpush1.bf16.msra.mxu0 0
  %842 = vmatprep.subr.bf16.mxu0 0
  %843 = vmatpush1.bf16.msra.mxu0 0
  %844 = vmatprep.subr.bf16.mxu0 0
  %845 = vmatpush1.bf16.msra.mxu0 0
  %846 = vmatprep.subr.bf16.mxu0 0
  %847 = vmatpush1.bf16.msra.mxu0 0
  %848 = vmatprep.subr.bf16.mxu0 0
  %849 = vmatpush1.bf16.msra.mxu0 0
  %850 = vmatprep.mubr.bf16.mxu0 0
  %851 = vmatmul.mubr.bf16.gmra.mrb[0].mxu0 %v212
  %v852 = vpop.f32.mrb[0].mxu0
  %v853 = vadd.f32 %v812, %v852
  %v854 = vpop.f32.mrb[0].mxu0
  %v855 = vpop.f32.mrb[0].mxu0
  %v856 = vadd.f32 %v815, %v855
  %v857 = vpop.f32.mrb[0].mxu0
  %858 = vdwg.mxu0
  %v859 = vmax.f32 %v853, 0.0
  %v860 = vmax.f32 %v856, 0.0
  %v861 = vpack.c.bf16 %v860, %v859
  %v863 = vunpack.c.l.b16 %v861
  %v864 = vunpack.c.h.b16 %v861
  %v865 = vpack.c.b16 %v863, %v863
  %v866 = vpack.c.b16 %v864, %v864
  %vm869 = vcmask 519168
  %870 = vst.msk [vmem:[%s3] sm:$0xf] %vm869, %v865
  %871 = vst.msk [vmem:[%s3 + $0x4] sm:$0xf] %vm869, %v866
  // Predicated region
  $region14: #{forward.8} parent=0 // pred_check
    _
  $region15: #{forward.8} parent=0 // pred_check_branch
    %873 = sbr.rel (0) target = $region17
  $region16: #{forward.8} parent=0 // pred_region
    _
  $region17: #{forward.8} parent=0 // pred_fallthru
    _
  // Predicated region
  $region18: #{forward.8} parent=0 // pred_check
    _
  $region19: #{forward.8} parent=0 // pred_check_branch
    %875 = sbr.rel (0) target = $region21
  $region20: #{forward.8} parent=0 // pred_region
    _
  $region21: #{forward.8} parent=0 // pred_fallthru
    _

</llo_original>
